<compile_context>
chip_gen: v5e
topology: v5e:2x2
jax: 0.10.0
libtpu: 0.0.40
codegen_flags: <defaults>
</compile_context>

<pallas_src>
import math

import numpy as np
import jax
import jax.numpy as jnp
from jax.experimental import pallas as pl
from jax.experimental.pallas import tpu as pltpu

EPS = 1e-5
LANE = 128
VMEM_LIMIT = 32 * 1024 * 1024
STAGE_REPEATS = [4, 8, 4]
STAGE_OUT = {
    "0.5x": [-1, 24, 48, 96, 192, 1024],
    "1.0x": [-1, 24, 116, 232, 464, 1024],
    "1.5x": [-1, 24, 176, 352, 704, 1024],
    "2.0x": [-1, 24, 244, 488, 976, 2048],
}


def _rup(x, m):
    return ((x + m - 1) // m) * m


def _pad2(a, rows, cols):
    a = np.asarray(a, np.float32)
    out = np.zeros((rows, cols), np.float32)
    out[: a.shape[0], : a.shape[1]] = a
    return out


def _cost(flops, arrays, out_bytes):
    nbytes = int(sum(int(a.size) * a.dtype.itemsize for a in arrays)) + int(out_bytes)
    return pl.CostEstimate(flops=int(flops), transcendentals=0, bytes_accessed=nbytes)


# ----------------------------- Pallas kernels -----------------------------

def _block_compute(x, w1, b1, t, wdw, w2, b2):
    """Fused ShuffleV2 block on row-flattened (P, C) lane-dense tiles (3 matmuls)."""
    y = jnp.maximum(
        jnp.dot(x.astype(jnp.bfloat16), w1, preferred_element_type=jnp.float32) + b1, 0.0)
    # Stacked 3x3 tap gather (+stride decimation): ONE bf16 matmul -> (9*Po, Cext).
    z = jnp.dot(t, y.astype(jnp.bfloat16), preferred_element_type=jnp.float32)
    po = t.shape[0] // 9
    acc = z[0:po, :] * wdw[0:1, :]
    for k in range(1, 9):
        acc = acc + z[k * po:(k + 1) * po, :] * wdw[k:k + 1, :]
    return jnp.maximum(
        jnp.dot(acc.astype(jnp.bfloat16), w2, preferred_element_type=jnp.float32) + b2, 0.0)


def _stem_kernel(x_ref, wc_ref, bc_ref, tmax_ref, o_ref):
    # first_conv (im2col matmul, BN folded) + ReLU, then 3x3/s2 maxpool via ONE stacked
    # bf16 one-hot gather matmul + max over the 9 tap slices.  OOB taps gather 0, which
    # is exact because the maxpool input is post-ReLU (>= 0).
    y = jnp.maximum(
        jnp.dot(x_ref[...].astype(jnp.bfloat16), wc_ref[...],
                preferred_element_type=jnp.float32) + bc_ref[...], 0.0)
    z = jnp.dot(tmax_ref[...], y.astype(jnp.bfloat16), preferred_element_type=jnp.float32)
    po = tmax_ref.shape[0] // 9
    m = z[0:po, :]
    for k in range(1, 9):
        m = jnp.maximum(m, z[k * po:(k + 1) * po, :])
    o_ref[...] = m


def _block_kernel(x_ref, w1_ref, b1_ref, t_ref, wdw_ref, w2_ref, b2_ref, o_ref):
    # Single-shot fused block (used for the stride-2 downsampling block of each stage).
    o_ref[...] = _block_compute(x_ref[...], w1_ref[...], b1_ref[...], t_ref[...],
                                wdw_ref[...], w2_ref[...], b2_ref[...])


def _stage_kernel(x_ref, t_ref, w1_ref, b1_ref, wdw_ref, w2_ref, b2_ref, o_ref, act_ref):
    # All stride-1 blocks of a stage under one grid; activation stays in VMEM scratch,
    # shared tap matrix stays resident, per-block weights are pipelined via index_map.
    i = pl.program_id(0)

    @pl.when(i == 0)
    def _():
        act_ref[...] = x_ref[...]

    out = _block_compute(act_ref[...], w1_ref[0], b1_ref[0], t_ref[...],
                         wdw_ref[0], w2_ref[0], b2_ref[0])
    act_ref[...] = out

    @pl.when(i == pl.num_programs(0) - 1)
    def _():
        o_ref[...] = out


def _last_kernel(x_ref, w_ref, b_ref, o_ref):
    # conv_last: 1x1 conv + folded BN + ReLU.
    o_ref[...] = jnp.maximum(
        jnp.dot(x_ref[...].astype(jnp.bfloat16), w_ref[...],
                preferred_element_type=jnp.float32) + b_ref[...], 0.0)


# ----------------------------- pallas_call wrappers -----------------------------

def _call_single(kernel, out_rows, out_cols, cost, *args):
    return pl.pallas_call(
        kernel,
        out_shape=jax.ShapeDtypeStruct((out_rows, out_cols), jnp.float32),
        in_specs=[pl.BlockSpec(memory_space=pltpu.MemorySpace.VMEM) for _ in args],
        out_specs=pl.BlockSpec(memory_space=pltpu.MemorySpace.VMEM),
        compiler_params=pltpu.CompilerParams(vmem_limit_bytes=VMEM_LIMIT),
        cost_estimate=cost,
    )(*args)


def _call_stage(x, t, w1, b1, wdw, w2, b2, cost):
    nb = w1.shape[0]
    rows, cp = x.shape
    return pl.pallas_call(
        _stage_kernel,
        out_shape=jax.ShapeDtypeStruct((rows, cp), jnp.float32),
        grid=(nb,),
        in_specs=[
            pl.BlockSpec((rows, cp), lambda i: (0, 0)),          # activation (resident)
            pl.BlockSpec((9 * rows, rows), lambda i: (0, 0)),    # shared tap matrix
            pl.BlockSpec((1, cp, cp), lambda i: (i, 0, 0)),      # pw1ext (per block)
            pl.BlockSpec((1, 1, cp), lambda i: (i, 0, 0)),
            pl.BlockSpec((1, 16, cp), lambda i: (i, 0, 0)),      # per-tap dw scales
            pl.BlockSpec((1, cp, cp), lambda i: (i, 0, 0)),      # pw2ext (per block)
            pl.BlockSpec((1, 1, cp), lambda i: (i, 0, 0)),
        ],
        out_specs=pl.BlockSpec((rows, cp), lambda i: (0, 0)),
        scratch_shapes=[pltpu.VMEM((rows, cp), jnp.float32)],
        compiler_params=pltpu.CompilerParams(
            dimension_semantics=("arbitrary",), vmem_limit_bytes=VMEM_LIMIT),
        cost_estimate=cost,
    )(x, t, w1, b1, wdw, w2, b2)


# ----------------------------- parameter construction -----------------------------

def _conv_init(key, shape, fan_in):
    return jax.random.normal(key, shape, jnp.float32) * (1.0 / math.sqrt(fan_in))


def _bn_params(key, c):
    k1, k2, k3, k4 = jax.random.split(key, 4)
    gamma = 1.0 + 0.1 * jax.random.normal(k1, (c,), jnp.float32)
    beta = 0.1 * jax.random.normal(k2, (c,), jnp.float32)
    mean = 0.1 * jax.random.normal(k3, (c,), jnp.float32)
    var = 0.9 + 0.1 * jnp.abs(jax.random.normal(k4, (c,), jnp.float32))
    scale = np.asarray(gamma / jnp.sqrt(var + EPS))
    bias = np.asarray(beta) - np.asarray(mean) * scale
    return scale, bias


def _dw_selection(n, h, w, stride, pin_pad, po_pad):
    """(9*po_pad, pin_pad) stacked one-hot tap-gather (+stride decimation) matrices for
    a 3x3/pad1 window on row-flattened (n,h,w) activations.  OOB taps -> zero rows.
    Stored in bfloat16 (one-hot values are exact)."""
    ho = (h - 1) // stride + 1
    wo = (w - 1) // stride + 1
    t = np.zeros((9 * po_pad, pin_pad), np.float32)
    for b in range(n):
        for oh in range(ho):
            for ow in range(wo):
                r = b * ho * wo + oh * wo + ow
                for dh in range(3):
                    for dwi in range(3):
                        ih = oh * stride - 1 + dh
                        iw = ow * stride - 1 + dwi
                        if 0 <= ih < h and 0 <= iw < w:
                            t[(dh * 3 + dwi) * po_pad + r, b * h * w + ih * w + iw] = 1.0
    return jnp.asarray(t, dtype=jnp.bfloat16)


def _init_block(key, batch, hw, cin, oup, stride):
    h = w = hw
    mid = oup // 2
    inp = cin if stride == 2 else cin // 2        # channels entering branch_main pw1
    outputs = oup - inp                           # branch_main output channels
    mext = mid + inp                              # pw1ext width (main mid + copy/proj lane)
    ho = (h - 1) // stride + 1
    cin_p, mext_p, oup_p = _rup(cin, LANE), _rup(mext, LANE), _rup(oup, LANE)
    pin_p = _rup(batch * h * w, 8)
    po_p = _rup(batch * ho * ho, 8)

    keys = jax.random.split(key, 10)
    w1 = np.asarray(_conv_init(keys[0], (inp, mid), inp))
    s1, b1 = _bn_params(keys[1], mid)
    wdw = np.asarray(_conv_init(keys[2], (9, mid), 9))
    sdw, bdw = _bn_params(keys[3], mid)
    w2 = np.asarray(_conv_init(keys[4], (mid, outputs), mid))
    s2, b2 = _bn_params(keys[5], outputs)
    w1s, w2s = w1 * s1[None, :], w2 * s2[None, :]

    # pw1 extended: [channel_shuffle odd-select -> pw1*BN | identity copy of the
    # passthrough (stride 1) / proj-dw input (stride 2)].  ReLU is a no-op on the copy.
    w1e = np.zeros((cin, mext), np.float32)
    b1e = np.zeros((1, mext), np.float32)
    b1e[0, :mid] = b1
    if stride == 1:
        w1e[1::2, :mid] = w1s                                   # odd channels -> branch_main
        w1e[np.arange(inp) * 2, mid + np.arange(inp)] = 1.0     # even channels -> passthrough
    else:
        w1e[:, :mid] = w1s
        w1e[np.arange(cin), mid + np.arange(cin)] = 1.0         # x copy -> branch_proj dw

    # Per-tap depthwise weights * BN scale; passthrough uses only the center tap
    # (the identity tap for stride 1).
    wde = np.zeros((16, mext), np.float32)
    bde = np.zeros((mext,), np.float32)
    wde[:9, :mid] = wdw * sdw[None, :]
    bde[:mid] = bdw
    if stride == 1:
        wde[4, mid:mid + inp] = 1.0
    else:
        wpdw = np.asarray(_conv_init(keys[6], (9, inp), 9))
        spdw, bpdw = _bn_params(keys[7], inp)
        wde[:9, mid:mid + inp] = wpdw * spdw[None, :]
        bde[mid:mid + inp] = bpdw

    # pw2 extended: main -> output cols [inp, oup); passthrough / proj-pw -> [0, inp).
    w2e = np.zeros((mext, oup), np.float32)
    bias = np.zeros((oup,), np.float32)
    w2e[:mid, inp:] = w2s
    bias[inp:] = b2
    if stride == 1:
        w2e[mid + np.arange(inp), np.arange(inp)] = 1.0
    else:
        wp = np.asarray(_conv_init(keys[8], (inp, inp), inp))
        sp, bp = _bn_params(keys[9], inp)
        w2e[mid:, :inp] = wp * sp[None, :]
        bias[:inp] = bp
    b2e = bde[None, :] @ w2e + bias[None, :]      # dw / proj-dw BN bias folded forward

    return {
        "stride": stride, "po_p": po_p, "oup_p": oup_p,
        "t": _dw_selection(batch, h, w, stride, pin_p, po_p),
        "w1": jnp.asarray(_pad2(w1e, cin_p, mext_p), jnp.bfloat16),
        "b1": jnp.asarray(_pad2(b1e, 1, mext_p), jnp.float32),
        "wdw": jnp.asarray(_pad2(wde, 16, mext_p), jnp.float32),
        "w2": jnp.asarray(_pad2(w2e, mext_p, oup_p), jnp.bfloat16),
        "b2": jnp.asarray(_pad2(b2e, 1, oup_p), jnp.float32),
    }


def init_params(key, batch, in_hw, model_size="0.5x"):
    stage_out = STAGE_OUT[model_size]
    n_blocks = sum(STAGE_REPEATS)
    keys = jax.random.split(key, 4 + n_blocks)
    c1 = stage_out[1]
    c1_p = _rup(c1, LANE)

    wfirst = np.asarray(_conv_init(keys[0], (3, 3, 3, c1), 27)).reshape(27, c1)  # HWIO
    sfc, bfc = _bn_params(keys[1], c1)
    params = {
        "first_w": jnp.asarray(_pad2(wfirst * sfc[None, :], 27, c1_p), jnp.bfloat16),
        "first_b": jnp.asarray(_pad2(bfc[None, :], 1, c1_p), jnp.float32),
    }

    h1 = (in_hw - 1) // 2 + 1                      # after first_conv (s2, pad 1)
    h2 = (h1 - 1) // 2 + 1                         # after maxpool   (s2, pad 1)
    rows_stem_in = _rup(batch * h1 * h1, 8)
    rows_stem_out = _rup(batch * h2 * h2, 8)
    params["tmax"] = _dw_selection(batch, h1, h1, 2, rows_stem_in, rows_stem_out)

    ki = 2
    stages = []
    input_channel, hw = c1, h2
    for s in range(len(STAGE_REPEATS)):
        out_ch = stage_out[s + 2]
        down = _init_block(keys[ki], batch, hw, input_channel, out_ch, 2)
        ki += 1
        hw = (hw - 1) // 2 + 1
        input_channel = out_ch
        blks = []
        for _ in range(1, STAGE_REPEATS[s]):
            blks.append(_init_block(keys[ki], batch, hw, input_channel, out_ch, 1))
            ki += 1
        s1 = {k: jnp.stack([b[k] for b in blks], axis=0)
              for k in ("w1", "b1", "wdw", "w2", "b2")}
        s1["t"] = blks[0]["t"]                     # shared by all stride-1 blocks of stage
        stages.append({"down": down, "s1": s1})
    params["stages"] = stages

    last_ch = stage_out[-1]
    cin_p = _rup(input_channel, LANE)
    wl = np.asarray(_conv_init(keys[ki], (input_channel, last_ch), input_channel))
    sl, bl = _bn_params(keys[ki + 1], last_ch)
    params["last_w"] = jnp.asarray(_pad2(wl * sl[None, :], cin_p, last_ch), jnp.bfloat16)
    params["last_b"] = jnp.asarray(bl[None, :], jnp.float32)

    params["meta"] = {"batch": batch, "in_hw": in_hw, "c1_p": c1_p, "h1": h1, "h2": h2,
                      "rows_stem_in": rows_stem_in, "rows_stem_out": rows_stem_out,
                      "last_hw": hw, "last_ch": last_ch}
    return params


# ----------------------------- forward pass -----------------------------

def shufflenetv2_backbone_forward(x_nchw, params):
    meta = params["meta"]
    n = x_nchw.shape[0]
    h1, c1_p = meta["h1"], meta["c1_p"]
    rows_in, rows_out = meta["rows_stem_in"], meta["rows_stem_out"]

    # XLA glue: im2col of the tiny 3-channel input for the 3x3/s2 first conv.
    x = jnp.transpose(x_nchw, (0, 2, 3, 1))                      # NCHW -> NHWC
    xp = jnp.pad(x, ((0, 0), (1, 1), (1, 1), (0, 0)))
    taps = [xp[:, dh:dh + 2 * h1 - 1:2, dw:dw + 2 * h1 - 1:2, :]
            for dh in range(3) for dw in range(3)]
    x2d = jnp.stack(taps, axis=3).reshape(n * h1 * h1, 27)
    if x2d.shape[0] < rows_in:
        x2d = jnp.pad(x2d, ((0, rows_in - x2d.shape[0]), (0, 0)))

    # Fused stem: first_conv + BN + ReLU + 3x3/s2 maxpool.
    flops = 2 * (rows_in * 27 * c1_p + 9 * rows_out * rows_in * c1_p)
    y = _call_single(
        _stem_kernel, rows_out, c1_p,
        _cost(flops, (x2d, params["first_w"], params["first_b"], params["tmax"]),
              rows_out * c1_p * 4),
        x2d, params["first_w"], params["first_b"], params["tmax"])

    for st in params["stages"]:
        d = st["down"]
        pin, cin_p = y.shape
        mext_p = d["w1"].shape[1]
        flops = 2 * (pin * cin_p * mext_p + 9 * d["po_p"] * pin * mext_p
                     + d["po_p"] * mext_p * d["oup_p"])
        y = _call_single(
            _block_kernel, d["po_p"], d["oup_p"],
            _cost(flops, (y, d["w1"], d["b1"], d["t"], d["wdw"], d["w2"], d["b2"]),
                  d["po_p"] * d["oup_p"] * 4),
            y, d["w1"], d["b1"], d["t"], d["wdw"], d["w2"], d["b2"])

        s1 = st["s1"]
        nb = s1["w1"].shape[0]
        rows, cp = y.shape
        flops = 2 * nb * (rows * cp * cp + 9 * rows * rows * cp + rows * cp * cp)
        y = _call_stage(
            y, s1["t"], s1["w1"], s1["b1"], s1["wdw"], s1["w2"], s1["b2"],
            _cost(flops, (y, s1["t"], s1["w1"], s1["b1"], s1["wdw"], s1["w2"], s1["b2"]),
                  rows * cp * 4))

    # conv_last (1x1 -> 1024) + BN + ReLU.
    rows, cin_p = y.shape
    last_ch = meta["last_ch"]
    flops = 2 * rows * cin_p * last_ch
    y = _call_single(
        _last_kernel, rows, last_ch,
        _cost(flops, (y, params["last_w"], params["last_b"]), rows * last_ch * 4),
        y, params["last_w"], params["last_b"])

    hwf = meta["last_hw"]
    y = y[: n * hwf * hwf]
    return jnp.transpose(y.reshape(n, hwf, hwf, last_ch), (0, 3, 1, 2))   # -> NCHW


# ----------------------------- main -----------------------------

if __name__ == "__main__":
    key = jax.random.PRNGKey(0)
    kp, kx = jax.random.split(key)
    x = jax.random.normal(kx, (2, 3, 32, 32), jnp.float32)       # NCHW, like the PyTorch module
    params = init_params(kp, batch=2, in_hw=32, model_size="0.5x")

    fwd = jax.jit(lambda inp: shufflenetv2_backbone_forward(inp, params))
    out = fwd(x)
    jax.block_until_ready(out)

    assert out.shape == (2, 1024, 1, 1), out.shape
    assert out.dtype == jnp.float32
    assert bool(jnp.all(jnp.isfinite(out)))
    print("KERNEL_OK")
</pallas_src>

<mosaic_0001>
module attributes {stable_mosaic.version = 11 : i64} {
  func.func @_stem_kernel(%arg0: memref<512x27xf32, #tpu.memory_space<vmem>>, %arg1: memref<27x128xbf16, #tpu.memory_space<vmem>>, %arg2: memref<1x128xf32, #tpu.memory_space<vmem>>, %arg3: memref<1152x512xbf16, #tpu.memory_space<vmem>>, %arg4: memref<128x128xf32, #tpu.memory_space<vmem>>) attributes {dimension_semantics = [], scalar_prefetch = 0 : i64, scratch_operands = 0 : i64, tpu.core_type = #tpu.core_type<tc>} {
    %c0 = arith.constant 0 : index
    %c0_0 = arith.constant 0 : index
    %0 = vector.load %arg0[%c0, %c0_0] : memref<512x27xf32, #tpu.memory_space<vmem>>, vector<512x27xf32>
    %1 = arith.truncf %0 : vector<512x27xf32> to vector<512x27xbf16>
    %c0_1 = arith.constant 0 : index
    %c0_2 = arith.constant 0 : index
    %2 = vector.load %arg1[%c0_1, %c0_2] : memref<27x128xbf16, #tpu.memory_space<vmem>>, vector<27x128xbf16>
    %cst = arith.constant dense<0.000000e+00> : vector<512x128xf32>
    %3 = tpu.matmul %1, %2, %cst {dimension_numbers = #tpu.dot_dimension_numbers<[1], [0], [0], [1], [0, 0, 1, 1], [], []>} : vector<512x27xbf16>, vector<27x128xbf16>, vector<512x128xf32> -> vector<512x128xf32>
    %c0_3 = arith.constant 0 : index
    %c0_4 = arith.constant 0 : index
    %4 = vector.load %arg2[%c0_3, %c0_4] : memref<1x128xf32, #tpu.memory_space<vmem>>, vector<1x128xf32>
    %5 = vector.broadcast %4 : vector<1x128xf32> to vector<512x128xf32>
    %6 = arith.addf %3, %5 : vector<512x128xf32>
    %cst_5 = arith.constant 0.000000e+00 : f32
    %7 = vector.broadcast %cst_5 : f32 to vector<512x128xf32>
    %8 = arith.maximumf %6, %7 : vector<512x128xf32>
    %c0_6 = arith.constant 0 : index
    %c0_7 = arith.constant 0 : index
    %9 = vector.load %arg3[%c0_6, %c0_7] : memref<1152x512xbf16, #tpu.memory_space<vmem>>, vector<1152x512xbf16>
    %10 = arith.truncf %8 : vector<512x128xf32> to vector<512x128xbf16>
    %cst_8 = arith.constant dense<0.000000e+00> : vector<1152x128xf32>
    %11 = tpu.matmul %9, %10, %cst_8 {dimension_numbers = #tpu.dot_dimension_numbers<[1], [0], [0], [1], [0, 0, 1, 1], [], []>} : vector<1152x512xbf16>, vector<512x128xbf16>, vector<1152x128xf32> -> vector<1152x128xf32>
    %12 = vector.extract_strided_slice %11 {offsets = [0, 0], sizes = [128, 128], strides = [1, 1]} : vector<1152x128xf32> to vector<128x128xf32>
    %13 = vector.extract_strided_slice %11 {offsets = [128, 0], sizes = [128, 128], strides = [1, 1]} : vector<1152x128xf32> to vector<128x128xf32>
    %14 = arith.maximumf %12, %13 : vector<128x128xf32>
    %15 = vector.extract_strided_slice %11 {offsets = [256, 0], sizes = [128, 128], strides = [1, 1]} : vector<1152x128xf32> to vector<128x128xf32>
    %16 = arith.maximumf %14, %15 : vector<128x128xf32>
    %17 = vector.extract_strided_slice %11 {offsets = [384, 0], sizes = [128, 128], strides = [1, 1]} : vector<1152x128xf32> to vector<128x128xf32>
    %18 = arith.maximumf %16, %17 : vector<128x128xf32>
    %19 = vector.extract_strided_slice %11 {offsets = [512, 0], sizes = [128, 128], strides = [1, 1]} : vector<1152x128xf32> to vector<128x128xf32>
    %20 = arith.maximumf %18, %19 : vector<128x128xf32>
    %21 = vector.extract_strided_slice %11 {offsets = [640, 0], sizes = [128, 128], strides = [1, 1]} : vector<1152x128xf32> to vector<128x128xf32>
    %22 = arith.maximumf %20, %21 : vector<128x128xf32>
    %23 = vector.extract_strided_slice %11 {offsets = [768, 0], sizes = [128, 128], strides = [1, 1]} : vector<1152x128xf32> to vector<128x128xf32>
    %24 = arith.maximumf %22, %23 : vector<128x128xf32>
    %25 = vector.extract_strided_slice %11 {offsets = [896, 0], sizes = [128, 128], strides = [1, 1]} : vector<1152x128xf32> to vector<128x128xf32>
    %26 = arith.maximumf %24, %25 : vector<128x128xf32>
    %27 = vector.extract_strided_slice %11 {offsets = [1024, 0], sizes = [128, 128], strides = [1, 1]} : vector<1152x128xf32> to vector<128x128xf32>
    %28 = arith.maximumf %26, %27 : vector<128x128xf32>
    %c0_9 = arith.constant 0 : index
    %c0_10 = arith.constant 0 : index
    %29 = vector.load %arg4[%c0_9, %c0_10] : memref<128x128xf32, #tpu.memory_space<vmem>>, vector<128x128xf32>
    tpu.vector_store %arg4[%c0_9, %c0_10], %28 {strides = array<i32>} : memref<128x128xf32, #tpu.memory_space<vmem>>, vector<128x128xf32>,
    return
  }
}

module attributes {stable_mosaic.version = 11 : i64} {
  func.func @_stage_kernel(%arg0: i32, %arg1: memref<32x128xf32, #tpu.memory_space<vmem>>, %arg2: memref<288x32xbf16, #tpu.memory_space<vmem>>, %arg3: memref<1x128x128xbf16, #tpu.memory_space<vmem>>, %arg4: memref<1x1x128xf32, #tpu.memory_space<vmem>>, %arg5: memref<1x16x128xf32, #tpu.memory_space<vmem>>, %arg6: memref<1x128x128xbf16, #tpu.memory_space<vmem>>, %arg7: memref<1x1x128xf32, #tpu.memory_space<vmem>>, %arg8: memref<32x128xf32, #tpu.memory_space<vmem>>, %arg9: memref<32x128xf32, #tpu.memory_space<vmem>>) attributes {dimension_semantics = [#tpu.dimension_semantics<arbitrary>], iteration_bounds = array<i64: 3>, scalar_prefetch = 0 : i64, scratch_operands = 1 : i64, tpu.core_type = #tpu.core_type<tc>, window_params = [{pipeline_mode = #tpu.pipeline_mode<synchronous>, transform_indices = @transform_0, window_bounds = array<i64: 32, 128>}, {pipeline_mode = #tpu.pipeline_mode<synchronous>, transform_indices = @transform_1, window_bounds = array<i64: 288, 32>}, {transform_indices = @transform_2, window_bounds = array<i64: 1, 128, 128>}, {transform_indices = @transform_3, window_bounds = array<i64: 1, 1, 128>}, {transform_indices = @transform_4, window_bounds = array<i64: 1, 16, 128>}, {transform_indices = @transform_5, window_bounds = array<i64: 1, 128, 128>}, {transform_indices = @transform_6, window_bounds = array<i64: 1, 1, 128>}, {pipeline_mode = #tpu.pipeline_mode<synchronous>, transform_indices = @transform_7, window_bounds = array<i64: 32, 128>}]} {
    %c0_i32 = arith.constant 0 : i32
    %0 = arith.cmpi eq, %arg0, %c0_i32 : i32
    %1 = arith.extui %0 : i1 to i32
    %c0_i32_0 = arith.constant 0 : i32
    %2 = arith.cmpi ne, %1, %c0_i32_0 : i32
    scf.if %2 {
      %c0_26 = arith.constant 0 : index
      %c0_27 = arith.constant 0 : index
      %77 = vector.load %arg1[%c0_26, %c0_27] : memref<32x128xf32, #tpu.memory_space<vmem>>, vector<32x128xf32>
      %c0_28 = arith.constant 0 : index
      %c0_29 = arith.constant 0 : index
      %78 = vector.load %arg9[%c0_28, %c0_29] : memref<32x128xf32, #tpu.memory_space<vmem>>, vector<32x128xf32>
      tpu.vector_store %arg9[%c0_28, %c0_29], %77 {strides = array<i32>} : memref<32x128xf32, #tpu.memory_space<vmem>>, vector<32x128xf32>,
    } else {
    }
    %c0 = arith.constant 0 : index
    %c0_1 = arith.constant 0 : index
    %3 = vector.load %arg9[%c0, %c0_1] : memref<32x128xf32, #tpu.memory_space<vmem>>, vector<32x128xf32>
    %c0_2 = arith.constant 0 : index
    %c0_3 = arith.constant 0 : index
    %c0_4 = arith.constant 0 : index
    %4 = vector.load %arg3[%c0_2, %c0_3, %c0_4] : memref<1x128x128xbf16, #tpu.memory_space<vmem>>, vector<1x128x128xbf16>
    %5 = vector.shape_cast %4 : vector<1x128x128xbf16> to vector<128x128xbf16>
    %c0_5 = arith.constant 0 : index
    %c0_6 = arith.constant 0 : index
    %c0_7 = arith.constant 0 : index
    %6 = vector.load %arg4[%c0_5, %c0_6, %c0_7] : memref<1x1x128xf32, #tpu.memory_space<vmem>>, vector<1x1x128xf32>
    %7 = vector.shape_cast %6 : vector<1x1x128xf32> to vector<1x128xf32>
    %c0_8 = arith.constant 0 : index
    %c0_9 = arith.constant 0 : index
    %8 = vector.load %arg2[%c0_8, %c0_9] : memref<288x32xbf16, #tpu.memory_space<vmem>>, vector<288x32xbf16>
    %c0_10 = arith.constant 0 : index
    %c0_11 = arith.constant 0 : index
    %c0_12 = arith.constant 0 : index
    %9 = vector.load %arg5[%c0_10, %c0_11, %c0_12] : memref<1x16x128xf32, #tpu.memory_space<vmem>>, vector<1x16x128xf32>
    %10 = vector.shape_cast %9 : vector<1x16x128xf32> to vector<16x128xf32>
    %c0_13 = arith.constant 0 : index
    %c0_14 = arith.constant 0 : index
    %c0_15 = arith.constant 0 : index
    %11 = vector.load %arg6[%c0_13, %c0_14, %c0_15] : memref<1x128x128xbf16, #tpu.memory_space<vmem>>, vector<1x128x128xbf16>
    %12 = vector.shape_cast %11 : vector<1x128x128xbf16> to vector<128x128xbf16>
    %c0_16 = arith.constant 0 : index
    %c0_17 = arith.constant 0 : index
    %c0_18 = arith.constant 0 : index
    %13 = vector.load %arg7[%c0_16, %c0_17, %c0_18] : memref<1x1x128xf32, #tpu.memory_space<vmem>>, vector<1x1x128xf32>
    %14 = vector.shape_cast %13 : vector<1x1x128xf32> to vector<1x128xf32>
    %15 = arith.truncf %3 : vector<32x128xf32> to vector<32x128xbf16>
    %cst = arith.constant dense<0.000000e+00> : vector<32x128xf32>
    %16 = tpu.matmul %15, %5, %cst {dimension_numbers = #tpu.dot_dimension_numbers<[1], [0], [0], [1], [0, 0, 1, 1], [], []>} : vector<32x128xbf16>, vector<128x128xbf16>, vector<32x128xf32> -> vector<32x128xf32>
    %17 = vector.broadcast %7 : vector<1x128xf32> to vector<32x128xf32>
    %18 = arith.addf %16, %17 : vector<32x128xf32>
    %cst_19 = arith.constant 0.000000e+00 : f32
    %19 = vector.broadcast %cst_19 : f32 to vector<32x128xf32>
    %20 = arith.maximumf %18, %19 : vector<32x128xf32>
    %21 = arith.truncf %20 : vector<32x128xf32> to vector<32x128xbf16>
    %cst_20 = arith.constant dense<0.000000e+00> : vector<288x128xf32>
    %22 = tpu.matmul %8, %21, %cst_20 {dimension_numbers = #tpu.dot_dimension_numbers<[1], [0], [0], [1], [0, 0, 1, 1], [], []>} : vector<288x32xbf16>, vector<32x128xbf16>, vector<288x128xf32> -> vector<288x128xf32>
    %23 = vector.extract_strided_slice %22 {offsets = [0, 0], sizes = [32, 128], strides = [1, 1]} : vector<288x128xf32> to vector<32x128xf32>
    %24 = vector.extract_strided_slice %10 {offsets = [0, 0], sizes = [1, 128], strides = [1, 1]} : vector<16x128xf32> to vector<1x128xf32>
    %25 = vector.broadcast %24 : vector<1x128xf32> to vector<32x128xf32>
    %26 = arith.mulf %23, %25 : vector<32x128xf32>
    %27 = vector.extract_strided_slice %22 {offsets = [32, 0], sizes = [32, 128], strides = [1, 1]} : vector<288x128xf32> to vector<32x128xf32>
    %28 = vector.extract_strided_slice %10 {offsets = [1, 0], sizes = [1, 128], strides = [1, 1]} : vector<16x128xf32> to vector<1x128xf32>
    %29 = vector.broadcast %28 : vector<1x128xf32> to vector<32x128xf32>
    %30 = arith.mulf %27, %29 : vector<32x128xf32>
    %31 = arith.addf %26, %30 : vector<32x128xf32>
    %32 = vector.extract_strided_slice %22 {offsets = [64, 0], sizes = [32, 128], strides = [1, 1]} : vector<288x128xf32> to vector<32x128xf32>
    %33 = vector.extract_strided_slice %10 {offsets = [2, 0], sizes = [1, 128], strides = [1, 1]} : vector<16x128xf32> to vector<1x128xf32>
    %34 = vector.broadcast %33 : vector<1x128xf32> to vector<32x128xf32>
    %35 = arith.mulf %32, %34 : vector<32x128xf32>
    %36 = arith.addf %31, %35 : vector<32x128xf32>
    %37 = vector.extract_strided_slice %22 {offsets = [96, 0], sizes = [32, 128], strides = [1, 1]} : vector<288x128xf32> to vector<32x128xf32>
    %38 = vector.extract_strided_slice %10 {offsets = [3, 0], sizes = [1, 128], strides = [1, 1]} : vector<16x128xf32> to vector<1x128xf32>
    %39 = vector.broadcast %38 : vector<1x128xf32> to vector<32x128xf32>
    %40 = arith.mulf %37, %39 : vector<32x128xf32>
    %41 = arith.addf %36, %40 : vector<32x128xf32>
    %42 = vector.extract_strided_slice %22 {offsets = [128, 0], sizes = [32, 128], strides = [1, 1]} : vector<288x128xf32> to vector<32x128xf32>
    %43 = vector.extract_strided_slice %10 {offsets = [4, 0], sizes = [1, 128], strides = [1, 1]} : vector<16x128xf32> to vector<1x128xf32>
    %44 = vector.broadcast %43 : vector<1x128xf32> to vector<32x128xf32>
    %45 = arith.mulf %42, %44 : vector<32x128xf32>
    %46 = arith.addf %41, %45 : vector<32x128xf32>
    %47 = vector.extract_strided_slice %22 {offsets = [160, 0], sizes = [32, 128], strides = [1, 1]} : vector<288x128xf32> to vector<32x128xf32>
    %48 = vector.extract_strided_slice %10 {offsets = [5, 0], sizes = [1, 128], strides = [1, 1]} : vector<16x128xf32> to vector<1x128xf32>
    %49 = vector.broadcast %48 : vector<1x128xf32> to vector<32x128xf32>
    %50 = arith.mulf %47, %49 : vector<32x128xf32>
    %51 = arith.addf %46, %50 : vector<32x128xf32>
    %52 = vector.extract_strided_slice %22 {offsets = [192, 0], sizes = [32, 128], strides = [1, 1]} : vector<288x128xf32> to vector<32x128xf32>
    %53 = vector.extract_strided_slice %10 {offsets = [6, 0], sizes = [1, 128], strides = [1, 1]} : vector<16x128xf32> to vector<1x128xf32>
    %54 = vector.broadcast %53 : vector<1x128xf32> to vector<32x128xf32>
    %55 = arith.mulf %52, %54 : vector<32x128xf32>
    %56 = arith.addf %51, %55 : vector<32x128xf32>
    %57 = vector.extract_strided_slice %22 {offsets = [224, 0], sizes = [32, 128], strides = [1, 1]} : vector<288x128xf32> to vector<32x128xf32>
    %58 = vector.extract_strided_slice %10 {offsets = [7, 0], sizes = [1, 128], strides = [1, 1]} : vector<16x128xf32> to vector<1x128xf32>
    %59 = vector.broadcast %58 : vector<1x128xf32> to vector<32x128xf32>
    %60 = arith.mulf %57, %59 : vector<32x128xf32>
    %61 = arith.addf %56, %60 : vector<32x128xf32>
    %62 = vector.extract_strided_slice %22 {offsets = [256, 0], sizes = [32, 128], strides = [1, 1]} : vector<288x128xf32> to vector<32x128xf32>
    %63 = vector.extract_strided_slice %10 {offsets = [8, 0], sizes = [1, 128], strides = [1, 1]} : vector<16x128xf32> to vector<1x128xf32>
    %64 = vector.broadcast %63 : vector<1x128xf32> to vector<32x128xf32>
    %65 = arith.mulf %62, %64 : vector<32x128xf32>
    %66 = arith.addf %61, %65 : vector<32x128xf32>
    %67 = arith.truncf %66 : vector<32x128xf32> to vector<32x128xbf16>
    %cst_21 = arith.constant dense<0.000000e+00> : vector<32x128xf32>
    %68 = tpu.matmul %67, %12, %cst_21 {dimension_numbers = #tpu.dot_dimension_numbers<[1], [0], [0], [1], [0, 0, 1, 1], [], []>} : vector<32x128xbf16>, vector<128x128xbf16>, vector<32x128xf32> -> vector<32x128xf32>
    %69 = vector.broadcast %14 : vector<1x128xf32> to vector<32x128xf32>
    %70 = arith.addf %68, %69 : vector<32x128xf32>
    %cst_22 = arith.constant 0.000000e+00 : f32
    %71 = vector.broadcast %cst_22 : f32 to vector<32x128xf32>
    %72 = arith.maximumf %70, %71 : vector<32x128xf32>
    %c0_23 = arith.constant 0 : index
    %c0_24 = arith.constant 0 : index
    %73 = vector.load %arg9[%c0_23, %c0_24] : memref<32x128xf32, #tpu.memory_space<vmem>>, vector<32x128xf32>
    tpu.vector_store %arg9[%c0_23, %c0_24], %72 {strides = array<i32>} : memref<32x128xf32, #tpu.memory_space<vmem>>, vector<32x128xf32>,
    %c2_i32 = arith.constant 2 : i32
    %74 = arith.cmpi eq, %arg0, %c2_i32 : i32
    %75 = arith.extui %74 : i1 to i32
    %c0_i32_25 = arith.constant 0 : i32
    %76 = arith.cmpi ne, %75, %c0_i32_25 : i32
    scf.if %76 {
      %c0_26 = arith.constant 0 : index
      %c0_27 = arith.constant 0 : index
      %77 = vector.load %arg8[%c0_26, %c0_27] : memref<32x128xf32, #tpu.memory_space<vmem>>, vector<32x128xf32>
      tpu.vector_store %arg8[%c0_26, %c0_27], %72 {strides = array<i32>} : memref<32x128xf32, #tpu.memory_space<vmem>>, vector<32x128xf32>,
    } else {
    }
    return
  }
  func.func @transform_0(%arg0: i32) -> (i32, i32) {
    %c0_i32 = arith.constant 0 : i32
    %c0_i32_0 = arith.constant 0 : i32
    %c0_i32_1 = arith.constant 0 : i32
    return %c0_i32, %c0_i32_0 : i32, i32
  }
  func.func @transform_1(%arg0: i32) -> (i32, i32) {
    %c0_i32 = arith.constant 0 : i32
    %c0_i32_0 = arith.constant 0 : i32
    %c0_i32_1 = arith.constant 0 : i32
    return %c0_i32, %c0_i32_0 : i32, i32
  }
  func.func @transform_2(%arg0: i32) -> (i32, i32, i32) {
    %c0_i32 = arith.constant 0 : i32
    %c0_i32_0 = arith.constant 0 : i32
    %c0_i32_1 = arith.constant 0 : i32
    return %arg0, %c0_i32, %c0_i32_0 : i32, i32, i32
  }
  func.func @transform_3(%arg0: i32) -> (i32, i32, i32) {
    %c0_i32 = arith.constant 0 : i32
    %c0_i32_0 = arith.constant 0 : i32
    %c0_i32_1 = arith.constant 0 : i32
    return %arg0, %c0_i32, %c0_i32_0 : i32, i32, i32
  }
  func.func @transform_4(%arg0: i32) -> (i32, i32, i32) {
    %c0_i32 = arith.constant 0 : i32
    %c0_i32_0 = arith.constant 0 : i32
    %c0_i32_1 = arith.constant 0 : i32
    return %arg0, %c0_i32, %c0_i32_0 : i32, i32, i32
  }
  func.func @transform_5(%arg0: i32) -> (i32, i32, i32) {
    %c0_i32 = arith.constant 0 : i32
    %c0_i32_0 = arith.constant 0 : i32
    %c0_i32_1 = arith.constant 0 : i32
    return %arg0, %c0_i32, %c0_i32_0 : i32, i32, i32
  }
  func.func @transform_6(%arg0: i32) -> (i32, i32, i32) {
    %c0_i32 = arith.constant 0 : i32
    %c0_i32_0 = arith.constant 0 : i32
    %c0_i32_1 = arith.constant 0 : i32
    return %arg0, %c0_i32, %c0_i32_0 : i32, i32, i32
  }
  func.func @transform_7(%arg0: i32) -> (i32, i32) {
    %c0_i32 = arith.constant 0 : i32
    %c0_i32_0 = arith.constant 0 : i32
    %c0_i32_1 = arith.constant 0 : i32
    return %c0_i32, %c0_i32_0 : i32, i32
  }
}

module attributes {stable_mosaic.version = 11 : i64} {
  func.func @_block_kernel(%arg0: memref<128x128xf32, #tpu.memory_space<vmem>>, %arg1: memref<128x128xbf16, #tpu.memory_space<vmem>>, %arg2: memref<1x128xf32, #tpu.memory_space<vmem>>, %arg3: memref<288x128xbf16, #tpu.memory_space<vmem>>, %arg4: memref<16x128xf32, #tpu.memory_space<vmem>>, %arg5: memref<128x128xbf16, #tpu.memory_space<vmem>>, %arg6: memref<1x128xf32, #tpu.memory_space<vmem>>, %arg7: memref<32x128xf32, #tpu.memory_space<vmem>>) attributes {dimension_semantics = [], scalar_prefetch = 0 : i64, scratch_operands = 0 : i64, tpu.core_type = #tpu.core_type<tc>} {
    %c0 = arith.constant 0 : index
    %c0_0 = arith.constant 0 : index
    %0 = vector.load %arg0[%c0, %c0_0] : memref<128x128xf32, #tpu.memory_space<vmem>>, vector<128x128xf32>
    %c0_1 = arith.constant 0 : index
    %c0_2 = arith.constant 0 : index
    %1 = vector.load %arg1[%c0_1, %c0_2] : memref<128x128xbf16, #tpu.memory_space<vmem>>, vector<128x128xbf16>
    %c0_3 = arith.constant 0 : index
    %c0_4 = arith.constant 0 : index
    %2 = vector.load %arg2[%c0_3, %c0_4] : memref<1x128xf32, #tpu.memory_space<vmem>>, vector<1x128xf32>
    %c0_5 = arith.constant 0 : index
    %c0_6 = arith.constant 0 : index
    %3 = vector.load %arg3[%c0_5, %c0_6] : memref<288x128xbf16, #tpu.memory_space<vmem>>, vector<288x128xbf16>
    %c0_7 = arith.constant 0 : index
    %c0_8 = arith.constant 0 : index
    %4 = vector.load %arg4[%c0_7, %c0_8] : memref<16x128xf32, #tpu.memory_space<vmem>>, vector<16x128xf32>
    %c0_9 = arith.constant 0 : index
    %c0_10 = arith.constant 0 : index
    %5 = vector.load %arg5[%c0_9, %c0_10] : memref<128x128xbf16, #tpu.memory_space<vmem>>, vector<128x128xbf16>
    %c0_11 = arith.constant 0 : index
    %c0_12 = arith.constant 0 : index
    %6 = vector.load %arg6[%c0_11, %c0_12] : memref<1x128xf32, #tpu.memory_space<vmem>>, vector<1x128xf32>
    %7 = arith.truncf %0 : vector<128x128xf32> to vector<128x128xbf16>
    %cst = arith.constant dense<0.000000e+00> : vector<128x128xf32>
    %8 = tpu.matmul %7, %1, %cst {dimension_numbers = #tpu.dot_dimension_numbers<[1], [0], [0], [1], [0, 0, 1, 1], [], []>} : vector<128x128xbf16>, vector<128x128xbf16>, vector<128x128xf32> -> vector<128x128xf32>
    %9 = vector.broadcast %2 : vector<1x128xf32> to vector<128x128xf32>
    %10 = arith.addf %8, %9 : vector<128x128xf32>
    %cst_13 = arith.constant 0.000000e+00 : f32
    %11 = vector.broadcast %cst_13 : f32 to vector<128x128xf32>
    %12 = arith.maximumf %10, %11 : vector<128x128xf32>
    %13 = arith.truncf %12 : vector<128x128xf32> to vector<128x128xbf16>
    %cst_14 = arith.constant dense<0.000000e+00> : vector<288x128xf32>
    %14 = tpu.matmul %3, %13, %cst_14 {dimension_numbers = #tpu.dot_dimension_numbers<[1], [0], [0], [1], [0, 0, 1, 1], [], []>} : vector<288x128xbf16>, vector<128x128xbf16>, vector<288x128xf32> -> vector<288x128xf32>
    %15 = vector.extract_strided_slice %14 {offsets = [0, 0], sizes = [32, 128], strides = [1, 1]} : vector<288x128xf32> to vector<32x128xf32>
    %16 = vector.extract_strided_slice %4 {offsets = [0, 0], sizes = [1, 128], strides = [1, 1]} : vector<16x128xf32> to vector<1x128xf32>
    %17 = vector.broadcast %16 : vector<1x128xf32> to vector<32x128xf32>
    %18 = arith.mulf %15, %17 : vector<32x128xf32>
    %19 = vector.extract_strided_slice %14 {offsets = [32, 0], sizes = [32, 128], strides = [1, 1]} : vector<288x128xf32> to vector<32x128xf32>
    %20 = vector.extract_strided_slice %4 {offsets = [1, 0], sizes = [1, 128], strides = [1, 1]} : vector<16x128xf32> to vector<1x128xf32>
    %21 = vector.broadcast %20 : vector<1x128xf32> to vector<32x128xf32>
    %22 = arith.mulf %19, %21 : vector<32x128xf32>
    %23 = arith.addf %18, %22 : vector<32x128xf32>
    %24 = vector.extract_strided_slice %14 {offsets = [64, 0], sizes = [32, 128], strides = [1, 1]} : vector<288x128xf32> to vector<32x128xf32>
    %25 = vector.extract_strided_slice %4 {offsets = [2, 0], sizes = [1, 128], strides = [1, 1]} : vector<16x128xf32> to vector<1x128xf32>
    %26 = vector.broadcast %25 : vector<1x128xf32> to vector<32x128xf32>
    %27 = arith.mulf %24, %26 : vector<32x128xf32>
    %28 = arith.addf %23, %27 : vector<32x128xf32>
    %29 = vector.extract_strided_slice %14 {offsets = [96, 0], sizes = [32, 128], strides = [1, 1]} : vector<288x128xf32> to vector<32x128xf32>
    %30 = vector.extract_strided_slice %4 {offsets = [3, 0], sizes = [1, 128], strides = [1, 1]} : vector<16x128xf32> to vector<1x128xf32>
    %31 = vector.broadcast %30 : vector<1x128xf32> to vector<32x128xf32>
    %32 = arith.mulf %29, %31 : vector<32x128xf32>
    %33 = arith.addf %28, %32 : vector<32x128xf32>
    %34 = vector.extract_strided_slice %14 {offsets = [128, 0], sizes = [32, 128], strides = [1, 1]} : vector<288x128xf32> to vector<32x128xf32>
    %35 = vector.extract_strided_slice %4 {offsets = [4, 0], sizes = [1, 128], strides = [1, 1]} : vector<16x128xf32> to vector<1x128xf32>
    %36 = vector.broadcast %35 : vector<1x128xf32> to vector<32x128xf32>
    %37 = arith.mulf %34, %36 : vector<32x128xf32>
    %38 = arith.addf %33, %37 : vector<32x128xf32>
    %39 = vector.extract_strided_slice %14 {offsets = [160, 0], sizes = [32, 128], strides = [1, 1]} : vector<288x128xf32> to vector<32x128xf32>
    %40 = vector.extract_strided_slice %4 {offsets = [5, 0], sizes = [1, 128], strides = [1, 1]} : vector<16x128xf32> to vector<1x128xf32>
    %41 = vector.broadcast %40 : vector<1x128xf32> to vector<32x128xf32>
    %42 = arith.mulf %39, %41 : vector<32x128xf32>
    %43 = arith.addf %38, %42 : vector<32x128xf32>
    %44 = vector.extract_strided_slice %14 {offsets = [192, 0], sizes = [32, 128], strides = [1, 1]} : vector<288x128xf32> to vector<32x128xf32>
    %45 = vector.extract_strided_slice %4 {offsets = [6, 0], sizes = [1, 128], strides = [1, 1]} : vector<16x128xf32> to vector<1x128xf32>
    %46 = vector.broadcast %45 : vector<1x128xf32> to vector<32x128xf32>
    %47 = arith.mulf %44, %46 : vector<32x128xf32>
    %48 = arith.addf %43, %47 : vector<32x128xf32>
    %49 = vector.extract_strided_slice %14 {offsets = [224, 0], sizes = [32, 128], strides = [1, 1]} : vector<288x128xf32> to vector<32x128xf32>
    %50 = vector.extract_strided_slice %4 {offsets = [7, 0], sizes = [1, 128], strides = [1, 1]} : vector<16x128xf32> to vector<1x128xf32>
    %51 = vector.broadcast %50 : vector<1x128xf32> to vector<32x128xf32>
    %52 = arith.mulf %49, %51 : vector<32x128xf32>
    %53 = arith.addf %48, %52 : vector<32x128xf32>
    %54 = vector.extract_strided_slice %14 {offsets = [256, 0], sizes = [32, 128], strides = [1, 1]} : vector<288x128xf32> to vector<32x128xf32>
    %55 = vector.extract_strided_slice %4 {offsets = [8, 0], sizes = [1, 128], strides = [1, 1]} : vector<16x128xf32> to vector<1x128xf32>
    %56 = vector.broadcast %55 : vector<1x128xf32> to vector<32x128xf32>
    %57 = arith.mulf %54, %56 : vector<32x128xf32>
    %58 = arith.addf %53, %57 : vector<32x128xf32>
    %59 = arith.truncf %58 : vector<32x128xf32> to vector<32x128xbf16>
    %cst_15 = arith.constant dense<0.000000e+00> : vector<32x128xf32>
    %60 = tpu.matmul %59, %5, %cst_15 {dimension_numbers = #tpu.dot_dimension_numbers<[1], [0], [0], [1], [0, 0, 1, 1], [], []>} : vector<32x128xbf16>, vector<128x128xbf16>, vector<32x128xf32> -> vector<32x128xf32>
    %61 = vector.broadcast %6 : vector<1x128xf32> to vector<32x128xf32>
    %62 = arith.addf %60, %61 : vector<32x128xf32>
    %cst_16 = arith.constant 0.000000e+00 : f32
    %63 = vector.broadcast %cst_16 : f32 to vector<32x128xf32>
    %64 = arith.maximumf %62, %63 : vector<32x128xf32>
    %c0_17 = arith.constant 0 : index
    %c0_18 = arith.constant 0 : index
    %65 = vector.load %arg7[%c0_17, %c0_18] : memref<32x128xf32, #tpu.memory_space<vmem>>, vector<32x128xf32>
    tpu.vector_store %arg7[%c0_17, %c0_18], %64 {strides = array<i32>} : memref<32x128xf32, #tpu.memory_space<vmem>>, vector<32x128xf32>,
    return
  }
}

module attributes {stable_mosaic.version = 11 : i64} {
  func.func @_block_kernel(%arg0: memref<32x128xf32, #tpu.memory_space<vmem>>, %arg1: memref<128x128xbf16, #tpu.memory_space<vmem>>, %arg2: memref<1x128xf32, #tpu.memory_space<vmem>>, %arg3: memref<72x32xbf16, #tpu.memory_space<vmem>>, %arg4: memref<16x128xf32, #tpu.memory_space<vmem>>, %arg5: memref<128x128xbf16, #tpu.memory_space<vmem>>, %arg6: memref<1x128xf32, #tpu.memory_space<vmem>>, %arg7: memref<8x128xf32, #tpu.memory_space<vmem>>) attributes {dimension_semantics = [], scalar_prefetch = 0 : i64, scratch_operands = 0 : i64, tpu.core_type = #tpu.core_type<tc>} {
    %c0 = arith.constant 0 : index
    %c0_0 = arith.constant 0 : index
    %0 = vector.load %arg0[%c0, %c0_0] : memref<32x128xf32, #tpu.memory_space<vmem>>, vector<32x128xf32>
    %c0_1 = arith.constant 0 : index
    %c0_2 = arith.constant 0 : index
    %1 = vector.load %arg1[%c0_1, %c0_2] : memref<128x128xbf16, #tpu.memory_space<vmem>>, vector<128x128xbf16>
    %c0_3 = arith.constant 0 : index
    %c0_4 = arith.constant 0 : index
    %2 = vector.load %arg2[%c0_3, %c0_4] : memref<1x128xf32, #tpu.memory_space<vmem>>, vector<1x128xf32>
    %c0_5 = arith.constant 0 : index
    %c0_6 = arith.constant 0 : index
    %3 = vector.load %arg3[%c0_5, %c0_6] : memref<72x32xbf16, #tpu.memory_space<vmem>>, vector<72x32xbf16>
    %c0_7 = arith.constant 0 : index
    %c0_8 = arith.constant 0 : index
    %4 = vector.load %arg4[%c0_7, %c0_8] : memref<16x128xf32, #tpu.memory_space<vmem>>, vector<16x128xf32>
    %c0_9 = arith.constant 0 : index
    %c0_10 = arith.constant 0 : index
    %5 = vector.load %arg5[%c0_9, %c0_10] : memref<128x128xbf16, #tpu.memory_space<vmem>>, vector<128x128xbf16>
    %c0_11 = arith.constant 0 : index
    %c0_12 = arith.constant 0 : index
    %6 = vector.load %arg6[%c0_11, %c0_12] : memref<1x128xf32, #tpu.memory_space<vmem>>, vector<1x128xf32>
    %7 = arith.truncf %0 : vector<32x128xf32> to vector<32x128xbf16>
    %cst = arith.constant dense<0.000000e+00> : vector<32x128xf32>
    %8 = tpu.matmul %7, %1, %cst {dimension_numbers = #tpu.dot_dimension_numbers<[1], [0], [0], [1], [0, 0, 1, 1], [], []>} : vector<32x128xbf16>, vector<128x128xbf16>, vector<32x128xf32> -> vector<32x128xf32>
    %9 = vector.broadcast %2 : vector<1x128xf32> to vector<32x128xf32>
    %10 = arith.addf %8, %9 : vector<32x128xf32>
    %cst_13 = arith.constant 0.000000e+00 : f32
    %11 = vector.broadcast %cst_13 : f32 to vector<32x128xf32>
    %12 = arith.maximumf %10, %11 : vector<32x128xf32>
    %13 = arith.truncf %12 : vector<32x128xf32> to vector<32x128xbf16>
    %cst_14 = arith.constant dense<0.000000e+00> : vector<72x128xf32>
    %14 = tpu.matmul %3, %13, %cst_14 {dimension_numbers = #tpu.dot_dimension_numbers<[1], [0], [0], [1], [0, 0, 1, 1], [], []>} : vector<72x32xbf16>, vector<32x128xbf16>, vector<72x128xf32> -> vector<72x128xf32>
    %15 = vector.extract_strided_slice %14 {offsets = [0, 0], sizes = [8, 128], strides = [1, 1]} : vector<72x128xf32> to vector<8x128xf32>
    %16 = vector.extract_strided_slice %4 {offsets = [0, 0], sizes = [1, 128], strides = [1, 1]} : vector<16x128xf32> to vector<1x128xf32>
    %17 = vector.broadcast %16 : vector<1x128xf32> to vector<8x128xf32>
    %18 = arith.mulf %15, %17 : vector<8x128xf32>
    %19 = vector.extract_strided_slice %14 {offsets = [8, 0], sizes = [8, 128], strides = [1, 1]} : vector<72x128xf32> to vector<8x128xf32>
    %20 = vector.extract_strided_slice %4 {offsets = [1, 0], sizes = [1, 128], strides = [1, 1]} : vector<16x128xf32> to vector<1x128xf32>
    %21 = vector.broadcast %20 : vector<1x128xf32> to vector<8x128xf32>
    %22 = arith.mulf %19, %21 : vector<8x128xf32>
    %23 = arith.addf %18, %22 : vector<8x128xf32>
    %24 = vector.extract_strided_slice %14 {offsets = [16, 0], sizes = [8, 128], strides = [1, 1]} : vector<72x128xf32> to vector<8x128xf32>
    %25 = vector.extract_strided_slice %4 {offsets = [2, 0], sizes = [1, 128], strides = [1, 1]} : vector<16x128xf32> to vector<1x128xf32>
    %26 = vector.broadcast %25 : vector<1x128xf32> to vector<8x128xf32>
    %27 = arith.mulf %24, %26 : vector<8x128xf32>
    %28 = arith.addf %23, %27 : vector<8x128xf32>
    %29 = vector.extract_strided_slice %14 {offsets = [24, 0], sizes = [8, 128], strides = [1, 1]} : vector<72x128xf32> to vector<8x128xf32>
    %30 = vector.extract_strided_slice %4 {offsets = [3, 0], sizes = [1, 128], strides = [1, 1]} : vector<16x128xf32> to vector<1x128xf32>
    %31 = vector.broadcast %30 : vector<1x128xf32> to vector<8x128xf32>
    %32 = arith.mulf %29, %31 : vector<8x128xf32>
    %33 = arith.addf %28, %32 : vector<8x128xf32>
    %34 = vector.extract_strided_slice %14 {offsets = [32, 0], sizes = [8, 128], strides = [1, 1]} : vector<72x128xf32> to vector<8x128xf32>
    %35 = vector.extract_strided_slice %4 {offsets = [4, 0], sizes = [1, 128], strides = [1, 1]} : vector<16x128xf32> to vector<1x128xf32>
    %36 = vector.broadcast %35 : vector<1x128xf32> to vector<8x128xf32>
    %37 = arith.mulf %34, %36 : vector<8x128xf32>
    %38 = arith.addf %33, %37 : vector<8x128xf32>
    %39 = vector.extract_strided_slice %14 {offsets = [40, 0], sizes = [8, 128], strides = [1, 1]} : vector<72x128xf32> to vector<8x128xf32>
    %40 = vector.extract_strided_slice %4 {offsets = [5, 0], sizes = [1, 128], strides = [1, 1]} : vector<16x128xf32> to vector<1x128xf32>
    %41 = vector.broadcast %40 : vector<1x128xf32> to vector<8x128xf32>
    %42 = arith.mulf %39, %41 : vector<8x128xf32>
    %43 = arith.addf %38, %42 : vector<8x128xf32>
    %44 = vector.extract_strided_slice %14 {offsets = [48, 0], sizes = [8, 128], strides = [1, 1]} : vector<72x128xf32> to vector<8x128xf32>
    %45 = vector.extract_strided_slice %4 {offsets = [6, 0], sizes = [1, 128], strides = [1, 1]} : vector<16x128xf32> to vector<1x128xf32>
    %46 = vector.broadcast %45 : vector<1x128xf32> to vector<8x128xf32>
    %47 = arith.mulf %44, %46 : vector<8x128xf32>
    %48 = arith.addf %43, %47 : vector<8x128xf32>
    %49 = vector.extract_strided_slice %14 {offsets = [56, 0], sizes = [8, 128], strides = [1, 1]} : vector<72x128xf32> to vector<8x128xf32>
    %50 = vector.extract_strided_slice %4 {offsets = [7, 0], sizes = [1, 128], strides = [1, 1]} : vector<16x128xf32> to vector<1x128xf32>
    %51 = vector.broadcast %50 : vector<1x128xf32> to vector<8x128xf32>
    %52 = arith.mulf %49, %51 : vector<8x128xf32>
    %53 = arith.addf %48, %52 : vector<8x128xf32>
    %54 = vector.extract_strided_slice %14 {offsets = [64, 0], sizes = [8, 128], strides = [1, 1]} : vector<72x128xf32> to vector<8x128xf32>
    %55 = vector.extract_strided_slice %4 {offsets = [8, 0], sizes = [1, 128], strides = [1, 1]} : vector<16x128xf32> to vector<1x128xf32>
    %56 = vector.broadcast %55 : vector<1x128xf32> to vector<8x128xf32>
    %57 = arith.mulf %54, %56 : vector<8x128xf32>
    %58 = arith.addf %53, %57 : vector<8x128xf32>
    %59 = arith.truncf %58 : vector<8x128xf32> to vector<8x128xbf16>
    %cst_15 = arith.constant dense<0.000000e+00> : vector<8x128xf32>
    %60 = tpu.matmul %59, %5, %cst_15 {dimension_numbers = #tpu.dot_dimension_numbers<[1], [0], [0], [1], [0, 0, 1, 1], [], []>} : vector<8x128xbf16>, vector<128x128xbf16>, vector<8x128xf32> -> vector<8x128xf32>
    %61 = vector.broadcast %6 : vector<1x128xf32> to vector<8x128xf32>
    %62 = arith.addf %60, %61 : vector<8x128xf32>
    %cst_16 = arith.constant 0.000000e+00 : f32
    %63 = vector.broadcast %cst_16 : f32 to vector<8x128xf32>
    %64 = arith.maximumf %62, %63 : vector<8x128xf32>
    %c0_17 = arith.constant 0 : index
    %c0_18 = arith.constant 0 : index
    %65 = vector.load %arg7[%c0_17, %c0_18] : memref<8x128xf32, #tpu.memory_space<vmem>>, vector<8x128xf32>
    tpu.vector_store %arg7[%c0_17, %c0_18], %64 {strides = array<i32>} : memref<8x128xf32, #tpu.memory_space<vmem>>, vector<8x128xf32>,
    return
  }
}

module attributes {stable_mosaic.version = 11 : i64} {
  func.func @_stage_kernel(%arg0: i32, %arg1: memref<8x128xf32, #tpu.memory_space<vmem>>, %arg2: memref<72x8xbf16, #tpu.memory_space<vmem>>, %arg3: memref<1x128x128xbf16, #tpu.memory_space<vmem>>, %arg4: memref<1x1x128xf32, #tpu.memory_space<vmem>>, %arg5: memref<1x16x128xf32, #tpu.memory_space<vmem>>, %arg6: memref<1x128x128xbf16, #tpu.memory_space<vmem>>, %arg7: memref<1x1x128xf32, #tpu.memory_space<vmem>>, %arg8: memref<8x128xf32, #tpu.memory_space<vmem>>, %arg9: memref<8x128xf32, #tpu.memory_space<vmem>>) attributes {dimension_semantics = [#tpu.dimension_semantics<arbitrary>], iteration_bounds = array<i64: 7>, scalar_prefetch = 0 : i64, scratch_operands = 1 : i64, tpu.core_type = #tpu.core_type<tc>, window_params = [{pipeline_mode = #tpu.pipeline_mode<synchronous>, transform_indices = @transform_0, window_bounds = array<i64: 8, 128>}, {pipeline_mode = #tpu.pipeline_mode<synchronous>, transform_indices = @transform_1, window_bounds = array<i64: 72, 8>}, {transform_indices = @transform_2, window_bounds = array<i64: 1, 128, 128>}, {transform_indices = @transform_3, window_bounds = array<i64: 1, 1, 128>}, {transform_indices = @transform_4, window_bounds = array<i64: 1, 16, 128>}, {transform_indices = @transform_5, window_bounds = array<i64: 1, 128, 128>}, {transform_indices = @transform_6, window_bounds = array<i64: 1, 1, 128>}, {pipeline_mode = #tpu.pipeline_mode<synchronous>, transform_indices = @transform_7, window_bounds = array<i64: 8, 128>}]} {
    %c0_i32 = arith.constant 0 : i32
    %0 = arith.cmpi eq, %arg0, %c0_i32 : i32
    %1 = arith.extui %0 : i1 to i32
    %c0_i32_0 = arith.constant 0 : i32
    %2 = arith.cmpi ne, %1, %c0_i32_0 : i32
    scf.if %2 {
      %c0_26 = arith.constant 0 : index
      %c0_27 = arith.constant 0 : index
      %77 = vector.load %arg1[%c0_26, %c0_27] : memref<8x128xf32, #tpu.memory_space<vmem>>, vector<8x128xf32>
      %c0_28 = arith.constant 0 : index
      %c0_29 = arith.constant 0 : index
      %78 = vector.load %arg9[%c0_28, %c0_29] : memref<8x128xf32, #tpu.memory_space<vmem>>, vector<8x128xf32>
      tpu.vector_store %arg9[%c0_28, %c0_29], %77 {strides = array<i32>} : memref<8x128xf32, #tpu.memory_space<vmem>>, vector<8x128xf32>,
    } else {
    }
    %c0 = arith.constant 0 : index
    %c0_1 = arith.constant 0 : index
    %3 = vector.load %arg9[%c0, %c0_1] : memref<8x128xf32, #tpu.memory_space<vmem>>, vector<8x128xf32>
    %c0_2 = arith.constant 0 : index
    %c0_3 = arith.constant 0 : index
    %c0_4 = arith.constant 0 : index
    %4 = vector.load %arg3[%c0_2, %c0_3, %c0_4] : memref<1x128x128xbf16, #tpu.memory_space<vmem>>, vector<1x128x128xbf16>
    %5 = vector.shape_cast %4 : vector<1x128x128xbf16> to vector<128x128xbf16>
    %c0_5 = arith.constant 0 : index
    %c0_6 = arith.constant 0 : index
    %c0_7 = arith.constant 0 : index
    %6 = vector.load %arg4[%c0_5, %c0_6, %c0_7] : memref<1x1x128xf32, #tpu.memory_space<vmem>>, vector<1x1x128xf32>
    %7 = vector.shape_cast %6 : vector<1x1x128xf32> to vector<1x128xf32>
    %c0_8 = arith.constant 0 : index
    %c0_9 = arith.constant 0 : index
    %8 = vector.load %arg2[%c0_8, %c0_9] : memref<72x8xbf16, #tpu.memory_space<vmem>>, vector<72x8xbf16>
    %c0_10 = arith.constant 0 : index
    %c0_11 = arith.constant 0 : index
    %c0_12 = arith.constant 0 : index
    %9 = vector.load %arg5[%c0_10, %c0_11, %c0_12] : memref<1x16x128xf32, #tpu.memory_space<vmem>>, vector<1x16x128xf32>
    %10 = vector.shape_cast %9 : vector<1x16x128xf32> to vector<16x128xf32>
    %c0_13 = arith.constant 0 : index
    %c0_14 = arith.constant 0 : index
    %c0_15 = arith.constant 0 : index
    %11 = vector.load %arg6[%c0_13, %c0_14, %c0_15] : memref<1x128x128xbf16, #tpu.memory_space<vmem>>, vector<1x128x128xbf16>
    %12 = vector.shape_cast %11 : vector<1x128x128xbf16> to vector<128x128xbf16>
    %c0_16 = arith.constant 0 : index
    %c0_17 = arith.constant 0 : index
    %c0_18 = arith.constant 0 : index
    %13 = vector.load %arg7[%c0_16, %c0_17, %c0_18] : memref<1x1x128xf32, #tpu.memory_space<vmem>>, vector<1x1x128xf32>
    %14 = vector.shape_cast %13 : vector<1x1x128xf32> to vector<1x128xf32>
    %15 = arith.truncf %3 : vector<8x128xf32> to vector<8x128xbf16>
    %cst = arith.constant dense<0.000000e+00> : vector<8x128xf32>
    %16 = tpu.matmul %15, %5, %cst {dimension_numbers = #tpu.dot_dimension_numbers<[1], [0], [0], [1], [0, 0, 1, 1], [], []>} : vector<8x128xbf16>, vector<128x128xbf16>, vector<8x128xf32> -> vector<8x128xf32>
    %17 = vector.broadcast %7 : vector<1x128xf32> to vector<8x128xf32>
    %18 = arith.addf %16, %17 : vector<8x128xf32>
    %cst_19 = arith.constant 0.000000e+00 : f32
    %19 = vector.broadcast %cst_19 : f32 to vector<8x128xf32>
    %20 = arith.maximumf %18, %19 : vector<8x128xf32>
    %21 = arith.truncf %20 : vector<8x128xf32> to vector<8x128xbf16>
    %cst_20 = arith.constant dense<0.000000e+00> : vector<72x128xf32>
    %22 = tpu.matmul %8, %21, %cst_20 {dimension_numbers = #tpu.dot_dimension_numbers<[1], [0], [0], [1], [0, 0, 1, 1], [], []>} : vector<72x8xbf16>, vector<8x128xbf16>, vector<72x128xf32> -> vector<72x128xf32>
    %23 = vector.extract_strided_slice %22 {offsets = [0, 0], sizes = [8, 128], strides = [1, 1]} : vector<72x128xf32> to vector<8x128xf32>
    %24 = vector.extract_strided_slice %10 {offsets = [0, 0], sizes = [1, 128], strides = [1, 1]} : vector<16x128xf32> to vector<1x128xf32>
    %25 = vector.broadcast %24 : vector<1x128xf32> to vector<8x128xf32>
    %26 = arith.mulf %23, %25 : vector<8x128xf32>
    %27 = vector.extract_strided_slice %22 {offsets = [8, 0], sizes = [8, 128], strides = [1, 1]} : vector<72x128xf32> to vector<8x128xf32>
    %28 = vector.extract_strided_slice %10 {offsets = [1, 0], sizes = [1, 128], strides = [1, 1]} : vector<16x128xf32> to vector<1x128xf32>
    %29 = vector.broadcast %28 : vector<1x128xf32> to vector<8x128xf32>
    %30 = arith.mulf %27, %29 : vector<8x128xf32>
    %31 = arith.addf %26, %30 : vector<8x128xf32>
    %32 = vector.extract_strided_slice %22 {offsets = [16, 0], sizes = [8, 128], strides = [1, 1]} : vector<72x128xf32> to vector<8x128xf32>
    %33 = vector.extract_strided_slice %10 {offsets = [2, 0], sizes = [1, 128], strides = [1, 1]} : vector<16x128xf32> to vector<1x128xf32>
    %34 = vector.broadcast %33 : vector<1x128xf32> to vector<8x128xf32>
    %35 = arith.mulf %32, %34 : vector<8x128xf32>
    %36 = arith.addf %31, %35 : vector<8x128xf32>
    %37 = vector.extract_strided_slice %22 {offsets = [24, 0], sizes = [8, 128], strides = [1, 1]} : vector<72x128xf32> to vector<8x128xf32>
    %38 = vector.extract_strided_slice %10 {offsets = [3, 0], sizes = [1, 128], strides = [1, 1]} : vector<16x128xf32> to vector<1x128xf32>
    %39 = vector.broadcast %38 : vector<1x128xf32> to vector<8x128xf32>
    %40 = arith.mulf %37, %39 : vector<8x128xf32>
    %41 = arith.addf %36, %40 : vector<8x128xf32>
    %42 = vector.extract_strided_slice %22 {offsets = [32, 0], sizes = [8, 128], strides = [1, 1]} : vector<72x128xf32> to vector<8x128xf32>
    %43 = vector.extract_strided_slice %10 {offsets = [4, 0], sizes = [1, 128], strides = [1, 1]} : vector<16x128xf32> to vector<1x128xf32>
    %44 = vector.broadcast %43 : vector<1x128xf32> to vector<8x128xf32>
    %45 = arith.mulf %42, %44 : vector<8x128xf32>
    %46 = arith.addf %41, %45 : vector<8x128xf32>
    %47 = vector.extract_strided_slice %22 {offsets = [40, 0], sizes = [8, 128], strides = [1, 1]} : vector<72x128xf32> to vector<8x128xf32>
    %48 = vector.extract_strided_slice %10 {offsets = [5, 0], sizes = [1, 128], strides = [1, 1]} : vector<16x128xf32> to vector<1x128xf32>
    %49 = vector.broadcast %48 : vector<1x128xf32> to vector<8x128xf32>
    %50 = arith.mulf %47, %49 : vector<8x128xf32>
    %51 = arith.addf %46, %50 : vector<8x128xf32>
    %52 = vector.extract_strided_slice %22 {offsets = [48, 0], sizes = [8, 128], strides = [1, 1]} : vector<72x128xf32> to vector<8x128xf32>
    %53 = vector.extract_strided_slice %10 {offsets = [6, 0], sizes = [1, 128], strides = [1, 1]} : vector<16x128xf32> to vector<1x128xf32>
    %54 = vector.broadcast %53 : vector<1x128xf32> to vector<8x128xf32>
    %55 = arith.mulf %52, %54 : vector<8x128xf32>
    %56 = arith.addf %51, %55 : vector<8x128xf32>
    %57 = vector.extract_strided_slice %22 {offsets = [56, 0], sizes = [8, 128], strides = [1, 1]} : vector<72x128xf32> to vector<8x128xf32>
    %58 = vector.extract_strided_slice %10 {offsets = [7, 0], sizes = [1, 128], strides = [1, 1]} : vector<16x128xf32> to vector<1x128xf32>
    %59 = vector.broadcast %58 : vector<1x128xf32> to vector<8x128xf32>
    %60 = arith.mulf %57, %59 : vector<8x128xf32>
    %61 = arith.addf %56, %60 : vector<8x128xf32>
    %62 = vector.extract_strided_slice %22 {offsets = [64, 0], sizes = [8, 128], strides = [1, 1]} : vector<72x128xf32> to vector<8x128xf32>
    %63 = vector.extract_strided_slice %10 {offsets = [8, 0], sizes = [1, 128], strides = [1, 1]} : vector<16x128xf32> to vector<1x128xf32>
    %64 = vector.broadcast %63 : vector<1x128xf32> to vector<8x128xf32>
    %65 = arith.mulf %62, %64 : vector<8x128xf32>
    %66 = arith.addf %61, %65 : vector<8x128xf32>
    %67 = arith.truncf %66 : vector<8x128xf32> to vector<8x128xbf16>
    %cst_21 = arith.constant dense<0.000000e+00> : vector<8x128xf32>
    %68 = tpu.matmul %67, %12, %cst_21 {dimension_numbers = #tpu.dot_dimension_numbers<[1], [0], [0], [1], [0, 0, 1, 1], [], []>} : vector<8x128xbf16>, vector<128x128xbf16>, vector<8x128xf32> -> vector<8x128xf32>
    %69 = vector.broadcast %14 : vector<1x128xf32> to vector<8x128xf32>
    %70 = arith.addf %68, %69 : vector<8x128xf32>
    %cst_22 = arith.constant 0.000000e+00 : f32
    %71 = vector.broadcast %cst_22 : f32 to vector<8x128xf32>
    %72 = arith.maximumf %70, %71 : vector<8x128xf32>
    %c0_23 = arith.constant 0 : index
    %c0_24 = arith.constant 0 : index
    %73 = vector.load %arg9[%c0_23, %c0_24] : memref<8x128xf32, #tpu.memory_space<vmem>>, vector<8x128xf32>
    tpu.vector_store %arg9[%c0_23, %c0_24], %72 {strides = array<i32>} : memref<8x128xf32, #tpu.memory_space<vmem>>, vector<8x128xf32>,
    %c6_i32 = arith.constant 6 : i32
    %74 = arith.cmpi eq, %arg0, %c6_i32 : i32
    %75 = arith.extui %74 : i1 to i32
    %c0_i32_25 = arith.constant 0 : i32
    %76 = arith.cmpi ne, %75, %c0_i32_25 : i32
    scf.if %76 {
      %c0_26 = arith.constant 0 : index
      %c0_27 = arith.constant 0 : index
      %77 = vector.load %arg8[%c0_26, %c0_27] : memref<8x128xf32, #tpu.memory_space<vmem>>, vector<8x128xf32>
      tpu.vector_store %arg8[%c0_26, %c0_27], %72 {strides = array<i32>} : memref<8x128xf32, #tpu.memory_space<vmem>>, vector<8x128xf32>,
    } else {
    }
    return
  }
  func.func @transform_0(%arg0: i32) -> (i32, i32) {
    %c0_i32 = arith.constant 0 : i32
    %c0_i32_0 = arith.constant 0 : i32
    %c0_i32_1 = arith.constant 0 : i32
    return %c0_i32, %c0_i32_0 : i32, i32
  }
  func.func @transform_1(%arg0: i32) -> (i32, i32) {
    %c0_i32 = arith.constant 0 : i32
    %c0_i32_0 = arith.constant 0 : i32
    %c0_i32_1 = arith.constant 0 : i32
    return %c0_i32, %c0_i32_0 : i32, i32
  }
  func.func @transform_2(%arg0: i32) -> (i32, i32, i32) {
    %c0_i32 = arith.constant 0 : i32
    %c0_i32_0 = arith.constant 0 : i32
    %c0_i32_1 = arith.constant 0 : i32
    return %arg0, %c0_i32, %c0_i32_0 : i32, i32, i32
  }
  func.func @transform_3(%arg0: i32) -> (i32, i32, i32) {
    %c0_i32 = arith.constant 0 : i32
    %c0_i32_0 = arith.constant 0 : i32
    %c0_i32_1 = arith.constant 0 : i32
    return %arg0, %c0_i32, %c0_i32_0 : i32, i32, i32
  }
  func.func @transform_4(%arg0: i32) -> (i32, i32, i32) {
    %c0_i32 = arith.constant 0 : i32
    %c0_i32_0 = arith.constant 0 : i32
    %c0_i32_1 = arith.constant 0 : i32
    return %arg0, %c0_i32, %c0_i32_0 : i32, i32, i32
  }
  func.func @transform_5(%arg0: i32) -> (i32, i32, i32) {
    %c0_i32 = arith.constant 0 : i32
    %c0_i32_0 = arith.constant 0 : i32
    %c0_i32_1 = arith.constant 0 : i32
    return %arg0, %c0_i32, %c0_i32_0 : i32, i32, i32
  }
  func.func @transform_6(%arg0: i32) -> (i32, i32, i32) {
    %c0_i32 = arith.constant 0 : i32
    %c0_i32_0 = arith.constant 0 : i32
    %c0_i32_1 = arith.constant 0 : i32
    return %arg0, %c0_i32, %c0_i32_0 : i32, i32, i32
  }
  func.func @transform_7(%arg0: i32) -> (i32, i32) {
    %c0_i32 = arith.constant 0 : i32
    %c0_i32_0 = arith.constant 0 : i32
    %c0_i32_1 = arith.constant 0 : i32
    return %c0_i32, %c0_i32_0 : i32, i32
  }
}

module attributes {stable_mosaic.version = 11 : i64} {
  func.func @_block_kernel(%arg0: memref<8x128xf32, #tpu.memory_space<vmem>>, %arg1: memref<128x256xbf16, #tpu.memory_space<vmem>>, %arg2: memref<1x256xf32, #tpu.memory_space<vmem>>, %arg3: memref<72x8xbf16, #tpu.memory_space<vmem>>, %arg4: memref<16x256xf32, #tpu.memory_space<vmem>>, %arg5: memref<256x256xbf16, #tpu.memory_space<vmem>>, %arg6: memref<1x256xf32, #tpu.memory_space<vmem>>, %arg7: memref<8x256xf32, #tpu.memory_space<vmem>>) attributes {dimension_semantics = [], scalar_prefetch = 0 : i64, scratch_operands = 0 : i64, tpu.core_type = #tpu.core_type<tc>} {
    %c0 = arith.constant 0 : index
    %c0_0 = arith.constant 0 : index
    %0 = vector.load %arg0[%c0, %c0_0] : memref<8x128xf32, #tpu.memory_space<vmem>>, vector<8x128xf32>
    %c0_1 = arith.constant 0 : index
    %c0_2 = arith.constant 0 : index
    %1 = vector.load %arg1[%c0_1, %c0_2] : memref<128x256xbf16, #tpu.memory_space<vmem>>, vector<128x256xbf16>
    %c0_3 = arith.constant 0 : index
    %c0_4 = arith.constant 0 : index
    %2 = vector.load %arg2[%c0_3, %c0_4] : memref<1x256xf32, #tpu.memory_space<vmem>>, vector<1x256xf32>
    %c0_5 = arith.constant 0 : index
    %c0_6 = arith.constant 0 : index
    %3 = vector.load %arg3[%c0_5, %c0_6] : memref<72x8xbf16, #tpu.memory_space<vmem>>, vector<72x8xbf16>
    %c0_7 = arith.constant 0 : index
    %c0_8 = arith.constant 0 : index
    %4 = vector.load %arg4[%c0_7, %c0_8] : memref<16x256xf32, #tpu.memory_space<vmem>>, vector<16x256xf32>
    %c0_9 = arith.constant 0 : index
    %c0_10 = arith.constant 0 : index
    %5 = vector.load %arg5[%c0_9, %c0_10] : memref<256x256xbf16, #tpu.memory_space<vmem>>, vector<256x256xbf16>
    %c0_11 = arith.constant 0 : index
    %c0_12 = arith.constant 0 : index
    %6 = vector.load %arg6[%c0_11, %c0_12] : memref<1x256xf32, #tpu.memory_space<vmem>>, vector<1x256xf32>
    %7 = arith.truncf %0 : vector<8x128xf32> to vector<8x128xbf16>
    %cst = arith.constant dense<0.000000e+00> : vector<8x256xf32>
    %8 = tpu.matmul %7, %1, %cst {dimension_numbers = #tpu.dot_dimension_numbers<[1], [0], [0], [1], [0, 0, 1, 1], [], []>} : vector<8x128xbf16>, vector<128x256xbf16>, vector<8x256xf32> -> vector<8x256xf32>
    %9 = vector.broadcast %2 : vector<1x256xf32> to vector<8x256xf32>
    %10 = arith.addf %8, %9 : vector<8x256xf32>
    %cst_13 = arith.constant 0.000000e+00 : f32
    %11 = vector.broadcast %cst_13 : f32 to vector<8x256xf32>
    %12 = arith.maximumf %10, %11 : vector<8x256xf32>
    %13 = arith.truncf %12 : vector<8x256xf32> to vector<8x256xbf16>
    %cst_14 = arith.constant dense<0.000000e+00> : vector<72x256xf32>
    %14 = tpu.matmul %3, %13, %cst_14 {dimension_numbers = #tpu.dot_dimension_numbers<[1], [0], [0], [1], [0, 0, 1, 1], [], []>} : vector<72x8xbf16>, vector<8x256xbf16>, vector<72x256xf32> -> vector<72x256xf32>
    %15 = vector.extract_strided_slice %14 {offsets = [0, 0], sizes = [8, 256], strides = [1, 1]} : vector<72x256xf32> to vector<8x256xf32>
    %16 = vector.extract_strided_slice %4 {offsets = [0, 0], sizes = [1, 256], strides = [1, 1]} : vector<16x256xf32> to vector<1x256xf32>
    %17 = vector.broadcast %16 : vector<1x256xf32> to vector<8x256xf32>
    %18 = arith.mulf %15, %17 : vector<8x256xf32>
    %19 = vector.extract_strided_slice %14 {offsets = [8, 0], sizes = [8, 256], strides = [1, 1]} : vector<72x256xf32> to vector<8x256xf32>
    %20 = vector.extract_strided_slice %4 {offsets = [1, 0], sizes = [1, 256], strides = [1, 1]} : vector<16x256xf32> to vector<1x256xf32>
    %21 = vector.broadcast %20 : vector<1x256xf32> to vector<8x256xf32>
    %22 = arith.mulf %19, %21 : vector<8x256xf32>
    %23 = arith.addf %18, %22 : vector<8x256xf32>
    %24 = vector.extract_strided_slice %14 {offsets = [16, 0], sizes = [8, 256], strides = [1, 1]} : vector<72x256xf32> to vector<8x256xf32>
    %25 = vector.extract_strided_slice %4 {offsets = [2, 0], sizes = [1, 256], strides = [1, 1]} : vector<16x256xf32> to vector<1x256xf32>
    %26 = vector.broadcast %25 : vector<1x256xf32> to vector<8x256xf32>
    %27 = arith.mulf %24, %26 : vector<8x256xf32>
    %28 = arith.addf %23, %27 : vector<8x256xf32>
    %29 = vector.extract_strided_slice %14 {offsets = [24, 0], sizes = [8, 256], strides = [1, 1]} : vector<72x256xf32> to vector<8x256xf32>
    %30 = vector.extract_strided_slice %4 {offsets = [3, 0], sizes = [1, 256], strides = [1, 1]} : vector<16x256xf32> to vector<1x256xf32>
    %31 = vector.broadcast %30 : vector<1x256xf32> to vector<8x256xf32>
    %32 = arith.mulf %29, %31 : vector<8x256xf32>
    %33 = arith.addf %28, %32 : vector<8x256xf32>
    %34 = vector.extract_strided_slice %14 {offsets = [32, 0], sizes = [8, 256], strides = [1, 1]} : vector<72x256xf32> to vector<8x256xf32>
    %35 = vector.extract_strided_slice %4 {offsets = [4, 0], sizes = [1, 256], strides = [1, 1]} : vector<16x256xf32> to vector<1x256xf32>
    %36 = vector.broadcast %35 : vector<1x256xf32> to vector<8x256xf32>
    %37 = arith.mulf %34, %36 : vector<8x256xf32>
    %38 = arith.addf %33, %37 : vector<8x256xf32>
    %39 = vector.extract_strided_slice %14 {offsets = [40, 0], sizes = [8, 256], strides = [1, 1]} : vector<72x256xf32> to vector<8x256xf32>
    %40 = vector.extract_strided_slice %4 {offsets = [5, 0], sizes = [1, 256], strides = [1, 1]} : vector<16x256xf32> to vector<1x256xf32>
    %41 = vector.broadcast %40 : vector<1x256xf32> to vector<8x256xf32>
    %42 = arith.mulf %39, %41 : vector<8x256xf32>
    %43 = arith.addf %38, %42 : vector<8x256xf32>
    %44 = vector.extract_strided_slice %14 {offsets = [48, 0], sizes = [8, 256], strides = [1, 1]} : vector<72x256xf32> to vector<8x256xf32>
    %45 = vector.extract_strided_slice %4 {offsets = [6, 0], sizes = [1, 256], strides = [1, 1]} : vector<16x256xf32> to vector<1x256xf32>
    %46 = vector.broadcast %45 : vector<1x256xf32> to vector<8x256xf32>
    %47 = arith.mulf %44, %46 : vector<8x256xf32>
    %48 = arith.addf %43, %47 : vector<8x256xf32>
    %49 = vector.extract_strided_slice %14 {offsets = [56, 0], sizes = [8, 256], strides = [1, 1]} : vector<72x256xf32> to vector<8x256xf32>
    %50 = vector.extract_strided_slice %4 {offsets = [7, 0], sizes = [1, 256], strides = [1, 1]} : vector<16x256xf32> to vector<1x256xf32>
    %51 = vector.broadcast %50 : vector<1x256xf32> to vector<8x256xf32>
    %52 = arith.mulf %49, %51 : vector<8x256xf32>
    %53 = arith.addf %48, %52 : vector<8x256xf32>
    %54 = vector.extract_strided_slice %14 {offsets = [64, 0], sizes = [8, 256], strides = [1, 1]} : vector<72x256xf32> to vector<8x256xf32>
    %55 = vector.extract_strided_slice %4 {offsets = [8, 0], sizes = [1, 256], strides = [1, 1]} : vector<16x256xf32> to vector<1x256xf32>
    %56 = vector.broadcast %55 : vector<1x256xf32> to vector<8x256xf32>
    %57 = arith.mulf %54, %56 : vector<8x256xf32>
    %58 = arith.addf %53, %57 : vector<8x256xf32>
    %59 = arith.truncf %58 : vector<8x256xf32> to vector<8x256xbf16>
    %cst_15 = arith.constant dense<0.000000e+00> : vector<8x256xf32>
    %60 = tpu.matmul %59, %5, %cst_15 {dimension_numbers = #tpu.dot_dimension_numbers<[1], [0], [0], [1], [0, 0, 1, 1], [], []>} : vector<8x256xbf16>, vector<256x256xbf16>, vector<8x256xf32> -> vector<8x256xf32>
    %61 = vector.broadcast %6 : vector<1x256xf32> to vector<8x256xf32>
    %62 = arith.addf %60, %61 : vector<8x256xf32>
    %cst_16 = arith.constant 0.000000e+00 : f32
    %63 = vector.broadcast %cst_16 : f32 to vector<8x256xf32>
    %64 = arith.maximumf %62, %63 : vector<8x256xf32>
    %c0_17 = arith.constant 0 : index
    %c0_18 = arith.constant 0 : index
    %65 = vector.load %arg7[%c0_17, %c0_18] : memref<8x256xf32, #tpu.memory_space<vmem>>, vector<8x256xf32>
    tpu.vector_store %arg7[%c0_17, %c0_18], %64 {strides = array<i32>} : memref<8x256xf32, #tpu.memory_space<vmem>>, vector<8x256xf32>,
    return
  }
}

module attributes {stable_mosaic.version = 11 : i64} {
  func.func @_stage_kernel(%arg0: i32, %arg1: memref<8x256xf32, #tpu.memory_space<vmem>>, %arg2: memref<72x8xbf16, #tpu.memory_space<vmem>>, %arg3: memref<1x256x256xbf16, #tpu.memory_space<vmem>>, %arg4: memref<1x1x256xf32, #tpu.memory_space<vmem>>, %arg5: memref<1x16x256xf32, #tpu.memory_space<vmem>>, %arg6: memref<1x256x256xbf16, #tpu.memory_space<vmem>>, %arg7: memref<1x1x256xf32, #tpu.memory_space<vmem>>, %arg8: memref<8x256xf32, #tpu.memory_space<vmem>>, %arg9: memref<8x256xf32, #tpu.memory_space<vmem>>) attributes {dimension_semantics = [#tpu.dimension_semantics<arbitrary>], iteration_bounds = array<i64: 3>, scalar_prefetch = 0 : i64, scratch_operands = 1 : i64, tpu.core_type = #tpu.core_type<tc>, window_params = [{pipeline_mode = #tpu.pipeline_mode<synchronous>, transform_indices = @transform_0, window_bounds = array<i64: 8, 256>}, {pipeline_mode = #tpu.pipeline_mode<synchronous>, transform_indices = @transform_1, window_bounds = array<i64: 72, 8>}, {transform_indices = @transform_2, window_bounds = array<i64: 1, 256, 256>}, {transform_indices = @transform_3, window_bounds = array<i64: 1, 1, 256>}, {transform_indices = @transform_4, window_bounds = array<i64: 1, 16, 256>}, {transform_indices = @transform_5, window_bounds = array<i64: 1, 256, 256>}, {transform_indices = @transform_6, window_bounds = array<i64: 1, 1, 256>}, {pipeline_mode = #tpu.pipeline_mode<synchronous>, transform_indices = @transform_7, window_bounds = array<i64: 8, 256>}]} {
    %c0_i32 = arith.constant 0 : i32
    %0 = arith.cmpi eq, %arg0, %c0_i32 : i32
    %1 = arith.extui %0 : i1 to i32
    %c0_i32_0 = arith.constant 0 : i32
    %2 = arith.cmpi ne, %1, %c0_i32_0 : i32
    scf.if %2 {
      %c0_26 = arith.constant 0 : index
      %c0_27 = arith.constant 0 : index
      %77 = vector.load %arg1[%c0_26, %c0_27] : memref<8x256xf32, #tpu.memory_space<vmem>>, vector<8x256xf32>
      %c0_28 = arith.constant 0 : index
      %c0_29 = arith.constant 0 : index
      %78 = vector.load %arg9[%c0_28, %c0_29] : memref<8x256xf32, #tpu.memory_space<vmem>>, vector<8x256xf32>
      tpu.vector_store %arg9[%c0_28, %c0_29], %77 {strides = array<i32>} : memref<8x256xf32, #tpu.memory_space<vmem>>, vector<8x256xf32>,
    } else {
    }
    %c0 = arith.constant 0 : index
    %c0_1 = arith.constant 0 : index
    %3 = vector.load %arg9[%c0, %c0_1] : memref<8x256xf32, #tpu.memory_space<vmem>>, vector<8x256xf32>
    %c0_2 = arith.constant 0 : index
    %c0_3 = arith.constant 0 : index
    %c0_4 = arith.constant 0 : index
    %4 = vector.load %arg3[%c0_2, %c0_3, %c0_4] : memref<1x256x256xbf16, #tpu.memory_space<vmem>>, vector<1x256x256xbf16>
    %5 = vector.shape_cast %4 : vector<1x256x256xbf16> to vector<256x256xbf16>
    %c0_5 = arith.constant 0 : index
    %c0_6 = arith.constant 0 : index
    %c0_7 = arith.constant 0 : index
    %6 = vector.load %arg4[%c0_5, %c0_6, %c0_7] : memref<1x1x256xf32, #tpu.memory_space<vmem>>, vector<1x1x256xf32>
    %7 = vector.shape_cast %6 : vector<1x1x256xf32> to vector<1x256xf32>
    %c0_8 = arith.constant 0 : index
    %c0_9 = arith.constant 0 : index
    %8 = vector.load %arg2[%c0_8, %c0_9] : memref<72x8xbf16, #tpu.memory_space<vmem>>, vector<72x8xbf16>
    %c0_10 = arith.constant 0 : index
    %c0_11 = arith.constant 0 : index
    %c0_12 = arith.constant 0 : index
    %9 = vector.load %arg5[%c0_10, %c0_11, %c0_12] : memref<1x16x256xf32, #tpu.memory_space<vmem>>, vector<1x16x256xf32>
    %10 = vector.shape_cast %9 : vector<1x16x256xf32> to vector<16x256xf32>
    %c0_13 = arith.constant 0 : index
    %c0_14 = arith.constant 0 : index
    %c0_15 = arith.constant 0 : index
    %11 = vector.load %arg6[%c0_13, %c0_14, %c0_15] : memref<1x256x256xbf16, #tpu.memory_space<vmem>>, vector<1x256x256xbf16>
    %12 = vector.shape_cast %11 : vector<1x256x256xbf16> to vector<256x256xbf16>
    %c0_16 = arith.constant 0 : index
    %c0_17 = arith.constant 0 : index
    %c0_18 = arith.constant 0 : index
    %13 = vector.load %arg7[%c0_16, %c0_17, %c0_18] : memref<1x1x256xf32, #tpu.memory_space<vmem>>, vector<1x1x256xf32>
    %14 = vector.shape_cast %13 : vector<1x1x256xf32> to vector<1x256xf32>
    %15 = arith.truncf %3 : vector<8x256xf32> to vector<8x256xbf16>
    %cst = arith.constant dense<0.000000e+00> : vector<8x256xf32>
    %16 = tpu.matmul %15, %5, %cst {dimension_numbers = #tpu.dot_dimension_numbers<[1], [0], [0], [1], [0, 0, 1, 1], [], []>} : vector<8x256xbf16>, vector<256x256xbf16>, vector<8x256xf32> -> vector<8x256xf32>
    %17 = vector.broadcast %7 : vector<1x256xf32> to vector<8x256xf32>
    %18 = arith.addf %16, %17 : vector<8x256xf32>
    %cst_19 = arith.constant 0.000000e+00 : f32
    %19 = vector.broadcast %cst_19 : f32 to vector<8x256xf32>
    %20 = arith.maximumf %18, %19 : vector<8x256xf32>
    %21 = arith.truncf %20 : vector<8x256xf32> to vector<8x256xbf16>
    %cst_20 = arith.constant dense<0.000000e+00> : vector<72x256xf32>
    %22 = tpu.matmul %8, %21, %cst_20 {dimension_numbers = #tpu.dot_dimension_numbers<[1], [0], [0], [1], [0, 0, 1, 1], [], []>} : vector<72x8xbf16>, vector<8x256xbf16>, vector<72x256xf32> -> vector<72x256xf32>
    %23 = vector.extract_strided_slice %22 {offsets = [0, 0], sizes = [8, 256], strides = [1, 1]} : vector<72x256xf32> to vector<8x256xf32>
    %24 = vector.extract_strided_slice %10 {offsets = [0, 0], sizes = [1, 256], strides = [1, 1]} : vector<16x256xf32> to vector<1x256xf32>
    %25 = vector.broadcast %24 : vector<1x256xf32> to vector<8x256xf32>
    %26 = arith.mulf %23, %25 : vector<8x256xf32>
    %27 = vector.extract_strided_slice %22 {offsets = [8, 0], sizes = [8, 256], strides = [1, 1]} : vector<72x256xf32> to vector<8x256xf32>
    %28 = vector.extract_strided_slice %10 {offsets = [1, 0], sizes = [1, 256], strides = [1, 1]} : vector<16x256xf32> to vector<1x256xf32>
    %29 = vector.broadcast %28 : vector<1x256xf32> to vector<8x256xf32>
    %30 = arith.mulf %27, %29 : vector<8x256xf32>
    %31 = arith.addf %26, %30 : vector<8x256xf32>
    %32 = vector.extract_strided_slice %22 {offsets = [16, 0], sizes = [8, 256], strides = [1, 1]} : vector<72x256xf32> to vector<8x256xf32>
    %33 = vector.extract_strided_slice %10 {offsets = [2, 0], sizes = [1, 256], strides = [1, 1]} : vector<16x256xf32> to vector<1x256xf32>
    %34 = vector.broadcast %33 : vector<1x256xf32> to vector<8x256xf32>
    %35 = arith.mulf %32, %34 : vector<8x256xf32>
    %36 = arith.addf %31, %35 : vector<8x256xf32>
    %37 = vector.extract_strided_slice %22 {offsets = [24, 0], sizes = [8, 256], strides = [1, 1]} : vector<72x256xf32> to vector<8x256xf32>
    %38 = vector.extract_strided_slice %10 {offsets = [3, 0], sizes = [1, 256], strides = [1, 1]} : vector<16x256xf32> to vector<1x256xf32>
    %39 = vector.broadcast %38 : vector<1x256xf32> to vector<8x256xf32>
    %40 = arith.mulf %37, %39 : vector<8x256xf32>
    %41 = arith.addf %36, %40 : vector<8x256xf32>
    %42 = vector.extract_strided_slice %22 {offsets = [32, 0], sizes = [8, 256], strides = [1, 1]} : vector<72x256xf32> to vector<8x256xf32>
    %43 = vector.extract_strided_slice %10 {offsets = [4, 0], sizes = [1, 256], strides = [1, 1]} : vector<16x256xf32> to vector<1x256xf32>
    %44 = vector.broadcast %43 : vector<1x256xf32> to vector<8x256xf32>
    %45 = arith.mulf %42, %44 : vector<8x256xf32>
    %46 = arith.addf %41, %45 : vector<8x256xf32>
    %47 = vector.extract_strided_slice %22 {offsets = [40, 0], sizes = [8, 256], strides = [1, 1]} : vector<72x256xf32> to vector<8x256xf32>
    %48 = vector.extract_strided_slice %10 {offsets = [5, 0], sizes = [1, 256], strides = [1, 1]} : vector<16x256xf32> to vector<1x256xf32>
    %49 = vector.broadcast %48 : vector<1x256xf32> to vector<8x256xf32>
    %50 = arith.mulf %47, %49 : vector<8x256xf32>
    %51 = arith.addf %46, %50 : vector<8x256xf32>
    %52 = vector.extract_strided_slice %22 {offsets = [48, 0], sizes = [8, 256], strides = [1, 1]} : vector<72x256xf32> to vector<8x256xf32>
    %53 = vector.extract_strided_slice %10 {offsets = [6, 0], sizes = [1, 256], strides = [1, 1]} : vector<16x256xf32> to vector<1x256xf32>
    %54 = vector.broadcast %53 : vector<1x256xf32> to vector<8x256xf32>
    %55 = arith.mulf %52, %54 : vector<8x256xf32>
    %56 = arith.addf %51, %55 : vector<8x256xf32>
    %57 = vector.extract_strided_slice %22 {offsets = [56, 0], sizes = [8, 256], strides = [1, 1]} : vector<72x256xf32> to vector<8x256xf32>
    %58 = vector.extract_strided_slice %10 {offsets = [7, 0], sizes = [1, 256], strides = [1, 1]} : vector<16x256xf32> to vector<1x256xf32>
    %59 = vector.broadcast %58 : vector<1x256xf32> to vector<8x256xf32>
    %60 = arith.mulf %57, %59 : vector<8x256xf32>
    %61 = arith.addf %56, %60 : vector<8x256xf32>
    %62 = vector.extract_strided_slice %22 {offsets = [64, 0], sizes = [8, 256], strides = [1, 1]} : vector<72x256xf32> to vector<8x256xf32>
    %63 = vector.extract_strided_slice %10 {offsets = [8, 0], sizes = [1, 256], strides = [1, 1]} : vector<16x256xf32> to vector<1x256xf32>
    %64 = vector.broadcast %63 : vector<1x256xf32> to vector<8x256xf32>
    %65 = arith.mulf %62, %64 : vector<8x256xf32>
    %66 = arith.addf %61, %65 : vector<8x256xf32>
    %67 = arith.truncf %66 : vector<8x256xf32> to vector<8x256xbf16>
    %cst_21 = arith.constant dense<0.000000e+00> : vector<8x256xf32>
    %68 = tpu.matmul %67, %12, %cst_21 {dimension_numbers = #tpu.dot_dimension_numbers<[1], [0], [0], [1], [0, 0, 1, 1], [], []>} : vector<8x256xbf16>, vector<256x256xbf16>, vector<8x256xf32> -> vector<8x256xf32>
    %69 = vector.broadcast %14 : vector<1x256xf32> to vector<8x256xf32>
    %70 = arith.addf %68, %69 : vector<8x256xf32>
    %cst_22 = arith.constant 0.000000e+00 : f32
    %71 = vector.broadcast %cst_22 : f32 to vector<8x256xf32>
    %72 = arith.maximumf %70, %71 : vector<8x256xf32>
    %c0_23 = arith.constant 0 : index
    %c0_24 = arith.constant 0 : index
    %73 = vector.load %arg9[%c0_23, %c0_24] : memref<8x256xf32, #tpu.memory_space<vmem>>, vector<8x256xf32>
    tpu.vector_store %arg9[%c0_23, %c0_24], %72 {strides = array<i32>} : memref<8x256xf32, #tpu.memory_space<vmem>>, vector<8x256xf32>,
    %c2_i32 = arith.constant 2 : i32
    %74 = arith.cmpi eq, %arg0, %c2_i32 : i32
    %75 = arith.extui %74 : i1 to i32
    %c0_i32_25 = arith.constant 0 : i32
    %76 = arith.cmpi ne, %75, %c0_i32_25 : i32
    scf.if %76 {
      %c0_26 = arith.constant 0 : index
      %c0_27 = arith.constant 0 : index
      %77 = vector.load %arg8[%c0_26, %c0_27] : memref<8x256xf32, #tpu.memory_space<vmem>>, vector<8x256xf32>
      tpu.vector_store %arg8[%c0_26, %c0_27], %72 {strides = array<i32>} : memref<8x256xf32, #tpu.memory_space<vmem>>, vector<8x256xf32>,
    } else {
    }
    return
  }
  func.func @transform_0(%arg0: i32) -> (i32, i32) {
    %c0_i32 = arith.constant 0 : i32
    %c0_i32_0 = arith.constant 0 : i32
    %c0_i32_1 = arith.constant 0 : i32
    return %c0_i32, %c0_i32_0 : i32, i32
  }
  func.func @transform_1(%arg0: i32) -> (i32, i32) {
    %c0_i32 = arith.constant 0 : i32
    %c0_i32_0 = arith.constant 0 : i32
    %c0_i32_1 = arith.constant 0 : i32
    return %c0_i32, %c0_i32_0 : i32, i32
  }
  func.func @transform_2(%arg0: i32) -> (i32, i32, i32) {
    %c0_i32 = arith.constant 0 : i32
    %c0_i32_0 = arith.constant 0 : i32
    %c0_i32_1 = arith.constant 0 : i32
    return %arg0, %c0_i32, %c0_i32_0 : i32, i32, i32
  }
  func.func @transform_3(%arg0: i32) -> (i32, i32, i32) {
    %c0_i32 = arith.constant 0 : i32
    %c0_i32_0 = arith.constant 0 : i32
    %c0_i32_1 = arith.constant 0 : i32
    return %arg0, %c0_i32, %c0_i32_0 : i32, i32, i32
  }
  func.func @transform_4(%arg0: i32) -> (i32, i32, i32) {
    %c0_i32 = arith.constant 0 : i32
    %c0_i32_0 = arith.constant 0 : i32
    %c0_i32_1 = arith.constant 0 : i32
    return %arg0, %c0_i32, %c0_i32_0 : i32, i32, i32
  }
  func.func @transform_5(%arg0: i32) -> (i32, i32, i32) {
    %c0_i32 = arith.constant 0 : i32
    %c0_i32_0 = arith.constant 0 : i32
    %c0_i32_1 = arith.constant 0 : i32
    return %arg0, %c0_i32, %c0_i32_0 : i32, i32, i32
  }
  func.func @transform_6(%arg0: i32) -> (i32, i32, i32) {
    %c0_i32 = arith.constant 0 : i32
    %c0_i32_0 = arith.constant 0 : i32
    %c0_i32_1 = arith.constant 0 : i32
    return %arg0, %c0_i32, %c0_i32_0 : i32, i32, i32
  }
  func.func @transform_7(%arg0: i32) -> (i32, i32) {
    %c0_i32 = arith.constant 0 : i32
    %c0_i32_0 = arith.constant 0 : i32
    %c0_i32_1 = arith.constant 0 : i32
    return %c0_i32, %c0_i32_0 : i32, i32
  }
}

module attributes {stable_mosaic.version = 11 : i64} {
  func.func @_last_kernel(%arg0: memref<8x256xf32, #tpu.memory_space<vmem>>, %arg1: memref<256x1024xbf16, #tpu.memory_space<vmem>>, %arg2: memref<1x1024xf32, #tpu.memory_space<vmem>>, %arg3: memref<8x1024xf32, #tpu.memory_space<vmem>>) attributes {dimension_semantics = [], scalar_prefetch = 0 : i64, scratch_operands = 0 : i64, tpu.core_type = #tpu.core_type<tc>} {
    %c0 = arith.constant 0 : index
    %c0_0 = arith.constant 0 : index
    %0 = vector.load %arg0[%c0, %c0_0] : memref<8x256xf32, #tpu.memory_space<vmem>>, vector<8x256xf32>
    %1 = arith.truncf %0 : vector<8x256xf32> to vector<8x256xbf16>
    %c0_1 = arith.constant 0 : index
    %c0_2 = arith.constant 0 : index
    %2 = vector.load %arg1[%c0_1, %c0_2] : memref<256x1024xbf16, #tpu.memory_space<vmem>>, vector<256x1024xbf16>
    %cst = arith.constant dense<0.000000e+00> : vector<8x1024xf32>
    %3 = tpu.matmul %1, %2, %cst {dimension_numbers = #tpu.dot_dimension_numbers<[1], [0], [0], [1], [0, 0, 1, 1], [], []>} : vector<8x256xbf16>, vector<256x1024xbf16>, vector<8x1024xf32> -> vector<8x1024xf32>
    %c0_3 = arith.constant 0 : index
    %c0_4 = arith.constant 0 : index
    %4 = vector.load %arg2[%c0_3, %c0_4] : memref<1x1024xf32, #tpu.memory_space<vmem>>, vector<1x1024xf32>
    %5 = vector.broadcast %4 : vector<1x1024xf32> to vector<8x1024xf32>
    %6 = arith.addf %3, %5 : vector<8x1024xf32>
    %cst_5 = arith.constant 0.000000e+00 : f32
    %7 = vector.broadcast %cst_5 : f32 to vector<8x1024xf32>
    %8 = arith.maximumf %6, %7 : vector<8x1024xf32>
    %c0_6 = arith.constant 0 : index
    %c0_7 = arith.constant 0 : index
    %9 = vector.load %arg3[%c0_6, %c0_7] : memref<8x1024xf32, #tpu.memory_space<vmem>>, vector<8x1024xf32>
    tpu.vector_store %arg3[%c0_6, %c0_7], %8 {strides = array<i32>} : memref<8x1024xf32, #tpu.memory_space<vmem>>, vector<8x1024xf32>,
    return
  }
}

</mosaic_0001>

<llo_original>
// kernel: _lambda_.9
$region0: #{_lambda_.9}
  #allocation0 [shape = 'u32[]', space=smem, size = 0x4, offset = 0x4, fixed_abs, tag = 'smem constant byte address 0x4 - core index']
  #allocation1 [shape = 'u32[72,128]{1,0:T(1,128)}', space=vmem, size = 0x9000, scoped, tag = 'internal scratch']
  %s0 = inlined_call_operand.vmem [shape: f32[128,128], index: 0, kind: input, shape index: {}]
  %s1 = inlined_call_operand.vmem [shape: bf16[128,128], index: 1, kind: input, shape index: {}]
  %s2 = inlined_call_operand.vmem [shape: f32[1,128], index: 2, kind: input, shape index: {}]
  %s3 = inlined_call_operand.vmem [shape: bf16[288,128], index: 3, kind: input, shape index: {}]
  %s4 = inlined_call_operand.vmem [shape: f32[16,128], index: 4, kind: input, shape index: {}]
  %s5 = inlined_call_operand.vmem [shape: bf16[128,128], index: 5, kind: input, shape index: {}]
  %s6 = inlined_call_operand.hbm [shape: f32[1,128], index: 6, kind: input, shape index: {}]
  %s7 = inlined_call_operand.vmem [shape: f32[32,128], index: 7, kind: output, shape index: {}]
  %s8 = sld [smem:[#allocation0]]
  $region42: #{_lambda_.9} parent=0
    _
  %s10 = ssub.s32 1, %s8
  %s11 = scalar_select 0, %s10, %s8
  $region1: #{_lambda_.9} parent=0
    #allocation2 [shape = 'u8[512]{0}', space=vmem, size = 0x400, scoped, tag = 'input window, operand 6, single buffered']
    #allocation3 [shape = 's32[1]{0}', space=sflag, size = 0x4, scoped, tag = 'scoped memory for _lambda_.9']
    %12 = vsyncpa [#allocation3], 0
    // Predicated region
    $region2: #{_lambda_.9} parent=1 // pred_check
      _
    $region3: #{_lambda_.9} parent=1 // pred_check_branch
      %14 = sbr.rel (0) target = $region5
    $region4: #{_lambda_.9} parent=1 // pred_region
      _
    $region5: #{_lambda_.9} parent=1 // pred_fallthru
      _
    // Predicated region
    $region6: #{_lambda_.9} parent=1 // pred_check
      _
    $region7: #{_lambda_.9} parent=1 // pred_check_branch
      %16 = sbr.rel (0) target = $region9
    $region8: #{_lambda_.9} parent=1 // pred_region
      _
    $region9: #{_lambda_.9} parent=1 // pred_fallthru
      _
    // Predicated region
    $region10: #{_lambda_.9} parent=1 // pred_check
      _
    $region11: #{_lambda_.9} parent=1 // pred_check_branch
      %18 = sbr.rel (0) target = $region13
    $region12: #{_lambda_.9} parent=1 // pred_region
      _
    $region13: #{_lambda_.9} parent=1 // pred_fallthru
      _
    // Predicated region
    $region14: #{_lambda_.9} parent=1 // pred_check
      _
    $region15: #{_lambda_.9} parent=1 // pred_check_branch
      %20 = sbr.rel (0) target = $region17
    $region16: #{_lambda_.9} parent=1 // pred_region
      _
    $region17: #{_lambda_.9} parent=1 // pred_fallthru
      _
    // Predicated region
    $region18: #{_lambda_.9} parent=1 // pred_check
      _
    $region19: #{_lambda_.9} parent=1 // pred_check_branch
      %22 = sbr.rel (0) target = $region21
    $region20: #{_lambda_.9} parent=1 // pred_region
      _
    $region21: #{_lambda_.9} parent=1 // pred_fallthru
      _
    // Predicated region
    $region22: #{_lambda_.9} parent=1 // pred_check
      _
    $region23: #{_lambda_.9} parent=1 // pred_check_branch
      %24 = sbr.rel (0) target = $region25
    $region24: #{_lambda_.9} parent=1 // pred_region
      _
    $region25: #{_lambda_.9} parent=1 // pred_fallthru
      _
    // Predicated region
    $region26: #{_lambda_.9} parent=1 // pred_check
      _
    $region27: #{_lambda_.9} parent=1 // pred_check_branch
      %26 = sbr.rel (0) target = $region29
    $region28: #{_lambda_.9} parent=1 // pred_region
      %28 = vsyncadd [#allocation3], 0
      %s30 = sshll.u32 %s6, 4
      %s31 = int_to_ptr.hbm [resolvable:$true] %s30
      %s32 = sshll.u32 [#allocation2], 4
      %s33 = int_to_ptr.vmem [resolvable:$true] %s32
      %35 = dma.hbm_to_vmem [thread:$0]  %s31, 16, %s33, [#allocation3]
    $region29: #{_lambda_.9} parent=1 // pred_fallthru
      _
    // Predicated region
    $region30: #{_lambda_.9} parent=1 // pred_check
      _
    $region31: #{_lambda_.9} parent=1 // pred_check_branch
      %37 = sbr.rel (0) target = $region33
    $region32: #{_lambda_.9} parent=1 // pred_region
      %39 = dma.done [#allocation3], 16
    $region33: #{_lambda_.9} parent=1 // pred_fallthru
      _
    %v40 = vld [vmem:[%s0] sm:$0xff]
    %v41 = vld [vmem:[%s0 + $0x8] sm:$0xff]
    %v42 = vld [vmem:[%s0 + $0x10] sm:$0xff]
    %v43 = vld [vmem:[%s0 + $0x18] sm:$0xff]
    %v44 = vld [vmem:[%s0 + $0x20] sm:$0xff]
    %v45 = vld [vmem:[%s0 + $0x28] sm:$0xff]
    %v46 = vld [vmem:[%s0 + $0x30] sm:$0xff]
    %v47 = vld [vmem:[%s0 + $0x38] sm:$0xff]
    %v48 = vld [vmem:[%s0 + $0x40] sm:$0xff]
    %v49 = vld [vmem:[%s0 + $0x48] sm:$0xff]
    %v50 = vld [vmem:[%s0 + $0x50] sm:$0xff]
    %v51 = vld [vmem:[%s0 + $0x58] sm:$0xff]
    %v52 = vld [vmem:[%s0 + $0x60] sm:$0xff]
    %v53 = vld [vmem:[%s0 + $0x68] sm:$0xff]
    %v54 = vld [vmem:[%s0 + $0x70] sm:$0xff]
    %v55 = vld [vmem:[%s0 + $0x78] sm:$0xff]
    %v56 = vld [vmem:[%s1] sm:$0xf]
    %v57 = vld [vmem:[%s1 + $0x4] sm:$0xf]
    %v58 = vld [vmem:[%s1 + $0x8] sm:$0xf]
    %v59 = vld [vmem:[%s1 + $0xc] sm:$0xf]
    %v60 = vld [vmem:[%s1 + $0x10] sm:$0xf]
    %v61 = vld [vmem:[%s1 + $0x14] sm:$0xf]
    %v62 = vld [vmem:[%s1 + $0x18] sm:$0xf]
    %v63 = vld [vmem:[%s1 + $0x1c] sm:$0xf]
    %v64 = vld [vmem:[%s1 + $0x20] sm:$0xf]
    %v65 = vld [vmem:[%s1 + $0x24] sm:$0xf]
    %v66 = vld [vmem:[%s1 + $0x28] sm:$0xf]
    %v67 = vld [vmem:[%s1 + $0x2c] sm:$0xf]
    %v68 = vld [vmem:[%s1 + $0x30] sm:$0xf]
    %v69 = vld [vmem:[%s1 + $0x34] sm:$0xf]
    %v70 = vld [vmem:[%s1 + $0x38] sm:$0xf]
    %v71 = vld [vmem:[%s1 + $0x3c] sm:$0xf]
    %v72 = vld [vmem:[%s2] sm:$0x1]
    %v73 = vld [vmem:[%s3] sm:$0xf]
    %v74 = vld [vmem:[%s3 + $0x4] sm:$0xf]
    %v75 = vld [vmem:[%s3 + $0x8] sm:$0xf]
    %v76 = vld [vmem:[%s3 + $0xc] sm:$0xf]
    %v77 = vld [vmem:[%s3 + $0x10] sm:$0xf]
    %v78 = vld [vmem:[%s3 + $0x14] sm:$0xf]
    %v79 = vld [vmem:[%s3 + $0x18] sm:$0xf]
    %v80 = vld [vmem:[%s3 + $0x1c] sm:$0xf]
    %v81 = vld [vmem:[%s3 + $0x20] sm:$0xf]
    %v82 = vld [vmem:[%s3 + $0x24] sm:$0xf]
    %v83 = vld [vmem:[%s3 + $0x28] sm:$0xf]
    %v84 = vld [vmem:[%s3 + $0x2c] sm:$0xf]
    %v85 = vld [vmem:[%s3 + $0x30] sm:$0xf]
    %v86 = vld [vmem:[%s3 + $0x34] sm:$0xf]
    %v87 = vld [vmem:[%s3 + $0x38] sm:$0xf]
    %v88 = vld [vmem:[%s3 + $0x3c] sm:$0xf]
    %v89 = vld [vmem:[%s3 + $0x40] sm:$0xf]
    %v90 = vld [vmem:[%s3 + $0x44] sm:$0xf]
    %v91 = vld [vmem:[%s3 + $0x48] sm:$0xf]
    %v92 = vld [vmem:[%s3 + $0x4c] sm:$0xf]
    %v93 = vld [vmem:[%s3 + $0x50] sm:$0xf]
    %v94 = vld [vmem:[%s3 + $0x54] sm:$0xf]
    %v95 = vld [vmem:[%s3 + $0x58] sm:$0xf]
    %v96 = vld [vmem:[%s3 + $0x5c] sm:$0xf]
    %v97 = vld [vmem:[%s3 + $0x60] sm:$0xf]
    %v98 = vld [vmem:[%s3 + $0x64] sm:$0xf]
    %v99 = vld [vmem:[%s3 + $0x68] sm:$0xf]
    %v100 = vld [vmem:[%s3 + $0x6c] sm:$0xf]
    %v101 = vld [vmem:[%s3 + $0x70] sm:$0xf]
    %v102 = vld [vmem:[%s3 + $0x74] sm:$0xf]
    %v103 = vld [vmem:[%s3 + $0x78] sm:$0xf]
    %v104 = vld [vmem:[%s3 + $0x7c] sm:$0xf]
    %v105 = vld [vmem:[%s3 + $0x80] sm:$0xf]
    %v106 = vld [vmem:[%s3 + $0x84] sm:$0xf]
    %v107 = vld [vmem:[%s3 + $0x88] sm:$0xf]
    %v108 = vld [vmem:[%s3 + $0x8c] sm:$0xf]
    %v109 = vld [vmem:[%s4] sm:$0xff]
    %v110 = vld [vmem:[%s4 + $0x8] sm:$0xff]
    %v111 = vld [vmem:[%s5] sm:$0xf]
    %v112 = vld [vmem:[%s5 + $0x4] sm:$0xf]
    %v113 = vld [vmem:[%s5 + $0x8] sm:$0xf]
    %v114 = vld [vmem:[%s5 + $0xc] sm:$0xf]
    %v115 = vld [vmem:[%s5 + $0x10] sm:$0xf]
    %v116 = vld [vmem:[%s5 + $0x14] sm:$0xf]
    %v117 = vld [vmem:[%s5 + $0x18] sm:$0xf]
    %v118 = vld [vmem:[%s5 + $0x1c] sm:$0xf]
    %v119 = vld [vmem:[%s5 + $0x20] sm:$0xf]
    %v120 = vld [vmem:[%s5 + $0x24] sm:$0xf]
    %v121 = vld [vmem:[%s5 + $0x28] sm:$0xf]
    %v122 = vld [vmem:[%s5 + $0x2c] sm:$0xf]
    %v123 = vld [vmem:[%s5 + $0x30] sm:$0xf]
    %v124 = vld [vmem:[%s5 + $0x34] sm:$0xf]
    %v125 = vld [vmem:[%s5 + $0x38] sm:$0xf]
    %v126 = vld [vmem:[%s5 + $0x3c] sm:$0xf]
    %v127 = vld [vmem:[#allocation2] sm:$0x1]
    %v128 = vpack.c.bf16 %v41, %v40
    %v129 = vpack.c.bf16 %v43, %v42
    %v130 = vpack.c.bf16 %v45, %v44
    %v131 = vpack.c.bf16 %v47, %v46
    %v132 = vpack.c.bf16 %v49, %v48
    %v133 = vpack.c.bf16 %v51, %v50
    %v134 = vpack.c.bf16 %v53, %v52
    %v135 = vpack.c.bf16 %v55, %v54
    %v137 = vperm.slane %v72, 0
    %v155 = vunpack.c.l.b16 %v56
    %v156 = vunpack.c.l.b16 %v57
    %v157 = vunpack.c.l.b16 %v58
    %v158 = vunpack.c.l.b16 %v59
    %v159 = vunpack.c.l.b16 %v60
    %v160 = vunpack.c.l.b16 %v61
    %v161 = vunpack.c.l.b16 %v62
    %v162 = vunpack.c.l.b16 %v63
    %v163 = vunpack.c.l.b16 %v64
    %v164 = vunpack.c.l.b16 %v65
    %v165 = vunpack.c.l.b16 %v66
    %v166 = vunpack.c.l.b16 %v67
    %v167 = vunpack.c.l.b16 %v68
    %v168 = vunpack.c.l.b16 %v69
    %v169 = vunpack.c.l.b16 %v70
    %v170 = vunpack.c.l.b16 %v71
    %v171 = vpack.c.b16 %v156, %v155
    %v172 = vpack.c.b16 %v158, %v157
    %v173 = vpack.c.b16 %v160, %v159
    %v174 = vpack.c.b16 %v162, %v161
    %v175 = vpack.c.b16 %v164, %v163
    %v176 = vpack.c.b16 %v166, %v165
    %v177 = vpack.c.b16 %v168, %v167
    %v178 = vpack.c.b16 %v170, %v169
    %187 = vmatpush.bf16.msra.mxu0 %v178
    %188 = vmatpush.bf16.msra.mxu0 %v177
    %189 = vmatpush.bf16.msra.mxu0 %v176
    %190 = vmatpush.bf16.msra.mxu0 %v175
    %191 = vmatpush.bf16.msra.mxu0 %v174
    %192 = vmatpush.bf16.msra.mxu0 %v173
    %193 = vmatpush.bf16.msra.mxu0 %v172
    %194 = vmatpush.bf16.msra.mxu0 %v171
    %195 = vmatmul.bf16.gmra.mxu0 %v128
    %v196 = vpop.f32.mrf.mxu0
    %v197 = vadd.f32 %v137, %v196
    %v198 = vpop.f32.mrf.mxu0
    %v199 = vadd.f32 %v137, %v198
    %200 = vmatmul.bf16.gmra.mxu0 %v129
    %v201 = vpop.f32.mrf.mxu0
    %v202 = vadd.f32 %v137, %v201
    %v203 = vpop.f32.mrf.mxu0
    %v204 = vadd.f32 %v137, %v203
    %205 = vmatmul.bf16.gmra.mxu0 %v130
    %v206 = vpop.f32.mrf.mxu0
    %v207 = vadd.f32 %v137, %v206
    %v208 = vpop.f32.mrf.mxu0
    %v209 = vadd.f32 %v137, %v208
    %210 = vmatmul.bf16.gmra.mxu0 %v131
    %v211 = vpop.f32.mrf.mxu0
    %v212 = vadd.f32 %v137, %v211
    %v213 = vpop.f32.mrf.mxu0
    %v214 = vadd.f32 %v137, %v213
    %215 = vmatmul.bf16.gmra.mxu0 %v132
    %v216 = vpop.f32.mrf.mxu0
    %v217 = vadd.f32 %v137, %v216
    %v218 = vpop.f32.mrf.mxu0
    %v219 = vadd.f32 %v137, %v218
    %220 = vmatmul.bf16.gmra.mxu0 %v133
    %v221 = vpop.f32.mrf.mxu0
    %v222 = vadd.f32 %v137, %v221
    %v223 = vpop.f32.mrf.mxu0
    %v224 = vadd.f32 %v137, %v223
    %225 = vmatmul.bf16.gmra.mxu0 %v134
    %v226 = vpop.f32.mrf.mxu0
    %v227 = vadd.f32 %v137, %v226
    %v228 = vpop.f32.mrf.mxu0
    %v229 = vadd.f32 %v137, %v228
    %230 = vmatmul.bf16.gmra.mxu0 %v135
    %v231 = vpop.f32.mrf.mxu0
    %v232 = vadd.f32 %v137, %v231
    %v233 = vpop.f32.mrf.mxu0
    %v234 = vadd.f32 %v137, %v233
    %235 = vdwg.mxu0
    %v236 = vmax.f32 %v197, 0.0
    %v237 = vmax.f32 %v199, 0.0
    %v238 = vmax.f32 %v202, 0.0
    %v239 = vmax.f32 %v204, 0.0
    %v240 = vmax.f32 %v207, 0.0
    %v241 = vmax.f32 %v209, 0.0
    %v242 = vmax.f32 %v212, 0.0
    %v243 = vmax.f32 %v214, 0.0
    %v244 = vmax.f32 %v217, 0.0
    %v245 = vmax.f32 %v219, 0.0
    %v246 = vmax.f32 %v222, 0.0
    %v247 = vmax.f32 %v224, 0.0
    %v248 = vmax.f32 %v227, 0.0
    %v249 = vmax.f32 %v229, 0.0
    %v250 = vmax.f32 %v232, 0.0
    %v251 = vmax.f32 %v234, 0.0
    %v252 = vpack.c.bf16 %v237, %v236
    %v253 = vpack.c.bf16 %v239, %v238
    %v254 = vpack.c.bf16 %v241, %v240
    %v255 = vpack.c.bf16 %v243, %v242
    %v256 = vpack.c.bf16 %v245, %v244
    %v257 = vpack.c.bf16 %v247, %v246
    %v258 = vpack.c.bf16 %v249, %v248
    %v259 = vpack.c.bf16 %v251, %v250
    %v296 = vunpack.c.l.b16 %v73
    %v297 = vunpack.c.l.b16 %v74
    %v298 = vunpack.c.l.b16 %v75
    %v299 = vunpack.c.l.b16 %v76
    %v300 = vunpack.c.l.b16 %v77
    %v301 = vunpack.c.l.b16 %v78
    %v302 = vunpack.c.l.b16 %v79
    %v303 = vunpack.c.l.b16 %v80
    %v304 = vunpack.c.l.b16 %v81
    %v305 = vunpack.c.l.b16 %v82
    %v306 = vunpack.c.l.b16 %v83
    %v307 = vunpack.c.l.b16 %v84
    %v308 = vunpack.c.l.b16 %v85
    %v309 = vunpack.c.l.b16 %v86
    %v310 = vunpack.c.l.b16 %v87
    %v311 = vunpack.c.l.b16 %v88
    %v312 = vunpack.c.l.b16 %v89
    %v313 = vunpack.c.l.b16 %v90
    %v314 = vunpack.c.l.b16 %v91
    %v315 = vunpack.c.l.b16 %v92
    %v316 = vunpack.c.l.b16 %v93
    %v317 = vunpack.c.l.b16 %v94
    %v318 = vunpack.c.l.b16 %v95
    %v319 = vunpack.c.l.b16 %v96
    %v320 = vunpack.c.l.b16 %v97
    %v321 = vunpack.c.l.b16 %v98
    %v322 = vunpack.c.l.b16 %v99
    %v323 = vunpack.c.l.b16 %v100
    %v324 = vunpack.c.l.b16 %v101
    %v325 = vunpack.c.l.b16 %v102
    %v326 = vunpack.c.l.b16 %v103
    %v327 = vunpack.c.l.b16 %v104
    %v328 = vunpack.c.l.b16 %v105
    %v329 = vunpack.c.l.b16 %v106
    %v330 = vunpack.c.l.b16 %v107
    %v331 = vunpack.c.l.b16 %v108
    %v332 = vpack.c.b16 %v297, %v296
    %v333 = vpack.c.b16 %v299, %v298
    %v334 = vpack.c.b16 %v301, %v300
    %v335 = vpack.c.b16 %v303, %v302
    %v336 = vpack.c.b16 %v305, %v304
    %v337 = vpack.c.b16 %v307, %v306
    %v338 = vpack.c.b16 %v309, %v308
    %v339 = vpack.c.b16 %v311, %v310
    %v340 = vpack.c.b16 %v313, %v312
    %v341 = vpack.c.b16 %v315, %v314
    %v342 = vpack.c.b16 %v317, %v316
    %v343 = vpack.c.b16 %v319, %v318
    %v344 = vpack.c.b16 %v321, %v320
    %v345 = vpack.c.b16 %v323, %v322
    %v346 = vpack.c.b16 %v325, %v324
    %v347 = vpack.c.b16 %v327, %v326
    %v348 = vpack.c.b16 %v329, %v328
    %v349 = vpack.c.b16 %v331, %v330
    %368 = vmatpush.bf16.msra.mxu0 %v259
    %369 = vmatpush.bf16.msra.mxu0 %v258
    %370 = vmatpush.bf16.msra.mxu0 %v257
    %371 = vmatpush.bf16.msra.mxu0 %v256
    %372 = vmatpush.bf16.msra.mxu0 %v255
    %373 = vmatpush.bf16.msra.mxu0 %v254
    %374 = vmatpush.bf16.msra.mxu0 %v253
    %375 = vmatpush.bf16.msra.mxu0 %v252
    %376 = vmatmul.bf16.gmra.mxu0 %v332
    %v377 = vpop.f32.mrf.mxu0
    %v378 = vadd.f32 0.0, %v377
    %v379 = vpop.f32.mrf.mxu0
    %v380 = vadd.f32 0.0, %v379
    %381 = vmatmul.bf16.gmra.mxu0 %v333
    %v382 = vpop.f32.mrf.mxu0
    %v383 = vadd.f32 0.0, %v382
    %v384 = vpop.f32.mrf.mxu0
    %v385 = vadd.f32 0.0, %v384
    %386 = vmatmul.bf16.gmra.mxu0 %v334
    %v387 = vpop.f32.mrf.mxu0
    %v388 = vadd.f32 0.0, %v387
    %v389 = vpop.f32.mrf.mxu0
    %v390 = vadd.f32 0.0, %v389
    %391 = vmatmul.bf16.gmra.mxu0 %v335
    %v392 = vpop.f32.mrf.mxu0
    %v393 = vadd.f32 0.0, %v392
    %v394 = vpop.f32.mrf.mxu0
    %v395 = vadd.f32 0.0, %v394
    %396 = vmatmul.bf16.gmra.mxu0 %v336
    %v397 = vpop.f32.mrf.mxu0
    %v398 = vadd.f32 0.0, %v397
    %v399 = vpop.f32.mrf.mxu0
    %v400 = vadd.f32 0.0, %v399
    %401 = vmatmul.bf16.gmra.mxu0 %v337
    %v402 = vpop.f32.mrf.mxu0
    %v403 = vadd.f32 0.0, %v402
    %v404 = vpop.f32.mrf.mxu0
    %v405 = vadd.f32 0.0, %v404
    %406 = vmatmul.bf16.gmra.mxu0 %v338
    %v407 = vpop.f32.mrf.mxu0
    %v408 = vadd.f32 0.0, %v407
    %v409 = vpop.f32.mrf.mxu0
    %v410 = vadd.f32 0.0, %v409
    %411 = vmatmul.bf16.gmra.mxu0 %v339
    %v412 = vpop.f32.mrf.mxu0
    %v413 = vadd.f32 0.0, %v412
    %v414 = vpop.f32.mrf.mxu0
    %v415 = vadd.f32 0.0, %v414
    %416 = vmatmul.bf16.gmra.mxu0 %v340
    %v417 = vpop.f32.mrf.mxu0
    %v418 = vadd.f32 0.0, %v417
    %v419 = vpop.f32.mrf.mxu0
    %v420 = vadd.f32 0.0, %v419
    %421 = vmatmul.bf16.gmra.mxu0 %v341
    %v422 = vpop.f32.mrf.mxu0
    %v423 = vadd.f32 0.0, %v422
    %v424 = vpop.f32.mrf.mxu0
    %v425 = vadd.f32 0.0, %v424
    %426 = vmatmul.bf16.gmra.mxu0 %v342
    %v427 = vpop.f32.mrf.mxu0
    %v428 = vadd.f32 0.0, %v427
    %v429 = vpop.f32.mrf.mxu0
    %v430 = vadd.f32 0.0, %v429
    %431 = vmatmul.bf16.gmra.mxu0 %v343
    %v432 = vpop.f32.mrf.mxu0
    %v433 = vadd.f32 0.0, %v432
    %v434 = vpop.f32.mrf.mxu0
    %v435 = vadd.f32 0.0, %v434
    %436 = vmatmul.bf16.gmra.mxu0 %v344
    %v437 = vpop.f32.mrf.mxu0
    %v438 = vadd.f32 0.0, %v437
    %v439 = vpop.f32.mrf.mxu0
    %v440 = vadd.f32 0.0, %v439
    %441 = vmatmul.bf16.gmra.mxu0 %v345
    %v442 = vpop.f32.mrf.mxu0
    %v443 = vadd.f32 0.0, %v442
    %v444 = vpop.f32.mrf.mxu0
    %v445 = vadd.f32 0.0, %v444
    %446 = vmatmul.bf16.gmra.mxu0 %v346
    %v447 = vpop.f32.mrf.mxu0
    %v448 = vadd.f32 0.0, %v447
    %v449 = vpop.f32.mrf.mxu0
    %v450 = vadd.f32 0.0, %v449
    %451 = vmatmul.bf16.gmra.mxu0 %v347
    %v452 = vpop.f32.mrf.mxu0
    %v453 = vadd.f32 0.0, %v452
    %v454 = vpop.f32.mrf.mxu0
    %v455 = vadd.f32 0.0, %v454
    %456 = vmatmul.bf16.gmra.mxu0 %v348
    %v457 = vpop.f32.mrf.mxu0
    %v458 = vadd.f32 0.0, %v457
    %v459 = vpop.f32.mrf.mxu0
    %v460 = vadd.f32 0.0, %v459
    %461 = vmatmul.bf16.gmra.mxu0 %v349
    %v462 = vpop.f32.mrf.mxu0
    %v463 = vadd.f32 0.0, %v462
    %v464 = vpop.f32.mrf.mxu0
    %v465 = vadd.f32 0.0, %v464
    %466 = vdwg.mxu0
    %v467 = vperm.slane %v109, 0
    %v468 = vmul.f32 %v378, %v467
    %v469 = vmul.f32 %v380, %v467
    %v470 = vmul.f32 %v383, %v467
    %v471 = vmul.f32 %v385, %v467
    %v472 = vperm.slane %v109, 1
    %v473 = vmul.f32 %v388, %v472
    %v474 = vmul.f32 %v390, %v472
    %v475 = vmul.f32 %v393, %v472
    %v476 = vmul.f32 %v395, %v472
    %v477 = vadd.f32 %v468, %v473
    %v478 = vadd.f32 %v469, %v474
    %v479 = vadd.f32 %v470, %v475
    %v480 = vadd.f32 %v471, %v476
    %v481 = vperm.slane %v109, 2
    %v482 = vmul.f32 %v398, %v481
    %v483 = vmul.f32 %v400, %v481
    %v484 = vmul.f32 %v403, %v481
    %v485 = vmul.f32 %v405, %v481
    %v486 = vadd.f32 %v477, %v482
    %v487 = vadd.f32 %v478, %v483
    %v488 = vadd.f32 %v479, %v484
    %v489 = vadd.f32 %v480, %v485
    %v490 = vperm.slane %v109, 3
    %v491 = vmul.f32 %v408, %v490
    %v492 = vmul.f32 %v410, %v490
    %v493 = vmul.f32 %v413, %v490
    %v494 = vmul.f32 %v415, %v490
    %v495 = vadd.f32 %v486, %v491
    %v496 = vadd.f32 %v487, %v492
    %v497 = vadd.f32 %v488, %v493
    %v498 = vadd.f32 %v489, %v494
    %v499 = vperm.slane %v109, 4
    %v500 = vmul.f32 %v418, %v499
    %v501 = vmul.f32 %v420, %v499
    %v502 = vmul.f32 %v423, %v499
    %v503 = vmul.f32 %v425, %v499
    %v504 = vadd.f32 %v495, %v500
    %v505 = vadd.f32 %v496, %v501
    %v506 = vadd.f32 %v497, %v502
    %v507 = vadd.f32 %v498, %v503
    %v508 = vperm.slane %v109, 5
    %v509 = vmul.f32 %v428, %v508
    %v510 = vmul.f32 %v430, %v508
    %v511 = vmul.f32 %v433, %v508
    %v512 = vmul.f32 %v435, %v508
    %v513 = vadd.f32 %v504, %v509
    %v514 = vadd.f32 %v505, %v510
    %v515 = vadd.f32 %v506, %v511
    %v516 = vadd.f32 %v507, %v512
    %v517 = vperm.slane %v109, 6
    %v518 = vmul.f32 %v438, %v517
    %v519 = vmul.f32 %v440, %v517
    %v520 = vmul.f32 %v443, %v517
    %v521 = vmul.f32 %v445, %v517
    %v522 = vadd.f32 %v513, %v518
    %v523 = vadd.f32 %v514, %v519
    %v524 = vadd.f32 %v515, %v520
    %v525 = vadd.f32 %v516, %v521
    %v526 = vperm.slane %v109, 7
    %v527 = vmul.f32 %v448, %v526
    %v528 = vmul.f32 %v450, %v526
    %v529 = vmul.f32 %v453, %v526
    %v530 = vmul.f32 %v455, %v526
    %v531 = vadd.f32 %v522, %v527
    %v532 = vadd.f32 %v523, %v528
    %v533 = vadd.f32 %v524, %v529
    %v534 = vadd.f32 %v525, %v530
    %v535 = vperm.slane %v110, 0
    %v536 = vmul.f32 %v458, %v535
    %v537 = vmul.f32 %v460, %v535
    %v538 = vmul.f32 %v463, %v535
    %v539 = vmul.f32 %v465, %v535
    %v540 = vadd.f32 %v531, %v536
    %v541 = vadd.f32 %v532, %v537
    %v542 = vadd.f32 %v533, %v538
    %v543 = vadd.f32 %v534, %v539
    %v544 = vpack.c.bf16 %v541, %v540
    %v545 = vpack.c.bf16 %v543, %v542
    %v547 = vperm.slane %v127, 0
    %v565 = vunpack.c.l.b16 %v111
    %v566 = vunpack.c.l.b16 %v112
    %v567 = vunpack.c.l.b16 %v113
    %v568 = vunpack.c.l.b16 %v114
    %v569 = vunpack.c.l.b16 %v115
    %v570 = vunpack.c.l.b16 %v116
    %v571 = vunpack.c.l.b16 %v117
    %v572 = vunpack.c.l.b16 %v118
    %v573 = vunpack.c.l.b16 %v119
    %v574 = vunpack.c.l.b16 %v120
    %v575 = vunpack.c.l.b16 %v121
    %v576 = vunpack.c.l.b16 %v122
    %v577 = vunpack.c.l.b16 %v123
    %v578 = vunpack.c.l.b16 %v124
    %v579 = vunpack.c.l.b16 %v125
    %v580 = vunpack.c.l.b16 %v126
    %v581 = vpack.c.b16 %v566, %v565
    %v582 = vpack.c.b16 %v568, %v567
    %v583 = vpack.c.b16 %v570, %v569
    %v584 = vpack.c.b16 %v572, %v571
    %v585 = vpack.c.b16 %v574, %v573
    %v586 = vpack.c.b16 %v576, %v575
    %v587 = vpack.c.b16 %v578, %v577
    %v588 = vpack.c.b16 %v580, %v579
    %597 = vmatpush.bf16.msra.mxu0 %v588
    %598 = vmatpush.bf16.msra.mxu0 %v587
    %599 = vmatpush.bf16.msra.mxu0 %v586
    %600 = vmatpush.bf16.msra.mxu0 %v585
    %601 = vmatpush.bf16.msra.mxu0 %v584
    %602 = vmatpush.bf16.msra.mxu0 %v583
    %603 = vmatpush.bf16.msra.mxu0 %v582
    %604 = vmatpush.bf16.msra.mxu0 %v581
    %605 = vmatmul.bf16.gmra.mxu0 %v544
    %v606 = vpop.f32.mrf.mxu0
    %v607 = vadd.f32 %v547, %v606
    %v608 = vpop.f32.mrf.mxu0
    %v609 = vadd.f32 %v547, %v608
    %610 = vmatmul.bf16.gmra.mxu0 %v545
    %v611 = vpop.f32.mrf.mxu0
    %v612 = vadd.f32 %v547, %v611
    %v613 = vpop.f32.mrf.mxu0
    %v614 = vadd.f32 %v547, %v613
    %615 = vdwg.mxu0
    %v616 = vmax.f32 %v607, 0.0
    %v617 = vmax.f32 %v609, 0.0
    %v618 = vmax.f32 %v612, 0.0
    %v619 = vmax.f32 %v614, 0.0
    %620 = vst [vmem:[%s7] sm:$0xff] %v616
    %621 = vst [vmem:[%s7 + $0x8] sm:$0xff] %v617
    %622 = vst [vmem:[%s7 + $0x10] sm:$0xff] %v618
    %623 = vst [vmem:[%s7 + $0x18] sm:$0xff] %v619
    // Predicated region
    $region34: #{_lambda_.9} parent=1 // pred_check
      _
    $region35: #{_lambda_.9} parent=1 // pred_check_branch
      %625 = sbr.rel (0) target = $region37
    $region36: #{_lambda_.9} parent=1 // pred_region
      _
    $region37: #{_lambda_.9} parent=1 // pred_fallthru
      _
    // Predicated region
    $region38: #{_lambda_.9} parent=1 // pred_check
      _
    $region39: #{_lambda_.9} parent=1 // pred_check_branch
      %627 = sbr.rel (0) target = $region41
    $region40: #{_lambda_.9} parent=1 // pred_region
      _
    $region41: #{_lambda_.9} parent=1 // pred_fallthru
      _
    %628 = vsyncpa [#allocation3], 1

// kernel: _lambda_.10
$region0: #{_lambda_.10}
  #allocation0 [shape = 'u32[]', space=smem, size = 0x4, offset = 0x4, fixed_abs, tag = 'smem constant byte address 0x4 - core index']
  #allocation1 [shape = 'u32[72,128]{1,0:T(1,128)}', space=vmem, size = 0x9000, scoped, tag = 'internal scratch']
  #allocation2 [shape = 'f32[32,128]{1,0:T(8,128)}', space=vmem, size = 0x4000, scoped, tag = 'scratch operand']
  %s0 = inlined_call_operand.vmem [shape: f32[32,128], index: 0, kind: input, shape index: {}]
  %s1 = inlined_call_operand.vmem [shape: bf16[288,32], index: 1, kind: input, shape index: {}]
  %s2 = inlined_call_operand.vmem [shape: bf16[3,128,128], index: 2, kind: input, shape index: {}]
  %s3 = inlined_call_operand.vmem [shape: f32[3,1,128], index: 3, kind: input, shape index: {}]
  %s4 = inlined_call_operand.vmem [shape: f32[3,16,128], index: 4, kind: input, shape index: {}]
  %s5 = inlined_call_operand.vmem [shape: bf16[3,128,128], index: 5, kind: input, shape index: {}]
  %s6 = inlined_call_operand.vmem [shape: f32[3,1,128], index: 6, kind: input, shape index: {}]
  %s7 = inlined_call_operand.vmem [shape: f32[32,128], index: 7, kind: output, shape index: {}]
  %s8 = sld [smem:[#allocation0]]
  $region69: #{_lambda_.10} parent=0
    _
  %s10 = ssub.s32 1, %s8
  %s11 = scalar_select 0, %s10, %s8
  loop: start=0, step=1, limit=5
  $region2: #{_lambda_.10} parent=0 // loop_pre_header
    _
  $region3: #{_lambda_.10} parent=0 // loop_header
    %s13 = sphi 0, %s17
    %p14 = scmp.ge.s32.totalorder %s13, 5
    %s21 = sphi 0, %s21
    %s23 = sphi 0, %s21
    %s24 = sphi 0, %s23
    %s38 = sphi 0, %s24
    %s42 = sphi 0, %s42
    %s44 = sphi 0, %s42
    %s45 = sphi 0, %s44
    %s59 = sphi 0, %s45
    %s65 = sphi 0, %s67
    %s68 = sphi 0, %s65
    %s69 = sphi 0, %s68
    %s85 = sphi 0, %s69
    %s91 = sphi 0, %s93
    %s94 = sphi 0, %s91
    %s95 = sphi 0, %s94
    %s111 = sphi 0, %s95
    %s117 = sphi 0, %s119
    %s120 = sphi 0, %s117
    %s121 = sphi 0, %s120
    %s137 = sphi 0, %s121
    %s143 = sphi 0, %s145
    %s146 = sphi 0, %s143
    %s147 = sphi 0, %s146
    %s163 = sphi 0, %s147
    %s169 = sphi 0, %s171
    %s172 = sphi 0, %s169
    %s173 = sphi 0, %s172
    %s189 = sphi 0, %s173
    %s193 = sphi 0, %s193
    %s195 = sphi 0, %s193
    %s196 = sphi 0, %s195
    %s210 = sphi 0, %s196
  $region4: #{_lambda_.10} parent=0 // loop_header_branch
    %16 = sbr.rel (%p14) target = $region8
  $region5: #{_lambda_.10} parent=0 // loop_body
    %s18 = ssub.s32 %s13, 1
    %s19 = ssub.s32 %s13, 2
    %s20 = sadd.s32 %s13, 1
    %s22 = sadd.s32 %s21, 1
    %p25 = scmp.eq.s32.totalorder %s13, 2
    %p26 = scmp.ne.s32.totalorder %s21, %s23
    %p27 = scmp.eq.s32.totalorder %s13, 0
    %p28 = por %p26, %p27
    %p29 = scmp.ne.s32.totalorder %s21, %s23
    %p30 = scmp.eq.s32.totalorder %s18, 2
    %p31 = por %p29, %p30
    %p32 = scmp.ne.s32.totalorder %s23, %s24
    %p33 = scmp.eq.s32.totalorder %s18, 0
    %p34 = por %p32, %p33
    %p35 = scmp.ne.s32.totalorder %s23, %s24
    %p36 = scmp.eq.s32.totalorder %s19, 2
    %p37 = por %p35, %p36
    %p39 = scmp.ne.s32.totalorder %s24, %s38
    %p40 = scmp.eq.s32.totalorder %s19, 0
    %p41 = por %p39, %p40
    %s43 = sadd.s32 %s42, 1
    %p46 = scmp.eq.s32.totalorder %s13, 2
    %p47 = scmp.ne.s32.totalorder %s42, %s44
    %p48 = scmp.eq.s32.totalorder %s13, 0
    %p49 = por %p47, %p48
    %p50 = scmp.ne.s32.totalorder %s42, %s44
    %p51 = scmp.eq.s32.totalorder %s18, 2
    %p52 = por %p50, %p51
    %p53 = scmp.ne.s32.totalorder %s44, %s45
    %p54 = scmp.eq.s32.totalorder %s18, 0
    %p55 = por %p53, %p54
    %p56 = scmp.ne.s32.totalorder %s44, %s45
    %p57 = scmp.eq.s32.totalorder %s19, 2
    %p58 = por %p56, %p57
    %p60 = scmp.ne.s32.totalorder %s45, %s59
    %p61 = scmp.eq.s32.totalorder %s19, 0
    %p62 = por %p60, %p61
    %s63 = ssub.s32 %s13, %s20
    %p64 = scmp.eq.s32.totalorder %s63, 0
    %s66 = sadd.s32 %s65, 1
    %s67 = scalar_select %p64, %s65, %s66
    %p70 = pneg %p64
    %p71 = scmp.eq.s32.totalorder %s13, 2
    %p72 = por %p70, %p71
    %p73 = scmp.ne.s32.totalorder %s65, %s68
    %p74 = scmp.eq.s32.totalorder %s13, 0
    %p75 = por %p73, %p74
    %p76 = scmp.ne.s32.totalorder %s65, %s68
    %p77 = scmp.eq.s32.totalorder %s18, 2
    %p78 = por %p76, %p77
    %p79 = scmp.ne.s32.totalorder %s68, %s69
    %p80 = scmp.eq.s32.totalorder %s18, 0
    %p81 = por %p79, %p80
    %p82 = scmp.ne.s32.totalorder %s68, %s69
    %p83 = scmp.eq.s32.totalorder %s19, 2
    %p84 = por %p82, %p83
    %p86 = scmp.ne.s32.totalorder %s69, %s85
    %p87 = scmp.eq.s32.totalorder %s19, 0
    %p88 = por %p86, %p87
    %s89 = ssub.s32 %s13, %s20
    %p90 = scmp.eq.s32.totalorder %s89, 0
    %s92 = sadd.s32 %s91, 1
    %s93 = scalar_select %p90, %s91, %s92
    %p96 = pneg %p90
    %p97 = scmp.eq.s32.totalorder %s13, 2
    %p98 = por %p96, %p97
    %p99 = scmp.ne.s32.totalorder %s91, %s94
    %p100 = scmp.eq.s32.totalorder %s13, 0
    %p101 = por %p99, %p100
    %p102 = scmp.ne.s32.totalorder %s91, %s94
    %p103 = scmp.eq.s32.totalorder %s18, 2
    %p104 = por %p102, %p103
    %p105 = scmp.ne.s32.totalorder %s94, %s95
    %p106 = scmp.eq.s32.totalorder %s18, 0
    %p107 = por %p105, %p106
    %p108 = scmp.ne.s32.totalorder %s94, %s95
    %p109 = scmp.eq.s32.totalorder %s19, 2
    %p110 = por %p108, %p109
    %p112 = scmp.ne.s32.totalorder %s95, %s111
    %p113 = scmp.eq.s32.totalorder %s19, 0
    %p114 = por %p112, %p113
    %s115 = ssub.s32 %s13, %s20
    %p116 = scmp.eq.s32.totalorder %s115, 0
    %s118 = sadd.s32 %s117, 1
    %s119 = scalar_select %p116, %s117, %s118
    %p122 = pneg %p116
    %p123 = scmp.eq.s32.totalorder %s13, 2
    %p124 = por %p122, %p123
    %p125 = scmp.ne.s32.totalorder %s117, %s120
    %p126 = scmp.eq.s32.totalorder %s13, 0
    %p127 = por %p125, %p126
    %p128 = scmp.ne.s32.totalorder %s117, %s120
    %p129 = scmp.eq.s32.totalorder %s18, 2
    %p130 = por %p128, %p129
    %p131 = scmp.ne.s32.totalorder %s120, %s121
    %p132 = scmp.eq.s32.totalorder %s18, 0
    %p133 = por %p131, %p132
    %p134 = scmp.ne.s32.totalorder %s120, %s121
    %p135 = scmp.eq.s32.totalorder %s19, 2
    %p136 = por %p134, %p135
    %p138 = scmp.ne.s32.totalorder %s121, %s137
    %p139 = scmp.eq.s32.totalorder %s19, 0
    %p140 = por %p138, %p139
    %s141 = ssub.s32 %s13, %s20
    %p142 = scmp.eq.s32.totalorder %s141, 0
    %s144 = sadd.s32 %s143, 1
    %s145 = scalar_select %p142, %s143, %s144
    %p148 = pneg %p142
    %p149 = scmp.eq.s32.totalorder %s13, 2
    %p150 = por %p148, %p149
    %p151 = scmp.ne.s32.totalorder %s143, %s146
    %p152 = scmp.eq.s32.totalorder %s13, 0
    %p153 = por %p151, %p152
    %p154 = scmp.ne.s32.totalorder %s143, %s146
    %p155 = scmp.eq.s32.totalorder %s18, 2
    %p156 = por %p154, %p155
    %p157 = scmp.ne.s32.totalorder %s146, %s147
    %p158 = scmp.eq.s32.totalorder %s18, 0
    %p159 = por %p157, %p158
    %p160 = scmp.ne.s32.totalorder %s146, %s147
    %p161 = scmp.eq.s32.totalorder %s19, 2
    %p162 = por %p160, %p161
    %p164 = scmp.ne.s32.totalorder %s147, %s163
    %p165 = scmp.eq.s32.totalorder %s19, 0
    %p166 = por %p164, %p165
    %s167 = ssub.s32 %s13, %s20
    %p168 = scmp.eq.s32.totalorder %s167, 0
    %s170 = sadd.s32 %s169, 1
    %s171 = scalar_select %p168, %s169, %s170
    %p174 = pneg %p168
    %p175 = scmp.eq.s32.totalorder %s13, 2
    %p176 = por %p174, %p175
    %p177 = scmp.ne.s32.totalorder %s169, %s172
    %p178 = scmp.eq.s32.totalorder %s13, 0
    %p179 = por %p177, %p178
    %p180 = scmp.ne.s32.totalorder %s169, %s172
    %p181 = scmp.eq.s32.totalorder %s18, 2
    %p182 = por %p180, %p181
    %p183 = scmp.ne.s32.totalorder %s172, %s173
    %p184 = scmp.eq.s32.totalorder %s18, 0
    %p185 = por %p183, %p184
    %p186 = scmp.ne.s32.totalorder %s172, %s173
    %p187 = scmp.eq.s32.totalorder %s19, 2
    %p188 = por %p186, %p187
    %p190 = scmp.ne.s32.totalorder %s173, %s189
    %p191 = scmp.eq.s32.totalorder %s19, 0
    %p192 = por %p190, %p191
    %s194 = sadd.s32 %s193, 1
    %p197 = scmp.eq.s32.totalorder %s13, 2
    %p198 = scmp.ne.s32.totalorder %s193, %s195
    %p199 = scmp.eq.s32.totalorder %s13, 0
    %p200 = por %p198, %p199
    %p201 = scmp.ne.s32.totalorder %s193, %s195
    %p202 = scmp.eq.s32.totalorder %s18, 2
    %p203 = por %p201, %p202
    %p204 = scmp.ne.s32.totalorder %s195, %s196
    %p205 = scmp.eq.s32.totalorder %s18, 0
    %p206 = por %p204, %p205
    %p207 = scmp.ne.s32.totalorder %s195, %s196
    %p208 = scmp.eq.s32.totalorder %s19, 2
    %p209 = por %p207, %p208
    %p211 = scmp.ne.s32.totalorder %s196, %s210
    %p212 = scmp.eq.s32.totalorder %s19, 0
    %p213 = por %p211, %p212
    %p214 = scmp.le.s32.totalorder 1, %s13
    %p215 = scmp.lt.s32.totalorder %s13, 4
    %p216 = pnand %p214, %p215
    %p217 = pneg %p216
    // Predicated region
    $region9: #{_lambda_.10} parent=5 // pred_check
      _
    $region10: #{_lambda_.10} parent=5 // pred_check_branch
      %219 = sbr.rel (%p216) target = $region12
    $region11: #{_lambda_.10} parent=5 // pred_region
      %s220 = ssub.s32 %s13, 1
      // Predicated region
      $region13: #{_lambda_.10} parent=11 // pred_check
        %p221 = pneg %p34
      $region14: #{_lambda_.10} parent=11 // pred_check_branch
        %223 = sbr.rel (%p221) target = $region16
      $region15: #{_lambda_.10} parent=11 // pred_region
        _
      $region16: #{_lambda_.10} parent=11 // pred_fallthru
        _
      // Predicated region
      $region17: #{_lambda_.10} parent=11 // pred_check
        %p224 = pneg %p55
      $region18: #{_lambda_.10} parent=11 // pred_check_branch
        %226 = sbr.rel (%p224) target = $region20
      $region19: #{_lambda_.10} parent=11 // pred_region
        _
      $region20: #{_lambda_.10} parent=11 // pred_fallthru
        _
    $region12: #{_lambda_.10} parent=5 // pred_fallthru
      _
    %p227 = scmp.lt.s32.totalorder %s13, 3
    // Predicated region
    $region21: #{_lambda_.10} parent=5 // pred_check
      %p228 = pneg %p227
    $region22: #{_lambda_.10} parent=5 // pred_check_branch
      %230 = sbr.rel (%p228) target = $region24
    $region23: #{_lambda_.10} parent=5 // pred_region
      // Predicated region
      $region25: #{_lambda_.10} parent=23 // pred_check
        %p231 = pneg %p75
      $region26: #{_lambda_.10} parent=23 // pred_check_branch
        %233 = sbr.rel (%p231) target = $region28
      $region27: #{_lambda_.10} parent=23 // pred_region
        %p234 = scmp.lt.s32.totalorder %s13, 2
        %s235 = scalar_select %p234, %s13, 2
        %s236 = smul.addr %s235, 16
        %s237 = smul.addr %s236, 4
        %s238 = scalar_lea.vmem %s2, %s237
      $region28: #{_lambda_.10} parent=23 // pred_fallthru
        _
      // Predicated region
      $region29: #{_lambda_.10} parent=23 // pred_check
        %p239 = pneg %p101
      $region30: #{_lambda_.10} parent=23 // pred_check_branch
        %241 = sbr.rel (%p239) target = $region32
      $region31: #{_lambda_.10} parent=23 // pred_region
        %p242 = scmp.lt.s32.totalorder %s13, 2
        %s243 = scalar_select %p242, %s13, 2
        %s244 = scalar_lea.vmem %s3, %s243
      $region32: #{_lambda_.10} parent=23 // pred_fallthru
        _
      // Predicated region
      $region33: #{_lambda_.10} parent=23 // pred_check
        %p245 = pneg %p127
      $region34: #{_lambda_.10} parent=23 // pred_check_branch
        %247 = sbr.rel (%p245) target = $region36
      $region35: #{_lambda_.10} parent=23 // pred_region
        %p248 = scmp.lt.s32.totalorder %s13, 2
        %s249 = scalar_select %p248, %s13, 2
        %s250 = smul.addr %s249, 2
        %s251 = smul.addr %s250, 8
        %s252 = scalar_lea.vmem %s4, %s251
      $region36: #{_lambda_.10} parent=23 // pred_fallthru
        _
      // Predicated region
      $region37: #{_lambda_.10} parent=23 // pred_check
        %p253 = pneg %p153
      $region38: #{_lambda_.10} parent=23 // pred_check_branch
        %255 = sbr.rel (%p253) target = $region40
      $region39: #{_lambda_.10} parent=23 // pred_region
        %p256 = scmp.lt.s32.totalorder %s13, 2
        %s257 = scalar_select %p256, %s13, 2
        %s258 = smul.addr %s257, 16
        %s259 = smul.addr %s258, 4
        %s260 = scalar_lea.vmem %s5, %s259
      $region40: #{_lambda_.10} parent=23 // pred_fallthru
        _
      // Predicated region
      $region41: #{_lambda_.10} parent=23 // pred_check
        %p261 = pneg %p179
      $region42: #{_lambda_.10} parent=23 // pred_check_branch
        %263 = sbr.rel (%p261) target = $region44
      $region43: #{_lambda_.10} parent=23 // pred_region
        %p264 = scmp.lt.s32.totalorder %s13, 2
        %s265 = scalar_select %p264, %s13, 2
        %s266 = scalar_lea.vmem %s6, %s265
      $region44: #{_lambda_.10} parent=23 // pred_fallthru
        _
    $region24: #{_lambda_.10} parent=5 // pred_fallthru
      _
    %p267 = scmp.le.s32.totalorder 1, %s13
    %p268 = scmp.lt.s32.totalorder %s13, 4
    %p269 = pnand %p267, %p268
    %p270 = pneg %p269
    // Predicated region
    $region45: #{_lambda_.10} parent=5 // pred_check
      _
    $region46: #{_lambda_.10} parent=5 // pred_check_branch
      %272 = sbr.rel (%p269) target = $region48
    $region47: #{_lambda_.10} parent=5 // pred_region
      %s273 = ssub.s32 %s13, 1
      %p274 = pneg %p34
      %p275 = pneg %p31
      %p276 = pneg %p55
      %p277 = pneg %p52
      %p278 = scmp.lt.s32.totalorder %s18, 2
      %s279 = scalar_select %p278, %s18, 2
      %s280 = smul.addr %s279, 16
      %s281 = smul.addr %s280, 4
      %s282 = scalar_lea.vmem %s2, %s281
      %p283 = pneg %p81
      %p284 = pneg %p78
      %p285 = scmp.lt.s32.totalorder %s18, 2
      %s286 = scalar_select %p285, %s18, 2
      %s287 = scalar_lea.vmem %s3, %s286
      %p288 = pneg %p107
      %p289 = pneg %p104
      %p290 = scmp.lt.s32.totalorder %s18, 2
      %s291 = scalar_select %p290, %s18, 2
      %s292 = smul.addr %s291, 2
      %s293 = smul.addr %s292, 8
      %s294 = scalar_lea.vmem %s4, %s293
      %p295 = pneg %p133
      %p296 = pneg %p130
      %p297 = scmp.lt.s32.totalorder %s18, 2
      %s298 = scalar_select %p297, %s18, 2
      %s299 = smul.addr %s298, 16
      %s300 = smul.addr %s299, 4
      %s301 = scalar_lea.vmem %s5, %s300
      %p302 = pneg %p159
      %p303 = pneg %p156
      %p304 = scmp.lt.s32.totalorder %s18, 2
      %s305 = scalar_select %p304, %s18, 2
      %s306 = scalar_lea.vmem %s6, %s305
      %p307 = pneg %p185
      %p308 = pneg %p182
      %p309 = pneg %p206
      %p310 = pneg %p203
      %p311 = scmp.lt.s32.totalorder %s18, 2
      %s312 = scalar_select %p311, %s18, 2
      %s313 = smul.addr %s312, 16
      %s314 = smul.addr %s313, 4
      %s315 = scalar_lea.vmem %s2, %s314
      %p316 = scmp.lt.s32.totalorder %s18, 2
      %s317 = scalar_select %p316, %s18, 2
      %s318 = scalar_lea.vmem %s3, %s317
      %p319 = scmp.lt.s32.totalorder %s18, 2
      %s320 = scalar_select %p319, %s18, 2
      %s321 = smul.addr %s320, 2
      %s322 = smul.addr %s321, 8
      %s323 = scalar_lea.vmem %s4, %s322
      %p324 = scmp.lt.s32.totalorder %s18, 2
      %s325 = scalar_select %p324, %s18, 2
      %s326 = smul.addr %s325, 16
      %s327 = smul.addr %s326, 4
      %s328 = scalar_lea.vmem %s5, %s327
      %p329 = scmp.lt.s32.totalorder %s18, 2
      %s330 = scalar_select %p329, %s18, 2
      %s331 = scalar_lea.vmem %s6, %s330
      %p333 = scmp.eq.s32.totalorder %s18, 0
      // Predicated region
      $region49: #{_lambda_.10} parent=47 // pred_check
        %p334 = pneg %p333
      $region50: #{_lambda_.10} parent=47 // pred_check_branch
        %336 = sbr.rel (%p334) target = $region52
      $region51: #{_lambda_.10} parent=47 // pred_region
        %v337 = vld [vmem:[%s0] sm:$0xff]
        %v338 = vld [vmem:[%s0 + $0x8] sm:$0xff]
        %v339 = vld [vmem:[%s0 + $0x10] sm:$0xff]
        %v340 = vld [vmem:[%s0 + $0x18] sm:$0xff]
        %341 = vst [vmem:[#allocation2] sm:$0xff] %v337
        %342 = vst [vmem:[#allocation2 + $0x8] sm:$0xff] %v338
        %343 = vst [vmem:[#allocation2 + $0x10] sm:$0xff] %v339
        %344 = vst [vmem:[#allocation2 + $0x18] sm:$0xff] %v340
      $region52: #{_lambda_.10} parent=47 // pred_fallthru
        _
      %v345 = vld [vmem:[#allocation2] sm:$0xff]
      %v346 = vld [vmem:[#allocation2 + $0x8] sm:$0xff]
      %v347 = vld [vmem:[#allocation2 + $0x10] sm:$0xff]
      %v348 = vld [vmem:[#allocation2 + $0x18] sm:$0xff]
      %v349 = vld [vmem:[%s315] sm:$0xf]
      %v350 = vld [vmem:[%s315 + $0x4] sm:$0xf]
      %v351 = vld [vmem:[%s315 + $0x8] sm:$0xf]
      %v352 = vld [vmem:[%s315 + $0xc] sm:$0xf]
      %v353 = vld [vmem:[%s315 + $0x10] sm:$0xf]
      %v354 = vld [vmem:[%s315 + $0x14] sm:$0xf]
      %v355 = vld [vmem:[%s315 + $0x18] sm:$0xf]
      %v356 = vld [vmem:[%s315 + $0x1c] sm:$0xf]
      %v357 = vld [vmem:[%s315 + $0x20] sm:$0xf]
      %v358 = vld [vmem:[%s315 + $0x24] sm:$0xf]
      %v359 = vld [vmem:[%s315 + $0x28] sm:$0xf]
      %v360 = vld [vmem:[%s315 + $0x2c] sm:$0xf]
      %v361 = vld [vmem:[%s315 + $0x30] sm:$0xf]
      %v362 = vld [vmem:[%s315 + $0x34] sm:$0xf]
      %v363 = vld [vmem:[%s315 + $0x38] sm:$0xf]
      %v364 = vld [vmem:[%s315 + $0x3c] sm:$0xf]
      %v365 = vld [vmem:[%s318] sm:$0x1]
      %v366 = vld [vmem:[%s1] sm:$0xf]
      %v367 = vld [vmem:[%s1 + $0x4] sm:$0xf]
      %v368 = vld [vmem:[%s1 + $0x8] sm:$0xf]
      %v369 = vld [vmem:[%s1 + $0xc] sm:$0xf]
      %v370 = vld [vmem:[%s1 + $0x10] sm:$0xf]
      %v371 = vld [vmem:[%s1 + $0x14] sm:$0xf]
      %v372 = vld [vmem:[%s1 + $0x18] sm:$0xf]
      %v373 = vld [vmem:[%s1 + $0x1c] sm:$0xf]
      %v374 = vld [vmem:[%s1 + $0x20] sm:$0xf]
      %v375 = vld [vmem:[%s1 + $0x24] sm:$0xf]
      %v376 = vld [vmem:[%s1 + $0x28] sm:$0xf]
      %v377 = vld [vmem:[%s1 + $0x2c] sm:$0xf]
      %v378 = vld [vmem:[%s1 + $0x30] sm:$0xf]
      %v379 = vld [vmem:[%s1 + $0x34] sm:$0xf]
      %v380 = vld [vmem:[%s1 + $0x38] sm:$0xf]
      %v381 = vld [vmem:[%s1 + $0x3c] sm:$0xf]
      %v382 = vld [vmem:[%s1 + $0x40] sm:$0xf]
      %v383 = vld [vmem:[%s1 + $0x44] sm:$0xf]
      %v384 = vld [vmem:[%s1 + $0x48] sm:$0xf]
      %v385 = vld [vmem:[%s1 + $0x4c] sm:$0xf]
      %v386 = vld [vmem:[%s1 + $0x50] sm:$0xf]
      %v387 = vld [vmem:[%s1 + $0x54] sm:$0xf]
      %v388 = vld [vmem:[%s1 + $0x58] sm:$0xf]
      %v389 = vld [vmem:[%s1 + $0x5c] sm:$0xf]
      %v390 = vld [vmem:[%s1 + $0x60] sm:$0xf]
      %v391 = vld [vmem:[%s1 + $0x64] sm:$0xf]
      %v392 = vld [vmem:[%s1 + $0x68] sm:$0xf]
      %v393 = vld [vmem:[%s1 + $0x6c] sm:$0xf]
      %v394 = vld [vmem:[%s1 + $0x70] sm:$0xf]
      %v395 = vld [vmem:[%s1 + $0x74] sm:$0xf]
      %v396 = vld [vmem:[%s1 + $0x78] sm:$0xf]
      %v397 = vld [vmem:[%s1 + $0x7c] sm:$0xf]
      %v398 = vld [vmem:[%s1 + $0x80] sm:$0xf]
      %v399 = vld [vmem:[%s1 + $0x84] sm:$0xf]
      %v400 = vld [vmem:[%s1 + $0x88] sm:$0xf]
      %v401 = vld [vmem:[%s1 + $0x8c] sm:$0xf]
      %v402 = vld [vmem:[%s323] sm:$0xff]
      %v403 = vld [vmem:[%s323 + $0x8] sm:$0xff]
      %v404 = vld [vmem:[%s328] sm:$0xf]
      %v405 = vld [vmem:[%s328 + $0x4] sm:$0xf]
      %v406 = vld [vmem:[%s328 + $0x8] sm:$0xf]
      %v407 = vld [vmem:[%s328 + $0xc] sm:$0xf]
      %v408 = vld [vmem:[%s328 + $0x10] sm:$0xf]
      %v409 = vld [vmem:[%s328 + $0x14] sm:$0xf]
      %v410 = vld [vmem:[%s328 + $0x18] sm:$0xf]
      %v411 = vld [vmem:[%s328 + $0x1c] sm:$0xf]
      %v412 = vld [vmem:[%s328 + $0x20] sm:$0xf]
      %v413 = vld [vmem:[%s328 + $0x24] sm:$0xf]
      %v414 = vld [vmem:[%s328 + $0x28] sm:$0xf]
      %v415 = vld [vmem:[%s328 + $0x2c] sm:$0xf]
      %v416 = vld [vmem:[%s328 + $0x30] sm:$0xf]
      %v417 = vld [vmem:[%s328 + $0x34] sm:$0xf]
      %v418 = vld [vmem:[%s328 + $0x38] sm:$0xf]
      %v419 = vld [vmem:[%s328 + $0x3c] sm:$0xf]
      %v420 = vld [vmem:[%s331] sm:$0x1]
      %v421 = vpack.c.bf16 %v346, %v345
      %v422 = vpack.c.bf16 %v348, %v347
      %v424 = vperm.slane %v365, 0
      %v442 = vunpack.c.l.b16 %v349
      %v443 = vunpack.c.l.b16 %v350
      %v444 = vunpack.c.l.b16 %v351
      %v445 = vunpack.c.l.b16 %v352
      %v446 = vunpack.c.l.b16 %v353
      %v447 = vunpack.c.l.b16 %v354
      %v448 = vunpack.c.l.b16 %v355
      %v449 = vunpack.c.l.b16 %v356
      %v450 = vunpack.c.l.b16 %v357
      %v451 = vunpack.c.l.b16 %v358
      %v452 = vunpack.c.l.b16 %v359
      %v453 = vunpack.c.l.b16 %v360
      %v454 = vunpack.c.l.b16 %v361
      %v455 = vunpack.c.l.b16 %v362
      %v456 = vunpack.c.l.b16 %v363
      %v457 = vunpack.c.l.b16 %v364
      %v458 = vpack.c.b16 %v443, %v442
      %v459 = vpack.c.b16 %v445, %v444
      %v460 = vpack.c.b16 %v447, %v446
      %v461 = vpack.c.b16 %v449, %v448
      %v462 = vpack.c.b16 %v451, %v450
      %v463 = vpack.c.b16 %v453, %v452
      %v464 = vpack.c.b16 %v455, %v454
      %v465 = vpack.c.b16 %v457, %v456
      %474 = vmatpush.bf16.msra.mxu0 %v465
      %475 = vmatpush.bf16.msra.mxu0 %v464
      %476 = vmatpush.bf16.msra.mxu0 %v463
      %477 = vmatpush.bf16.msra.mxu0 %v462
      %478 = vmatpush.bf16.msra.mxu0 %v461
      %479 = vmatpush.bf16.msra.mxu0 %v460
      %480 = vmatpush.bf16.msra.mxu0 %v459
      %481 = vmatpush.bf16.msra.mxu0 %v458
      %482 = vmatmul.bf16.gmra.mxu0 %v421
      %v483 = vpop.f32.mrf.mxu0
      %v484 = vadd.f32 %v424, %v483
      %v485 = vpop.f32.mrf.mxu0
      %v486 = vadd.f32 %v424, %v485
      %487 = vmatmul.bf16.gmra.mxu0 %v422
      %v488 = vpop.f32.mrf.mxu0
      %v489 = vadd.f32 %v424, %v488
      %v490 = vpop.f32.mrf.mxu0
      %v491 = vadd.f32 %v424, %v490
      %492 = vdwg.mxu0
      %v493 = vmax.f32 %v484, 0.0
      %v494 = vmax.f32 %v486, 0.0
      %v495 = vmax.f32 %v489, 0.0
      %v496 = vmax.f32 %v491, 0.0
      %v497 = vpack.c.bf16 %v494, %v493
      %v498 = vpack.c.bf16 %v496, %v495
      %v535 = vunpack.c.l.b16 %v366
      %v536 = vunpack.c.l.b16 %v367
      %v537 = vunpack.c.l.b16 %v368
      %v538 = vunpack.c.l.b16 %v369
      %v539 = vunpack.c.l.b16 %v370
      %v540 = vunpack.c.l.b16 %v371
      %v541 = vunpack.c.l.b16 %v372
      %v542 = vunpack.c.l.b16 %v373
      %v543 = vunpack.c.l.b16 %v374
      %v544 = vunpack.c.l.b16 %v375
      %v545 = vunpack.c.l.b16 %v376
      %v546 = vunpack.c.l.b16 %v377
      %v547 = vunpack.c.l.b16 %v378
      %v548 = vunpack.c.l.b16 %v379
      %v549 = vunpack.c.l.b16 %v380
      %v550 = vunpack.c.l.b16 %v381
      %v551 = vunpack.c.l.b16 %v382
      %v552 = vunpack.c.l.b16 %v383
      %v553 = vunpack.c.l.b16 %v384
      %v554 = vunpack.c.l.b16 %v385
      %v555 = vunpack.c.l.b16 %v386
      %v556 = vunpack.c.l.b16 %v387
      %v557 = vunpack.c.l.b16 %v388
      %v558 = vunpack.c.l.b16 %v389
      %v559 = vunpack.c.l.b16 %v390
      %v560 = vunpack.c.l.b16 %v391
      %v561 = vunpack.c.l.b16 %v392
      %v562 = vunpack.c.l.b16 %v393
      %v563 = vunpack.c.l.b16 %v394
      %v564 = vunpack.c.l.b16 %v395
      %v565 = vunpack.c.l.b16 %v396
      %v566 = vunpack.c.l.b16 %v397
      %v567 = vunpack.c.l.b16 %v398
      %v568 = vunpack.c.l.b16 %v399
      %v569 = vunpack.c.l.b16 %v400
      %v570 = vunpack.c.l.b16 %v401
      %v571 = vpack.c.b16 %v536, %v535
      %v572 = vpack.c.b16 %v538, %v537
      %v573 = vpack.c.b16 %v540, %v539
      %v574 = vpack.c.b16 %v542, %v541
      %v575 = vpack.c.b16 %v544, %v543
      %v576 = vpack.c.b16 %v546, %v545
      %v577 = vpack.c.b16 %v548, %v547
      %v578 = vpack.c.b16 %v550, %v549
      %v579 = vpack.c.b16 %v552, %v551
      %v580 = vpack.c.b16 %v554, %v553
      %v581 = vpack.c.b16 %v556, %v555
      %v582 = vpack.c.b16 %v558, %v557
      %v583 = vpack.c.b16 %v560, %v559
      %v584 = vpack.c.b16 %v562, %v561
      %v585 = vpack.c.b16 %v564, %v563
      %v586 = vpack.c.b16 %v566, %v565
      %v587 = vpack.c.b16 %v568, %v567
      %v588 = vpack.c.b16 %v570, %v569
      %vm589 = vcmask 261120
      %v591 = vsel %vm589, %v571, 0
      %v594 = vsel %vm589, %v572, 0
      %v597 = vsel %vm589, %v573, 0
      %v600 = vsel %vm589, %v574, 0
      %v603 = vsel %vm589, %v575, 0
      %v606 = vsel %vm589, %v576, 0
      %v609 = vsel %vm589, %v577, 0
      %v612 = vsel %vm589, %v578, 0
      %v615 = vsel %vm589, %v579, 0
      %v618 = vsel %vm589, %v580, 0
      %v621 = vsel %vm589, %v581, 0
      %v624 = vsel %vm589, %v582, 0
      %v627 = vsel %vm589, %v583, 0
      %v630 = vsel %vm589, %v584, 0
      %v633 = vsel %vm589, %v585, 0
      %v636 = vsel %vm589, %v586, 0
      %v639 = vsel %vm589, %v587, 0
      %v642 = vsel %vm589, %v588, 0
      %644 = vmatpush.bf16.msra.mxu0 0
      %645 = vmatpush.bf16.msra.mxu0 0
      %646 = vmatpush.bf16.msra.mxu0 0
      %647 = vmatpush.bf16.msra.mxu0 0
      %648 = vmatpush.bf16.msra.mxu0 0
      %649 = vmatpush.bf16.msra.mxu0 0
      %650 = vmatpush.bf16.msra.mxu0 %v498
      %651 = vmatpush.bf16.msra.mxu0 %v497
      %652 = vmatmul.bf16.gmra.mxu0 %v591
      %v653 = vpop.f32.mrf.mxu0
      %v654 = vadd.f32 0.0, %v653
      %v655 = vpop.f32.mrf.mxu0
      %v656 = vadd.f32 0.0, %v655
      %657 = vmatmul.bf16.gmra.mxu0 %v594
      %v658 = vpop.f32.mrf.mxu0
      %v659 = vadd.f32 0.0, %v658
      %v660 = vpop.f32.mrf.mxu0
      %v661 = vadd.f32 0.0, %v660
      %662 = vmatmul.bf16.gmra.mxu0 %v597
      %v663 = vpop.f32.mrf.mxu0
      %v664 = vadd.f32 0.0, %v663
      %v665 = vpop.f32.mrf.mxu0
      %v666 = vadd.f32 0.0, %v665
      %667 = vmatmul.bf16.gmra.mxu0 %v600
      %v668 = vpop.f32.mrf.mxu0
      %v669 = vadd.f32 0.0, %v668
      %v670 = vpop.f32.mrf.mxu0
      %v671 = vadd.f32 0.0, %v670
      %672 = vmatmul.bf16.gmra.mxu0 %v603
      %v673 = vpop.f32.mrf.mxu0
      %v674 = vadd.f32 0.0, %v673
      %v675 = vpop.f32.mrf.mxu0
      %v676 = vadd.f32 0.0, %v675
      %677 = vmatmul.bf16.gmra.mxu0 %v606
      %v678 = vpop.f32.mrf.mxu0
      %v679 = vadd.f32 0.0, %v678
      %v680 = vpop.f32.mrf.mxu0
      %v681 = vadd.f32 0.0, %v680
      %682 = vmatmul.bf16.gmra.mxu0 %v609
      %v683 = vpop.f32.mrf.mxu0
      %v684 = vadd.f32 0.0, %v683
      %v685 = vpop.f32.mrf.mxu0
      %v686 = vadd.f32 0.0, %v685
      %687 = vmatmul.bf16.gmra.mxu0 %v612
      %v688 = vpop.f32.mrf.mxu0
      %v689 = vadd.f32 0.0, %v688
      %v690 = vpop.f32.mrf.mxu0
      %v691 = vadd.f32 0.0, %v690
      %692 = vmatmul.bf16.gmra.mxu0 %v615
      %v693 = vpop.f32.mrf.mxu0
      %v694 = vadd.f32 0.0, %v693
      %v695 = vpop.f32.mrf.mxu0
      %v696 = vadd.f32 0.0, %v695
      %697 = vmatmul.bf16.gmra.mxu0 %v618
      %v698 = vpop.f32.mrf.mxu0
      %v699 = vadd.f32 0.0, %v698
      %v700 = vpop.f32.mrf.mxu0
      %v701 = vadd.f32 0.0, %v700
      %702 = vmatmul.bf16.gmra.mxu0 %v621
      %v703 = vpop.f32.mrf.mxu0
      %v704 = vadd.f32 0.0, %v703
      %v705 = vpop.f32.mrf.mxu0
      %v706 = vadd.f32 0.0, %v705
      %707 = vmatmul.bf16.gmra.mxu0 %v624
      %v708 = vpop.f32.mrf.mxu0
      %v709 = vadd.f32 0.0, %v708
      %v710 = vpop.f32.mrf.mxu0
      %v711 = vadd.f32 0.0, %v710
      %712 = vmatmul.bf16.gmra.mxu0 %v627
      %v713 = vpop.f32.mrf.mxu0
      %v714 = vadd.f32 0.0, %v713
      %v715 = vpop.f32.mrf.mxu0
      %v716 = vadd.f32 0.0, %v715
      %717 = vmatmul.bf16.gmra.mxu0 %v630
      %v718 = vpop.f32.mrf.mxu0
      %v719 = vadd.f32 0.0, %v718
      %v720 = vpop.f32.mrf.mxu0
      %v721 = vadd.f32 0.0, %v720
      %722 = vmatmul.bf16.gmra.mxu0 %v633
      %v723 = vpop.f32.mrf.mxu0
      %v724 = vadd.f32 0.0, %v723
      %v725 = vpop.f32.mrf.mxu0
      %v726 = vadd.f32 0.0, %v725
      %727 = vmatmul.bf16.gmra.mxu0 %v636
      %v728 = vpop.f32.mrf.mxu0
      %v729 = vadd.f32 0.0, %v728
      %v730 = vpop.f32.mrf.mxu0
      %v731 = vadd.f32 0.0, %v730
      %732 = vmatmul.bf16.gmra.mxu0 %v639
      %v733 = vpop.f32.mrf.mxu0
      %v734 = vadd.f32 0.0, %v733
      %v735 = vpop.f32.mrf.mxu0
      %v736 = vadd.f32 0.0, %v735
      %737 = vmatmul.bf16.gmra.mxu0 %v642
      %v738 = vpop.f32.mrf.mxu0
      %v739 = vadd.f32 0.0, %v738
      %v740 = vpop.f32.mrf.mxu0
      %v741 = vadd.f32 0.0, %v740
      %742 = vdwg.mxu0
      %v743 = vperm.slane %v402, 0
      %v744 = vmul.f32 %v654, %v743
      %v745 = vmul.f32 %v656, %v743
      %v746 = vmul.f32 %v659, %v743
      %v747 = vmul.f32 %v661, %v743
      %v748 = vperm.slane %v402, 1
      %v749 = vmul.f32 %v664, %v748
      %v750 = vmul.f32 %v666, %v748
      %v751 = vmul.f32 %v669, %v748
      %v752 = vmul.f32 %v671, %v748
      %v753 = vadd.f32 %v744, %v749
      %v754 = vadd.f32 %v745, %v750
      %v755 = vadd.f32 %v746, %v751
      %v756 = vadd.f32 %v747, %v752
      %v757 = vperm.slane %v402, 2
      %v758 = vmul.f32 %v674, %v757
      %v759 = vmul.f32 %v676, %v757
      %v760 = vmul.f32 %v679, %v757
      %v761 = vmul.f32 %v681, %v757
      %v762 = vadd.f32 %v753, %v758
      %v763 = vadd.f32 %v754, %v759
      %v764 = vadd.f32 %v755, %v760
      %v765 = vadd.f32 %v756, %v761
      %v766 = vperm.slane %v402, 3
      %v767 = vmul.f32 %v684, %v766
      %v768 = vmul.f32 %v686, %v766
      %v769 = vmul.f32 %v689, %v766
      %v770 = vmul.f32 %v691, %v766
      %v771 = vadd.f32 %v762, %v767
      %v772 = vadd.f32 %v763, %v768
      %v773 = vadd.f32 %v764, %v769
      %v774 = vadd.f32 %v765, %v770
      %v775 = vperm.slane %v402, 4
      %v776 = vmul.f32 %v694, %v775
      %v777 = vmul.f32 %v696, %v775
      %v778 = vmul.f32 %v699, %v775
      %v779 = vmul.f32 %v701, %v775
      %v780 = vadd.f32 %v771, %v776
      %v781 = vadd.f32 %v772, %v777
      %v782 = vadd.f32 %v773, %v778
      %v783 = vadd.f32 %v774, %v779
      %v784 = vperm.slane %v402, 5
      %v785 = vmul.f32 %v704, %v784
      %v786 = vmul.f32 %v706, %v784
      %v787 = vmul.f32 %v709, %v784
      %v788 = vmul.f32 %v711, %v784
      %v789 = vadd.f32 %v780, %v785
      %v790 = vadd.f32 %v781, %v786
      %v791 = vadd.f32 %v782, %v787
      %v792 = vadd.f32 %v783, %v788
      %v793 = vperm.slane %v402, 6
      %v794 = vmul.f32 %v714, %v793
      %v795 = vmul.f32 %v716, %v793
      %v796 = vmul.f32 %v719, %v793
      %v797 = vmul.f32 %v721, %v793
      %v798 = vadd.f32 %v789, %v794
      %v799 = vadd.f32 %v790, %v795
      %v800 = vadd.f32 %v791, %v796
      %v801 = vadd.f32 %v792, %v797
      %v802 = vperm.slane %v402, 7
      %v803 = vmul.f32 %v724, %v802
      %v804 = vmul.f32 %v726, %v802
      %v805 = vmul.f32 %v729, %v802
      %v806 = vmul.f32 %v731, %v802
      %v807 = vadd.f32 %v798, %v803
      %v808 = vadd.f32 %v799, %v804
      %v809 = vadd.f32 %v800, %v805
      %v810 = vadd.f32 %v801, %v806
      %v811 = vperm.slane %v403, 0
      %v812 = vmul.f32 %v734, %v811
      %v813 = vmul.f32 %v736, %v811
      %v814 = vmul.f32 %v739, %v811
      %v815 = vmul.f32 %v741, %v811
      %v816 = vadd.f32 %v807, %v812
      %v817 = vadd.f32 %v808, %v813
      %v818 = vadd.f32 %v809, %v814
      %v819 = vadd.f32 %v810, %v815
      %v820 = vpack.c.bf16 %v817, %v816
      %v821 = vpack.c.bf16 %v819, %v818
      %v823 = vperm.slane %v420, 0
      %v841 = vunpack.c.l.b16 %v404
      %v842 = vunpack.c.l.b16 %v405
      %v843 = vunpack.c.l.b16 %v406
      %v844 = vunpack.c.l.b16 %v407
      %v845 = vunpack.c.l.b16 %v408
      %v846 = vunpack.c.l.b16 %v409
      %v847 = vunpack.c.l.b16 %v410
      %v848 = vunpack.c.l.b16 %v411
      %v849 = vunpack.c.l.b16 %v412
      %v850 = vunpack.c.l.b16 %v413
      %v851 = vunpack.c.l.b16 %v414
      %v852 = vunpack.c.l.b16 %v415
      %v853 = vunpack.c.l.b16 %v416
      %v854 = vunpack.c.l.b16 %v417
      %v855 = vunpack.c.l.b16 %v418
      %v856 = vunpack.c.l.b16 %v419
      %v857 = vpack.c.b16 %v842, %v841
      %v858 = vpack.c.b16 %v844, %v843
      %v859 = vpack.c.b16 %v846, %v845
      %v860 = vpack.c.b16 %v848, %v847
      %v861 = vpack.c.b16 %v850, %v849
      %v862 = vpack.c.b16 %v852, %v851
      %v863 = vpack.c.b16 %v854, %v853
      %v864 = vpack.c.b16 %v856, %v855
      %873 = vmatpush.bf16.msra.mxu0 %v864
      %874 = vmatpush.bf16.msra.mxu0 %v863
      %875 = vmatpush.bf16.msra.mxu0 %v862
      %876 = vmatpush.bf16.msra.mxu0 %v861
      %877 = vmatpush.bf16.msra.mxu0 %v860
      %878 = vmatpush.bf16.msra.mxu0 %v859
      %879 = vmatpush.bf16.msra.mxu0 %v858
      %880 = vmatpush.bf16.msra.mxu0 %v857
      %881 = vmatmul.bf16.gmra.mxu0 %v820
      %v882 = vpop.f32.mrf.mxu0
      %v883 = vadd.f32 %v823, %v882
      %v884 = vpop.f32.mrf.mxu0
      %v885 = vadd.f32 %v823, %v884
      %886 = vmatmul.bf16.gmra.mxu0 %v821
      %v887 = vpop.f32.mrf.mxu0
      %v888 = vadd.f32 %v823, %v887
      %v889 = vpop.f32.mrf.mxu0
      %v890 = vadd.f32 %v823, %v889
      %891 = vdwg.mxu0
      %v892 = vmax.f32 %v883, 0.0
      %v893 = vmax.f32 %v885, 0.0
      %v894 = vmax.f32 %v888, 0.0
      %v895 = vmax.f32 %v890, 0.0
      %896 = vst [vmem:[#allocation2] sm:$0xff] %v892
      %897 = vst [vmem:[#allocation2 + $0x8] sm:$0xff] %v893
      %898 = vst [vmem:[#allocation2 + $0x10] sm:$0xff] %v894
      %899 = vst [vmem:[#allocation2 + $0x18] sm:$0xff] %v895
      %p900 = scmp.eq.s32.totalorder %s18, 2
      // Predicated region
      $region53: #{_lambda_.10} parent=47 // pred_check
        %p901 = pneg %p900
      $region54: #{_lambda_.10} parent=47 // pred_check_branch
        %903 = sbr.rel (%p901) target = $region56
      $region55: #{_lambda_.10} parent=47 // pred_region
        %904 = vst [vmem:[%s7] sm:$0xff] %v892
        %905 = vst [vmem:[%s7 + $0x8] sm:$0xff] %v893
        %906 = vst [vmem:[%s7 + $0x10] sm:$0xff] %v894
        %907 = vst [vmem:[%s7 + $0x18] sm:$0xff] %v895
      $region56: #{_lambda_.10} parent=47 // pred_fallthru
        _
      // Predicated region
      $region57: #{_lambda_.10} parent=47 // pred_check
        %p908 = pneg %p203
      $region58: #{_lambda_.10} parent=47 // pred_check_branch
        %910 = sbr.rel (%p908) target = $region60
      $region59: #{_lambda_.10} parent=47 // pred_region
        _
      $region60: #{_lambda_.10} parent=47 // pred_fallthru
        _
      // Predicated region
      $region61: #{_lambda_.10} parent=47 // pred_check
        %p911 = pneg %p203
      $region62: #{_lambda_.10} parent=47 // pred_check_branch
        %913 = sbr.rel (%p911) target = $region64
      $region63: #{_lambda_.10} parent=47 // pred_region
        _
      $region64: #{_lambda_.10} parent=47 // pred_fallthru
        _
    $region48: #{_lambda_.10} parent=5 // pred_fallthru
      _
    %p914 = scmp.le.s32.totalorder 2, %s13
    // Predicated region
    $region65: #{_lambda_.10} parent=5 // pred_check
      %p915 = pneg %p914
    $region66: #{_lambda_.10} parent=5 // pred_check_branch
      %917 = sbr.rel (%p915) target = $region68
    $region67: #{_lambda_.10} parent=5 // pred_region
      %s918 = ssub.s32 %s13, 2
    $region68: #{_lambda_.10} parent=5 // pred_fallthru
      _
  $region6: #{_lambda_.10} parent=0 // loop_footer
    %s17 = sadd.s32 1, %s13
  $region7: #{_lambda_.10} parent=0 // loop_footer_branch
    %12 = sbr.rel target = $region3
  $region8: #{_lambda_.10} parent=0 // loop_exit
    _

// kernel: _lambda_.11
$region0: #{_lambda_.11}
  #allocation0 [shape = 'u32[]', space=smem, size = 0x4, offset = 0x4, fixed_abs, tag = 'smem constant byte address 0x4 - core index']
  #allocation1 [shape = 'u32[72,128]{1,0:T(1,128)}', space=vmem, size = 0x9000, scoped, tag = 'internal scratch']
  %s0 = inlined_call_operand.vmem [shape: f32[32,128], index: 0, kind: input, shape index: {}]
  %s1 = inlined_call_operand.vmem [shape: bf16[128,128], index: 1, kind: input, shape index: {}]
  %s2 = inlined_call_operand.hbm [shape: f32[1,128], index: 2, kind: input, shape index: {}]
  %s3 = inlined_call_operand.vmem [shape: bf16[72,32], index: 3, kind: input, shape index: {}]
  %s4 = inlined_call_operand.vmem [shape: f32[16,128], index: 4, kind: input, shape index: {}]
  %s5 = inlined_call_operand.vmem [shape: bf16[128,128], index: 5, kind: input, shape index: {}]
  %s6 = inlined_call_operand.hbm [shape: f32[1,128], index: 6, kind: input, shape index: {}]
  %s7 = inlined_call_operand.vmem [shape: f32[8,128], index: 7, kind: output, shape index: {}]
  %s8 = sld [smem:[#allocation0]]
  $region46: #{_lambda_.11} parent=0
    _
  %s10 = ssub.s32 1, %s8
  %s11 = scalar_select 0, %s10, %s8
  $region1: #{_lambda_.11} parent=0
    #allocation2 [shape = 'u8[512]{0}', space=vmem, size = 0x400, scoped, tag = 'input window, operand 2, single buffered']
    #allocation3 [shape = 's32[1]{0}', space=sflag, size = 0x4, scoped, tag = 'scoped memory for _lambda_.11']
    #allocation4 [shape = 'u8[512]{0}', space=vmem, size = 0x400, scoped, tag = 'input window, operand 6, single buffered']
    #allocation5 [shape = 's32[1]{0}', space=sflag, size = 0x4, scoped, tag = 'scoped memory for _lambda_.11']
    %12 = vsyncpa [#allocation3], 0
    %13 = vsyncpa [#allocation5], 0
    // Predicated region
    $region2: #{_lambda_.11} parent=1 // pred_check
      _
    $region3: #{_lambda_.11} parent=1 // pred_check_branch
      %15 = sbr.rel (0) target = $region5
    $region4: #{_lambda_.11} parent=1 // pred_region
      _
    $region5: #{_lambda_.11} parent=1 // pred_fallthru
      _
    // Predicated region
    $region6: #{_lambda_.11} parent=1 // pred_check
      _
    $region7: #{_lambda_.11} parent=1 // pred_check_branch
      %17 = sbr.rel (0) target = $region9
    $region8: #{_lambda_.11} parent=1 // pred_region
      _
    $region9: #{_lambda_.11} parent=1 // pred_fallthru
      _
    // Predicated region
    $region10: #{_lambda_.11} parent=1 // pred_check
      _
    $region11: #{_lambda_.11} parent=1 // pred_check_branch
      %19 = sbr.rel (0) target = $region13
    $region12: #{_lambda_.11} parent=1 // pred_region
      %21 = vsyncadd [#allocation3], 0
      %s23 = sshll.u32 %s2, 4
      %s24 = int_to_ptr.hbm [resolvable:$true] %s23
      %s25 = sshll.u32 [#allocation2], 4
      %s26 = int_to_ptr.vmem [resolvable:$true] %s25
      %28 = dma.hbm_to_vmem [thread:$0]  %s24, 16, %s26, [#allocation3]
    $region13: #{_lambda_.11} parent=1 // pred_fallthru
      _
    // Predicated region
    $region14: #{_lambda_.11} parent=1 // pred_check
      _
    $region15: #{_lambda_.11} parent=1 // pred_check_branch
      %30 = sbr.rel (0) target = $region17
    $region16: #{_lambda_.11} parent=1 // pred_region
      _
    $region17: #{_lambda_.11} parent=1 // pred_fallthru
      _
    // Predicated region
    $region18: #{_lambda_.11} parent=1 // pred_check
      _
    $region19: #{_lambda_.11} parent=1 // pred_check_branch
      %32 = sbr.rel (0) target = $region21
    $region20: #{_lambda_.11} parent=1 // pred_region
      _
    $region21: #{_lambda_.11} parent=1 // pred_fallthru
      _
    // Predicated region
    $region22: #{_lambda_.11} parent=1 // pred_check
      _
    $region23: #{_lambda_.11} parent=1 // pred_check_branch
      %34 = sbr.rel (0) target = $region25
    $region24: #{_lambda_.11} parent=1 // pred_region
      _
    $region25: #{_lambda_.11} parent=1 // pred_fallthru
      _
    // Predicated region
    $region26: #{_lambda_.11} parent=1 // pred_check
      _
    $region27: #{_lambda_.11} parent=1 // pred_check_branch
      %36 = sbr.rel (0) target = $region29
    $region28: #{_lambda_.11} parent=1 // pred_region
      %38 = vsyncadd [#allocation5], 0
      %s40 = sshll.u32 %s6, 4
      %s41 = int_to_ptr.hbm [resolvable:$true] %s40
      %s42 = sshll.u32 [#allocation4], 4
      %s43 = int_to_ptr.vmem [resolvable:$true] %s42
      %45 = dma.hbm_to_vmem [thread:$0]  %s41, 16, %s43, [#allocation5]
    $region29: #{_lambda_.11} parent=1 // pred_fallthru
      _
    // Predicated region
    $region30: #{_lambda_.11} parent=1 // pred_check
      _
    $region31: #{_lambda_.11} parent=1 // pred_check_branch
      %47 = sbr.rel (0) target = $region33
    $region32: #{_lambda_.11} parent=1 // pred_region
      %49 = dma.done [#allocation3], 16
    $region33: #{_lambda_.11} parent=1 // pred_fallthru
      _
    // Predicated region
    $region34: #{_lambda_.11} parent=1 // pred_check
      _
    $region35: #{_lambda_.11} parent=1 // pred_check_branch
      %51 = sbr.rel (0) target = $region37
    $region36: #{_lambda_.11} parent=1 // pred_region
      %53 = dma.done [#allocation5], 16
    $region37: #{_lambda_.11} parent=1 // pred_fallthru
      _
    %v55 = vld [vmem:[%s0] sm:$0xff]
    %v56 = vld [vmem:[%s0 + $0x8] sm:$0xff]
    %v57 = vld [vmem:[%s0 + $0x10] sm:$0xff]
    %v58 = vld [vmem:[%s0 + $0x18] sm:$0xff]
    %v59 = vld [vmem:[%s1] sm:$0xf]
    %v60 = vld [vmem:[%s1 + $0x4] sm:$0xf]
    %v61 = vld [vmem:[%s1 + $0x8] sm:$0xf]
    %v62 = vld [vmem:[%s1 + $0xc] sm:$0xf]
    %v63 = vld [vmem:[%s1 + $0x10] sm:$0xf]
    %v64 = vld [vmem:[%s1 + $0x14] sm:$0xf]
    %v65 = vld [vmem:[%s1 + $0x18] sm:$0xf]
    %v66 = vld [vmem:[%s1 + $0x1c] sm:$0xf]
    %v67 = vld [vmem:[%s1 + $0x20] sm:$0xf]
    %v68 = vld [vmem:[%s1 + $0x24] sm:$0xf]
    %v69 = vld [vmem:[%s1 + $0x28] sm:$0xf]
    %v70 = vld [vmem:[%s1 + $0x2c] sm:$0xf]
    %v71 = vld [vmem:[%s1 + $0x30] sm:$0xf]
    %v72 = vld [vmem:[%s1 + $0x34] sm:$0xf]
    %v73 = vld [vmem:[%s1 + $0x38] sm:$0xf]
    %v74 = vld [vmem:[%s1 + $0x3c] sm:$0xf]
    %v75 = vld [vmem:[#allocation2] sm:$0x1]
    %v76 = vld [vmem:[%s3] sm:$0xf]
    %v77 = vld [vmem:[%s3 + $0x4] sm:$0xf]
    %v78 = vld [vmem:[%s3 + $0x8] sm:$0xf]
    %v79 = vld [vmem:[%s3 + $0xc] sm:$0xf]
    %v80 = vld [vmem:[%s3 + $0x10] sm:$0xf]
    %v81 = vld [vmem:[%s3 + $0x14] sm:$0xf]
    %v82 = vld [vmem:[%s3 + $0x18] sm:$0xf]
    %v83 = vld [vmem:[%s3 + $0x1c] sm:$0xf]
    %v84 = vld [vmem:[%s3 + $0x20] sm:$0xf]
    %v85 = vld [vmem:[%s4] sm:$0xff]
    %v86 = vld [vmem:[%s4 + $0x8] sm:$0xff]
    %v87 = vld [vmem:[%s5] sm:$0xf]
    %v88 = vld [vmem:[%s5 + $0x4] sm:$0xf]
    %v89 = vld [vmem:[%s5 + $0x8] sm:$0xf]
    %v90 = vld [vmem:[%s5 + $0xc] sm:$0xf]
    %v91 = vld [vmem:[%s5 + $0x10] sm:$0xf]
    %v92 = vld [vmem:[%s5 + $0x14] sm:$0xf]
    %v93 = vld [vmem:[%s5 + $0x18] sm:$0xf]
    %v94 = vld [vmem:[%s5 + $0x1c] sm:$0xf]
    %v95 = vld [vmem:[%s5 + $0x20] sm:$0xf]
    %v96 = vld [vmem:[%s5 + $0x24] sm:$0xf]
    %v97 = vld [vmem:[%s5 + $0x28] sm:$0xf]
    %v98 = vld [vmem:[%s5 + $0x2c] sm:$0xf]
    %v99 = vld [vmem:[%s5 + $0x30] sm:$0xf]
    %v100 = vld [vmem:[%s5 + $0x34] sm:$0xf]
    %v101 = vld [vmem:[%s5 + $0x38] sm:$0xf]
    %v102 = vld [vmem:[%s5 + $0x3c] sm:$0xf]
    %v103 = vld [vmem:[#allocation4] sm:$0x1]
    %v104 = vpack.c.bf16 %v56, %v55
    %v105 = vpack.c.bf16 %v58, %v57
    %v107 = vperm.slane %v75, 0
    %v125 = vunpack.c.l.b16 %v59
    %v126 = vunpack.c.l.b16 %v60
    %v127 = vunpack.c.l.b16 %v61
    %v128 = vunpack.c.l.b16 %v62
    %v129 = vunpack.c.l.b16 %v63
    %v130 = vunpack.c.l.b16 %v64
    %v131 = vunpack.c.l.b16 %v65
    %v132 = vunpack.c.l.b16 %v66
    %v133 = vunpack.c.l.b16 %v67
    %v134 = vunpack.c.l.b16 %v68
    %v135 = vunpack.c.l.b16 %v69
    %v136 = vunpack.c.l.b16 %v70
    %v137 = vunpack.c.l.b16 %v71
    %v138 = vunpack.c.l.b16 %v72
    %v139 = vunpack.c.l.b16 %v73
    %v140 = vunpack.c.l.b16 %v74
    %v141 = vpack.c.b16 %v126, %v125
    %v142 = vpack.c.b16 %v128, %v127
    %v143 = vpack.c.b16 %v130, %v129
    %v144 = vpack.c.b16 %v132, %v131
    %v145 = vpack.c.b16 %v134, %v133
    %v146 = vpack.c.b16 %v136, %v135
    %v147 = vpack.c.b16 %v138, %v137
    %v148 = vpack.c.b16 %v140, %v139
    %157 = vmatpush.bf16.msra.mxu0 %v148
    %158 = vmatpush.bf16.msra.mxu0 %v147
    %159 = vmatpush.bf16.msra.mxu0 %v146
    %160 = vmatpush.bf16.msra.mxu0 %v145
    %161 = vmatpush.bf16.msra.mxu0 %v144
    %162 = vmatpush.bf16.msra.mxu0 %v143
    %163 = vmatpush.bf16.msra.mxu0 %v142
    %164 = vmatpush.bf16.msra.mxu0 %v141
    %165 = vmatmul.bf16.gmra.mxu0 %v104
    %v166 = vpop.f32.mrf.mxu0
    %v167 = vadd.f32 %v107, %v166
    %v168 = vpop.f32.mrf.mxu0
    %v169 = vadd.f32 %v107, %v168
    %170 = vmatmul.bf16.gmra.mxu0 %v105
    %v171 = vpop.f32.mrf.mxu0
    %v172 = vadd.f32 %v107, %v171
    %v173 = vpop.f32.mrf.mxu0
    %v174 = vadd.f32 %v107, %v173
    %175 = vdwg.mxu0
    %v176 = vmax.f32 %v167, 0.0
    %v177 = vmax.f32 %v169, 0.0
    %v178 = vmax.f32 %v172, 0.0
    %v179 = vmax.f32 %v174, 0.0
    %v180 = vpack.c.bf16 %v177, %v176
    %v181 = vpack.c.bf16 %v179, %v178
    %v191 = vunpack.c.l.b16 %v76
    %v192 = vunpack.c.l.b16 %v77
    %v193 = vunpack.c.l.b16 %v78
    %v194 = vunpack.c.l.b16 %v79
    %v195 = vunpack.c.l.b16 %v80
    %v196 = vunpack.c.l.b16 %v81
    %v197 = vunpack.c.l.b16 %v82
    %v198 = vunpack.c.l.b16 %v83
    %v199 = vunpack.c.l.b16 %v84
    %v200 = vpack.c.b16 %v192, %v191
    %v201 = vpack.c.b16 %v194, %v193
    %v202 = vpack.c.b16 %v196, %v195
    %v203 = vpack.c.b16 %v198, %v197
    %v204 = vpack.c.b16 %v199, %v199
    %vm205 = vcmask 261120
    %v207 = vsel %vm205, %v200, 0
    %v210 = vsel %vm205, %v201, 0
    %v213 = vsel %vm205, %v202, 0
    %v216 = vsel %vm205, %v203, 0
    %v219 = vsel %vm205, %v204, 0
    %221 = vmatpush.bf16.msra.mxu0 0
    %222 = vmatpush.bf16.msra.mxu0 0
    %223 = vmatpush.bf16.msra.mxu0 0
    %224 = vmatpush.bf16.msra.mxu0 0
    %225 = vmatpush.bf16.msra.mxu0 0
    %226 = vmatpush.bf16.msra.mxu0 0
    %227 = vmatpush.bf16.msra.mxu0 %v181
    %228 = vmatpush.bf16.msra.mxu0 %v180
    %229 = vmatmul.bf16.gmra.mxu0 %v207
    %v230 = vpop.f32.mrf.mxu0
    %v231 = vadd.f32 0.0, %v230
    %v232 = vpop.f32.mrf.mxu0
    %v233 = vadd.f32 0.0, %v232
    %234 = vmatmul.bf16.gmra.mxu0 %v210
    %v235 = vpop.f32.mrf.mxu0
    %v236 = vadd.f32 0.0, %v235
    %v237 = vpop.f32.mrf.mxu0
    %v238 = vadd.f32 0.0, %v237
    %239 = vmatmul.bf16.gmra.mxu0 %v213
    %v240 = vpop.f32.mrf.mxu0
    %v241 = vadd.f32 0.0, %v240
    %v242 = vpop.f32.mrf.mxu0
    %v243 = vadd.f32 0.0, %v242
    %244 = vmatmul.bf16.gmra.mxu0 %v216
    %v245 = vpop.f32.mrf.mxu0
    %v246 = vadd.f32 0.0, %v245
    %v247 = vpop.f32.mrf.mxu0
    %v248 = vadd.f32 0.0, %v247
    %249 = vmatmul.bf16.gmra.mxu0 %v219
    %v250 = vpop.f32.mrf.mxu0
    %v251 = vadd.f32 0.0, %v250
    %v252 = vpop.f32.mrf.mxu0
    %253 = vdwg.mxu0
    %v254 = vperm.slane %v85, 0
    %v255 = vmul.f32 %v231, %v254
    %v256 = vperm.slane %v85, 1
    %v257 = vmul.f32 %v233, %v256
    %v258 = vadd.f32 %v255, %v257
    %v259 = vperm.slane %v85, 2
    %v260 = vmul.f32 %v236, %v259
    %v261 = vadd.f32 %v258, %v260
    %v262 = vperm.slane %v85, 3
    %v263 = vmul.f32 %v238, %v262
    %v264 = vadd.f32 %v261, %v263
    %v265 = vperm.slane %v85, 4
    %v266 = vmul.f32 %v241, %v265
    %v267 = vadd.f32 %v264, %v266
    %v268 = vperm.slane %v85, 5
    %v269 = vmul.f32 %v243, %v268
    %v270 = vadd.f32 %v267, %v269
    %v271 = vperm.slane %v85, 6
    %v272 = vmul.f32 %v246, %v271
    %v273 = vadd.f32 %v270, %v272
    %v274 = vperm.slane %v85, 7
    %v275 = vmul.f32 %v248, %v274
    %v276 = vadd.f32 %v273, %v275
    %v277 = vperm.slane %v86, 0
    %v278 = vmul.f32 %v251, %v277
    %v279 = vadd.f32 %v276, %v278
    %v280 = vpack.c.bf16 %v279, %v279
    %v282 = vperm.slane %v103, 0
    %v300 = vunpack.c.l.b16 %v87
    %v301 = vunpack.c.l.b16 %v88
    %v302 = vunpack.c.l.b16 %v89
    %v303 = vunpack.c.l.b16 %v90
    %v304 = vunpack.c.l.b16 %v91
    %v305 = vunpack.c.l.b16 %v92
    %v306 = vunpack.c.l.b16 %v93
    %v307 = vunpack.c.l.b16 %v94
    %v308 = vunpack.c.l.b16 %v95
    %v309 = vunpack.c.l.b16 %v96
    %v310 = vunpack.c.l.b16 %v97
    %v311 = vunpack.c.l.b16 %v98
    %v312 = vunpack.c.l.b16 %v99
    %v313 = vunpack.c.l.b16 %v100
    %v314 = vunpack.c.l.b16 %v101
    %v315 = vunpack.c.l.b16 %v102
    %v316 = vpack.c.b16 %v301, %v300
    %v317 = vpack.c.b16 %v303, %v302
    %v318 = vpack.c.b16 %v305, %v304
    %v319 = vpack.c.b16 %v307, %v306
    %v320 = vpack.c.b16 %v309, %v308
    %v321 = vpack.c.b16 %v311, %v310
    %v322 = vpack.c.b16 %v313, %v312
    %v323 = vpack.c.b16 %v315, %v314
    %332 = vmatpush.bf16.msra.mxu0 %v323
    %333 = vmatpush.bf16.msra.mxu0 %v322
    %334 = vmatpush.bf16.msra.mxu0 %v321
    %335 = vmatpush.bf16.msra.mxu0 %v320
    %336 = vmatpush.bf16.msra.mxu0 %v319
    %337 = vmatpush.bf16.msra.mxu0 %v318
    %338 = vmatpush.bf16.msra.mxu0 %v317
    %339 = vmatpush.bf16.msra.mxu0 %v316
    %340 = vmatmul.bf16.gmra.mxu0 %v280
    %v341 = vpop.f32.mrf.mxu0
    %v342 = vadd.f32 %v282, %v341
    %v343 = vpop.f32.mrf.mxu0
    %344 = vdwg.mxu0
    %v345 = vmax.f32 %v342, 0.0
    %346 = vst [vmem:[%s7] sm:$0xff] %v345
    // Predicated region
    $region38: #{_lambda_.11} parent=1 // pred_check
      _
    $region39: #{_lambda_.11} parent=1 // pred_check_branch
      %348 = sbr.rel (0) target = $region41
    $region40: #{_lambda_.11} parent=1 // pred_region
      _
    $region41: #{_lambda_.11} parent=1 // pred_fallthru
      _
    // Predicated region
    $region42: #{_lambda_.11} parent=1 // pred_check
      _
    $region43: #{_lambda_.11} parent=1 // pred_check_branch
      %350 = sbr.rel (0) target = $region45
    $region44: #{_lambda_.11} parent=1 // pred_region
      _
    $region45: #{_lambda_.11} parent=1 // pred_fallthru
      _
    %351 = vsyncpa [#allocation3], 1
    %352 = vsyncpa [#allocation5], 1

// kernel: _lambda_.12
$region0: #{_lambda_.12}
  #allocation0 [shape = 'u32[]', space=smem, size = 0x4, offset = 0x4, fixed_abs, tag = 'smem constant byte address 0x4 - core index']
  #allocation1 [shape = 'u32[72,128]{1,0:T(1,128)}', space=vmem, size = 0x9000, scoped, tag = 'internal scratch']
  #allocation2 [shape = 'f32[8,128]{1,0:T(8,128)}', space=vmem, size = 0x1000, scoped, tag = 'scratch operand']
  %s0 = inlined_call_operand.vmem [shape: f32[8,128], index: 0, kind: input, shape index: {}]
  %s1 = inlined_call_operand.vmem [shape: bf16[72,8], index: 1, kind: input, shape index: {}]
  %s2 = inlined_call_operand.vmem [shape: bf16[7,128,128], index: 2, kind: input, shape index: {}]
  %s3 = inlined_call_operand.vmem [shape: f32[7,1,128], index: 3, kind: input, shape index: {}]
  %s4 = inlined_call_operand.vmem [shape: f32[7,16,128], index: 4, kind: input, shape index: {}]
  %s5 = inlined_call_operand.vmem [shape: bf16[7,128,128], index: 5, kind: input, shape index: {}]
  %s6 = inlined_call_operand.vmem [shape: f32[7,1,128], index: 6, kind: input, shape index: {}]
  %s7 = inlined_call_operand.vmem [shape: f32[8,128], index: 7, kind: output, shape index: {}]
  %s8 = sld [smem:[#allocation0]]
  $region69: #{_lambda_.12} parent=0
    _
  %s10 = ssub.s32 1, %s8
  %s11 = scalar_select 0, %s10, %s8
  loop: start=0, step=1, limit=9
  $region2: #{_lambda_.12} parent=0 // loop_pre_header
    _
  $region3: #{_lambda_.12} parent=0 // loop_header
    %s13 = sphi 0, %s17
    %p14 = scmp.ge.s32.totalorder %s13, 9
    %s21 = sphi 0, %s21
    %s23 = sphi 0, %s21
    %s24 = sphi 0, %s23
    %s38 = sphi 0, %s24
    %s42 = sphi 0, %s42
    %s44 = sphi 0, %s42
    %s45 = sphi 0, %s44
    %s59 = sphi 0, %s45
    %s65 = sphi 0, %s67
    %s68 = sphi 0, %s65
    %s69 = sphi 0, %s68
    %s85 = sphi 0, %s69
    %s91 = sphi 0, %s93
    %s94 = sphi 0, %s91
    %s95 = sphi 0, %s94
    %s111 = sphi 0, %s95
    %s117 = sphi 0, %s119
    %s120 = sphi 0, %s117
    %s121 = sphi 0, %s120
    %s137 = sphi 0, %s121
    %s143 = sphi 0, %s145
    %s146 = sphi 0, %s143
    %s147 = sphi 0, %s146
    %s163 = sphi 0, %s147
    %s169 = sphi 0, %s171
    %s172 = sphi 0, %s169
    %s173 = sphi 0, %s172
    %s189 = sphi 0, %s173
    %s193 = sphi 0, %s193
    %s195 = sphi 0, %s193
    %s196 = sphi 0, %s195
    %s210 = sphi 0, %s196
  $region4: #{_lambda_.12} parent=0 // loop_header_branch
    %16 = sbr.rel (%p14) target = $region8
  $region5: #{_lambda_.12} parent=0 // loop_body
    %s18 = ssub.s32 %s13, 1
    %s19 = ssub.s32 %s13, 2
    %s20 = sadd.s32 %s13, 1
    %s22 = sadd.s32 %s21, 1
    %p25 = scmp.eq.s32.totalorder %s13, 6
    %p26 = scmp.ne.s32.totalorder %s21, %s23
    %p27 = scmp.eq.s32.totalorder %s13, 0
    %p28 = por %p26, %p27
    %p29 = scmp.ne.s32.totalorder %s21, %s23
    %p30 = scmp.eq.s32.totalorder %s18, 6
    %p31 = por %p29, %p30
    %p32 = scmp.ne.s32.totalorder %s23, %s24
    %p33 = scmp.eq.s32.totalorder %s18, 0
    %p34 = por %p32, %p33
    %p35 = scmp.ne.s32.totalorder %s23, %s24
    %p36 = scmp.eq.s32.totalorder %s19, 6
    %p37 = por %p35, %p36
    %p39 = scmp.ne.s32.totalorder %s24, %s38
    %p40 = scmp.eq.s32.totalorder %s19, 0
    %p41 = por %p39, %p40
    %s43 = sadd.s32 %s42, 1
    %p46 = scmp.eq.s32.totalorder %s13, 6
    %p47 = scmp.ne.s32.totalorder %s42, %s44
    %p48 = scmp.eq.s32.totalorder %s13, 0
    %p49 = por %p47, %p48
    %p50 = scmp.ne.s32.totalorder %s42, %s44
    %p51 = scmp.eq.s32.totalorder %s18, 6
    %p52 = por %p50, %p51
    %p53 = scmp.ne.s32.totalorder %s44, %s45
    %p54 = scmp.eq.s32.totalorder %s18, 0
    %p55 = por %p53, %p54
    %p56 = scmp.ne.s32.totalorder %s44, %s45
    %p57 = scmp.eq.s32.totalorder %s19, 6
    %p58 = por %p56, %p57
    %p60 = scmp.ne.s32.totalorder %s45, %s59
    %p61 = scmp.eq.s32.totalorder %s19, 0
    %p62 = por %p60, %p61
    %s63 = ssub.s32 %s13, %s20
    %p64 = scmp.eq.s32.totalorder %s63, 0
    %s66 = sadd.s32 %s65, 1
    %s67 = scalar_select %p64, %s65, %s66
    %p70 = pneg %p64
    %p71 = scmp.eq.s32.totalorder %s13, 6
    %p72 = por %p70, %p71
    %p73 = scmp.ne.s32.totalorder %s65, %s68
    %p74 = scmp.eq.s32.totalorder %s13, 0
    %p75 = por %p73, %p74
    %p76 = scmp.ne.s32.totalorder %s65, %s68
    %p77 = scmp.eq.s32.totalorder %s18, 6
    %p78 = por %p76, %p77
    %p79 = scmp.ne.s32.totalorder %s68, %s69
    %p80 = scmp.eq.s32.totalorder %s18, 0
    %p81 = por %p79, %p80
    %p82 = scmp.ne.s32.totalorder %s68, %s69
    %p83 = scmp.eq.s32.totalorder %s19, 6
    %p84 = por %p82, %p83
    %p86 = scmp.ne.s32.totalorder %s69, %s85
    %p87 = scmp.eq.s32.totalorder %s19, 0
    %p88 = por %p86, %p87
    %s89 = ssub.s32 %s13, %s20
    %p90 = scmp.eq.s32.totalorder %s89, 0
    %s92 = sadd.s32 %s91, 1
    %s93 = scalar_select %p90, %s91, %s92
    %p96 = pneg %p90
    %p97 = scmp.eq.s32.totalorder %s13, 6
    %p98 = por %p96, %p97
    %p99 = scmp.ne.s32.totalorder %s91, %s94
    %p100 = scmp.eq.s32.totalorder %s13, 0
    %p101 = por %p99, %p100
    %p102 = scmp.ne.s32.totalorder %s91, %s94
    %p103 = scmp.eq.s32.totalorder %s18, 6
    %p104 = por %p102, %p103
    %p105 = scmp.ne.s32.totalorder %s94, %s95
    %p106 = scmp.eq.s32.totalorder %s18, 0
    %p107 = por %p105, %p106
    %p108 = scmp.ne.s32.totalorder %s94, %s95
    %p109 = scmp.eq.s32.totalorder %s19, 6
    %p110 = por %p108, %p109
    %p112 = scmp.ne.s32.totalorder %s95, %s111
    %p113 = scmp.eq.s32.totalorder %s19, 0
    %p114 = por %p112, %p113
    %s115 = ssub.s32 %s13, %s20
    %p116 = scmp.eq.s32.totalorder %s115, 0
    %s118 = sadd.s32 %s117, 1
    %s119 = scalar_select %p116, %s117, %s118
    %p122 = pneg %p116
    %p123 = scmp.eq.s32.totalorder %s13, 6
    %p124 = por %p122, %p123
    %p125 = scmp.ne.s32.totalorder %s117, %s120
    %p126 = scmp.eq.s32.totalorder %s13, 0
    %p127 = por %p125, %p126
    %p128 = scmp.ne.s32.totalorder %s117, %s120
    %p129 = scmp.eq.s32.totalorder %s18, 6
    %p130 = por %p128, %p129
    %p131 = scmp.ne.s32.totalorder %s120, %s121
    %p132 = scmp.eq.s32.totalorder %s18, 0
    %p133 = por %p131, %p132
    %p134 = scmp.ne.s32.totalorder %s120, %s121
    %p135 = scmp.eq.s32.totalorder %s19, 6
    %p136 = por %p134, %p135
    %p138 = scmp.ne.s32.totalorder %s121, %s137
    %p139 = scmp.eq.s32.totalorder %s19, 0
    %p140 = por %p138, %p139
    %s141 = ssub.s32 %s13, %s20
    %p142 = scmp.eq.s32.totalorder %s141, 0
    %s144 = sadd.s32 %s143, 1
    %s145 = scalar_select %p142, %s143, %s144
    %p148 = pneg %p142
    %p149 = scmp.eq.s32.totalorder %s13, 6
    %p150 = por %p148, %p149
    %p151 = scmp.ne.s32.totalorder %s143, %s146
    %p152 = scmp.eq.s32.totalorder %s13, 0
    %p153 = por %p151, %p152
    %p154 = scmp.ne.s32.totalorder %s143, %s146
    %p155 = scmp.eq.s32.totalorder %s18, 6
    %p156 = por %p154, %p155
    %p157 = scmp.ne.s32.totalorder %s146, %s147
    %p158 = scmp.eq.s32.totalorder %s18, 0
    %p159 = por %p157, %p158
    %p160 = scmp.ne.s32.totalorder %s146, %s147
    %p161 = scmp.eq.s32.totalorder %s19, 6
    %p162 = por %p160, %p161
    %p164 = scmp.ne.s32.totalorder %s147, %s163
    %p165 = scmp.eq.s32.totalorder %s19, 0
    %p166 = por %p164, %p165
    %s167 = ssub.s32 %s13, %s20
    %p168 = scmp.eq.s32.totalorder %s167, 0
    %s170 = sadd.s32 %s169, 1
    %s171 = scalar_select %p168, %s169, %s170
    %p174 = pneg %p168
    %p175 = scmp.eq.s32.totalorder %s13, 6
    %p176 = por %p174, %p175
    %p177 = scmp.ne.s32.totalorder %s169, %s172
    %p178 = scmp.eq.s32.totalorder %s13, 0
    %p179 = por %p177, %p178
    %p180 = scmp.ne.s32.totalorder %s169, %s172
    %p181 = scmp.eq.s32.totalorder %s18, 6
    %p182 = por %p180, %p181
    %p183 = scmp.ne.s32.totalorder %s172, %s173
    %p184 = scmp.eq.s32.totalorder %s18, 0
    %p185 = por %p183, %p184
    %p186 = scmp.ne.s32.totalorder %s172, %s173
    %p187 = scmp.eq.s32.totalorder %s19, 6
    %p188 = por %p186, %p187
    %p190 = scmp.ne.s32.totalorder %s173, %s189
    %p191 = scmp.eq.s32.totalorder %s19, 0
    %p192 = por %p190, %p191
    %s194 = sadd.s32 %s193, 1
    %p197 = scmp.eq.s32.totalorder %s13, 6
    %p198 = scmp.ne.s32.totalorder %s193, %s195
    %p199 = scmp.eq.s32.totalorder %s13, 0
    %p200 = por %p198, %p199
    %p201 = scmp.ne.s32.totalorder %s193, %s195
    %p202 = scmp.eq.s32.totalorder %s18, 6
    %p203 = por %p201, %p202
    %p204 = scmp.ne.s32.totalorder %s195, %s196
    %p205 = scmp.eq.s32.totalorder %s18, 0
    %p206 = por %p204, %p205
    %p207 = scmp.ne.s32.totalorder %s195, %s196
    %p208 = scmp.eq.s32.totalorder %s19, 6
    %p209 = por %p207, %p208
    %p211 = scmp.ne.s32.totalorder %s196, %s210
    %p212 = scmp.eq.s32.totalorder %s19, 0
    %p213 = por %p211, %p212
    %p214 = scmp.le.s32.totalorder 1, %s13
    %p215 = scmp.lt.s32.totalorder %s13, 8
    %p216 = pnand %p214, %p215
    %p217 = pneg %p216
    // Predicated region
    $region9: #{_lambda_.12} parent=5 // pred_check
      _
    $region10: #{_lambda_.12} parent=5 // pred_check_branch
      %219 = sbr.rel (%p216) target = $region12
    $region11: #{_lambda_.12} parent=5 // pred_region
      %s220 = ssub.s32 %s13, 1
      // Predicated region
      $region13: #{_lambda_.12} parent=11 // pred_check
        %p221 = pneg %p34
      $region14: #{_lambda_.12} parent=11 // pred_check_branch
        %223 = sbr.rel (%p221) target = $region16
      $region15: #{_lambda_.12} parent=11 // pred_region
        _
      $region16: #{_lambda_.12} parent=11 // pred_fallthru
        _
      // Predicated region
      $region17: #{_lambda_.12} parent=11 // pred_check
        %p224 = pneg %p55
      $region18: #{_lambda_.12} parent=11 // pred_check_branch
        %226 = sbr.rel (%p224) target = $region20
      $region19: #{_lambda_.12} parent=11 // pred_region
        _
      $region20: #{_lambda_.12} parent=11 // pred_fallthru
        _
    $region12: #{_lambda_.12} parent=5 // pred_fallthru
      _
    %p227 = scmp.lt.s32.totalorder %s13, 7
    // Predicated region
    $region21: #{_lambda_.12} parent=5 // pred_check
      %p228 = pneg %p227
    $region22: #{_lambda_.12} parent=5 // pred_check_branch
      %230 = sbr.rel (%p228) target = $region24
    $region23: #{_lambda_.12} parent=5 // pred_region
      // Predicated region
      $region25: #{_lambda_.12} parent=23 // pred_check
        %p231 = pneg %p75
      $region26: #{_lambda_.12} parent=23 // pred_check_branch
        %233 = sbr.rel (%p231) target = $region28
      $region27: #{_lambda_.12} parent=23 // pred_region
        %p234 = scmp.lt.s32.totalorder %s13, 6
        %s235 = scalar_select %p234, %s13, 6
        %s236 = smul.addr %s235, 16
        %s237 = smul.addr %s236, 4
        %s238 = scalar_lea.vmem %s2, %s237
      $region28: #{_lambda_.12} parent=23 // pred_fallthru
        _
      // Predicated region
      $region29: #{_lambda_.12} parent=23 // pred_check
        %p239 = pneg %p101
      $region30: #{_lambda_.12} parent=23 // pred_check_branch
        %241 = sbr.rel (%p239) target = $region32
      $region31: #{_lambda_.12} parent=23 // pred_region
        %p242 = scmp.lt.s32.totalorder %s13, 6
        %s243 = scalar_select %p242, %s13, 6
        %s244 = scalar_lea.vmem %s3, %s243
      $region32: #{_lambda_.12} parent=23 // pred_fallthru
        _
      // Predicated region
      $region33: #{_lambda_.12} parent=23 // pred_check
        %p245 = pneg %p127
      $region34: #{_lambda_.12} parent=23 // pred_check_branch
        %247 = sbr.rel (%p245) target = $region36
      $region35: #{_lambda_.12} parent=23 // pred_region
        %p248 = scmp.lt.s32.totalorder %s13, 6
        %s249 = scalar_select %p248, %s13, 6
        %s250 = smul.addr %s249, 2
        %s251 = smul.addr %s250, 8
        %s252 = scalar_lea.vmem %s4, %s251
      $region36: #{_lambda_.12} parent=23 // pred_fallthru
        _
      // Predicated region
      $region37: #{_lambda_.12} parent=23 // pred_check
        %p253 = pneg %p153
      $region38: #{_lambda_.12} parent=23 // pred_check_branch
        %255 = sbr.rel (%p253) target = $region40
      $region39: #{_lambda_.12} parent=23 // pred_region
        %p256 = scmp.lt.s32.totalorder %s13, 6
        %s257 = scalar_select %p256, %s13, 6
        %s258 = smul.addr %s257, 16
        %s259 = smul.addr %s258, 4
        %s260 = scalar_lea.vmem %s5, %s259
      $region40: #{_lambda_.12} parent=23 // pred_fallthru
        _
      // Predicated region
      $region41: #{_lambda_.12} parent=23 // pred_check
        %p261 = pneg %p179
      $region42: #{_lambda_.12} parent=23 // pred_check_branch
        %263 = sbr.rel (%p261) target = $region44
      $region43: #{_lambda_.12} parent=23 // pred_region
        %p264 = scmp.lt.s32.totalorder %s13, 6
        %s265 = scalar_select %p264, %s13, 6
        %s266 = scalar_lea.vmem %s6, %s265
      $region44: #{_lambda_.12} parent=23 // pred_fallthru
        _
    $region24: #{_lambda_.12} parent=5 // pred_fallthru
      _
    %p267 = scmp.le.s32.totalorder 1, %s13
    %p268 = scmp.lt.s32.totalorder %s13, 8
    %p269 = pnand %p267, %p268
    %p270 = pneg %p269
    // Predicated region
    $region45: #{_lambda_.12} parent=5 // pred_check
      _
    $region46: #{_lambda_.12} parent=5 // pred_check_branch
      %272 = sbr.rel (%p269) target = $region48
    $region47: #{_lambda_.12} parent=5 // pred_region
      %s273 = ssub.s32 %s13, 1
      %p274 = pneg %p34
      %p275 = pneg %p31
      %p276 = pneg %p55
      %p277 = pneg %p52
      %p278 = scmp.lt.s32.totalorder %s18, 6
      %s279 = scalar_select %p278, %s18, 6
      %s280 = smul.addr %s279, 16
      %s281 = smul.addr %s280, 4
      %s282 = scalar_lea.vmem %s2, %s281
      %p283 = pneg %p81
      %p284 = pneg %p78
      %p285 = scmp.lt.s32.totalorder %s18, 6
      %s286 = scalar_select %p285, %s18, 6
      %s287 = scalar_lea.vmem %s3, %s286
      %p288 = pneg %p107
      %p289 = pneg %p104
      %p290 = scmp.lt.s32.totalorder %s18, 6
      %s291 = scalar_select %p290, %s18, 6
      %s292 = smul.addr %s291, 2
      %s293 = smul.addr %s292, 8
      %s294 = scalar_lea.vmem %s4, %s293
      %p295 = pneg %p133
      %p296 = pneg %p130
      %p297 = scmp.lt.s32.totalorder %s18, 6
      %s298 = scalar_select %p297, %s18, 6
      %s299 = smul.addr %s298, 16
      %s300 = smul.addr %s299, 4
      %s301 = scalar_lea.vmem %s5, %s300
      %p302 = pneg %p159
      %p303 = pneg %p156
      %p304 = scmp.lt.s32.totalorder %s18, 6
      %s305 = scalar_select %p304, %s18, 6
      %s306 = scalar_lea.vmem %s6, %s305
      %p307 = pneg %p185
      %p308 = pneg %p182
      %p309 = pneg %p206
      %p310 = pneg %p203
      %p311 = scmp.lt.s32.totalorder %s18, 6
      %s312 = scalar_select %p311, %s18, 6
      %s313 = smul.addr %s312, 16
      %s314 = smul.addr %s313, 4
      %s315 = scalar_lea.vmem %s2, %s314
      %p316 = scmp.lt.s32.totalorder %s18, 6
      %s317 = scalar_select %p316, %s18, 6
      %s318 = scalar_lea.vmem %s3, %s317
      %p319 = scmp.lt.s32.totalorder %s18, 6
      %s320 = scalar_select %p319, %s18, 6
      %s321 = smul.addr %s320, 2
      %s322 = smul.addr %s321, 8
      %s323 = scalar_lea.vmem %s4, %s322
      %p324 = scmp.lt.s32.totalorder %s18, 6
      %s325 = scalar_select %p324, %s18, 6
      %s326 = smul.addr %s325, 16
      %s327 = smul.addr %s326, 4
      %s328 = scalar_lea.vmem %s5, %s327
      %p329 = scmp.lt.s32.totalorder %s18, 6
      %s330 = scalar_select %p329, %s18, 6
      %s331 = scalar_lea.vmem %s6, %s330
      %p333 = scmp.eq.s32.totalorder %s18, 0
      // Predicated region
      $region49: #{_lambda_.12} parent=47 // pred_check
        %p334 = pneg %p333
      $region50: #{_lambda_.12} parent=47 // pred_check_branch
        %336 = sbr.rel (%p334) target = $region52
      $region51: #{_lambda_.12} parent=47 // pred_region
        %v337 = vld [vmem:[%s0] sm:$0xff]
        %338 = vst [vmem:[#allocation2] sm:$0xff] %v337
      $region52: #{_lambda_.12} parent=47 // pred_fallthru
        _
      %v339 = vld [vmem:[#allocation2] sm:$0xff]
      %v340 = vld [vmem:[%s315] sm:$0xf]
      %v341 = vld [vmem:[%s315 + $0x4] sm:$0xf]
      %v342 = vld [vmem:[%s315 + $0x8] sm:$0xf]
      %v343 = vld [vmem:[%s315 + $0xc] sm:$0xf]
      %v344 = vld [vmem:[%s315 + $0x10] sm:$0xf]
      %v345 = vld [vmem:[%s315 + $0x14] sm:$0xf]
      %v346 = vld [vmem:[%s315 + $0x18] sm:$0xf]
      %v347 = vld [vmem:[%s315 + $0x1c] sm:$0xf]
      %v348 = vld [vmem:[%s315 + $0x20] sm:$0xf]
      %v349 = vld [vmem:[%s315 + $0x24] sm:$0xf]
      %v350 = vld [vmem:[%s315 + $0x28] sm:$0xf]
      %v351 = vld [vmem:[%s315 + $0x2c] sm:$0xf]
      %v352 = vld [vmem:[%s315 + $0x30] sm:$0xf]
      %v353 = vld [vmem:[%s315 + $0x34] sm:$0xf]
      %v354 = vld [vmem:[%s315 + $0x38] sm:$0xf]
      %v355 = vld [vmem:[%s315 + $0x3c] sm:$0xf]
      %v356 = vld [vmem:[%s318] sm:$0x1]
      %v357 = vld [vmem:[%s1] sm:$0xf]
      %v358 = vld [vmem:[%s1 + $0x4] sm:$0xf]
      %v359 = vld [vmem:[%s1 + $0x8] sm:$0xf]
      %v360 = vld [vmem:[%s1 + $0xc] sm:$0xf]
      %v361 = vld [vmem:[%s1 + $0x10] sm:$0xf]
      %v362 = vld [vmem:[%s1 + $0x14] sm:$0xf]
      %v363 = vld [vmem:[%s1 + $0x18] sm:$0xf]
      %v364 = vld [vmem:[%s1 + $0x1c] sm:$0xf]
      %v365 = vld [vmem:[%s1 + $0x20] sm:$0xf]
      %v366 = vld [vmem:[%s323] sm:$0xff]
      %v367 = vld [vmem:[%s323 + $0x8] sm:$0xff]
      %v368 = vld [vmem:[%s328] sm:$0xf]
      %v369 = vld [vmem:[%s328 + $0x4] sm:$0xf]
      %v370 = vld [vmem:[%s328 + $0x8] sm:$0xf]
      %v371 = vld [vmem:[%s328 + $0xc] sm:$0xf]
      %v372 = vld [vmem:[%s328 + $0x10] sm:$0xf]
      %v373 = vld [vmem:[%s328 + $0x14] sm:$0xf]
      %v374 = vld [vmem:[%s328 + $0x18] sm:$0xf]
      %v375 = vld [vmem:[%s328 + $0x1c] sm:$0xf]
      %v376 = vld [vmem:[%s328 + $0x20] sm:$0xf]
      %v377 = vld [vmem:[%s328 + $0x24] sm:$0xf]
      %v378 = vld [vmem:[%s328 + $0x28] sm:$0xf]
      %v379 = vld [vmem:[%s328 + $0x2c] sm:$0xf]
      %v380 = vld [vmem:[%s328 + $0x30] sm:$0xf]
      %v381 = vld [vmem:[%s328 + $0x34] sm:$0xf]
      %v382 = vld [vmem:[%s328 + $0x38] sm:$0xf]
      %v383 = vld [vmem:[%s328 + $0x3c] sm:$0xf]
      %v384 = vld [vmem:[%s331] sm:$0x1]
      %v385 = vpack.c.bf16 %v339, %v339
      %v387 = vperm.slane %v356, 0
      %v405 = vunpack.c.l.b16 %v340
      %v406 = vunpack.c.l.b16 %v341
      %v407 = vunpack.c.l.b16 %v342
      %v408 = vunpack.c.l.b16 %v343
      %v409 = vunpack.c.l.b16 %v344
      %v410 = vunpack.c.l.b16 %v345
      %v411 = vunpack.c.l.b16 %v346
      %v412 = vunpack.c.l.b16 %v347
      %v413 = vunpack.c.l.b16 %v348
      %v414 = vunpack.c.l.b16 %v349
      %v415 = vunpack.c.l.b16 %v350
      %v416 = vunpack.c.l.b16 %v351
      %v417 = vunpack.c.l.b16 %v352
      %v418 = vunpack.c.l.b16 %v353
      %v419 = vunpack.c.l.b16 %v354
      %v420 = vunpack.c.l.b16 %v355
      %v421 = vpack.c.b16 %v406, %v405
      %v422 = vpack.c.b16 %v408, %v407
      %v423 = vpack.c.b16 %v410, %v409
      %v424 = vpack.c.b16 %v412, %v411
      %v425 = vpack.c.b16 %v414, %v413
      %v426 = vpack.c.b16 %v416, %v415
      %v427 = vpack.c.b16 %v418, %v417
      %v428 = vpack.c.b16 %v420, %v419
      %437 = vmatpush.bf16.msra.mxu0 %v428
      %438 = vmatpush.bf16.msra.mxu0 %v427
      %439 = vmatpush.bf16.msra.mxu0 %v426
      %440 = vmatpush.bf16.msra.mxu0 %v425
      %441 = vmatpush.bf16.msra.mxu0 %v424
      %442 = vmatpush.bf16.msra.mxu0 %v423
      %443 = vmatpush.bf16.msra.mxu0 %v422
      %444 = vmatpush.bf16.msra.mxu0 %v421
      %445 = vmatmul.bf16.gmra.mxu0 %v385
      %v446 = vpop.f32.mrf.mxu0
      %v447 = vadd.f32 %v387, %v446
      %v448 = vpop.f32.mrf.mxu0
      %449 = vdwg.mxu0
      %v450 = vmax.f32 %v447, 0.0
      %v451 = vpack.c.bf16 %v450, %v450
      %v461 = vunpack.c.l.b16 %v357
      %v462 = vunpack.c.l.b16 %v358
      %v463 = vunpack.c.l.b16 %v359
      %v464 = vunpack.c.l.b16 %v360
      %v465 = vunpack.c.l.b16 %v361
      %v466 = vunpack.c.l.b16 %v362
      %v467 = vunpack.c.l.b16 %v363
      %v468 = vunpack.c.l.b16 %v364
      %v469 = vunpack.c.l.b16 %v365
      %v470 = vpack.c.b16 %v462, %v461
      %v471 = vpack.c.b16 %v464, %v463
      %v472 = vpack.c.b16 %v466, %v465
      %v473 = vpack.c.b16 %v468, %v467
      %v474 = vpack.c.b16 %v469, %v469
      %vm475 = vcmask 64512
      %v477 = vsel %vm475, %v470, 0
      %v480 = vsel %vm475, %v471, 0
      %v483 = vsel %vm475, %v472, 0
      %v486 = vsel %vm475, %v473, 0
      %v489 = vsel %vm475, %v474, 0
      %vm491 = vcmask 1043456
      %v493 = vsel %vm491, %v451, 0
      %495 = vmatpush.bf16.msra.mxu0 0
      %496 = vmatpush.bf16.msra.mxu0 0
      %497 = vmatpush.bf16.msra.mxu0 0
      %498 = vmatpush.bf16.msra.mxu0 0
      %499 = vmatpush.bf16.msra.mxu0 0
      %500 = vmatpush.bf16.msra.mxu0 0
      %501 = vmatpush.bf16.msra.mxu0 0
      %502 = vmatpush.bf16.msra.mxu0 %v493
      %503 = vmatmul.bf16.gmra.mxu0 %v477
      %v504 = vpop.f32.mrf.mxu0
      %v505 = vadd.f32 0.0, %v504
      %v506 = vpop.f32.mrf.mxu0
      %v507 = vadd.f32 0.0, %v506
      %508 = vmatmul.bf16.gmra.mxu0 %v480
      %v509 = vpop.f32.mrf.mxu0
      %v510 = vadd.f32 0.0, %v509
      %v511 = vpop.f32.mrf.mxu0
      %v512 = vadd.f32 0.0, %v511
      %513 = vmatmul.bf16.gmra.mxu0 %v483
      %v514 = vpop.f32.mrf.mxu0
      %v515 = vadd.f32 0.0, %v514
      %v516 = vpop.f32.mrf.mxu0
      %v517 = vadd.f32 0.0, %v516
      %518 = vmatmul.bf16.gmra.mxu0 %v486
      %v519 = vpop.f32.mrf.mxu0
      %v520 = vadd.f32 0.0, %v519
      %v521 = vpop.f32.mrf.mxu0
      %v522 = vadd.f32 0.0, %v521
      %523 = vmatmul.bf16.gmra.mxu0 %v489
      %v524 = vpop.f32.mrf.mxu0
      %v525 = vadd.f32 0.0, %v524
      %v526 = vpop.f32.mrf.mxu0
      %527 = vdwg.mxu0
      %v528 = vperm.slane %v366, 0
      %v529 = vmul.f32 %v505, %v528
      %v530 = vperm.slane %v366, 1
      %v531 = vmul.f32 %v507, %v530
      %v532 = vadd.f32 %v529, %v531
      %v533 = vperm.slane %v366, 2
      %v534 = vmul.f32 %v510, %v533
      %v535 = vadd.f32 %v532, %v534
      %v536 = vperm.slane %v366, 3
      %v537 = vmul.f32 %v512, %v536
      %v538 = vadd.f32 %v535, %v537
      %v539 = vperm.slane %v366, 4
      %v540 = vmul.f32 %v515, %v539
      %v541 = vadd.f32 %v538, %v540
      %v542 = vperm.slane %v366, 5
      %v543 = vmul.f32 %v517, %v542
      %v544 = vadd.f32 %v541, %v543
      %v545 = vperm.slane %v366, 6
      %v546 = vmul.f32 %v520, %v545
      %v547 = vadd.f32 %v544, %v546
      %v548 = vperm.slane %v366, 7
      %v549 = vmul.f32 %v522, %v548
      %v550 = vadd.f32 %v547, %v549
      %v551 = vperm.slane %v367, 0
      %v552 = vmul.f32 %v525, %v551
      %v553 = vadd.f32 %v550, %v552
      %v554 = vpack.c.bf16 %v553, %v553
      %v556 = vperm.slane %v384, 0
      %v574 = vunpack.c.l.b16 %v368
      %v575 = vunpack.c.l.b16 %v369
      %v576 = vunpack.c.l.b16 %v370
      %v577 = vunpack.c.l.b16 %v371
      %v578 = vunpack.c.l.b16 %v372
      %v579 = vunpack.c.l.b16 %v373
      %v580 = vunpack.c.l.b16 %v374
      %v581 = vunpack.c.l.b16 %v375
      %v582 = vunpack.c.l.b16 %v376
      %v583 = vunpack.c.l.b16 %v377
      %v584 = vunpack.c.l.b16 %v378
      %v585 = vunpack.c.l.b16 %v379
      %v586 = vunpack.c.l.b16 %v380
      %v587 = vunpack.c.l.b16 %v381
      %v588 = vunpack.c.l.b16 %v382
      %v589 = vunpack.c.l.b16 %v383
      %v590 = vpack.c.b16 %v575, %v574
      %v591 = vpack.c.b16 %v577, %v576
      %v592 = vpack.c.b16 %v579, %v578
      %v593 = vpack.c.b16 %v581, %v580
      %v594 = vpack.c.b16 %v583, %v582
      %v595 = vpack.c.b16 %v585, %v584
      %v596 = vpack.c.b16 %v587, %v586
      %v597 = vpack.c.b16 %v589, %v588
      %606 = vmatpush.bf16.msra.mxu0 %v597
      %607 = vmatpush.bf16.msra.mxu0 %v596
      %608 = vmatpush.bf16.msra.mxu0 %v595
      %609 = vmatpush.bf16.msra.mxu0 %v594
      %610 = vmatpush.bf16.msra.mxu0 %v593
      %611 = vmatpush.bf16.msra.mxu0 %v592
      %612 = vmatpush.bf16.msra.mxu0 %v591
      %613 = vmatpush.bf16.msra.mxu0 %v590
      %614 = vmatmul.bf16.gmra.mxu0 %v554
      %v615 = vpop.f32.mrf.mxu0
      %v616 = vadd.f32 %v556, %v615
      %v617 = vpop.f32.mrf.mxu0
      %618 = vdwg.mxu0
      %v619 = vmax.f32 %v616, 0.0
      %620 = vst [vmem:[#allocation2] sm:$0xff] %v619
      %p621 = scmp.eq.s32.totalorder %s18, 6
      // Predicated region
      $region53: #{_lambda_.12} parent=47 // pred_check
        %p622 = pneg %p621
      $region54: #{_lambda_.12} parent=47 // pred_check_branch
        %624 = sbr.rel (%p622) target = $region56
      $region55: #{_lambda_.12} parent=47 // pred_region
        %625 = vst [vmem:[%s7] sm:$0xff] %v619
      $region56: #{_lambda_.12} parent=47 // pred_fallthru
        _
      // Predicated region
      $region57: #{_lambda_.12} parent=47 // pred_check
        %p626 = pneg %p203
      $region58: #{_lambda_.12} parent=47 // pred_check_branch
        %628 = sbr.rel (%p626) target = $region60
      $region59: #{_lambda_.12} parent=47 // pred_region
        _
      $region60: #{_lambda_.12} parent=47 // pred_fallthru
        _
      // Predicated region
      $region61: #{_lambda_.12} parent=47 // pred_check
        %p629 = pneg %p203
      $region62: #{_lambda_.12} parent=47 // pred_check_branch
        %631 = sbr.rel (%p629) target = $region64
      $region63: #{_lambda_.12} parent=47 // pred_region
        _
      $region64: #{_lambda_.12} parent=47 // pred_fallthru
        _
    $region48: #{_lambda_.12} parent=5 // pred_fallthru
      _
    %p632 = scmp.le.s32.totalorder 2, %s13
    // Predicated region
    $region65: #{_lambda_.12} parent=5 // pred_check
      %p633 = pneg %p632
    $region66: #{_lambda_.12} parent=5 // pred_check_branch
      %635 = sbr.rel (%p633) target = $region68
    $region67: #{_lambda_.12} parent=5 // pred_region
      %s636 = ssub.s32 %s13, 2
    $region68: #{_lambda_.12} parent=5 // pred_fallthru
      _
  $region6: #{_lambda_.12} parent=0 // loop_footer
    %s17 = sadd.s32 1, %s13
  $region7: #{_lambda_.12} parent=0 // loop_footer_branch
    %12 = sbr.rel target = $region3
  $region8: #{_lambda_.12} parent=0 // loop_exit
    _

// kernel: _lambda_.8
$region0: #{_lambda_.8}
  #allocation0 [shape = 'u32[]', space=smem, size = 0x4, offset = 0x4, fixed_abs, tag = 'smem constant byte address 0x4 - core index']
  #allocation1 [shape = 'u32[72,128]{1,0:T(1,128)}', space=vmem, size = 0x9000, scoped, tag = 'internal scratch']
  %s0 = inlined_call_operand.vmem [shape: f32[512,27], index: 0, kind: input, shape index: {}]
  %s1 = inlined_call_operand.vmem [shape: bf16[27,128], index: 1, kind: input, shape index: {}]
  %s2 = inlined_call_operand.vmem [shape: f32[1,128], index: 2, kind: input, shape index: {}]
  %s3 = inlined_call_operand.vmem [shape: bf16[1152,512], index: 3, kind: input, shape index: {}]
  %s4 = inlined_call_operand.vmem [shape: f32[128,128], index: 4, kind: output, shape index: {}]
  %s5 = sld [smem:[#allocation0]]
  $region26: #{_lambda_.8} parent=0
    _
  %s7 = ssub.s32 1, %s5
  %s8 = scalar_select 0, %s7, %s5
  // Predicated region
  $region2: #{_lambda_.8} parent=0 // pred_check
    _
  $region3: #{_lambda_.8} parent=0 // pred_check_branch
    %10 = sbr.rel (0) target = $region5
  $region4: #{_lambda_.8} parent=0 // pred_region
    _
  $region5: #{_lambda_.8} parent=0 // pred_fallthru
    _
  // Predicated region
  $region6: #{_lambda_.8} parent=0 // pred_check
    _
  $region7: #{_lambda_.8} parent=0 // pred_check_branch
    %12 = sbr.rel (0) target = $region9
  $region8: #{_lambda_.8} parent=0 // pred_region
    _
  $region9: #{_lambda_.8} parent=0 // pred_fallthru
    _
  // Predicated region
  $region10: #{_lambda_.8} parent=0 // pred_check
    _
  $region11: #{_lambda_.8} parent=0 // pred_check_branch
    %14 = sbr.rel (0) target = $region13
  $region12: #{_lambda_.8} parent=0 // pred_region
    _
  $region13: #{_lambda_.8} parent=0 // pred_fallthru
    _
  // Predicated region
  $region14: #{_lambda_.8} parent=0 // pred_check
    _
  $region15: #{_lambda_.8} parent=0 // pred_check_branch
    %16 = sbr.rel (0) target = $region17
  $region16: #{_lambda_.8} parent=0 // pred_region
    _
  $region17: #{_lambda_.8} parent=0 // pred_fallthru
    _
  %v18 = vld [vmem:[%s0] sm:$0xff]
  %v19 = vld [vmem:[%s0 + $0x8] sm:$0xff]
  %v20 = vld [vmem:[%s0 + $0x10] sm:$0xff]
  %v21 = vld [vmem:[%s0 + $0x18] sm:$0xff]
  %v22 = vld [vmem:[%s0 + $0x20] sm:$0xff]
  %v23 = vld [vmem:[%s0 + $0x28] sm:$0xff]
  %v24 = vld [vmem:[%s0 + $0x30] sm:$0xff]
  %v25 = vld [vmem:[%s0 + $0x38] sm:$0xff]
  %v26 = vld [vmem:[%s0 + $0x40] sm:$0xff]
  %v27 = vld [vmem:[%s0 + $0x48] sm:$0xff]
  %v28 = vld [vmem:[%s0 + $0x50] sm:$0xff]
  %v29 = vld [vmem:[%s0 + $0x58] sm:$0xff]
  %v30 = vld [vmem:[%s0 + $0x60] sm:$0xff]
  %v31 = vld [vmem:[%s0 + $0x68] sm:$0xff]
  %v32 = vld [vmem:[%s0 + $0x70] sm:$0xff]
  %v33 = vld [vmem:[%s0 + $0x78] sm:$0xff]
  %v34 = vld [vmem:[%s0 + $0x80] sm:$0xff]
  %v35 = vld [vmem:[%s0 + $0x88] sm:$0xff]
  %v36 = vld [vmem:[%s0 + $0x90] sm:$0xff]
  %v37 = vld [vmem:[%s0 + $0x98] sm:$0xff]
  %v38 = vld [vmem:[%s0 + $0xa0] sm:$0xff]
  %v39 = vld [vmem:[%s0 + $0xa8] sm:$0xff]
  %v40 = vld [vmem:[%s0 + $0xb0] sm:$0xff]
  %v41 = vld [vmem:[%s0 + $0xb8] sm:$0xff]
  %v42 = vld [vmem:[%s0 + $0xc0] sm:$0xff]
  %v43 = vld [vmem:[%s0 + $0xc8] sm:$0xff]
  %v44 = vld [vmem:[%s0 + $0xd0] sm:$0xff]
  %v45 = vld [vmem:[%s0 + $0xd8] sm:$0xff]
  %v46 = vld [vmem:[%s0 + $0xe0] sm:$0xff]
  %v47 = vld [vmem:[%s0 + $0xe8] sm:$0xff]
  %v48 = vld [vmem:[%s0 + $0xf0] sm:$0xff]
  %v49 = vld [vmem:[%s0 + $0xf8] sm:$0xff]
  %v50 = vld [vmem:[%s0 + $0x100] sm:$0xff]
  %v51 = vld [vmem:[%s0 + $0x108] sm:$0xff]
  %v52 = vld [vmem:[%s0 + $0x110] sm:$0xff]
  %v53 = vld [vmem:[%s0 + $0x118] sm:$0xff]
  %v54 = vld [vmem:[%s0 + $0x120] sm:$0xff]
  %v55 = vld [vmem:[%s0 + $0x128] sm:$0xff]
  %v56 = vld [vmem:[%s0 + $0x130] sm:$0xff]
  %v57 = vld [vmem:[%s0 + $0x138] sm:$0xff]
  %v58 = vld [vmem:[%s0 + $0x140] sm:$0xff]
  %v59 = vld [vmem:[%s0 + $0x148] sm:$0xff]
  %v60 = vld [vmem:[%s0 + $0x150] sm:$0xff]
  %v61 = vld [vmem:[%s0 + $0x158] sm:$0xff]
  %v62 = vld [vmem:[%s0 + $0x160] sm:$0xff]
  %v63 = vld [vmem:[%s0 + $0x168] sm:$0xff]
  %v64 = vld [vmem:[%s0 + $0x170] sm:$0xff]
  %v65 = vld [vmem:[%s0 + $0x178] sm:$0xff]
  %v66 = vld [vmem:[%s0 + $0x180] sm:$0xff]
  %v67 = vld [vmem:[%s0 + $0x188] sm:$0xff]
  %v68 = vld [vmem:[%s0 + $0x190] sm:$0xff]
  %v69 = vld [vmem:[%s0 + $0x198] sm:$0xff]
  %v70 = vld [vmem:[%s0 + $0x1a0] sm:$0xff]
  %v71 = vld [vmem:[%s0 + $0x1a8] sm:$0xff]
  %v72 = vld [vmem:[%s0 + $0x1b0] sm:$0xff]
  %v73 = vld [vmem:[%s0 + $0x1b8] sm:$0xff]
  %v74 = vld [vmem:[%s0 + $0x1c0] sm:$0xff]
  %v75 = vld [vmem:[%s0 + $0x1c8] sm:$0xff]
  %v76 = vld [vmem:[%s0 + $0x1d0] sm:$0xff]
  %v77 = vld [vmem:[%s0 + $0x1d8] sm:$0xff]
  %v78 = vld [vmem:[%s0 + $0x1e0] sm:$0xff]
  %v79 = vld [vmem:[%s0 + $0x1e8] sm:$0xff]
  %v80 = vld [vmem:[%s0 + $0x1f0] sm:$0xff]
  %v81 = vld [vmem:[%s0 + $0x1f8] sm:$0xff]
  %v82 = vpack.c.bf16 %v19, %v18
  %v83 = vpack.c.bf16 %v21, %v20
  %v84 = vpack.c.bf16 %v23, %v22
  %v85 = vpack.c.bf16 %v25, %v24
  %v86 = vpack.c.bf16 %v27, %v26
  %v87 = vpack.c.bf16 %v29, %v28
  %v88 = vpack.c.bf16 %v31, %v30
  %v89 = vpack.c.bf16 %v33, %v32
  %v90 = vpack.c.bf16 %v35, %v34
  %v91 = vpack.c.bf16 %v37, %v36
  %v92 = vpack.c.bf16 %v39, %v38
  %v93 = vpack.c.bf16 %v41, %v40
  %v94 = vpack.c.bf16 %v43, %v42
  %v95 = vpack.c.bf16 %v45, %v44
  %v96 = vpack.c.bf16 %v47, %v46
  %v97 = vpack.c.bf16 %v49, %v48
  %v98 = vpack.c.bf16 %v51, %v50
  %v99 = vpack.c.bf16 %v53, %v52
  %v100 = vpack.c.bf16 %v55, %v54
  %v101 = vpack.c.bf16 %v57, %v56
  %v102 = vpack.c.bf16 %v59, %v58
  %v103 = vpack.c.bf16 %v61, %v60
  %v104 = vpack.c.bf16 %v63, %v62
  %v105 = vpack.c.bf16 %v65, %v64
  %v106 = vpack.c.bf16 %v67, %v66
  %v107 = vpack.c.bf16 %v69, %v68
  %v108 = vpack.c.bf16 %v71, %v70
  %v109 = vpack.c.bf16 %v73, %v72
  %v110 = vpack.c.bf16 %v75, %v74
  %v111 = vpack.c.bf16 %v77, %v76
  %v112 = vpack.c.bf16 %v79, %v78
  %v113 = vpack.c.bf16 %v81, %v80
  %v114 = vld [vmem:[%s1] sm:$0xf]
  %v115 = vld [vmem:[%s1 + $0x4] sm:$0xf]
  %v116 = vld [vmem:[%s1 + $0x8] sm:$0xf]
  %v117 = vld [vmem:[%s1 + $0xc] sm:$0x3]
  %v118 = vld [vmem:[%s2] sm:$0x1]
  %v120 = vperm.slane %v118, 0
  %v126 = vunpack.c.l.b16 %v114
  %v127 = vunpack.c.l.b16 %v115
  %v128 = vunpack.c.l.b16 %v116
  %v129 = vunpack.c.l.b16 %v117
  %v130 = vpack.c.b16 %v127, %v126
  %v131 = vpack.c.b16 %v129, %v128
  %vm133 = vcmask 220160
  %v135 = vsel %vm133, %v82, 0
  %v138 = vsel %vm133, %v83, 0
  %v141 = vsel %vm133, %v84, 0
  %v144 = vsel %vm133, %v85, 0
  %v147 = vsel %vm133, %v86, 0
  %v150 = vsel %vm133, %v87, 0
  %v153 = vsel %vm133, %v88, 0
  %v156 = vsel %vm133, %v89, 0
  %v159 = vsel %vm133, %v90, 0
  %v162 = vsel %vm133, %v91, 0
  %v165 = vsel %vm133, %v92, 0
  %v168 = vsel %vm133, %v93, 0
  %v171 = vsel %vm133, %v94, 0
  %v174 = vsel %vm133, %v95, 0
  %v177 = vsel %vm133, %v96, 0
  %v180 = vsel %vm133, %v97, 0
  %v183 = vsel %vm133, %v98, 0
  %v186 = vsel %vm133, %v99, 0
  %v189 = vsel %vm133, %v100, 0
  %v192 = vsel %vm133, %v101, 0
  %v195 = vsel %vm133, %v102, 0
  %v198 = vsel %vm133, %v103, 0
  %v201 = vsel %vm133, %v104, 0
  %v204 = vsel %vm133, %v105, 0
  %v207 = vsel %vm133, %v106, 0
  %v210 = vsel %vm133, %v107, 0
  %v213 = vsel %vm133, %v108, 0
  %v216 = vsel %vm133, %v109, 0
  %v219 = vsel %vm133, %v110, 0
  %v222 = vsel %vm133, %v111, 0
  %v225 = vsel %vm133, %v112, 0
  %v228 = vsel %vm133, %v113, 0
  %vm230 = vcmask 1044480
  %vm231 = vcmask 1045504
  %v232 = vsel %vm230, 4294967295, 65535
  %v233 = vsel %vm231, %v232, 0
  %v235 = vand.u32 %v131, %v233
  %237 = vmatpush.bf16.msra.mxu0 0
  %238 = vmatpush.bf16.msra.mxu0 0
  %239 = vmatpush.bf16.msra.mxu0 0
  %240 = vmatpush.bf16.msra.mxu0 0
  %241 = vmatpush.bf16.msra.mxu0 0
  %242 = vmatpush.bf16.msra.mxu0 0
  %243 = vmatpush.bf16.msra.mxu0 %v235
  %244 = vmatpush.bf16.msra.mxu0 %v130
  %245 = vmatmul.bf16.gmra.mxu0 %v135
  %v246 = vpop.f32.mrf.mxu0
  %v247 = vadd.f32 %v120, %v246
  %v248 = vpop.f32.mrf.mxu0
  %v249 = vadd.f32 %v120, %v248
  %250 = vmatmul.bf16.gmra.mxu0 %v138
  %v251 = vpop.f32.mrf.mxu0
  %v252 = vadd.f32 %v120, %v251
  %v253 = vpop.f32.mrf.mxu0
  %v254 = vadd.f32 %v120, %v253
  %255 = vmatmul.bf16.gmra.mxu0 %v141
  %v256 = vpop.f32.mrf.mxu0
  %v257 = vadd.f32 %v120, %v256
  %v258 = vpop.f32.mrf.mxu0
  %v259 = vadd.f32 %v120, %v258
  %260 = vmatmul.bf16.gmra.mxu0 %v144
  %v261 = vpop.f32.mrf.mxu0
  %v262 = vadd.f32 %v120, %v261
  %v263 = vpop.f32.mrf.mxu0
  %v264 = vadd.f32 %v120, %v263
  %265 = vmatmul.bf16.gmra.mxu0 %v147
  %v266 = vpop.f32.mrf.mxu0
  %v267 = vadd.f32 %v120, %v266
  %v268 = vpop.f32.mrf.mxu0
  %v269 = vadd.f32 %v120, %v268
  %270 = vmatmul.bf16.gmra.mxu0 %v150
  %v271 = vpop.f32.mrf.mxu0
  %v272 = vadd.f32 %v120, %v271
  %v273 = vpop.f32.mrf.mxu0
  %v274 = vadd.f32 %v120, %v273
  %275 = vmatmul.bf16.gmra.mxu0 %v153
  %v276 = vpop.f32.mrf.mxu0
  %v277 = vadd.f32 %v120, %v276
  %v278 = vpop.f32.mrf.mxu0
  %v279 = vadd.f32 %v120, %v278
  %280 = vmatmul.bf16.gmra.mxu0 %v156
  %v281 = vpop.f32.mrf.mxu0
  %v282 = vadd.f32 %v120, %v281
  %v283 = vpop.f32.mrf.mxu0
  %v284 = vadd.f32 %v120, %v283
  %285 = vmatmul.bf16.gmra.mxu0 %v159
  %v286 = vpop.f32.mrf.mxu0
  %v287 = vadd.f32 %v120, %v286
  %v288 = vpop.f32.mrf.mxu0
  %v289 = vadd.f32 %v120, %v288
  %290 = vmatmul.bf16.gmra.mxu0 %v162
  %v291 = vpop.f32.mrf.mxu0
  %v292 = vadd.f32 %v120, %v291
  %v293 = vpop.f32.mrf.mxu0
  %v294 = vadd.f32 %v120, %v293
  %295 = vmatmul.bf16.gmra.mxu0 %v165
  %v296 = vpop.f32.mrf.mxu0
  %v297 = vadd.f32 %v120, %v296
  %v298 = vpop.f32.mrf.mxu0
  %v299 = vadd.f32 %v120, %v298
  %300 = vmatmul.bf16.gmra.mxu0 %v168
  %v301 = vpop.f32.mrf.mxu0
  %v302 = vadd.f32 %v120, %v301
  %v303 = vpop.f32.mrf.mxu0
  %v304 = vadd.f32 %v120, %v303
  %305 = vmatmul.bf16.gmra.mxu0 %v171
  %v306 = vpop.f32.mrf.mxu0
  %v307 = vadd.f32 %v120, %v306
  %v308 = vpop.f32.mrf.mxu0
  %v309 = vadd.f32 %v120, %v308
  %310 = vmatmul.bf16.gmra.mxu0 %v174
  %v311 = vpop.f32.mrf.mxu0
  %v312 = vadd.f32 %v120, %v311
  %v313 = vpop.f32.mrf.mxu0
  %v314 = vadd.f32 %v120, %v313
  %315 = vmatmul.bf16.gmra.mxu0 %v177
  %v316 = vpop.f32.mrf.mxu0
  %v317 = vadd.f32 %v120, %v316
  %v318 = vpop.f32.mrf.mxu0
  %v319 = vadd.f32 %v120, %v318
  %320 = vmatmul.bf16.gmra.mxu0 %v180
  %v321 = vpop.f32.mrf.mxu0
  %v322 = vadd.f32 %v120, %v321
  %v323 = vpop.f32.mrf.mxu0
  %v324 = vadd.f32 %v120, %v323
  %325 = vmatmul.bf16.gmra.mxu0 %v183
  %v326 = vpop.f32.mrf.mxu0
  %v327 = vadd.f32 %v120, %v326
  %v328 = vpop.f32.mrf.mxu0
  %v329 = vadd.f32 %v120, %v328
  %330 = vmatmul.bf16.gmra.mxu0 %v186
  %v331 = vpop.f32.mrf.mxu0
  %v332 = vadd.f32 %v120, %v331
  %v333 = vpop.f32.mrf.mxu0
  %v334 = vadd.f32 %v120, %v333
  %335 = vmatmul.bf16.gmra.mxu0 %v189
  %v336 = vpop.f32.mrf.mxu0
  %v337 = vadd.f32 %v120, %v336
  %v338 = vpop.f32.mrf.mxu0
  %v339 = vadd.f32 %v120, %v338
  %340 = vmatmul.bf16.gmra.mxu0 %v192
  %v341 = vpop.f32.mrf.mxu0
  %v342 = vadd.f32 %v120, %v341
  %v343 = vpop.f32.mrf.mxu0
  %v344 = vadd.f32 %v120, %v343
  %345 = vmatmul.bf16.gmra.mxu0 %v195
  %v346 = vpop.f32.mrf.mxu0
  %v347 = vadd.f32 %v120, %v346
  %v348 = vpop.f32.mrf.mxu0
  %v349 = vadd.f32 %v120, %v348
  %350 = vmatmul.bf16.gmra.mxu0 %v198
  %v351 = vpop.f32.mrf.mxu0
  %v352 = vadd.f32 %v120, %v351
  %v353 = vpop.f32.mrf.mxu0
  %v354 = vadd.f32 %v120, %v353
  %355 = vmatmul.bf16.gmra.mxu0 %v201
  %v356 = vpop.f32.mrf.mxu0
  %v357 = vadd.f32 %v120, %v356
  %v358 = vpop.f32.mrf.mxu0
  %v359 = vadd.f32 %v120, %v358
  %360 = vmatmul.bf16.gmra.mxu0 %v204
  %v361 = vpop.f32.mrf.mxu0
  %v362 = vadd.f32 %v120, %v361
  %v363 = vpop.f32.mrf.mxu0
  %v364 = vadd.f32 %v120, %v363
  %365 = vmatmul.bf16.gmra.mxu0 %v207
  %v366 = vpop.f32.mrf.mxu0
  %v367 = vadd.f32 %v120, %v366
  %v368 = vpop.f32.mrf.mxu0
  %v369 = vadd.f32 %v120, %v368
  %370 = vmatmul.bf16.gmra.mxu0 %v210
  %v371 = vpop.f32.mrf.mxu0
  %v372 = vadd.f32 %v120, %v371
  %v373 = vpop.f32.mrf.mxu0
  %v374 = vadd.f32 %v120, %v373
  %375 = vmatmul.bf16.gmra.mxu0 %v213
  %v376 = vpop.f32.mrf.mxu0
  %v377 = vadd.f32 %v120, %v376
  %v378 = vpop.f32.mrf.mxu0
  %v379 = vadd.f32 %v120, %v378
  %380 = vmatmul.bf16.gmra.mxu0 %v216
  %v381 = vpop.f32.mrf.mxu0
  %v382 = vadd.f32 %v120, %v381
  %v383 = vpop.f32.mrf.mxu0
  %v384 = vadd.f32 %v120, %v383
  %385 = vmatmul.bf16.gmra.mxu0 %v219
  %v386 = vpop.f32.mrf.mxu0
  %v387 = vadd.f32 %v120, %v386
  %v388 = vpop.f32.mrf.mxu0
  %v389 = vadd.f32 %v120, %v388
  %390 = vmatmul.bf16.gmra.mxu0 %v222
  %v391 = vpop.f32.mrf.mxu0
  %v392 = vadd.f32 %v120, %v391
  %v393 = vpop.f32.mrf.mxu0
  %v394 = vadd.f32 %v120, %v393
  %395 = vmatmul.bf16.gmra.mxu0 %v225
  %v396 = vpop.f32.mrf.mxu0
  %v397 = vadd.f32 %v120, %v396
  %v398 = vpop.f32.mrf.mxu0
  %v399 = vadd.f32 %v120, %v398
  %400 = vmatmul.bf16.gmra.mxu0 %v228
  %v401 = vpop.f32.mrf.mxu0
  %v402 = vadd.f32 %v120, %v401
  %v403 = vpop.f32.mrf.mxu0
  %v404 = vadd.f32 %v120, %v403
  %405 = vdwg.mxu0
  %v406 = vmax.f32 %v247, 0.0
  %v407 = vmax.f32 %v249, 0.0
  %v408 = vmax.f32 %v252, 0.0
  %v409 = vmax.f32 %v254, 0.0
  %v410 = vmax.f32 %v257, 0.0
  %v411 = vmax.f32 %v259, 0.0
  %v412 = vmax.f32 %v262, 0.0
  %v413 = vmax.f32 %v264, 0.0
  %v414 = vmax.f32 %v267, 0.0
  %v415 = vmax.f32 %v269, 0.0
  %v416 = vmax.f32 %v272, 0.0
  %v417 = vmax.f32 %v274, 0.0
  %v418 = vmax.f32 %v277, 0.0
  %v419 = vmax.f32 %v279, 0.0
  %v420 = vmax.f32 %v282, 0.0
  %v421 = vmax.f32 %v284, 0.0
  %v422 = vmax.f32 %v287, 0.0
  %v423 = vmax.f32 %v289, 0.0
  %v424 = vmax.f32 %v292, 0.0
  %v425 = vmax.f32 %v294, 0.0
  %v426 = vmax.f32 %v297, 0.0
  %v427 = vmax.f32 %v299, 0.0
  %v428 = vmax.f32 %v302, 0.0
  %v429 = vmax.f32 %v304, 0.0
  %v430 = vmax.f32 %v307, 0.0
  %v431 = vmax.f32 %v309, 0.0
  %v432 = vmax.f32 %v312, 0.0
  %v433 = vmax.f32 %v314, 0.0
  %v434 = vmax.f32 %v317, 0.0
  %v435 = vmax.f32 %v319, 0.0
  %v436 = vmax.f32 %v322, 0.0
  %v437 = vmax.f32 %v324, 0.0
  %v438 = vmax.f32 %v327, 0.0
  %v439 = vmax.f32 %v329, 0.0
  %v440 = vmax.f32 %v332, 0.0
  %v441 = vmax.f32 %v334, 0.0
  %v442 = vmax.f32 %v337, 0.0
  %v443 = vmax.f32 %v339, 0.0
  %v444 = vmax.f32 %v342, 0.0
  %v445 = vmax.f32 %v344, 0.0
  %v446 = vmax.f32 %v347, 0.0
  %v447 = vmax.f32 %v349, 0.0
  %v448 = vmax.f32 %v352, 0.0
  %v449 = vmax.f32 %v354, 0.0
  %v450 = vmax.f32 %v357, 0.0
  %v451 = vmax.f32 %v359, 0.0
  %v452 = vmax.f32 %v362, 0.0
  %v453 = vmax.f32 %v364, 0.0
  %v454 = vmax.f32 %v367, 0.0
  %v455 = vmax.f32 %v369, 0.0
  %v456 = vmax.f32 %v372, 0.0
  %v457 = vmax.f32 %v374, 0.0
  %v458 = vmax.f32 %v377, 0.0
  %v459 = vmax.f32 %v379, 0.0
  %v460 = vmax.f32 %v382, 0.0
  %v461 = vmax.f32 %v384, 0.0
  %v462 = vmax.f32 %v387, 0.0
  %v463 = vmax.f32 %v389, 0.0
  %v464 = vmax.f32 %v392, 0.0
  %v465 = vmax.f32 %v394, 0.0
  %v466 = vmax.f32 %v397, 0.0
  %v467 = vmax.f32 %v399, 0.0
  %v468 = vmax.f32 %v402, 0.0
  %v469 = vmax.f32 %v404, 0.0
  %v470 = vld [vmem:[%s3] sm:$0xff]
  %v471 = vld [vmem:[%s3 + $0x8] sm:$0xff]
  %v472 = vld [vmem:[%s3 + $0x10] sm:$0xff]
  %v473 = vld [vmem:[%s3 + $0x18] sm:$0xff]
  %v474 = vld [vmem:[%s3 + $0x20] sm:$0xff]
  %v475 = vld [vmem:[%s3 + $0x28] sm:$0xff]
  %v476 = vld [vmem:[%s3 + $0x30] sm:$0xff]
  %v477 = vld [vmem:[%s3 + $0x38] sm:$0xff]
  %v478 = vld [vmem:[%s3 + $0x40] sm:$0xff]
  %v479 = vld [vmem:[%s3 + $0x48] sm:$0xff]
  %v480 = vld [vmem:[%s3 + $0x50] sm:$0xff]
  %v481 = vld [vmem:[%s3 + $0x58] sm:$0xff]
  %v482 = vld [vmem:[%s3 + $0x60] sm:$0xff]
  %v483 = vld [vmem:[%s3 + $0x68] sm:$0xff]
  %v484 = vld [vmem:[%s3 + $0x70] sm:$0xff]
  %v485 = vld [vmem:[%s3 + $0x78] sm:$0xff]
  %v486 = vld [vmem:[%s3 + $0x80] sm:$0xff]
  %v487 = vld [vmem:[%s3 + $0x88] sm:$0xff]
  %v488 = vld [vmem:[%s3 + $0x90] sm:$0xff]
  %v489 = vld [vmem:[%s3 + $0x98] sm:$0xff]
  %v490 = vld [vmem:[%s3 + $0xa0] sm:$0xff]
  %v491 = vld [vmem:[%s3 + $0xa8] sm:$0xff]
  %v492 = vld [vmem:[%s3 + $0xb0] sm:$0xff]
  %v493 = vld [vmem:[%s3 + $0xb8] sm:$0xff]
  %v494 = vld [vmem:[%s3 + $0xc0] sm:$0xff]
  %v495 = vld [vmem:[%s3 + $0xc8] sm:$0xff]
  %v496 = vld [vmem:[%s3 + $0xd0] sm:$0xff]
  %v497 = vld [vmem:[%s3 + $0xd8] sm:$0xff]
  %v498 = vld [vmem:[%s3 + $0xe0] sm:$0xff]
  %v499 = vld [vmem:[%s3 + $0xe8] sm:$0xff]
  %v500 = vld [vmem:[%s3 + $0xf0] sm:$0xff]
  %v501 = vld [vmem:[%s3 + $0xf8] sm:$0xff]
  %v502 = vld [vmem:[%s3 + $0x100] sm:$0xff]
  %v503 = vld [vmem:[%s3 + $0x108] sm:$0xff]
  %v504 = vld [vmem:[%s3 + $0x110] sm:$0xff]
  %v505 = vld [vmem:[%s3 + $0x118] sm:$0xff]
  %v506 = vld [vmem:[%s3 + $0x120] sm:$0xff]
  %v507 = vld [vmem:[%s3 + $0x128] sm:$0xff]
  %v508 = vld [vmem:[%s3 + $0x130] sm:$0xff]
  %v509 = vld [vmem:[%s3 + $0x138] sm:$0xff]
  %v510 = vld [vmem:[%s3 + $0x140] sm:$0xff]
  %v511 = vld [vmem:[%s3 + $0x148] sm:$0xff]
  %v512 = vld [vmem:[%s3 + $0x150] sm:$0xff]
  %v513 = vld [vmem:[%s3 + $0x158] sm:$0xff]
  %v514 = vld [vmem:[%s3 + $0x160] sm:$0xff]
  %v515 = vld [vmem:[%s3 + $0x168] sm:$0xff]
  %v516 = vld [vmem:[%s3 + $0x170] sm:$0xff]
  %v517 = vld [vmem:[%s3 + $0x178] sm:$0xff]
  %v518 = vld [vmem:[%s3 + $0x180] sm:$0xff]
  %v519 = vld [vmem:[%s3 + $0x188] sm:$0xff]
  %v520 = vld [vmem:[%s3 + $0x190] sm:$0xff]
  %v521 = vld [vmem:[%s3 + $0x198] sm:$0xff]
  %v522 = vld [vmem:[%s3 + $0x1a0] sm:$0xff]
  %v523 = vld [vmem:[%s3 + $0x1a8] sm:$0xff]
  %v524 = vld [vmem:[%s3 + $0x1b0] sm:$0xff]
  %v525 = vld [vmem:[%s3 + $0x1b8] sm:$0xff]
  %v526 = vld [vmem:[%s3 + $0x1c0] sm:$0xff]
  %v527 = vld [vmem:[%s3 + $0x1c8] sm:$0xff]
  %v528 = vld [vmem:[%s3 + $0x1d0] sm:$0xff]
  %v529 = vld [vmem:[%s3 + $0x1d8] sm:$0xff]
  %v530 = vld [vmem:[%s3 + $0x1e0] sm:$0xff]
  %v531 = vld [vmem:[%s3 + $0x1e8] sm:$0xff]
  %v532 = vld [vmem:[%s3 + $0x1f0] sm:$0xff]
  %v533 = vld [vmem:[%s3 + $0x1f8] sm:$0xff]
  %v534 = vld [vmem:[%s3 + $0x200] sm:$0xff]
  %v535 = vld [vmem:[%s3 + $0x208] sm:$0xff]
  %v536 = vld [vmem:[%s3 + $0x210] sm:$0xff]
  %v537 = vld [vmem:[%s3 + $0x218] sm:$0xff]
  %v538 = vld [vmem:[%s3 + $0x220] sm:$0xff]
  %v539 = vld [vmem:[%s3 + $0x228] sm:$0xff]
  %v540 = vld [vmem:[%s3 + $0x230] sm:$0xff]
  %v541 = vld [vmem:[%s3 + $0x238] sm:$0xff]
  %v542 = vld [vmem:[%s3 + $0x240] sm:$0xff]
  %v543 = vld [vmem:[%s3 + $0x248] sm:$0xff]
  %v544 = vld [vmem:[%s3 + $0x250] sm:$0xff]
  %v545 = vld [vmem:[%s3 + $0x258] sm:$0xff]
  %v546 = vld [vmem:[%s3 + $0x260] sm:$0xff]
  %v547 = vld [vmem:[%s3 + $0x268] sm:$0xff]
  %v548 = vld [vmem:[%s3 + $0x270] sm:$0xff]
  %v549 = vld [vmem:[%s3 + $0x278] sm:$0xff]
  %v550 = vld [vmem:[%s3 + $0x280] sm:$0xff]
  %v551 = vld [vmem:[%s3 + $0x288] sm:$0xff]
  %v552 = vld [vmem:[%s3 + $0x290] sm:$0xff]
  %v553 = vld [vmem:[%s3 + $0x298] sm:$0xff]
  %v554 = vld [vmem:[%s3 + $0x2a0] sm:$0xff]
  %v555 = vld [vmem:[%s3 + $0x2a8] sm:$0xff]
  %v556 = vld [vmem:[%s3 + $0x2b0] sm:$0xff]
  %v557 = vld [vmem:[%s3 + $0x2b8] sm:$0xff]
  %v558 = vld [vmem:[%s3 + $0x2c0] sm:$0xff]
  %v559 = vld [vmem:[%s3 + $0x2c8] sm:$0xff]
  %v560 = vld [vmem:[%s3 + $0x2d0] sm:$0xff]
  %v561 = vld [vmem:[%s3 + $0x2d8] sm:$0xff]
  %v562 = vld [vmem:[%s3 + $0x2e0] sm:$0xff]
  %v563 = vld [vmem:[%s3 + $0x2e8] sm:$0xff]
  %v564 = vld [vmem:[%s3 + $0x2f0] sm:$0xff]
  %v565 = vld [vmem:[%s3 + $0x2f8] sm:$0xff]
  %v566 = vld [vmem:[%s3 + $0x300] sm:$0xff]
  %v567 = vld [vmem:[%s3 + $0x308] sm:$0xff]
  %v568 = vld [vmem:[%s3 + $0x310] sm:$0xff]
  %v569 = vld [vmem:[%s3 + $0x318] sm:$0xff]
  %v570 = vld [vmem:[%s3 + $0x320] sm:$0xff]
  %v571 = vld [vmem:[%s3 + $0x328] sm:$0xff]
  %v572 = vld [vmem:[%s3 + $0x330] sm:$0xff]
  %v573 = vld [vmem:[%s3 + $0x338] sm:$0xff]
  %v574 = vld [vmem:[%s3 + $0x340] sm:$0xff]
  %v575 = vld [vmem:[%s3 + $0x348] sm:$0xff]
  %v576 = vld [vmem:[%s3 + $0x350] sm:$0xff]
  %v577 = vld [vmem:[%s3 + $0x358] sm:$0xff]
  %v578 = vld [vmem:[%s3 + $0x360] sm:$0xff]
  %v579 = vld [vmem:[%s3 + $0x368] sm:$0xff]
  %v580 = vld [vmem:[%s3 + $0x370] sm:$0xff]
  %v581 = vld [vmem:[%s3 + $0x378] sm:$0xff]
  %v582 = vld [vmem:[%s3 + $0x380] sm:$0xff]
  %v583 = vld [vmem:[%s3 + $0x388] sm:$0xff]
  %v584 = vld [vmem:[%s3 + $0x390] sm:$0xff]
  %v585 = vld [vmem:[%s3 + $0x398] sm:$0xff]
  %v586 = vld [vmem:[%s3 + $0x3a0] sm:$0xff]
  %v587 = vld [vmem:[%s3 + $0x3a8] sm:$0xff]
  %v588 = vld [vmem:[%s3 + $0x3b0] sm:$0xff]
  %v589 = vld [vmem:[%s3 + $0x3b8] sm:$0xff]
  %v590 = vld [vmem:[%s3 + $0x3c0] sm:$0xff]
  %v591 = vld [vmem:[%s3 + $0x3c8] sm:$0xff]
  %v592 = vld [vmem:[%s3 + $0x3d0] sm:$0xff]
  %v593 = vld [vmem:[%s3 + $0x3d8] sm:$0xff]
  %v594 = vld [vmem:[%s3 + $0x3e0] sm:$0xff]
  %v595 = vld [vmem:[%s3 + $0x3e8] sm:$0xff]
  %v596 = vld [vmem:[%s3 + $0x3f0] sm:$0xff]
  %v597 = vld [vmem:[%s3 + $0x3f8] sm:$0xff]
  %v598 = vld [vmem:[%s3 + $0x400] sm:$0xff]
  %v599 = vld [vmem:[%s3 + $0x408] sm:$0xff]
  %v600 = vld [vmem:[%s3 + $0x410] sm:$0xff]
  %v601 = vld [vmem:[%s3 + $0x418] sm:$0xff]
  %v602 = vld [vmem:[%s3 + $0x420] sm:$0xff]
  %v603 = vld [vmem:[%s3 + $0x428] sm:$0xff]
  %v604 = vld [vmem:[%s3 + $0x430] sm:$0xff]
  %v605 = vld [vmem:[%s3 + $0x438] sm:$0xff]
  %v606 = vld [vmem:[%s3 + $0x440] sm:$0xff]
  %v607 = vld [vmem:[%s3 + $0x448] sm:$0xff]
  %v608 = vld [vmem:[%s3 + $0x450] sm:$0xff]
  %v609 = vld [vmem:[%s3 + $0x458] sm:$0xff]
  %v610 = vld [vmem:[%s3 + $0x460] sm:$0xff]
  %v611 = vld [vmem:[%s3 + $0x468] sm:$0xff]
  %v612 = vld [vmem:[%s3 + $0x470] sm:$0xff]
  %v613 = vld [vmem:[%s3 + $0x478] sm:$0xff]
  %v614 = vld [vmem:[%s3 + $0x480] sm:$0xff]
  %v615 = vld [vmem:[%s3 + $0x488] sm:$0xff]
  %v616 = vld [vmem:[%s3 + $0x490] sm:$0xff]
  %v617 = vld [vmem:[%s3 + $0x498] sm:$0xff]
  %v618 = vld [vmem:[%s3 + $0x4a0] sm:$0xff]
  %v619 = vld [vmem:[%s3 + $0x4a8] sm:$0xff]
  %v620 = vld [vmem:[%s3 + $0x4b0] sm:$0xff]
  %v621 = vld [vmem:[%s3 + $0x4b8] sm:$0xff]
  %v622 = vld [vmem:[%s3 + $0x4c0] sm:$0xff]
  %v623 = vld [vmem:[%s3 + $0x4c8] sm:$0xff]
  %v624 = vld [vmem:[%s3 + $0x4d0] sm:$0xff]
  %v625 = vld [vmem:[%s3 + $0x4d8] sm:$0xff]
  %v626 = vld [vmem:[%s3 + $0x4e0] sm:$0xff]
  %v627 = vld [vmem:[%s3 + $0x4e8] sm:$0xff]
  %v628 = vld [vmem:[%s3 + $0x4f0] sm:$0xff]
  %v629 = vld [vmem:[%s3 + $0x4f8] sm:$0xff]
  %v630 = vld [vmem:[%s3 + $0x500] sm:$0xff]
  %v631 = vld [vmem:[%s3 + $0x508] sm:$0xff]
  %v632 = vld [vmem:[%s3 + $0x510] sm:$0xff]
  %v633 = vld [vmem:[%s3 + $0x518] sm:$0xff]
  %v634 = vld [vmem:[%s3 + $0x520] sm:$0xff]
  %v635 = vld [vmem:[%s3 + $0x528] sm:$0xff]
  %v636 = vld [vmem:[%s3 + $0x530] sm:$0xff]
  %v637 = vld [vmem:[%s3 + $0x538] sm:$0xff]
  %v638 = vld [vmem:[%s3 + $0x540] sm:$0xff]
  %v639 = vld [vmem:[%s3 + $0x548] sm:$0xff]
  %v640 = vld [vmem:[%s3 + $0x550] sm:$0xff]
  %v641 = vld [vmem:[%s3 + $0x558] sm:$0xff]
  %v642 = vld [vmem:[%s3 + $0x560] sm:$0xff]
  %v643 = vld [vmem:[%s3 + $0x568] sm:$0xff]
  %v644 = vld [vmem:[%s3 + $0x570] sm:$0xff]
  %v645 = vld [vmem:[%s3 + $0x578] sm:$0xff]
  %v646 = vld [vmem:[%s3 + $0x580] sm:$0xff]
  %v647 = vld [vmem:[%s3 + $0x588] sm:$0xff]
  %v648 = vld [vmem:[%s3 + $0x590] sm:$0xff]
  %v649 = vld [vmem:[%s3 + $0x598] sm:$0xff]
  %v650 = vld [vmem:[%s3 + $0x5a0] sm:$0xff]
  %v651 = vld [vmem:[%s3 + $0x5a8] sm:$0xff]
  %v652 = vld [vmem:[%s3 + $0x5b0] sm:$0xff]
  %v653 = vld [vmem:[%s3 + $0x5b8] sm:$0xff]
  %v654 = vld [vmem:[%s3 + $0x5c0] sm:$0xff]
  %v655 = vld [vmem:[%s3 + $0x5c8] sm:$0xff]
  %v656 = vld [vmem:[%s3 + $0x5d0] sm:$0xff]
  %v657 = vld [vmem:[%s3 + $0x5d8] sm:$0xff]
  %v658 = vld [vmem:[%s3 + $0x5e0] sm:$0xff]
  %v659 = vld [vmem:[%s3 + $0x5e8] sm:$0xff]
  %v660 = vld [vmem:[%s3 + $0x5f0] sm:$0xff]
  %v661 = vld [vmem:[%s3 + $0x5f8] sm:$0xff]
  %v662 = vld [vmem:[%s3 + $0x600] sm:$0xff]
  %v663 = vld [vmem:[%s3 + $0x608] sm:$0xff]
  %v664 = vld [vmem:[%s3 + $0x610] sm:$0xff]
  %v665 = vld [vmem:[%s3 + $0x618] sm:$0xff]
  %v666 = vld [vmem:[%s3 + $0x620] sm:$0xff]
  %v667 = vld [vmem:[%s3 + $0x628] sm:$0xff]
  %v668 = vld [vmem:[%s3 + $0x630] sm:$0xff]
  %v669 = vld [vmem:[%s3 + $0x638] sm:$0xff]
  %v670 = vld [vmem:[%s3 + $0x640] sm:$0xff]
  %v671 = vld [vmem:[%s3 + $0x648] sm:$0xff]
  %v672 = vld [vmem:[%s3 + $0x650] sm:$0xff]
  %v673 = vld [vmem:[%s3 + $0x658] sm:$0xff]
  %v674 = vld [vmem:[%s3 + $0x660] sm:$0xff]
  %v675 = vld [vmem:[%s3 + $0x668] sm:$0xff]
  %v676 = vld [vmem:[%s3 + $0x670] sm:$0xff]
  %v677 = vld [vmem:[%s3 + $0x678] sm:$0xff]
  %v678 = vld [vmem:[%s3 + $0x680] sm:$0xff]
  %v679 = vld [vmem:[%s3 + $0x688] sm:$0xff]
  %v680 = vld [vmem:[%s3 + $0x690] sm:$0xff]
  %v681 = vld [vmem:[%s3 + $0x698] sm:$0xff]
  %v682 = vld [vmem:[%s3 + $0x6a0] sm:$0xff]
  %v683 = vld [vmem:[%s3 + $0x6a8] sm:$0xff]
  %v684 = vld [vmem:[%s3 + $0x6b0] sm:$0xff]
  %v685 = vld [vmem:[%s3 + $0x6b8] sm:$0xff]
  %v686 = vld [vmem:[%s3 + $0x6c0] sm:$0xff]
  %v687 = vld [vmem:[%s3 + $0x6c8] sm:$0xff]
  %v688 = vld [vmem:[%s3 + $0x6d0] sm:$0xff]
  %v689 = vld [vmem:[%s3 + $0x6d8] sm:$0xff]
  %v690 = vld [vmem:[%s3 + $0x6e0] sm:$0xff]
  %v691 = vld [vmem:[%s3 + $0x6e8] sm:$0xff]
  %v692 = vld [vmem:[%s3 + $0x6f0] sm:$0xff]
  %v693 = vld [vmem:[%s3 + $0x6f8] sm:$0xff]
  %v694 = vld [vmem:[%s3 + $0x700] sm:$0xff]
  %v695 = vld [vmem:[%s3 + $0x708] sm:$0xff]
  %v696 = vld [vmem:[%s3 + $0x710] sm:$0xff]
  %v697 = vld [vmem:[%s3 + $0x718] sm:$0xff]
  %v698 = vld [vmem:[%s3 + $0x720] sm:$0xff]
  %v699 = vld [vmem:[%s3 + $0x728] sm:$0xff]
  %v700 = vld [vmem:[%s3 + $0x730] sm:$0xff]
  %v701 = vld [vmem:[%s3 + $0x738] sm:$0xff]
  %v702 = vld [vmem:[%s3 + $0x740] sm:$0xff]
  %v703 = vld [vmem:[%s3 + $0x748] sm:$0xff]
  %v704 = vld [vmem:[%s3 + $0x750] sm:$0xff]
  %v705 = vld [vmem:[%s3 + $0x758] sm:$0xff]
  %v706 = vld [vmem:[%s3 + $0x760] sm:$0xff]
  %v707 = vld [vmem:[%s3 + $0x768] sm:$0xff]
  %v708 = vld [vmem:[%s3 + $0x770] sm:$0xff]
  %v709 = vld [vmem:[%s3 + $0x778] sm:$0xff]
  %v710 = vld [vmem:[%s3 + $0x780] sm:$0xff]
  %v711 = vld [vmem:[%s3 + $0x788] sm:$0xff]
  %v712 = vld [vmem:[%s3 + $0x790] sm:$0xff]
  %v713 = vld [vmem:[%s3 + $0x798] sm:$0xff]
  %v714 = vld [vmem:[%s3 + $0x7a0] sm:$0xff]
  %v715 = vld [vmem:[%s3 + $0x7a8] sm:$0xff]
  %v716 = vld [vmem:[%s3 + $0x7b0] sm:$0xff]
  %v717 = vld [vmem:[%s3 + $0x7b8] sm:$0xff]
  %v718 = vld [vmem:[%s3 + $0x7c0] sm:$0xff]
  %v719 = vld [vmem:[%s3 + $0x7c8] sm:$0xff]
  %v720 = vld [vmem:[%s3 + $0x7d0] sm:$0xff]
  %v721 = vld [vmem:[%s3 + $0x7d8] sm:$0xff]
  %v722 = vld [vmem:[%s3 + $0x7e0] sm:$0xff]
  %v723 = vld [vmem:[%s3 + $0x7e8] sm:$0xff]
  %v724 = vld [vmem:[%s3 + $0x7f0] sm:$0xff]
  %v725 = vld [vmem:[%s3 + $0x7f8] sm:$0xff]
  %v726 = vld [vmem:[%s3 + $0x800] sm:$0xff]
  %v727 = vld [vmem:[%s3 + $0x808] sm:$0xff]
  %v728 = vld [vmem:[%s3 + $0x810] sm:$0xff]
  %v729 = vld [vmem:[%s3 + $0x818] sm:$0xff]
  %v730 = vld [vmem:[%s3 + $0x820] sm:$0xff]
  %v731 = vld [vmem:[%s3 + $0x828] sm:$0xff]
  %v732 = vld [vmem:[%s3 + $0x830] sm:$0xff]
  %v733 = vld [vmem:[%s3 + $0x838] sm:$0xff]
  %v734 = vld [vmem:[%s3 + $0x840] sm:$0xff]
  %v735 = vld [vmem:[%s3 + $0x848] sm:$0xff]
  %v736 = vld [vmem:[%s3 + $0x850] sm:$0xff]
  %v737 = vld [vmem:[%s3 + $0x858] sm:$0xff]
  %v738 = vld [vmem:[%s3 + $0x860] sm:$0xff]
  %v739 = vld [vmem:[%s3 + $0x868] sm:$0xff]
  %v740 = vld [vmem:[%s3 + $0x870] sm:$0xff]
  %v741 = vld [vmem:[%s3 + $0x878] sm:$0xff]
  %v742 = vld [vmem:[%s3 + $0x880] sm:$0xff]
  %v743 = vld [vmem:[%s3 + $0x888] sm:$0xff]
  %v744 = vld [vmem:[%s3 + $0x890] sm:$0xff]
  %v745 = vld [vmem:[%s3 + $0x898] sm:$0xff]
  %v746 = vld [vmem:[%s3 + $0x8a0] sm:$0xff]
  %v747 = vld [vmem:[%s3 + $0x8a8] sm:$0xff]
  %v748 = vld [vmem:[%s3 + $0x8b0] sm:$0xff]
  %v749 = vld [vmem:[%s3 + $0x8b8] sm:$0xff]
  %v750 = vld [vmem:[%s3 + $0x8c0] sm:$0xff]
  %v751 = vld [vmem:[%s3 + $0x8c8] sm:$0xff]
  %v752 = vld [vmem:[%s3 + $0x8d0] sm:$0xff]
  %v753 = vld [vmem:[%s3 + $0x8d8] sm:$0xff]
  %v754 = vld [vmem:[%s3 + $0x8e0] sm:$0xff]
  %v755 = vld [vmem:[%s3 + $0x8e8] sm:$0xff]
  %v756 = vld [vmem:[%s3 + $0x8f0] sm:$0xff]
  %v757 = vld [vmem:[%s3 + $0x8f8] sm:$0xff]
  %v758 = vpack.c.bf16 %v407, %v406
  %v759 = vpack.c.bf16 %v409, %v408
  %v760 = vpack.c.bf16 %v411, %v410
  %v761 = vpack.c.bf16 %v413, %v412
  %v762 = vpack.c.bf16 %v415, %v414
  %v763 = vpack.c.bf16 %v417, %v416
  %v764 = vpack.c.bf16 %v419, %v418
  %v765 = vpack.c.bf16 %v421, %v420
  %v766 = vpack.c.bf16 %v423, %v422
  %v767 = vpack.c.bf16 %v425, %v424
  %v768 = vpack.c.bf16 %v427, %v426
  %v769 = vpack.c.bf16 %v429, %v428
  %v770 = vpack.c.bf16 %v431, %v430
  %v771 = vpack.c.bf16 %v433, %v432
  %v772 = vpack.c.bf16 %v435, %v434
  %v773 = vpack.c.bf16 %v437, %v436
  %v774 = vpack.c.bf16 %v439, %v438
  %v775 = vpack.c.bf16 %v441, %v440
  %v776 = vpack.c.bf16 %v443, %v442
  %v777 = vpack.c.bf16 %v445, %v444
  %v778 = vpack.c.bf16 %v447, %v446
  %v779 = vpack.c.bf16 %v449, %v448
  %v780 = vpack.c.bf16 %v451, %v450
  %v781 = vpack.c.bf16 %v453, %v452
  %v782 = vpack.c.bf16 %v455, %v454
  %v783 = vpack.c.bf16 %v457, %v456
  %v784 = vpack.c.bf16 %v459, %v458
  %v785 = vpack.c.bf16 %v461, %v460
  %v786 = vpack.c.bf16 %v463, %v462
  %v787 = vpack.c.bf16 %v465, %v464
  %v788 = vpack.c.bf16 %v467, %v466
  %v789 = vpack.c.bf16 %v469, %v468
  %v1078 = vunpack.c.l.b16 %v470
  %v1079 = vunpack.c.h.b16 %v470
  %v1080 = vunpack.c.l.b16 %v471
  %v1081 = vunpack.c.h.b16 %v471
  %v1082 = vunpack.c.l.b16 %v472
  %v1083 = vunpack.c.h.b16 %v472
  %v1084 = vunpack.c.l.b16 %v473
  %v1085 = vunpack.c.h.b16 %v473
  %v1086 = vunpack.c.l.b16 %v474
  %v1087 = vunpack.c.h.b16 %v474
  %v1088 = vunpack.c.l.b16 %v475
  %v1089 = vunpack.c.h.b16 %v475
  %v1090 = vunpack.c.l.b16 %v476
  %v1091 = vunpack.c.h.b16 %v476
  %v1092 = vunpack.c.l.b16 %v477
  %v1093 = vunpack.c.h.b16 %v477
  %v1094 = vunpack.c.l.b16 %v478
  %v1095 = vunpack.c.h.b16 %v478
  %v1096 = vunpack.c.l.b16 %v479
  %v1097 = vunpack.c.h.b16 %v479
  %v1098 = vunpack.c.l.b16 %v480
  %v1099 = vunpack.c.h.b16 %v480
  %v1100 = vunpack.c.l.b16 %v481
  %v1101 = vunpack.c.h.b16 %v481
  %v1102 = vunpack.c.l.b16 %v482
  %v1103 = vunpack.c.h.b16 %v482
  %v1104 = vunpack.c.l.b16 %v483
  %v1105 = vunpack.c.h.b16 %v483
  %v1106 = vunpack.c.l.b16 %v484
  %v1107 = vunpack.c.h.b16 %v484
  %v1108 = vunpack.c.l.b16 %v485
  %v1109 = vunpack.c.h.b16 %v485
  %v1110 = vunpack.c.l.b16 %v486
  %v1111 = vunpack.c.h.b16 %v486
  %v1112 = vunpack.c.l.b16 %v487
  %v1113 = vunpack.c.h.b16 %v487
  %v1114 = vunpack.c.l.b16 %v488
  %v1115 = vunpack.c.h.b16 %v488
  %v1116 = vunpack.c.l.b16 %v489
  %v1117 = vunpack.c.h.b16 %v489
  %v1118 = vunpack.c.l.b16 %v490
  %v1119 = vunpack.c.h.b16 %v490
  %v1120 = vunpack.c.l.b16 %v491
  %v1121 = vunpack.c.h.b16 %v491
  %v1122 = vunpack.c.l.b16 %v492
  %v1123 = vunpack.c.h.b16 %v492
  %v1124 = vunpack.c.l.b16 %v493
  %v1125 = vunpack.c.h.b16 %v493
  %v1126 = vunpack.c.l.b16 %v494
  %v1127 = vunpack.c.h.b16 %v494
  %v1128 = vunpack.c.l.b16 %v495
  %v1129 = vunpack.c.h.b16 %v495
  %v1130 = vunpack.c.l.b16 %v496
  %v1131 = vunpack.c.h.b16 %v496
  %v1132 = vunpack.c.l.b16 %v497
  %v1133 = vunpack.c.h.b16 %v497
  %v1134 = vunpack.c.l.b16 %v498
  %v1135 = vunpack.c.h.b16 %v498
  %v1136 = vunpack.c.l.b16 %v499
  %v1137 = vunpack.c.h.b16 %v499
  %v1138 = vunpack.c.l.b16 %v500
  %v1139 = vunpack.c.h.b16 %v500
  %v1140 = vunpack.c.l.b16 %v501
  %v1141 = vunpack.c.h.b16 %v501
  %v1142 = vunpack.c.l.b16 %v502
  %v1143 = vunpack.c.h.b16 %v502
  %v1144 = vunpack.c.l.b16 %v503
  %v1145 = vunpack.c.h.b16 %v503
  %v1146 = vunpack.c.l.b16 %v504
  %v1147 = vunpack.c.h.b16 %v504
  %v1148 = vunpack.c.l.b16 %v505
  %v1149 = vunpack.c.h.b16 %v505
  %v1150 = vunpack.c.l.b16 %v506
  %v1151 = vunpack.c.h.b16 %v506
  %v1152 = vunpack.c.l.b16 %v507
  %v1153 = vunpack.c.h.b16 %v507
  %v1154 = vunpack.c.l.b16 %v508
  %v1155 = vunpack.c.h.b16 %v508
  %v1156 = vunpack.c.l.b16 %v509
  %v1157 = vunpack.c.h.b16 %v509
  %v1158 = vunpack.c.l.b16 %v510
  %v1159 = vunpack.c.h.b16 %v510
  %v1160 = vunpack.c.l.b16 %v511
  %v1161 = vunpack.c.h.b16 %v511
  %v1162 = vunpack.c.l.b16 %v512
  %v1163 = vunpack.c.h.b16 %v512
  %v1164 = vunpack.c.l.b16 %v513
  %v1165 = vunpack.c.h.b16 %v513
  %v1166 = vunpack.c.l.b16 %v514
  %v1167 = vunpack.c.h.b16 %v514
  %v1168 = vunpack.c.l.b16 %v515
  %v1169 = vunpack.c.h.b16 %v515
  %v1170 = vunpack.c.l.b16 %v516
  %v1171 = vunpack.c.h.b16 %v516
  %v1172 = vunpack.c.l.b16 %v517
  %v1173 = vunpack.c.h.b16 %v517
  %v1174 = vunpack.c.l.b16 %v518
  %v1175 = vunpack.c.h.b16 %v518
  %v1176 = vunpack.c.l.b16 %v519
  %v1177 = vunpack.c.h.b16 %v519
  %v1178 = vunpack.c.l.b16 %v520
  %v1179 = vunpack.c.h.b16 %v520
  %v1180 = vunpack.c.l.b16 %v521
  %v1181 = vunpack.c.h.b16 %v521
  %v1182 = vunpack.c.l.b16 %v522
  %v1183 = vunpack.c.h.b16 %v522
  %v1184 = vunpack.c.l.b16 %v523
  %v1185 = vunpack.c.h.b16 %v523
  %v1186 = vunpack.c.l.b16 %v524
  %v1187 = vunpack.c.h.b16 %v524
  %v1188 = vunpack.c.l.b16 %v525
  %v1189 = vunpack.c.h.b16 %v525
  %v1190 = vunpack.c.l.b16 %v526
  %v1191 = vunpack.c.h.b16 %v526
  %v1192 = vunpack.c.l.b16 %v527
  %v1193 = vunpack.c.h.b16 %v527
  %v1194 = vunpack.c.l.b16 %v528
  %v1195 = vunpack.c.h.b16 %v528
  %v1196 = vunpack.c.l.b16 %v529
  %v1197 = vunpack.c.h.b16 %v529
  %v1198 = vunpack.c.l.b16 %v530
  %v1199 = vunpack.c.h.b16 %v530
  %v1200 = vunpack.c.l.b16 %v531
  %v1201 = vunpack.c.h.b16 %v531
  %v1202 = vunpack.c.l.b16 %v532
  %v1203 = vunpack.c.h.b16 %v532
  %v1204 = vunpack.c.l.b16 %v533
  %v1205 = vunpack.c.h.b16 %v533
  %v1206 = vunpack.c.l.b16 %v534
  %v1207 = vunpack.c.h.b16 %v534
  %v1208 = vunpack.c.l.b16 %v535
  %v1209 = vunpack.c.h.b16 %v535
  %v1210 = vunpack.c.l.b16 %v536
  %v1211 = vunpack.c.h.b16 %v536
  %v1212 = vunpack.c.l.b16 %v537
  %v1213 = vunpack.c.h.b16 %v537
  %v1214 = vunpack.c.l.b16 %v538
  %v1215 = vunpack.c.h.b16 %v538
  %v1216 = vunpack.c.l.b16 %v539
  %v1217 = vunpack.c.h.b16 %v539
  %v1218 = vunpack.c.l.b16 %v540
  %v1219 = vunpack.c.h.b16 %v540
  %v1220 = vunpack.c.l.b16 %v541
  %v1221 = vunpack.c.h.b16 %v541
  %v1222 = vunpack.c.l.b16 %v542
  %v1223 = vunpack.c.h.b16 %v542
  %v1224 = vunpack.c.l.b16 %v543
  %v1225 = vunpack.c.h.b16 %v543
  %v1226 = vunpack.c.l.b16 %v544
  %v1227 = vunpack.c.h.b16 %v544
  %v1228 = vunpack.c.l.b16 %v545
  %v1229 = vunpack.c.h.b16 %v545
  %v1230 = vunpack.c.l.b16 %v546
  %v1231 = vunpack.c.h.b16 %v546
  %v1232 = vunpack.c.l.b16 %v547
  %v1233 = vunpack.c.h.b16 %v547
  %v1234 = vunpack.c.l.b16 %v548
  %v1235 = vunpack.c.h.b16 %v548
  %v1236 = vunpack.c.l.b16 %v549
  %v1237 = vunpack.c.h.b16 %v549
  %v1238 = vunpack.c.l.b16 %v550
  %v1239 = vunpack.c.h.b16 %v550
  %v1240 = vunpack.c.l.b16 %v551
  %v1241 = vunpack.c.h.b16 %v551
  %v1242 = vunpack.c.l.b16 %v552
  %v1243 = vunpack.c.h.b16 %v552
  %v1244 = vunpack.c.l.b16 %v553
  %v1245 = vunpack.c.h.b16 %v553
  %v1246 = vunpack.c.l.b16 %v554
  %v1247 = vunpack.c.h.b16 %v554
  %v1248 = vunpack.c.l.b16 %v555
  %v1249 = vunpack.c.h.b16 %v555
  %v1250 = vunpack.c.l.b16 %v556
  %v1251 = vunpack.c.h.b16 %v556
  %v1252 = vunpack.c.l.b16 %v557
  %v1253 = vunpack.c.h.b16 %v557
  %v1254 = vunpack.c.l.b16 %v558
  %v1255 = vunpack.c.h.b16 %v558
  %v1256 = vunpack.c.l.b16 %v559
  %v1257 = vunpack.c.h.b16 %v559
  %v1258 = vunpack.c.l.b16 %v560
  %v1259 = vunpack.c.h.b16 %v560
  %v1260 = vunpack.c.l.b16 %v561
  %v1261 = vunpack.c.h.b16 %v561
  %v1262 = vunpack.c.l.b16 %v562
  %v1263 = vunpack.c.h.b16 %v562
  %v1264 = vunpack.c.l.b16 %v563
  %v1265 = vunpack.c.h.b16 %v563
  %v1266 = vunpack.c.l.b16 %v564
  %v1267 = vunpack.c.h.b16 %v564
  %v1268 = vunpack.c.l.b16 %v565
  %v1269 = vunpack.c.h.b16 %v565
  %v1270 = vunpack.c.l.b16 %v566
  %v1271 = vunpack.c.h.b16 %v566
  %v1272 = vunpack.c.l.b16 %v567
  %v1273 = vunpack.c.h.b16 %v567
  %v1274 = vunpack.c.l.b16 %v568
  %v1275 = vunpack.c.h.b16 %v568
  %v1276 = vunpack.c.l.b16 %v569
  %v1277 = vunpack.c.h.b16 %v569
  %v1278 = vunpack.c.l.b16 %v570
  %v1279 = vunpack.c.h.b16 %v570
  %v1280 = vunpack.c.l.b16 %v571
  %v1281 = vunpack.c.h.b16 %v571
  %v1282 = vunpack.c.l.b16 %v572
  %v1283 = vunpack.c.h.b16 %v572
  %v1284 = vunpack.c.l.b16 %v573
  %v1285 = vunpack.c.h.b16 %v573
  %v1286 = vunpack.c.l.b16 %v574
  %v1287 = vunpack.c.h.b16 %v574
  %v1288 = vunpack.c.l.b16 %v575
  %v1289 = vunpack.c.h.b16 %v575
  %v1290 = vunpack.c.l.b16 %v576
  %v1291 = vunpack.c.h.b16 %v576
  %v1292 = vunpack.c.l.b16 %v577
  %v1293 = vunpack.c.h.b16 %v577
  %v1294 = vunpack.c.l.b16 %v578
  %v1295 = vunpack.c.h.b16 %v578
  %v1296 = vunpack.c.l.b16 %v579
  %v1297 = vunpack.c.h.b16 %v579
  %v1298 = vunpack.c.l.b16 %v580
  %v1299 = vunpack.c.h.b16 %v580
  %v1300 = vunpack.c.l.b16 %v581
  %v1301 = vunpack.c.h.b16 %v581
  %v1302 = vunpack.c.l.b16 %v582
  %v1303 = vunpack.c.h.b16 %v582
  %v1304 = vunpack.c.l.b16 %v583
  %v1305 = vunpack.c.h.b16 %v583
  %v1306 = vunpack.c.l.b16 %v584
  %v1307 = vunpack.c.h.b16 %v584
  %v1308 = vunpack.c.l.b16 %v585
  %v1309 = vunpack.c.h.b16 %v585
  %v1310 = vunpack.c.l.b16 %v586
  %v1311 = vunpack.c.h.b16 %v586
  %v1312 = vunpack.c.l.b16 %v587
  %v1313 = vunpack.c.h.b16 %v587
  %v1314 = vunpack.c.l.b16 %v588
  %v1315 = vunpack.c.h.b16 %v588
  %v1316 = vunpack.c.l.b16 %v589
  %v1317 = vunpack.c.h.b16 %v589
  %v1318 = vunpack.c.l.b16 %v590
  %v1319 = vunpack.c.h.b16 %v590
  %v1320 = vunpack.c.l.b16 %v591
  %v1321 = vunpack.c.h.b16 %v591
  %v1322 = vunpack.c.l.b16 %v592
  %v1323 = vunpack.c.h.b16 %v592
  %v1324 = vunpack.c.l.b16 %v593
  %v1325 = vunpack.c.h.b16 %v593
  %v1326 = vunpack.c.l.b16 %v594
  %v1327 = vunpack.c.h.b16 %v594
  %v1328 = vunpack.c.l.b16 %v595
  %v1329 = vunpack.c.h.b16 %v595
  %v1330 = vunpack.c.l.b16 %v596
  %v1331 = vunpack.c.h.b16 %v596
  %v1332 = vunpack.c.l.b16 %v597
  %v1333 = vunpack.c.h.b16 %v597
  %v1334 = vunpack.c.l.b16 %v598
  %v1335 = vunpack.c.h.b16 %v598
  %v1336 = vunpack.c.l.b16 %v599
  %v1337 = vunpack.c.h.b16 %v599
  %v1338 = vunpack.c.l.b16 %v600
  %v1339 = vunpack.c.h.b16 %v600
  %v1340 = vunpack.c.l.b16 %v601
  %v1341 = vunpack.c.h.b16 %v601
  %v1342 = vunpack.c.l.b16 %v602
  %v1343 = vunpack.c.h.b16 %v602
  %v1344 = vunpack.c.l.b16 %v603
  %v1345 = vunpack.c.h.b16 %v603
  %v1346 = vunpack.c.l.b16 %v604
  %v1347 = vunpack.c.h.b16 %v604
  %v1348 = vunpack.c.l.b16 %v605
  %v1349 = vunpack.c.h.b16 %v605
  %v1350 = vunpack.c.l.b16 %v606
  %v1351 = vunpack.c.h.b16 %v606
  %v1352 = vunpack.c.l.b16 %v607
  %v1353 = vunpack.c.h.b16 %v607
  %v1354 = vunpack.c.l.b16 %v608
  %v1355 = vunpack.c.h.b16 %v608
  %v1356 = vunpack.c.l.b16 %v609
  %v1357 = vunpack.c.h.b16 %v609
  %v1358 = vunpack.c.l.b16 %v610
  %v1359 = vunpack.c.h.b16 %v610
  %v1360 = vunpack.c.l.b16 %v611
  %v1361 = vunpack.c.h.b16 %v611
  %v1362 = vunpack.c.l.b16 %v612
  %v1363 = vunpack.c.h.b16 %v612
  %v1364 = vunpack.c.l.b16 %v613
  %v1365 = vunpack.c.h.b16 %v613
  %v1366 = vunpack.c.l.b16 %v614
  %v1367 = vunpack.c.h.b16 %v614
  %v1368 = vunpack.c.l.b16 %v615
  %v1369 = vunpack.c.h.b16 %v615
  %v1370 = vunpack.c.l.b16 %v616
  %v1371 = vunpack.c.h.b16 %v616
  %v1372 = vunpack.c.l.b16 %v617
  %v1373 = vunpack.c.h.b16 %v617
  %v1374 = vunpack.c.l.b16 %v618
  %v1375 = vunpack.c.h.b16 %v618
  %v1376 = vunpack.c.l.b16 %v619
  %v1377 = vunpack.c.h.b16 %v619
  %v1378 = vunpack.c.l.b16 %v620
  %v1379 = vunpack.c.h.b16 %v620
  %v1380 = vunpack.c.l.b16 %v621
  %v1381 = vunpack.c.h.b16 %v621
  %v1382 = vunpack.c.l.b16 %v622
  %v1383 = vunpack.c.h.b16 %v622
  %v1384 = vunpack.c.l.b16 %v623
  %v1385 = vunpack.c.h.b16 %v623
  %v1386 = vunpack.c.l.b16 %v624
  %v1387 = vunpack.c.h.b16 %v624
  %v1388 = vunpack.c.l.b16 %v625
  %v1389 = vunpack.c.h.b16 %v625
  %v1390 = vunpack.c.l.b16 %v626
  %v1391 = vunpack.c.h.b16 %v626
  %v1392 = vunpack.c.l.b16 %v627
  %v1393 = vunpack.c.h.b16 %v627
  %v1394 = vunpack.c.l.b16 %v628
  %v1395 = vunpack.c.h.b16 %v628
  %v1396 = vunpack.c.l.b16 %v629
  %v1397 = vunpack.c.h.b16 %v629
  %v1398 = vunpack.c.l.b16 %v630
  %v1399 = vunpack.c.h.b16 %v630
  %v1400 = vunpack.c.l.b16 %v631
  %v1401 = vunpack.c.h.b16 %v631
  %v1402 = vunpack.c.l.b16 %v632
  %v1403 = vunpack.c.h.b16 %v632
  %v1404 = vunpack.c.l.b16 %v633
  %v1405 = vunpack.c.h.b16 %v633
  %v1406 = vunpack.c.l.b16 %v634
  %v1407 = vunpack.c.h.b16 %v634
  %v1408 = vunpack.c.l.b16 %v635
  %v1409 = vunpack.c.h.b16 %v635
  %v1410 = vunpack.c.l.b16 %v636
  %v1411 = vunpack.c.h.b16 %v636
  %v1412 = vunpack.c.l.b16 %v637
  %v1413 = vunpack.c.h.b16 %v637
  %v1414 = vunpack.c.l.b16 %v638
  %v1415 = vunpack.c.h.b16 %v638
  %v1416 = vunpack.c.l.b16 %v639
  %v1417 = vunpack.c.h.b16 %v639
  %v1418 = vunpack.c.l.b16 %v640
  %v1419 = vunpack.c.h.b16 %v640
  %v1420 = vunpack.c.l.b16 %v641
  %v1421 = vunpack.c.h.b16 %v641
  %v1422 = vunpack.c.l.b16 %v642
  %v1423 = vunpack.c.h.b16 %v642
  %v1424 = vunpack.c.l.b16 %v643
  %v1425 = vunpack.c.h.b16 %v643
  %v1426 = vunpack.c.l.b16 %v644
  %v1427 = vunpack.c.h.b16 %v644
  %v1428 = vunpack.c.l.b16 %v645
  %v1429 = vunpack.c.h.b16 %v645
  %v1430 = vunpack.c.l.b16 %v646
  %v1431 = vunpack.c.h.b16 %v646
  %v1432 = vunpack.c.l.b16 %v647
  %v1433 = vunpack.c.h.b16 %v647
  %v1434 = vunpack.c.l.b16 %v648
  %v1435 = vunpack.c.h.b16 %v648
  %v1436 = vunpack.c.l.b16 %v649
  %v1437 = vunpack.c.h.b16 %v649
  %v1438 = vunpack.c.l.b16 %v650
  %v1439 = vunpack.c.h.b16 %v650
  %v1440 = vunpack.c.l.b16 %v651
  %v1441 = vunpack.c.h.b16 %v651
  %v1442 = vunpack.c.l.b16 %v652
  %v1443 = vunpack.c.h.b16 %v652
  %v1444 = vunpack.c.l.b16 %v653
  %v1445 = vunpack.c.h.b16 %v653
  %v1446 = vunpack.c.l.b16 %v654
  %v1447 = vunpack.c.h.b16 %v654
  %v1448 = vunpack.c.l.b16 %v655
  %v1449 = vunpack.c.h.b16 %v655
  %v1450 = vunpack.c.l.b16 %v656
  %v1451 = vunpack.c.h.b16 %v656
  %v1452 = vunpack.c.l.b16 %v657
  %v1453 = vunpack.c.h.b16 %v657
  %v1454 = vunpack.c.l.b16 %v658
  %v1455 = vunpack.c.h.b16 %v658
  %v1456 = vunpack.c.l.b16 %v659
  %v1457 = vunpack.c.h.b16 %v659
  %v1458 = vunpack.c.l.b16 %v660
  %v1459 = vunpack.c.h.b16 %v660
  %v1460 = vunpack.c.l.b16 %v661
  %v1461 = vunpack.c.h.b16 %v661
  %v1462 = vunpack.c.l.b16 %v662
  %v1463 = vunpack.c.h.b16 %v662
  %v1464 = vunpack.c.l.b16 %v663
  %v1465 = vunpack.c.h.b16 %v663
  %v1466 = vunpack.c.l.b16 %v664
  %v1467 = vunpack.c.h.b16 %v664
  %v1468 = vunpack.c.l.b16 %v665
  %v1469 = vunpack.c.h.b16 %v665
  %v1470 = vunpack.c.l.b16 %v666
  %v1471 = vunpack.c.h.b16 %v666
  %v1472 = vunpack.c.l.b16 %v667
  %v1473 = vunpack.c.h.b16 %v667
  %v1474 = vunpack.c.l.b16 %v668
  %v1475 = vunpack.c.h.b16 %v668
  %v1476 = vunpack.c.l.b16 %v669
  %v1477 = vunpack.c.h.b16 %v669
  %v1478 = vunpack.c.l.b16 %v670
  %v1479 = vunpack.c.h.b16 %v670
  %v1480 = vunpack.c.l.b16 %v671
  %v1481 = vunpack.c.h.b16 %v671
  %v1482 = vunpack.c.l.b16 %v672
  %v1483 = vunpack.c.h.b16 %v672
  %v1484 = vunpack.c.l.b16 %v673
  %v1485 = vunpack.c.h.b16 %v673
  %v1486 = vunpack.c.l.b16 %v674
  %v1487 = vunpack.c.h.b16 %v674
  %v1488 = vunpack.c.l.b16 %v675
  %v1489 = vunpack.c.h.b16 %v675
  %v1490 = vunpack.c.l.b16 %v676
  %v1491 = vunpack.c.h.b16 %v676
  %v1492 = vunpack.c.l.b16 %v677
  %v1493 = vunpack.c.h.b16 %v677
  %v1494 = vunpack.c.l.b16 %v678
  %v1495 = vunpack.c.h.b16 %v678
  %v1496 = vunpack.c.l.b16 %v679
  %v1497 = vunpack.c.h.b16 %v679
  %v1498 = vunpack.c.l.b16 %v680
  %v1499 = vunpack.c.h.b16 %v680
  %v1500 = vunpack.c.l.b16 %v681
  %v1501 = vunpack.c.h.b16 %v681
  %v1502 = vunpack.c.l.b16 %v682
  %v1503 = vunpack.c.h.b16 %v682
  %v1504 = vunpack.c.l.b16 %v683
  %v1505 = vunpack.c.h.b16 %v683
  %v1506 = vunpack.c.l.b16 %v684
  %v1507 = vunpack.c.h.b16 %v684
  %v1508 = vunpack.c.l.b16 %v685
  %v1509 = vunpack.c.h.b16 %v685
  %v1510 = vunpack.c.l.b16 %v686
  %v1511 = vunpack.c.h.b16 %v686
  %v1512 = vunpack.c.l.b16 %v687
  %v1513 = vunpack.c.h.b16 %v687
  %v1514 = vunpack.c.l.b16 %v688
  %v1515 = vunpack.c.h.b16 %v688
  %v1516 = vunpack.c.l.b16 %v689
  %v1517 = vunpack.c.h.b16 %v689
  %v1518 = vunpack.c.l.b16 %v690
  %v1519 = vunpack.c.h.b16 %v690
  %v1520 = vunpack.c.l.b16 %v691
  %v1521 = vunpack.c.h.b16 %v691
  %v1522 = vunpack.c.l.b16 %v692
  %v1523 = vunpack.c.h.b16 %v692
  %v1524 = vunpack.c.l.b16 %v693
  %v1525 = vunpack.c.h.b16 %v693
  %v1526 = vunpack.c.l.b16 %v694
  %v1527 = vunpack.c.h.b16 %v694
  %v1528 = vunpack.c.l.b16 %v695
  %v1529 = vunpack.c.h.b16 %v695
  %v1530 = vunpack.c.l.b16 %v696
  %v1531 = vunpack.c.h.b16 %v696
  %v1532 = vunpack.c.l.b16 %v697
  %v1533 = vunpack.c.h.b16 %v697
  %v1534 = vunpack.c.l.b16 %v698
  %v1535 = vunpack.c.h.b16 %v698
  %v1536 = vunpack.c.l.b16 %v699
  %v1537 = vunpack.c.h.b16 %v699
  %v1538 = vunpack.c.l.b16 %v700
  %v1539 = vunpack.c.h.b16 %v700
  %v1540 = vunpack.c.l.b16 %v701
  %v1541 = vunpack.c.h.b16 %v701
  %v1542 = vunpack.c.l.b16 %v702
  %v1543 = vunpack.c.h.b16 %v702
  %v1544 = vunpack.c.l.b16 %v703
  %v1545 = vunpack.c.h.b16 %v703
  %v1546 = vunpack.c.l.b16 %v704
  %v1547 = vunpack.c.h.b16 %v704
  %v1548 = vunpack.c.l.b16 %v705
  %v1549 = vunpack.c.h.b16 %v705
  %v1550 = vunpack.c.l.b16 %v706
  %v1551 = vunpack.c.h.b16 %v706
  %v1552 = vunpack.c.l.b16 %v707
  %v1553 = vunpack.c.h.b16 %v707
  %v1554 = vunpack.c.l.b16 %v708
  %v1555 = vunpack.c.h.b16 %v708
  %v1556 = vunpack.c.l.b16 %v709
  %v1557 = vunpack.c.h.b16 %v709
  %v1558 = vunpack.c.l.b16 %v710
  %v1559 = vunpack.c.h.b16 %v710
  %v1560 = vunpack.c.l.b16 %v711
  %v1561 = vunpack.c.h.b16 %v711
  %v1562 = vunpack.c.l.b16 %v712
  %v1563 = vunpack.c.h.b16 %v712
  %v1564 = vunpack.c.l.b16 %v713
  %v1565 = vunpack.c.h.b16 %v713
  %v1566 = vunpack.c.l.b16 %v714
  %v1567 = vunpack.c.h.b16 %v714
  %v1568 = vunpack.c.l.b16 %v715
  %v1569 = vunpack.c.h.b16 %v715
  %v1570 = vunpack.c.l.b16 %v716
  %v1571 = vunpack.c.h.b16 %v716
  %v1572 = vunpack.c.l.b16 %v717
  %v1573 = vunpack.c.h.b16 %v717
  %v1574 = vunpack.c.l.b16 %v718
  %v1575 = vunpack.c.h.b16 %v718
  %v1576 = vunpack.c.l.b16 %v719
  %v1577 = vunpack.c.h.b16 %v719
  %v1578 = vunpack.c.l.b16 %v720
  %v1579 = vunpack.c.h.b16 %v720
  %v1580 = vunpack.c.l.b16 %v721
  %v1581 = vunpack.c.h.b16 %v721
  %v1582 = vunpack.c.l.b16 %v722
  %v1583 = vunpack.c.h.b16 %v722
  %v1584 = vunpack.c.l.b16 %v723
  %v1585 = vunpack.c.h.b16 %v723
  %v1586 = vunpack.c.l.b16 %v724
  %v1587 = vunpack.c.h.b16 %v724
  %v1588 = vunpack.c.l.b16 %v725
  %v1589 = vunpack.c.h.b16 %v725
  %v1590 = vunpack.c.l.b16 %v726
  %v1591 = vunpack.c.h.b16 %v726
  %v1592 = vunpack.c.l.b16 %v727
  %v1593 = vunpack.c.h.b16 %v727
  %v1594 = vunpack.c.l.b16 %v728
  %v1595 = vunpack.c.h.b16 %v728
  %v1596 = vunpack.c.l.b16 %v729
  %v1597 = vunpack.c.h.b16 %v729
  %v1598 = vunpack.c.l.b16 %v730
  %v1599 = vunpack.c.h.b16 %v730
  %v1600 = vunpack.c.l.b16 %v731
  %v1601 = vunpack.c.h.b16 %v731
  %v1602 = vunpack.c.l.b16 %v732
  %v1603 = vunpack.c.h.b16 %v732
  %v1604 = vunpack.c.l.b16 %v733
  %v1605 = vunpack.c.h.b16 %v733
  %v1606 = vunpack.c.l.b16 %v734
  %v1607 = vunpack.c.h.b16 %v734
  %v1608 = vunpack.c.l.b16 %v735
  %v1609 = vunpack.c.h.b16 %v735
  %v1610 = vunpack.c.l.b16 %v736
  %v1611 = vunpack.c.h.b16 %v736
  %v1612 = vunpack.c.l.b16 %v737
  %v1613 = vunpack.c.h.b16 %v737
  %v1614 = vunpack.c.l.b16 %v738
  %v1615 = vunpack.c.h.b16 %v738
  %v1616 = vunpack.c.l.b16 %v739
  %v1617 = vunpack.c.h.b16 %v739
  %v1618 = vunpack.c.l.b16 %v740
  %v1619 = vunpack.c.h.b16 %v740
  %v1620 = vunpack.c.l.b16 %v741
  %v1621 = vunpack.c.h.b16 %v741
  %v1622 = vunpack.c.l.b16 %v742
  %v1623 = vunpack.c.h.b16 %v742
  %v1624 = vunpack.c.l.b16 %v743
  %v1625 = vunpack.c.h.b16 %v743
  %v1626 = vunpack.c.l.b16 %v744
  %v1627 = vunpack.c.h.b16 %v744
  %v1628 = vunpack.c.l.b16 %v745
  %v1629 = vunpack.c.h.b16 %v745
  %v1630 = vunpack.c.l.b16 %v746
  %v1631 = vunpack.c.h.b16 %v746
  %v1632 = vunpack.c.l.b16 %v747
  %v1633 = vunpack.c.h.b16 %v747
  %v1634 = vunpack.c.l.b16 %v748
  %v1635 = vunpack.c.h.b16 %v748
  %v1636 = vunpack.c.l.b16 %v749
  %v1637 = vunpack.c.h.b16 %v749
  %v1638 = vunpack.c.l.b16 %v750
  %v1639 = vunpack.c.h.b16 %v750
  %v1640 = vunpack.c.l.b16 %v751
  %v1641 = vunpack.c.h.b16 %v751
  %v1642 = vunpack.c.l.b16 %v752
  %v1643 = vunpack.c.h.b16 %v752
  %v1644 = vunpack.c.l.b16 %v753
  %v1645 = vunpack.c.h.b16 %v753
  %v1646 = vunpack.c.l.b16 %v754
  %v1647 = vunpack.c.h.b16 %v754
  %v1648 = vunpack.c.l.b16 %v755
  %v1649 = vunpack.c.h.b16 %v755
  %v1650 = vunpack.c.l.b16 %v756
  %v1651 = vunpack.c.h.b16 %v756
  %v1652 = vunpack.c.l.b16 %v757
  %v1653 = vunpack.c.h.b16 %v757
  %v1654 = vpack.c.b16 %v1082, %v1078
  %v1655 = vpack.c.b16 %v1083, %v1079
  %v1656 = vpack.c.b16 %v1084, %v1080
  %v1657 = vpack.c.b16 %v1085, %v1081
  %v1658 = vpack.c.b16 %v1090, %v1086
  %v1659 = vpack.c.b16 %v1091, %v1087
  %v1660 = vpack.c.b16 %v1092, %v1088
  %v1661 = vpack.c.b16 %v1093, %v1089
  %v1662 = vpack.c.b16 %v1098, %v1094
  %v1663 = vpack.c.b16 %v1099, %v1095
  %v1664 = vpack.c.b16 %v1100, %v1096
  %v1665 = vpack.c.b16 %v1101, %v1097
  %v1666 = vpack.c.b16 %v1106, %v1102
  %v1667 = vpack.c.b16 %v1107, %v1103
  %v1668 = vpack.c.b16 %v1108, %v1104
  %v1669 = vpack.c.b16 %v1109, %v1105
  %v1670 = vpack.c.b16 %v1114, %v1110
  %v1671 = vpack.c.b16 %v1115, %v1111
  %v1672 = vpack.c.b16 %v1116, %v1112
  %v1673 = vpack.c.b16 %v1117, %v1113
  %v1674 = vpack.c.b16 %v1122, %v1118
  %v1675 = vpack.c.b16 %v1123, %v1119
  %v1676 = vpack.c.b16 %v1124, %v1120
  %v1677 = vpack.c.b16 %v1125, %v1121
  %v1678 = vpack.c.b16 %v1130, %v1126
  %v1679 = vpack.c.b16 %v1131, %v1127
  %v1680 = vpack.c.b16 %v1132, %v1128
  %v1681 = vpack.c.b16 %v1133, %v1129
  %v1682 = vpack.c.b16 %v1138, %v1134
  %v1683 = vpack.c.b16 %v1139, %v1135
  %v1684 = vpack.c.b16 %v1140, %v1136
  %v1685 = vpack.c.b16 %v1141, %v1137
  %v1686 = vpack.c.b16 %v1146, %v1142
  %v1687 = vpack.c.b16 %v1147, %v1143
  %v1688 = vpack.c.b16 %v1148, %v1144
  %v1689 = vpack.c.b16 %v1149, %v1145
  %v1690 = vpack.c.b16 %v1154, %v1150
  %v1691 = vpack.c.b16 %v1155, %v1151
  %v1692 = vpack.c.b16 %v1156, %v1152
  %v1693 = vpack.c.b16 %v1157, %v1153
  %v1694 = vpack.c.b16 %v1162, %v1158
  %v1695 = vpack.c.b16 %v1163, %v1159
  %v1696 = vpack.c.b16 %v1164, %v1160
  %v1697 = vpack.c.b16 %v1165, %v1161
  %v1698 = vpack.c.b16 %v1170, %v1166
  %v1699 = vpack.c.b16 %v1171, %v1167
  %v1700 = vpack.c.b16 %v1172, %v1168
  %v1701 = vpack.c.b16 %v1173, %v1169
  %v1702 = vpack.c.b16 %v1178, %v1174
  %v1703 = vpack.c.b16 %v1179, %v1175
  %v1704 = vpack.c.b16 %v1180, %v1176
  %v1705 = vpack.c.b16 %v1181, %v1177
  %v1706 = vpack.c.b16 %v1186, %v1182
  %v1707 = vpack.c.b16 %v1187, %v1183
  %v1708 = vpack.c.b16 %v1188, %v1184
  %v1709 = vpack.c.b16 %v1189, %v1185
  %v1710 = vpack.c.b16 %v1194, %v1190
  %v1711 = vpack.c.b16 %v1195, %v1191
  %v1712 = vpack.c.b16 %v1196, %v1192
  %v1713 = vpack.c.b16 %v1197, %v1193
  %v1714 = vpack.c.b16 %v1202, %v1198
  %v1715 = vpack.c.b16 %v1203, %v1199
  %v1716 = vpack.c.b16 %v1204, %v1200
  %v1717 = vpack.c.b16 %v1205, %v1201
  %v1718 = vpack.c.b16 %v1210, %v1206
  %v1719 = vpack.c.b16 %v1211, %v1207
  %v1720 = vpack.c.b16 %v1212, %v1208
  %v1721 = vpack.c.b16 %v1213, %v1209
  %v1722 = vpack.c.b16 %v1218, %v1214
  %v1723 = vpack.c.b16 %v1219, %v1215
  %v1724 = vpack.c.b16 %v1220, %v1216
  %v1725 = vpack.c.b16 %v1221, %v1217
  %v1726 = vpack.c.b16 %v1226, %v1222
  %v1727 = vpack.c.b16 %v1227, %v1223
  %v1728 = vpack.c.b16 %v1228, %v1224
  %v1729 = vpack.c.b16 %v1229, %v1225
  %v1730 = vpack.c.b16 %v1234, %v1230
  %v1731 = vpack.c.b16 %v1235, %v1231
  %v1732 = vpack.c.b16 %v1236, %v1232
  %v1733 = vpack.c.b16 %v1237, %v1233
  %v1734 = vpack.c.b16 %v1242, %v1238
  %v1735 = vpack.c.b16 %v1243, %v1239
  %v1736 = vpack.c.b16 %v1244, %v1240
  %v1737 = vpack.c.b16 %v1245, %v1241
  %v1738 = vpack.c.b16 %v1250, %v1246
  %v1739 = vpack.c.b16 %v1251, %v1247
  %v1740 = vpack.c.b16 %v1252, %v1248
  %v1741 = vpack.c.b16 %v1253, %v1249
  %v1742 = vpack.c.b16 %v1258, %v1254
  %v1743 = vpack.c.b16 %v1259, %v1255
  %v1744 = vpack.c.b16 %v1260, %v1256
  %v1745 = vpack.c.b16 %v1261, %v1257
  %v1746 = vpack.c.b16 %v1266, %v1262
  %v1747 = vpack.c.b16 %v1267, %v1263
  %v1748 = vpack.c.b16 %v1268, %v1264
  %v1749 = vpack.c.b16 %v1269, %v1265
  %v1750 = vpack.c.b16 %v1274, %v1270
  %v1751 = vpack.c.b16 %v1275, %v1271
  %v1752 = vpack.c.b16 %v1276, %v1272
  %v1753 = vpack.c.b16 %v1277, %v1273
  %v1754 = vpack.c.b16 %v1282, %v1278
  %v1755 = vpack.c.b16 %v1283, %v1279
  %v1756 = vpack.c.b16 %v1284, %v1280
  %v1757 = vpack.c.b16 %v1285, %v1281
  %v1758 = vpack.c.b16 %v1290, %v1286
  %v1759 = vpack.c.b16 %v1291, %v1287
  %v1760 = vpack.c.b16 %v1292, %v1288
  %v1761 = vpack.c.b16 %v1293, %v1289
  %v1762 = vpack.c.b16 %v1298, %v1294
  %v1763 = vpack.c.b16 %v1299, %v1295
  %v1764 = vpack.c.b16 %v1300, %v1296
  %v1765 = vpack.c.b16 %v1301, %v1297
  %v1766 = vpack.c.b16 %v1306, %v1302
  %v1767 = vpack.c.b16 %v1307, %v1303
  %v1768 = vpack.c.b16 %v1308, %v1304
  %v1769 = vpack.c.b16 %v1309, %v1305
  %v1770 = vpack.c.b16 %v1314, %v1310
  %v1771 = vpack.c.b16 %v1315, %v1311
  %v1772 = vpack.c.b16 %v1316, %v1312
  %v1773 = vpack.c.b16 %v1317, %v1313
  %v1774 = vpack.c.b16 %v1322, %v1318
  %v1775 = vpack.c.b16 %v1323, %v1319
  %v1776 = vpack.c.b16 %v1324, %v1320
  %v1777 = vpack.c.b16 %v1325, %v1321
  %v1778 = vpack.c.b16 %v1330, %v1326
  %v1779 = vpack.c.b16 %v1331, %v1327
  %v1780 = vpack.c.b16 %v1332, %v1328
  %v1781 = vpack.c.b16 %v1333, %v1329
  %v1782 = vpack.c.b16 %v1338, %v1334
  %v1783 = vpack.c.b16 %v1339, %v1335
  %v1784 = vpack.c.b16 %v1340, %v1336
  %v1785 = vpack.c.b16 %v1341, %v1337
  %v1786 = vpack.c.b16 %v1346, %v1342
  %v1787 = vpack.c.b16 %v1347, %v1343
  %v1788 = vpack.c.b16 %v1348, %v1344
  %v1789 = vpack.c.b16 %v1349, %v1345
  %v1790 = vpack.c.b16 %v1354, %v1350
  %v1791 = vpack.c.b16 %v1355, %v1351
  %v1792 = vpack.c.b16 %v1356, %v1352
  %v1793 = vpack.c.b16 %v1357, %v1353
  %v1794 = vpack.c.b16 %v1362, %v1358
  %v1795 = vpack.c.b16 %v1363, %v1359
  %v1796 = vpack.c.b16 %v1364, %v1360
  %v1797 = vpack.c.b16 %v1365, %v1361
  %v1798 = vpack.c.b16 %v1370, %v1366
  %v1799 = vpack.c.b16 %v1371, %v1367
  %v1800 = vpack.c.b16 %v1372, %v1368
  %v1801 = vpack.c.b16 %v1373, %v1369
  %v1802 = vpack.c.b16 %v1378, %v1374
  %v1803 = vpack.c.b16 %v1379, %v1375
  %v1804 = vpack.c.b16 %v1380, %v1376
  %v1805 = vpack.c.b16 %v1381, %v1377
  %v1806 = vpack.c.b16 %v1386, %v1382
  %v1807 = vpack.c.b16 %v1387, %v1383
  %v1808 = vpack.c.b16 %v1388, %v1384
  %v1809 = vpack.c.b16 %v1389, %v1385
  %v1810 = vpack.c.b16 %v1394, %v1390
  %v1811 = vpack.c.b16 %v1395, %v1391
  %v1812 = vpack.c.b16 %v1396, %v1392
  %v1813 = vpack.c.b16 %v1397, %v1393
  %v1814 = vpack.c.b16 %v1402, %v1398
  %v1815 = vpack.c.b16 %v1403, %v1399
  %v1816 = vpack.c.b16 %v1404, %v1400
  %v1817 = vpack.c.b16 %v1405, %v1401
  %v1818 = vpack.c.b16 %v1410, %v1406
  %v1819 = vpack.c.b16 %v1411, %v1407
  %v1820 = vpack.c.b16 %v1412, %v1408
  %v1821 = vpack.c.b16 %v1413, %v1409
  %v1822 = vpack.c.b16 %v1418, %v1414
  %v1823 = vpack.c.b16 %v1419, %v1415
  %v1824 = vpack.c.b16 %v1420, %v1416
  %v1825 = vpack.c.b16 %v1421, %v1417
  %v1826 = vpack.c.b16 %v1426, %v1422
  %v1827 = vpack.c.b16 %v1427, %v1423
  %v1828 = vpack.c.b16 %v1428, %v1424
  %v1829 = vpack.c.b16 %v1429, %v1425
  %v1830 = vpack.c.b16 %v1434, %v1430
  %v1831 = vpack.c.b16 %v1435, %v1431
  %v1832 = vpack.c.b16 %v1436, %v1432
  %v1833 = vpack.c.b16 %v1437, %v1433
  %v1834 = vpack.c.b16 %v1442, %v1438
  %v1835 = vpack.c.b16 %v1443, %v1439
  %v1836 = vpack.c.b16 %v1444, %v1440
  %v1837 = vpack.c.b16 %v1445, %v1441
  %v1838 = vpack.c.b16 %v1450, %v1446
  %v1839 = vpack.c.b16 %v1451, %v1447
  %v1840 = vpack.c.b16 %v1452, %v1448
  %v1841 = vpack.c.b16 %v1453, %v1449
  %v1842 = vpack.c.b16 %v1458, %v1454
  %v1843 = vpack.c.b16 %v1459, %v1455
  %v1844 = vpack.c.b16 %v1460, %v1456
  %v1845 = vpack.c.b16 %v1461, %v1457
  %v1846 = vpack.c.b16 %v1466, %v1462
  %v1847 = vpack.c.b16 %v1467, %v1463
  %v1848 = vpack.c.b16 %v1468, %v1464
  %v1849 = vpack.c.b16 %v1469, %v1465
  %v1850 = vpack.c.b16 %v1474, %v1470
  %v1851 = vpack.c.b16 %v1475, %v1471
  %v1852 = vpack.c.b16 %v1476, %v1472
  %v1853 = vpack.c.b16 %v1477, %v1473
  %v1854 = vpack.c.b16 %v1482, %v1478
  %v1855 = vpack.c.b16 %v1483, %v1479
  %v1856 = vpack.c.b16 %v1484, %v1480
  %v1857 = vpack.c.b16 %v1485, %v1481
  %v1858 = vpack.c.b16 %v1490, %v1486
  %v1859 = vpack.c.b16 %v1491, %v1487
  %v1860 = vpack.c.b16 %v1492, %v1488
  %v1861 = vpack.c.b16 %v1493, %v1489
  %v1862 = vpack.c.b16 %v1498, %v1494
  %v1863 = vpack.c.b16 %v1499, %v1495
  %v1864 = vpack.c.b16 %v1500, %v1496
  %v1865 = vpack.c.b16 %v1501, %v1497
  %v1866 = vpack.c.b16 %v1506, %v1502
  %v1867 = vpack.c.b16 %v1507, %v1503
  %v1868 = vpack.c.b16 %v1508, %v1504
  %v1869 = vpack.c.b16 %v1509, %v1505
  %v1870 = vpack.c.b16 %v1514, %v1510
  %v1871 = vpack.c.b16 %v1515, %v1511
  %v1872 = vpack.c.b16 %v1516, %v1512
  %v1873 = vpack.c.b16 %v1517, %v1513
  %v1874 = vpack.c.b16 %v1522, %v1518
  %v1875 = vpack.c.b16 %v1523, %v1519
  %v1876 = vpack.c.b16 %v1524, %v1520
  %v1877 = vpack.c.b16 %v1525, %v1521
  %v1878 = vpack.c.b16 %v1530, %v1526
  %v1879 = vpack.c.b16 %v1531, %v1527
  %v1880 = vpack.c.b16 %v1532, %v1528
  %v1881 = vpack.c.b16 %v1533, %v1529
  %v1882 = vpack.c.b16 %v1538, %v1534
  %v1883 = vpack.c.b16 %v1539, %v1535
  %v1884 = vpack.c.b16 %v1540, %v1536
  %v1885 = vpack.c.b16 %v1541, %v1537
  %v1886 = vpack.c.b16 %v1546, %v1542
  %v1887 = vpack.c.b16 %v1547, %v1543
  %v1888 = vpack.c.b16 %v1548, %v1544
  %v1889 = vpack.c.b16 %v1549, %v1545
  %v1890 = vpack.c.b16 %v1554, %v1550
  %v1891 = vpack.c.b16 %v1555, %v1551
  %v1892 = vpack.c.b16 %v1556, %v1552
  %v1893 = vpack.c.b16 %v1557, %v1553
  %v1894 = vpack.c.b16 %v1562, %v1558
  %v1895 = vpack.c.b16 %v1563, %v1559
  %v1896 = vpack.c.b16 %v1564, %v1560
  %v1897 = vpack.c.b16 %v1565, %v1561
  %v1898 = vpack.c.b16 %v1570, %v1566
  %v1899 = vpack.c.b16 %v1571, %v1567
  %v1900 = vpack.c.b16 %v1572, %v1568
  %v1901 = vpack.c.b16 %v1573, %v1569
  %v1902 = vpack.c.b16 %v1578, %v1574
  %v1903 = vpack.c.b16 %v1579, %v1575
  %v1904 = vpack.c.b16 %v1580, %v1576
  %v1905 = vpack.c.b16 %v1581, %v1577
  %v1906 = vpack.c.b16 %v1586, %v1582
  %v1907 = vpack.c.b16 %v1587, %v1583
  %v1908 = vpack.c.b16 %v1588, %v1584
  %v1909 = vpack.c.b16 %v1589, %v1585
  %v1910 = vpack.c.b16 %v1594, %v1590
  %v1911 = vpack.c.b16 %v1595, %v1591
  %v1912 = vpack.c.b16 %v1596, %v1592
  %v1913 = vpack.c.b16 %v1597, %v1593
  %v1914 = vpack.c.b16 %v1602, %v1598
  %v1915 = vpack.c.b16 %v1603, %v1599
  %v1916 = vpack.c.b16 %v1604, %v1600
  %v1917 = vpack.c.b16 %v1605, %v1601
  %v1918 = vpack.c.b16 %v1610, %v1606
  %v1919 = vpack.c.b16 %v1611, %v1607
  %v1920 = vpack.c.b16 %v1612, %v1608
  %v1921 = vpack.c.b16 %v1613, %v1609
  %v1922 = vpack.c.b16 %v1618, %v1614
  %v1923 = vpack.c.b16 %v1619, %v1615
  %v1924 = vpack.c.b16 %v1620, %v1616
  %v1925 = vpack.c.b16 %v1621, %v1617
  %v1926 = vpack.c.b16 %v1626, %v1622
  %v1927 = vpack.c.b16 %v1627, %v1623
  %v1928 = vpack.c.b16 %v1628, %v1624
  %v1929 = vpack.c.b16 %v1629, %v1625
  %v1930 = vpack.c.b16 %v1634, %v1630
  %v1931 = vpack.c.b16 %v1635, %v1631
  %v1932 = vpack.c.b16 %v1636, %v1632
  %v1933 = vpack.c.b16 %v1637, %v1633
  %v1934 = vpack.c.b16 %v1642, %v1638
  %v1935 = vpack.c.b16 %v1643, %v1639
  %v1936 = vpack.c.b16 %v1644, %v1640
  %v1937 = vpack.c.b16 %v1645, %v1641
  %v1938 = vpack.c.b16 %v1650, %v1646
  %v1939 = vpack.c.b16 %v1651, %v1647
  %v1940 = vpack.c.b16 %v1652, %v1648
  %v1941 = vpack.c.b16 %v1653, %v1649
  %2230 = vmatpush.bf16.msra.mxu0 %v765
  %2231 = vmatpush.bf16.msra.mxu0 %v764
  %2232 = vmatpush.bf16.msra.mxu0 %v763
  %2233 = vmatpush.bf16.msra.mxu0 %v762
  %2234 = vmatpush.bf16.msra.mxu0 %v761
  %2235 = vmatpush.bf16.msra.mxu0 %v760
  %2236 = vmatpush.bf16.msra.mxu0 %v759
  %2237 = vmatpush.bf16.msra.mxu0 %v758
  %2238 = vmatmul.bf16.gmra.mxu0 %v1654
  %v2239 = vpop.f32.mrf.mxu0
  %v2240 = vadd.f32 0.0, %v2239
  %v2241 = vpop.f32.mrf.mxu0
  %v2242 = vadd.f32 0.0, %v2241
  %2243 = vmatmul.bf16.gmra.mxu0 %v1658
  %v2244 = vpop.f32.mrf.mxu0
  %v2245 = vadd.f32 0.0, %v2244
  %v2246 = vpop.f32.mrf.mxu0
  %v2247 = vadd.f32 0.0, %v2246
  %2248 = vmatmul.bf16.gmra.mxu0 %v1662
  %v2249 = vpop.f32.mrf.mxu0
  %v2250 = vadd.f32 0.0, %v2249
  %v2251 = vpop.f32.mrf.mxu0
  %v2252 = vadd.f32 0.0, %v2251
  %2253 = vmatmul.bf16.gmra.mxu0 %v1666
  %v2254 = vpop.f32.mrf.mxu0
  %v2255 = vadd.f32 0.0, %v2254
  %v2256 = vpop.f32.mrf.mxu0
  %v2257 = vadd.f32 0.0, %v2256
  %2258 = vmatmul.bf16.gmra.mxu0 %v1670
  %v2259 = vpop.f32.mrf.mxu0
  %v2260 = vadd.f32 0.0, %v2259
  %v2261 = vpop.f32.mrf.mxu0
  %v2262 = vadd.f32 0.0, %v2261
  %2263 = vmatmul.bf16.gmra.mxu0 %v1674
  %v2264 = vpop.f32.mrf.mxu0
  %v2265 = vadd.f32 0.0, %v2264
  %v2266 = vpop.f32.mrf.mxu0
  %v2267 = vadd.f32 0.0, %v2266
  %2268 = vmatmul.bf16.gmra.mxu0 %v1678
  %v2269 = vpop.f32.mrf.mxu0
  %v2270 = vadd.f32 0.0, %v2269
  %v2271 = vpop.f32.mrf.mxu0
  %v2272 = vadd.f32 0.0, %v2271
  %2273 = vmatmul.bf16.gmra.mxu0 %v1682
  %v2274 = vpop.f32.mrf.mxu0
  %v2275 = vadd.f32 0.0, %v2274
  %v2276 = vpop.f32.mrf.mxu0
  %v2277 = vadd.f32 0.0, %v2276
  %2278 = vmatmul.bf16.gmra.mxu0 %v1686
  %v2279 = vpop.f32.mrf.mxu0
  %v2280 = vadd.f32 0.0, %v2279
  %v2281 = vpop.f32.mrf.mxu0
  %v2282 = vadd.f32 0.0, %v2281
  %2283 = vmatmul.bf16.gmra.mxu0 %v1690
  %v2284 = vpop.f32.mrf.mxu0
  %v2285 = vadd.f32 0.0, %v2284
  %v2286 = vpop.f32.mrf.mxu0
  %v2287 = vadd.f32 0.0, %v2286
  %2288 = vmatmul.bf16.gmra.mxu0 %v1694
  %v2289 = vpop.f32.mrf.mxu0
  %v2290 = vadd.f32 0.0, %v2289
  %v2291 = vpop.f32.mrf.mxu0
  %v2292 = vadd.f32 0.0, %v2291
  %2293 = vmatmul.bf16.gmra.mxu0 %v1698
  %v2294 = vpop.f32.mrf.mxu0
  %v2295 = vadd.f32 0.0, %v2294
  %v2296 = vpop.f32.mrf.mxu0
  %v2297 = vadd.f32 0.0, %v2296
  %2298 = vmatmul.bf16.gmra.mxu0 %v1702
  %v2299 = vpop.f32.mrf.mxu0
  %v2300 = vadd.f32 0.0, %v2299
  %v2301 = vpop.f32.mrf.mxu0
  %v2302 = vadd.f32 0.0, %v2301
  %2303 = vmatmul.bf16.gmra.mxu0 %v1706
  %v2304 = vpop.f32.mrf.mxu0
  %v2305 = vadd.f32 0.0, %v2304
  %v2306 = vpop.f32.mrf.mxu0
  %v2307 = vadd.f32 0.0, %v2306
  %2308 = vmatmul.bf16.gmra.mxu0 %v1710
  %v2309 = vpop.f32.mrf.mxu0
  %v2310 = vadd.f32 0.0, %v2309
  %v2311 = vpop.f32.mrf.mxu0
  %v2312 = vadd.f32 0.0, %v2311
  %2313 = vmatmul.bf16.gmra.mxu0 %v1714
  %v2314 = vpop.f32.mrf.mxu0
  %v2315 = vadd.f32 0.0, %v2314
  %v2316 = vpop.f32.mrf.mxu0
  %v2317 = vadd.f32 0.0, %v2316
  %2318 = vmatmul.bf16.gmra.mxu0 %v1718
  %v2319 = vpop.f32.mrf.mxu0
  %v2320 = vadd.f32 0.0, %v2319
  %v2321 = vpop.f32.mrf.mxu0
  %v2322 = vadd.f32 0.0, %v2321
  %2323 = vmatmul.bf16.gmra.mxu0 %v1722
  %v2324 = vpop.f32.mrf.mxu0
  %v2325 = vadd.f32 0.0, %v2324
  %v2326 = vpop.f32.mrf.mxu0
  %v2327 = vadd.f32 0.0, %v2326
  %2328 = vmatmul.bf16.gmra.mxu0 %v1726
  %v2329 = vpop.f32.mrf.mxu0
  %v2330 = vadd.f32 0.0, %v2329
  %v2331 = vpop.f32.mrf.mxu0
  %v2332 = vadd.f32 0.0, %v2331
  %2333 = vmatmul.bf16.gmra.mxu0 %v1730
  %v2334 = vpop.f32.mrf.mxu0
  %v2335 = vadd.f32 0.0, %v2334
  %v2336 = vpop.f32.mrf.mxu0
  %v2337 = vadd.f32 0.0, %v2336
  %2338 = vmatmul.bf16.gmra.mxu0 %v1734
  %v2339 = vpop.f32.mrf.mxu0
  %v2340 = vadd.f32 0.0, %v2339
  %v2341 = vpop.f32.mrf.mxu0
  %v2342 = vadd.f32 0.0, %v2341
  %2343 = vmatmul.bf16.gmra.mxu0 %v1738
  %v2344 = vpop.f32.mrf.mxu0
  %v2345 = vadd.f32 0.0, %v2344
  %v2346 = vpop.f32.mrf.mxu0
  %v2347 = vadd.f32 0.0, %v2346
  %2348 = vmatmul.bf16.gmra.mxu0 %v1742
  %v2349 = vpop.f32.mrf.mxu0
  %v2350 = vadd.f32 0.0, %v2349
  %v2351 = vpop.f32.mrf.mxu0
  %v2352 = vadd.f32 0.0, %v2351
  %2353 = vmatmul.bf16.gmra.mxu0 %v1746
  %v2354 = vpop.f32.mrf.mxu0
  %v2355 = vadd.f32 0.0, %v2354
  %v2356 = vpop.f32.mrf.mxu0
  %v2357 = vadd.f32 0.0, %v2356
  %2358 = vmatmul.bf16.gmra.mxu0 %v1750
  %v2359 = vpop.f32.mrf.mxu0
  %v2360 = vadd.f32 0.0, %v2359
  %v2361 = vpop.f32.mrf.mxu0
  %v2362 = vadd.f32 0.0, %v2361
  %2363 = vmatmul.bf16.gmra.mxu0 %v1754
  %v2364 = vpop.f32.mrf.mxu0
  %v2365 = vadd.f32 0.0, %v2364
  %v2366 = vpop.f32.mrf.mxu0
  %v2367 = vadd.f32 0.0, %v2366
  %2368 = vmatmul.bf16.gmra.mxu0 %v1758
  %v2369 = vpop.f32.mrf.mxu0
  %v2370 = vadd.f32 0.0, %v2369
  %v2371 = vpop.f32.mrf.mxu0
  %v2372 = vadd.f32 0.0, %v2371
  %2373 = vmatmul.bf16.gmra.mxu0 %v1762
  %v2374 = vpop.f32.mrf.mxu0
  %v2375 = vadd.f32 0.0, %v2374
  %v2376 = vpop.f32.mrf.mxu0
  %v2377 = vadd.f32 0.0, %v2376
  %2378 = vmatmul.bf16.gmra.mxu0 %v1766
  %v2379 = vpop.f32.mrf.mxu0
  %v2380 = vadd.f32 0.0, %v2379
  %v2381 = vpop.f32.mrf.mxu0
  %v2382 = vadd.f32 0.0, %v2381
  %2383 = vmatmul.bf16.gmra.mxu0 %v1770
  %v2384 = vpop.f32.mrf.mxu0
  %v2385 = vadd.f32 0.0, %v2384
  %v2386 = vpop.f32.mrf.mxu0
  %v2387 = vadd.f32 0.0, %v2386
  %2388 = vmatmul.bf16.gmra.mxu0 %v1774
  %v2389 = vpop.f32.mrf.mxu0
  %v2390 = vadd.f32 0.0, %v2389
  %v2391 = vpop.f32.mrf.mxu0
  %v2392 = vadd.f32 0.0, %v2391
  %2393 = vmatmul.bf16.gmra.mxu0 %v1778
  %v2394 = vpop.f32.mrf.mxu0
  %v2395 = vadd.f32 0.0, %v2394
  %v2396 = vpop.f32.mrf.mxu0
  %v2397 = vadd.f32 0.0, %v2396
  %2398 = vmatmul.bf16.gmra.mxu0 %v1782
  %v2399 = vpop.f32.mrf.mxu0
  %v2400 = vadd.f32 0.0, %v2399
  %v2401 = vpop.f32.mrf.mxu0
  %v2402 = vadd.f32 0.0, %v2401
  %2403 = vmatmul.bf16.gmra.mxu0 %v1786
  %v2404 = vpop.f32.mrf.mxu0
  %v2405 = vadd.f32 0.0, %v2404
  %v2406 = vpop.f32.mrf.mxu0
  %v2407 = vadd.f32 0.0, %v2406
  %2408 = vmatmul.bf16.gmra.mxu0 %v1790
  %v2409 = vpop.f32.mrf.mxu0
  %v2410 = vadd.f32 0.0, %v2409
  %v2411 = vpop.f32.mrf.mxu0
  %v2412 = vadd.f32 0.0, %v2411
  %2413 = vmatmul.bf16.gmra.mxu0 %v1794
  %v2414 = vpop.f32.mrf.mxu0
  %v2415 = vadd.f32 0.0, %v2414
  %v2416 = vpop.f32.mrf.mxu0
  %v2417 = vadd.f32 0.0, %v2416
  %2418 = vmatmul.bf16.gmra.mxu0 %v1798
  %v2419 = vpop.f32.mrf.mxu0
  %v2420 = vadd.f32 0.0, %v2419
  %v2421 = vpop.f32.mrf.mxu0
  %v2422 = vadd.f32 0.0, %v2421
  %2423 = vmatmul.bf16.gmra.mxu0 %v1802
  %v2424 = vpop.f32.mrf.mxu0
  %v2425 = vadd.f32 0.0, %v2424
  %v2426 = vpop.f32.mrf.mxu0
  %v2427 = vadd.f32 0.0, %v2426
  %2428 = vmatmul.bf16.gmra.mxu0 %v1806
  %v2429 = vpop.f32.mrf.mxu0
  %v2430 = vadd.f32 0.0, %v2429
  %v2431 = vpop.f32.mrf.mxu0
  %v2432 = vadd.f32 0.0, %v2431
  %2433 = vmatmul.bf16.gmra.mxu0 %v1810
  %v2434 = vpop.f32.mrf.mxu0
  %v2435 = vadd.f32 0.0, %v2434
  %v2436 = vpop.f32.mrf.mxu0
  %v2437 = vadd.f32 0.0, %v2436
  %2438 = vmatmul.bf16.gmra.mxu0 %v1814
  %v2439 = vpop.f32.mrf.mxu0
  %v2440 = vadd.f32 0.0, %v2439
  %v2441 = vpop.f32.mrf.mxu0
  %v2442 = vadd.f32 0.0, %v2441
  %2443 = vmatmul.bf16.gmra.mxu0 %v1818
  %v2444 = vpop.f32.mrf.mxu0
  %v2445 = vadd.f32 0.0, %v2444
  %v2446 = vpop.f32.mrf.mxu0
  %v2447 = vadd.f32 0.0, %v2446
  %2448 = vmatmul.bf16.gmra.mxu0 %v1822
  %v2449 = vpop.f32.mrf.mxu0
  %v2450 = vadd.f32 0.0, %v2449
  %v2451 = vpop.f32.mrf.mxu0
  %v2452 = vadd.f32 0.0, %v2451
  %2453 = vmatmul.bf16.gmra.mxu0 %v1826
  %v2454 = vpop.f32.mrf.mxu0
  %v2455 = vadd.f32 0.0, %v2454
  %v2456 = vpop.f32.mrf.mxu0
  %v2457 = vadd.f32 0.0, %v2456
  %2458 = vmatmul.bf16.gmra.mxu0 %v1830
  %v2459 = vpop.f32.mrf.mxu0
  %v2460 = vadd.f32 0.0, %v2459
  %v2461 = vpop.f32.mrf.mxu0
  %v2462 = vadd.f32 0.0, %v2461
  %2463 = vmatmul.bf16.gmra.mxu0 %v1834
  %v2464 = vpop.f32.mrf.mxu0
  %v2465 = vadd.f32 0.0, %v2464
  %v2466 = vpop.f32.mrf.mxu0
  %v2467 = vadd.f32 0.0, %v2466
  %2468 = vmatmul.bf16.gmra.mxu0 %v1838
  %v2469 = vpop.f32.mrf.mxu0
  %v2470 = vadd.f32 0.0, %v2469
  %v2471 = vpop.f32.mrf.mxu0
  %v2472 = vadd.f32 0.0, %v2471
  %2473 = vmatmul.bf16.gmra.mxu0 %v1842
  %v2474 = vpop.f32.mrf.mxu0
  %v2475 = vadd.f32 0.0, %v2474
  %v2476 = vpop.f32.mrf.mxu0
  %v2477 = vadd.f32 0.0, %v2476
  %2478 = vmatmul.bf16.gmra.mxu0 %v1846
  %v2479 = vpop.f32.mrf.mxu0
  %v2480 = vadd.f32 0.0, %v2479
  %v2481 = vpop.f32.mrf.mxu0
  %v2482 = vadd.f32 0.0, %v2481
  %2483 = vmatmul.bf16.gmra.mxu0 %v1850
  %v2484 = vpop.f32.mrf.mxu0
  %v2485 = vadd.f32 0.0, %v2484
  %v2486 = vpop.f32.mrf.mxu0
  %v2487 = vadd.f32 0.0, %v2486
  %2488 = vmatmul.bf16.gmra.mxu0 %v1854
  %v2489 = vpop.f32.mrf.mxu0
  %v2490 = vadd.f32 0.0, %v2489
  %v2491 = vpop.f32.mrf.mxu0
  %v2492 = vadd.f32 0.0, %v2491
  %2493 = vmatmul.bf16.gmra.mxu0 %v1858
  %v2494 = vpop.f32.mrf.mxu0
  %v2495 = vadd.f32 0.0, %v2494
  %v2496 = vpop.f32.mrf.mxu0
  %v2497 = vadd.f32 0.0, %v2496
  %2498 = vmatmul.bf16.gmra.mxu0 %v1862
  %v2499 = vpop.f32.mrf.mxu0
  %v2500 = vadd.f32 0.0, %v2499
  %v2501 = vpop.f32.mrf.mxu0
  %v2502 = vadd.f32 0.0, %v2501
  %2503 = vmatmul.bf16.gmra.mxu0 %v1866
  %v2504 = vpop.f32.mrf.mxu0
  %v2505 = vadd.f32 0.0, %v2504
  %v2506 = vpop.f32.mrf.mxu0
  %v2507 = vadd.f32 0.0, %v2506
  %2508 = vmatmul.bf16.gmra.mxu0 %v1870
  %v2509 = vpop.f32.mrf.mxu0
  %v2510 = vadd.f32 0.0, %v2509
  %v2511 = vpop.f32.mrf.mxu0
  %v2512 = vadd.f32 0.0, %v2511
  %2513 = vmatmul.bf16.gmra.mxu0 %v1874
  %v2514 = vpop.f32.mrf.mxu0
  %v2515 = vadd.f32 0.0, %v2514
  %v2516 = vpop.f32.mrf.mxu0
  %v2517 = vadd.f32 0.0, %v2516
  %2518 = vmatmul.bf16.gmra.mxu0 %v1878
  %v2519 = vpop.f32.mrf.mxu0
  %v2520 = vadd.f32 0.0, %v2519
  %v2521 = vpop.f32.mrf.mxu0
  %v2522 = vadd.f32 0.0, %v2521
  %2523 = vmatmul.bf16.gmra.mxu0 %v1882
  %v2524 = vpop.f32.mrf.mxu0
  %v2525 = vadd.f32 0.0, %v2524
  %v2526 = vpop.f32.mrf.mxu0
  %v2527 = vadd.f32 0.0, %v2526
  %2528 = vmatmul.bf16.gmra.mxu0 %v1886
  %v2529 = vpop.f32.mrf.mxu0
  %v2530 = vadd.f32 0.0, %v2529
  %v2531 = vpop.f32.mrf.mxu0
  %v2532 = vadd.f32 0.0, %v2531
  %2533 = vmatmul.bf16.gmra.mxu0 %v1890
  %v2534 = vpop.f32.mrf.mxu0
  %v2535 = vadd.f32 0.0, %v2534
  %v2536 = vpop.f32.mrf.mxu0
  %v2537 = vadd.f32 0.0, %v2536
  %2538 = vmatmul.bf16.gmra.mxu0 %v1894
  %v2539 = vpop.f32.mrf.mxu0
  %v2540 = vadd.f32 0.0, %v2539
  %v2541 = vpop.f32.mrf.mxu0
  %v2542 = vadd.f32 0.0, %v2541
  %2543 = vmatmul.bf16.gmra.mxu0 %v1898
  %v2544 = vpop.f32.mrf.mxu0
  %v2545 = vadd.f32 0.0, %v2544
  %v2546 = vpop.f32.mrf.mxu0
  %v2547 = vadd.f32 0.0, %v2546
  %2548 = vmatmul.bf16.gmra.mxu0 %v1902
  %v2549 = vpop.f32.mrf.mxu0
  %v2550 = vadd.f32 0.0, %v2549
  %v2551 = vpop.f32.mrf.mxu0
  %v2552 = vadd.f32 0.0, %v2551
  %2553 = vmatmul.bf16.gmra.mxu0 %v1906
  %v2554 = vpop.f32.mrf.mxu0
  %v2555 = vadd.f32 0.0, %v2554
  %v2556 = vpop.f32.mrf.mxu0
  %v2557 = vadd.f32 0.0, %v2556
  %2558 = vmatmul.bf16.gmra.mxu0 %v1910
  %v2559 = vpop.f32.mrf.mxu0
  %v2560 = vadd.f32 0.0, %v2559
  %v2561 = vpop.f32.mrf.mxu0
  %v2562 = vadd.f32 0.0, %v2561
  %2563 = vmatmul.bf16.gmra.mxu0 %v1914
  %v2564 = vpop.f32.mrf.mxu0
  %v2565 = vadd.f32 0.0, %v2564
  %v2566 = vpop.f32.mrf.mxu0
  %v2567 = vadd.f32 0.0, %v2566
  %2568 = vmatmul.bf16.gmra.mxu0 %v1918
  %v2569 = vpop.f32.mrf.mxu0
  %v2570 = vadd.f32 0.0, %v2569
  %v2571 = vpop.f32.mrf.mxu0
  %v2572 = vadd.f32 0.0, %v2571
  %2573 = vmatmul.bf16.gmra.mxu0 %v1922
  %v2574 = vpop.f32.mrf.mxu0
  %v2575 = vadd.f32 0.0, %v2574
  %v2576 = vpop.f32.mrf.mxu0
  %v2577 = vadd.f32 0.0, %v2576
  %2578 = vmatmul.bf16.gmra.mxu0 %v1926
  %v2579 = vpop.f32.mrf.mxu0
  %v2580 = vadd.f32 0.0, %v2579
  %v2581 = vpop.f32.mrf.mxu0
  %v2582 = vadd.f32 0.0, %v2581
  %2583 = vmatmul.bf16.gmra.mxu0 %v1930
  %v2584 = vpop.f32.mrf.mxu0
  %v2585 = vadd.f32 0.0, %v2584
  %v2586 = vpop.f32.mrf.mxu0
  %v2587 = vadd.f32 0.0, %v2586
  %2588 = vmatmul.bf16.gmra.mxu0 %v1934
  %v2589 = vpop.f32.mrf.mxu0
  %v2590 = vadd.f32 0.0, %v2589
  %v2591 = vpop.f32.mrf.mxu0
  %v2592 = vadd.f32 0.0, %v2591
  %2593 = vmatmul.bf16.gmra.mxu0 %v1938
  %v2594 = vpop.f32.mrf.mxu0
  %v2595 = vadd.f32 0.0, %v2594
  %v2596 = vpop.f32.mrf.mxu0
  %v2597 = vadd.f32 0.0, %v2596
  %2598 = vdwg.mxu0
  %2599 = vmatpush.bf16.msra.mxu0 %v773
  %2600 = vmatpush.bf16.msra.mxu0 %v772
  %2601 = vmatpush.bf16.msra.mxu0 %v771
  %2602 = vmatpush.bf16.msra.mxu0 %v770
  %2603 = vmatpush.bf16.msra.mxu0 %v769
  %2604 = vmatpush.bf16.msra.mxu0 %v768
  %2605 = vmatpush.bf16.msra.mxu0 %v767
  %2606 = vmatpush.bf16.msra.mxu0 %v766
  %2607 = vmatmul.bf16.gmra.mxu0 %v1655
  %v2608 = vpop.f32.mrf.mxu0
  %v2609 = vadd.f32 %v2240, %v2608
  %v2610 = vpop.f32.mrf.mxu0
  %v2611 = vadd.f32 %v2242, %v2610
  %2612 = vmatmul.bf16.gmra.mxu0 %v1659
  %v2613 = vpop.f32.mrf.mxu0
  %v2614 = vadd.f32 %v2245, %v2613
  %v2615 = vpop.f32.mrf.mxu0
  %v2616 = vadd.f32 %v2247, %v2615
  %2617 = vmatmul.bf16.gmra.mxu0 %v1663
  %v2618 = vpop.f32.mrf.mxu0
  %v2619 = vadd.f32 %v2250, %v2618
  %v2620 = vpop.f32.mrf.mxu0
  %v2621 = vadd.f32 %v2252, %v2620
  %2622 = vmatmul.bf16.gmra.mxu0 %v1667
  %v2623 = vpop.f32.mrf.mxu0
  %v2624 = vadd.f32 %v2255, %v2623
  %v2625 = vpop.f32.mrf.mxu0
  %v2626 = vadd.f32 %v2257, %v2625
  %2627 = vmatmul.bf16.gmra.mxu0 %v1671
  %v2628 = vpop.f32.mrf.mxu0
  %v2629 = vadd.f32 %v2260, %v2628
  %v2630 = vpop.f32.mrf.mxu0
  %v2631 = vadd.f32 %v2262, %v2630
  %2632 = vmatmul.bf16.gmra.mxu0 %v1675
  %v2633 = vpop.f32.mrf.mxu0
  %v2634 = vadd.f32 %v2265, %v2633
  %v2635 = vpop.f32.mrf.mxu0
  %v2636 = vadd.f32 %v2267, %v2635
  %2637 = vmatmul.bf16.gmra.mxu0 %v1679
  %v2638 = vpop.f32.mrf.mxu0
  %v2639 = vadd.f32 %v2270, %v2638
  %v2640 = vpop.f32.mrf.mxu0
  %v2641 = vadd.f32 %v2272, %v2640
  %2642 = vmatmul.bf16.gmra.mxu0 %v1683
  %v2643 = vpop.f32.mrf.mxu0
  %v2644 = vadd.f32 %v2275, %v2643
  %v2645 = vpop.f32.mrf.mxu0
  %v2646 = vadd.f32 %v2277, %v2645
  %2647 = vmatmul.bf16.gmra.mxu0 %v1687
  %v2648 = vpop.f32.mrf.mxu0
  %v2649 = vadd.f32 %v2280, %v2648
  %v2650 = vpop.f32.mrf.mxu0
  %v2651 = vadd.f32 %v2282, %v2650
  %2652 = vmatmul.bf16.gmra.mxu0 %v1691
  %v2653 = vpop.f32.mrf.mxu0
  %v2654 = vadd.f32 %v2285, %v2653
  %v2655 = vpop.f32.mrf.mxu0
  %v2656 = vadd.f32 %v2287, %v2655
  %2657 = vmatmul.bf16.gmra.mxu0 %v1695
  %v2658 = vpop.f32.mrf.mxu0
  %v2659 = vadd.f32 %v2290, %v2658
  %v2660 = vpop.f32.mrf.mxu0
  %v2661 = vadd.f32 %v2292, %v2660
  %2662 = vmatmul.bf16.gmra.mxu0 %v1699
  %v2663 = vpop.f32.mrf.mxu0
  %v2664 = vadd.f32 %v2295, %v2663
  %v2665 = vpop.f32.mrf.mxu0
  %v2666 = vadd.f32 %v2297, %v2665
  %2667 = vmatmul.bf16.gmra.mxu0 %v1703
  %v2668 = vpop.f32.mrf.mxu0
  %v2669 = vadd.f32 %v2300, %v2668
  %v2670 = vpop.f32.mrf.mxu0
  %v2671 = vadd.f32 %v2302, %v2670
  %2672 = vmatmul.bf16.gmra.mxu0 %v1707
  %v2673 = vpop.f32.mrf.mxu0
  %v2674 = vadd.f32 %v2305, %v2673
  %v2675 = vpop.f32.mrf.mxu0
  %v2676 = vadd.f32 %v2307, %v2675
  %2677 = vmatmul.bf16.gmra.mxu0 %v1711
  %v2678 = vpop.f32.mrf.mxu0
  %v2679 = vadd.f32 %v2310, %v2678
  %v2680 = vpop.f32.mrf.mxu0
  %v2681 = vadd.f32 %v2312, %v2680
  %2682 = vmatmul.bf16.gmra.mxu0 %v1715
  %v2683 = vpop.f32.mrf.mxu0
  %v2684 = vadd.f32 %v2315, %v2683
  %v2685 = vpop.f32.mrf.mxu0
  %v2686 = vadd.f32 %v2317, %v2685
  %2687 = vmatmul.bf16.gmra.mxu0 %v1719
  %v2688 = vpop.f32.mrf.mxu0
  %v2689 = vadd.f32 %v2320, %v2688
  %v2690 = vpop.f32.mrf.mxu0
  %v2691 = vadd.f32 %v2322, %v2690
  %2692 = vmatmul.bf16.gmra.mxu0 %v1723
  %v2693 = vpop.f32.mrf.mxu0
  %v2694 = vadd.f32 %v2325, %v2693
  %v2695 = vpop.f32.mrf.mxu0
  %v2696 = vadd.f32 %v2327, %v2695
  %2697 = vmatmul.bf16.gmra.mxu0 %v1727
  %v2698 = vpop.f32.mrf.mxu0
  %v2699 = vadd.f32 %v2330, %v2698
  %v2700 = vpop.f32.mrf.mxu0
  %v2701 = vadd.f32 %v2332, %v2700
  %2702 = vmatmul.bf16.gmra.mxu0 %v1731
  %v2703 = vpop.f32.mrf.mxu0
  %v2704 = vadd.f32 %v2335, %v2703
  %v2705 = vpop.f32.mrf.mxu0
  %v2706 = vadd.f32 %v2337, %v2705
  %2707 = vmatmul.bf16.gmra.mxu0 %v1735
  %v2708 = vpop.f32.mrf.mxu0
  %v2709 = vadd.f32 %v2340, %v2708
  %v2710 = vpop.f32.mrf.mxu0
  %v2711 = vadd.f32 %v2342, %v2710
  %2712 = vmatmul.bf16.gmra.mxu0 %v1739
  %v2713 = vpop.f32.mrf.mxu0
  %v2714 = vadd.f32 %v2345, %v2713
  %v2715 = vpop.f32.mrf.mxu0
  %v2716 = vadd.f32 %v2347, %v2715
  %2717 = vmatmul.bf16.gmra.mxu0 %v1743
  %v2718 = vpop.f32.mrf.mxu0
  %v2719 = vadd.f32 %v2350, %v2718
  %v2720 = vpop.f32.mrf.mxu0
  %v2721 = vadd.f32 %v2352, %v2720
  %2722 = vmatmul.bf16.gmra.mxu0 %v1747
  %v2723 = vpop.f32.mrf.mxu0
  %v2724 = vadd.f32 %v2355, %v2723
  %v2725 = vpop.f32.mrf.mxu0
  %v2726 = vadd.f32 %v2357, %v2725
  %2727 = vmatmul.bf16.gmra.mxu0 %v1751
  %v2728 = vpop.f32.mrf.mxu0
  %v2729 = vadd.f32 %v2360, %v2728
  %v2730 = vpop.f32.mrf.mxu0
  %v2731 = vadd.f32 %v2362, %v2730
  %2732 = vmatmul.bf16.gmra.mxu0 %v1755
  %v2733 = vpop.f32.mrf.mxu0
  %v2734 = vadd.f32 %v2365, %v2733
  %v2735 = vpop.f32.mrf.mxu0
  %v2736 = vadd.f32 %v2367, %v2735
  %2737 = vmatmul.bf16.gmra.mxu0 %v1759
  %v2738 = vpop.f32.mrf.mxu0
  %v2739 = vadd.f32 %v2370, %v2738
  %v2740 = vpop.f32.mrf.mxu0
  %v2741 = vadd.f32 %v2372, %v2740
  %2742 = vmatmul.bf16.gmra.mxu0 %v1763
  %v2743 = vpop.f32.mrf.mxu0
  %v2744 = vadd.f32 %v2375, %v2743
  %v2745 = vpop.f32.mrf.mxu0
  %v2746 = vadd.f32 %v2377, %v2745
  %2747 = vmatmul.bf16.gmra.mxu0 %v1767
  %v2748 = vpop.f32.mrf.mxu0
  %v2749 = vadd.f32 %v2380, %v2748
  %v2750 = vpop.f32.mrf.mxu0
  %v2751 = vadd.f32 %v2382, %v2750
  %2752 = vmatmul.bf16.gmra.mxu0 %v1771
  %v2753 = vpop.f32.mrf.mxu0
  %v2754 = vadd.f32 %v2385, %v2753
  %v2755 = vpop.f32.mrf.mxu0
  %v2756 = vadd.f32 %v2387, %v2755
  %2757 = vmatmul.bf16.gmra.mxu0 %v1775
  %v2758 = vpop.f32.mrf.mxu0
  %v2759 = vadd.f32 %v2390, %v2758
  %v2760 = vpop.f32.mrf.mxu0
  %v2761 = vadd.f32 %v2392, %v2760
  %2762 = vmatmul.bf16.gmra.mxu0 %v1779
  %v2763 = vpop.f32.mrf.mxu0
  %v2764 = vadd.f32 %v2395, %v2763
  %v2765 = vpop.f32.mrf.mxu0
  %v2766 = vadd.f32 %v2397, %v2765
  %2767 = vmatmul.bf16.gmra.mxu0 %v1783
  %v2768 = vpop.f32.mrf.mxu0
  %v2769 = vadd.f32 %v2400, %v2768
  %v2770 = vpop.f32.mrf.mxu0
  %v2771 = vadd.f32 %v2402, %v2770
  %2772 = vmatmul.bf16.gmra.mxu0 %v1787
  %v2773 = vpop.f32.mrf.mxu0
  %v2774 = vadd.f32 %v2405, %v2773
  %v2775 = vpop.f32.mrf.mxu0
  %v2776 = vadd.f32 %v2407, %v2775
  %2777 = vmatmul.bf16.gmra.mxu0 %v1791
  %v2778 = vpop.f32.mrf.mxu0
  %v2779 = vadd.f32 %v2410, %v2778
  %v2780 = vpop.f32.mrf.mxu0
  %v2781 = vadd.f32 %v2412, %v2780
  %2782 = vmatmul.bf16.gmra.mxu0 %v1795
  %v2783 = vpop.f32.mrf.mxu0
  %v2784 = vadd.f32 %v2415, %v2783
  %v2785 = vpop.f32.mrf.mxu0
  %v2786 = vadd.f32 %v2417, %v2785
  %2787 = vmatmul.bf16.gmra.mxu0 %v1799
  %v2788 = vpop.f32.mrf.mxu0
  %v2789 = vadd.f32 %v2420, %v2788
  %v2790 = vpop.f32.mrf.mxu0
  %v2791 = vadd.f32 %v2422, %v2790
  %2792 = vmatmul.bf16.gmra.mxu0 %v1803
  %v2793 = vpop.f32.mrf.mxu0
  %v2794 = vadd.f32 %v2425, %v2793
  %v2795 = vpop.f32.mrf.mxu0
  %v2796 = vadd.f32 %v2427, %v2795
  %2797 = vmatmul.bf16.gmra.mxu0 %v1807
  %v2798 = vpop.f32.mrf.mxu0
  %v2799 = vadd.f32 %v2430, %v2798
  %v2800 = vpop.f32.mrf.mxu0
  %v2801 = vadd.f32 %v2432, %v2800
  %2802 = vmatmul.bf16.gmra.mxu0 %v1811
  %v2803 = vpop.f32.mrf.mxu0
  %v2804 = vadd.f32 %v2435, %v2803
  %v2805 = vpop.f32.mrf.mxu0
  %v2806 = vadd.f32 %v2437, %v2805
  %2807 = vmatmul.bf16.gmra.mxu0 %v1815
  %v2808 = vpop.f32.mrf.mxu0
  %v2809 = vadd.f32 %v2440, %v2808
  %v2810 = vpop.f32.mrf.mxu0
  %v2811 = vadd.f32 %v2442, %v2810
  %2812 = vmatmul.bf16.gmra.mxu0 %v1819
  %v2813 = vpop.f32.mrf.mxu0
  %v2814 = vadd.f32 %v2445, %v2813
  %v2815 = vpop.f32.mrf.mxu0
  %v2816 = vadd.f32 %v2447, %v2815
  %2817 = vmatmul.bf16.gmra.mxu0 %v1823
  %v2818 = vpop.f32.mrf.mxu0
  %v2819 = vadd.f32 %v2450, %v2818
  %v2820 = vpop.f32.mrf.mxu0
  %v2821 = vadd.f32 %v2452, %v2820
  %2822 = vmatmul.bf16.gmra.mxu0 %v1827
  %v2823 = vpop.f32.mrf.mxu0
  %v2824 = vadd.f32 %v2455, %v2823
  %v2825 = vpop.f32.mrf.mxu0
  %v2826 = vadd.f32 %v2457, %v2825
  %2827 = vmatmul.bf16.gmra.mxu0 %v1831
  %v2828 = vpop.f32.mrf.mxu0
  %v2829 = vadd.f32 %v2460, %v2828
  %v2830 = vpop.f32.mrf.mxu0
  %v2831 = vadd.f32 %v2462, %v2830
  %2832 = vmatmul.bf16.gmra.mxu0 %v1835
  %v2833 = vpop.f32.mrf.mxu0
  %v2834 = vadd.f32 %v2465, %v2833
  %v2835 = vpop.f32.mrf.mxu0
  %v2836 = vadd.f32 %v2467, %v2835
  %2837 = vmatmul.bf16.gmra.mxu0 %v1839
  %v2838 = vpop.f32.mrf.mxu0
  %v2839 = vadd.f32 %v2470, %v2838
  %v2840 = vpop.f32.mrf.mxu0
  %v2841 = vadd.f32 %v2472, %v2840
  %2842 = vmatmul.bf16.gmra.mxu0 %v1843
  %v2843 = vpop.f32.mrf.mxu0
  %v2844 = vadd.f32 %v2475, %v2843
  %v2845 = vpop.f32.mrf.mxu0
  %v2846 = vadd.f32 %v2477, %v2845
  %2847 = vmatmul.bf16.gmra.mxu0 %v1847
  %v2848 = vpop.f32.mrf.mxu0
  %v2849 = vadd.f32 %v2480, %v2848
  %v2850 = vpop.f32.mrf.mxu0
  %v2851 = vadd.f32 %v2482, %v2850
  %2852 = vmatmul.bf16.gmra.mxu0 %v1851
  %v2853 = vpop.f32.mrf.mxu0
  %v2854 = vadd.f32 %v2485, %v2853
  %v2855 = vpop.f32.mrf.mxu0
  %v2856 = vadd.f32 %v2487, %v2855
  %2857 = vmatmul.bf16.gmra.mxu0 %v1855
  %v2858 = vpop.f32.mrf.mxu0
  %v2859 = vadd.f32 %v2490, %v2858
  %v2860 = vpop.f32.mrf.mxu0
  %v2861 = vadd.f32 %v2492, %v2860
  %2862 = vmatmul.bf16.gmra.mxu0 %v1859
  %v2863 = vpop.f32.mrf.mxu0
  %v2864 = vadd.f32 %v2495, %v2863
  %v2865 = vpop.f32.mrf.mxu0
  %v2866 = vadd.f32 %v2497, %v2865
  %2867 = vmatmul.bf16.gmra.mxu0 %v1863
  %v2868 = vpop.f32.mrf.mxu0
  %v2869 = vadd.f32 %v2500, %v2868
  %v2870 = vpop.f32.mrf.mxu0
  %v2871 = vadd.f32 %v2502, %v2870
  %2872 = vmatmul.bf16.gmra.mxu0 %v1867
  %v2873 = vpop.f32.mrf.mxu0
  %v2874 = vadd.f32 %v2505, %v2873
  %v2875 = vpop.f32.mrf.mxu0
  %v2876 = vadd.f32 %v2507, %v2875
  %2877 = vmatmul.bf16.gmra.mxu0 %v1871
  %v2878 = vpop.f32.mrf.mxu0
  %v2879 = vadd.f32 %v2510, %v2878
  %v2880 = vpop.f32.mrf.mxu0
  %v2881 = vadd.f32 %v2512, %v2880
  %2882 = vmatmul.bf16.gmra.mxu0 %v1875
  %v2883 = vpop.f32.mrf.mxu0
  %v2884 = vadd.f32 %v2515, %v2883
  %v2885 = vpop.f32.mrf.mxu0
  %v2886 = vadd.f32 %v2517, %v2885
  %2887 = vmatmul.bf16.gmra.mxu0 %v1879
  %v2888 = vpop.f32.mrf.mxu0
  %v2889 = vadd.f32 %v2520, %v2888
  %v2890 = vpop.f32.mrf.mxu0
  %v2891 = vadd.f32 %v2522, %v2890
  %2892 = vmatmul.bf16.gmra.mxu0 %v1883
  %v2893 = vpop.f32.mrf.mxu0
  %v2894 = vadd.f32 %v2525, %v2893
  %v2895 = vpop.f32.mrf.mxu0
  %v2896 = vadd.f32 %v2527, %v2895
  %2897 = vmatmul.bf16.gmra.mxu0 %v1887
  %v2898 = vpop.f32.mrf.mxu0
  %v2899 = vadd.f32 %v2530, %v2898
  %v2900 = vpop.f32.mrf.mxu0
  %v2901 = vadd.f32 %v2532, %v2900
  %2902 = vmatmul.bf16.gmra.mxu0 %v1891
  %v2903 = vpop.f32.mrf.mxu0
  %v2904 = vadd.f32 %v2535, %v2903
  %v2905 = vpop.f32.mrf.mxu0
  %v2906 = vadd.f32 %v2537, %v2905
  %2907 = vmatmul.bf16.gmra.mxu0 %v1895
  %v2908 = vpop.f32.mrf.mxu0
  %v2909 = vadd.f32 %v2540, %v2908
  %v2910 = vpop.f32.mrf.mxu0
  %v2911 = vadd.f32 %v2542, %v2910
  %2912 = vmatmul.bf16.gmra.mxu0 %v1899
  %v2913 = vpop.f32.mrf.mxu0
  %v2914 = vadd.f32 %v2545, %v2913
  %v2915 = vpop.f32.mrf.mxu0
  %v2916 = vadd.f32 %v2547, %v2915
  %2917 = vmatmul.bf16.gmra.mxu0 %v1903
  %v2918 = vpop.f32.mrf.mxu0
  %v2919 = vadd.f32 %v2550, %v2918
  %v2920 = vpop.f32.mrf.mxu0
  %v2921 = vadd.f32 %v2552, %v2920
  %2922 = vmatmul.bf16.gmra.mxu0 %v1907
  %v2923 = vpop.f32.mrf.mxu0
  %v2924 = vadd.f32 %v2555, %v2923
  %v2925 = vpop.f32.mrf.mxu0
  %v2926 = vadd.f32 %v2557, %v2925
  %2927 = vmatmul.bf16.gmra.mxu0 %v1911
  %v2928 = vpop.f32.mrf.mxu0
  %v2929 = vadd.f32 %v2560, %v2928
  %v2930 = vpop.f32.mrf.mxu0
  %v2931 = vadd.f32 %v2562, %v2930
  %2932 = vmatmul.bf16.gmra.mxu0 %v1915
  %v2933 = vpop.f32.mrf.mxu0
  %v2934 = vadd.f32 %v2565, %v2933
  %v2935 = vpop.f32.mrf.mxu0
  %v2936 = vadd.f32 %v2567, %v2935
  %2937 = vmatmul.bf16.gmra.mxu0 %v1919
  %v2938 = vpop.f32.mrf.mxu0
  %v2939 = vadd.f32 %v2570, %v2938
  %v2940 = vpop.f32.mrf.mxu0
  %v2941 = vadd.f32 %v2572, %v2940
  %2942 = vmatmul.bf16.gmra.mxu0 %v1923
  %v2943 = vpop.f32.mrf.mxu0
  %v2944 = vadd.f32 %v2575, %v2943
  %v2945 = vpop.f32.mrf.mxu0
  %v2946 = vadd.f32 %v2577, %v2945
  %2947 = vmatmul.bf16.gmra.mxu0 %v1927
  %v2948 = vpop.f32.mrf.mxu0
  %v2949 = vadd.f32 %v2580, %v2948
  %v2950 = vpop.f32.mrf.mxu0
  %v2951 = vadd.f32 %v2582, %v2950
  %2952 = vmatmul.bf16.gmra.mxu0 %v1931
  %v2953 = vpop.f32.mrf.mxu0
  %v2954 = vadd.f32 %v2585, %v2953
  %v2955 = vpop.f32.mrf.mxu0
  %v2956 = vadd.f32 %v2587, %v2955
  %2957 = vmatmul.bf16.gmra.mxu0 %v1935
  %v2958 = vpop.f32.mrf.mxu0
  %v2959 = vadd.f32 %v2590, %v2958
  %v2960 = vpop.f32.mrf.mxu0
  %v2961 = vadd.f32 %v2592, %v2960
  %2962 = vmatmul.bf16.gmra.mxu0 %v1939
  %v2963 = vpop.f32.mrf.mxu0
  %v2964 = vadd.f32 %v2595, %v2963
  %v2965 = vpop.f32.mrf.mxu0
  %v2966 = vadd.f32 %v2597, %v2965
  %2967 = vdwg.mxu0
  %2968 = vmatpush.bf16.msra.mxu0 %v781
  %2969 = vmatpush.bf16.msra.mxu0 %v780
  %2970 = vmatpush.bf16.msra.mxu0 %v779
  %2971 = vmatpush.bf16.msra.mxu0 %v778
  %2972 = vmatpush.bf16.msra.mxu0 %v777
  %2973 = vmatpush.bf16.msra.mxu0 %v776
  %2974 = vmatpush.bf16.msra.mxu0 %v775
  %2975 = vmatpush.bf16.msra.mxu0 %v774
  %2976 = vmatmul.bf16.gmra.mxu0 %v1656
  %v2977 = vpop.f32.mrf.mxu0
  %v2978 = vadd.f32 %v2609, %v2977
  %v2979 = vpop.f32.mrf.mxu0
  %v2980 = vadd.f32 %v2611, %v2979
  %2981 = vmatmul.bf16.gmra.mxu0 %v1660
  %v2982 = vpop.f32.mrf.mxu0
  %v2983 = vadd.f32 %v2614, %v2982
  %v2984 = vpop.f32.mrf.mxu0
  %v2985 = vadd.f32 %v2616, %v2984
  %2986 = vmatmul.bf16.gmra.mxu0 %v1664
  %v2987 = vpop.f32.mrf.mxu0
  %v2988 = vadd.f32 %v2619, %v2987
  %v2989 = vpop.f32.mrf.mxu0
  %v2990 = vadd.f32 %v2621, %v2989
  %2991 = vmatmul.bf16.gmra.mxu0 %v1668
  %v2992 = vpop.f32.mrf.mxu0
  %v2993 = vadd.f32 %v2624, %v2992
  %v2994 = vpop.f32.mrf.mxu0
  %v2995 = vadd.f32 %v2626, %v2994
  %2996 = vmatmul.bf16.gmra.mxu0 %v1672
  %v2997 = vpop.f32.mrf.mxu0
  %v2998 = vadd.f32 %v2629, %v2997
  %v2999 = vpop.f32.mrf.mxu0
  %v3000 = vadd.f32 %v2631, %v2999
  %3001 = vmatmul.bf16.gmra.mxu0 %v1676
  %v3002 = vpop.f32.mrf.mxu0
  %v3003 = vadd.f32 %v2634, %v3002
  %v3004 = vpop.f32.mrf.mxu0
  %v3005 = vadd.f32 %v2636, %v3004
  %3006 = vmatmul.bf16.gmra.mxu0 %v1680
  %v3007 = vpop.f32.mrf.mxu0
  %v3008 = vadd.f32 %v2639, %v3007
  %v3009 = vpop.f32.mrf.mxu0
  %v3010 = vadd.f32 %v2641, %v3009
  %3011 = vmatmul.bf16.gmra.mxu0 %v1684
  %v3012 = vpop.f32.mrf.mxu0
  %v3013 = vadd.f32 %v2644, %v3012
  %v3014 = vpop.f32.mrf.mxu0
  %v3015 = vadd.f32 %v2646, %v3014
  %3016 = vmatmul.bf16.gmra.mxu0 %v1688
  %v3017 = vpop.f32.mrf.mxu0
  %v3018 = vadd.f32 %v2649, %v3017
  %v3019 = vpop.f32.mrf.mxu0
  %v3020 = vadd.f32 %v2651, %v3019
  %3021 = vmatmul.bf16.gmra.mxu0 %v1692
  %v3022 = vpop.f32.mrf.mxu0
  %v3023 = vadd.f32 %v2654, %v3022
  %v3024 = vpop.f32.mrf.mxu0
  %v3025 = vadd.f32 %v2656, %v3024
  %3026 = vmatmul.bf16.gmra.mxu0 %v1696
  %v3027 = vpop.f32.mrf.mxu0
  %v3028 = vadd.f32 %v2659, %v3027
  %v3029 = vpop.f32.mrf.mxu0
  %v3030 = vadd.f32 %v2661, %v3029
  %3031 = vmatmul.bf16.gmra.mxu0 %v1700
  %v3032 = vpop.f32.mrf.mxu0
  %v3033 = vadd.f32 %v2664, %v3032
  %v3034 = vpop.f32.mrf.mxu0
  %v3035 = vadd.f32 %v2666, %v3034
  %3036 = vmatmul.bf16.gmra.mxu0 %v1704
  %v3037 = vpop.f32.mrf.mxu0
  %v3038 = vadd.f32 %v2669, %v3037
  %v3039 = vpop.f32.mrf.mxu0
  %v3040 = vadd.f32 %v2671, %v3039
  %3041 = vmatmul.bf16.gmra.mxu0 %v1708
  %v3042 = vpop.f32.mrf.mxu0
  %v3043 = vadd.f32 %v2674, %v3042
  %v3044 = vpop.f32.mrf.mxu0
  %v3045 = vadd.f32 %v2676, %v3044
  %3046 = vmatmul.bf16.gmra.mxu0 %v1712
  %v3047 = vpop.f32.mrf.mxu0
  %v3048 = vadd.f32 %v2679, %v3047
  %v3049 = vpop.f32.mrf.mxu0
  %v3050 = vadd.f32 %v2681, %v3049
  %3051 = vmatmul.bf16.gmra.mxu0 %v1716
  %v3052 = vpop.f32.mrf.mxu0
  %v3053 = vadd.f32 %v2684, %v3052
  %v3054 = vpop.f32.mrf.mxu0
  %v3055 = vadd.f32 %v2686, %v3054
  %3056 = vmatmul.bf16.gmra.mxu0 %v1720
  %v3057 = vpop.f32.mrf.mxu0
  %v3058 = vadd.f32 %v2689, %v3057
  %v3059 = vpop.f32.mrf.mxu0
  %v3060 = vadd.f32 %v2691, %v3059
  %3061 = vmatmul.bf16.gmra.mxu0 %v1724
  %v3062 = vpop.f32.mrf.mxu0
  %v3063 = vadd.f32 %v2694, %v3062
  %v3064 = vpop.f32.mrf.mxu0
  %v3065 = vadd.f32 %v2696, %v3064
  %3066 = vmatmul.bf16.gmra.mxu0 %v1728
  %v3067 = vpop.f32.mrf.mxu0
  %v3068 = vadd.f32 %v2699, %v3067
  %v3069 = vpop.f32.mrf.mxu0
  %v3070 = vadd.f32 %v2701, %v3069
  %3071 = vmatmul.bf16.gmra.mxu0 %v1732
  %v3072 = vpop.f32.mrf.mxu0
  %v3073 = vadd.f32 %v2704, %v3072
  %v3074 = vpop.f32.mrf.mxu0
  %v3075 = vadd.f32 %v2706, %v3074
  %3076 = vmatmul.bf16.gmra.mxu0 %v1736
  %v3077 = vpop.f32.mrf.mxu0
  %v3078 = vadd.f32 %v2709, %v3077
  %v3079 = vpop.f32.mrf.mxu0
  %v3080 = vadd.f32 %v2711, %v3079
  %3081 = vmatmul.bf16.gmra.mxu0 %v1740
  %v3082 = vpop.f32.mrf.mxu0
  %v3083 = vadd.f32 %v2714, %v3082
  %v3084 = vpop.f32.mrf.mxu0
  %v3085 = vadd.f32 %v2716, %v3084
  %3086 = vmatmul.bf16.gmra.mxu0 %v1744
  %v3087 = vpop.f32.mrf.mxu0
  %v3088 = vadd.f32 %v2719, %v3087
  %v3089 = vpop.f32.mrf.mxu0
  %v3090 = vadd.f32 %v2721, %v3089
  %3091 = vmatmul.bf16.gmra.mxu0 %v1748
  %v3092 = vpop.f32.mrf.mxu0
  %v3093 = vadd.f32 %v2724, %v3092
  %v3094 = vpop.f32.mrf.mxu0
  %v3095 = vadd.f32 %v2726, %v3094
  %3096 = vmatmul.bf16.gmra.mxu0 %v1752
  %v3097 = vpop.f32.mrf.mxu0
  %v3098 = vadd.f32 %v2729, %v3097
  %v3099 = vpop.f32.mrf.mxu0
  %v3100 = vadd.f32 %v2731, %v3099
  %3101 = vmatmul.bf16.gmra.mxu0 %v1756
  %v3102 = vpop.f32.mrf.mxu0
  %v3103 = vadd.f32 %v2734, %v3102
  %v3104 = vpop.f32.mrf.mxu0
  %v3105 = vadd.f32 %v2736, %v3104
  %3106 = vmatmul.bf16.gmra.mxu0 %v1760
  %v3107 = vpop.f32.mrf.mxu0
  %v3108 = vadd.f32 %v2739, %v3107
  %v3109 = vpop.f32.mrf.mxu0
  %v3110 = vadd.f32 %v2741, %v3109
  %3111 = vmatmul.bf16.gmra.mxu0 %v1764
  %v3112 = vpop.f32.mrf.mxu0
  %v3113 = vadd.f32 %v2744, %v3112
  %v3114 = vpop.f32.mrf.mxu0
  %v3115 = vadd.f32 %v2746, %v3114
  %3116 = vmatmul.bf16.gmra.mxu0 %v1768
  %v3117 = vpop.f32.mrf.mxu0
  %v3118 = vadd.f32 %v2749, %v3117
  %v3119 = vpop.f32.mrf.mxu0
  %v3120 = vadd.f32 %v2751, %v3119
  %3121 = vmatmul.bf16.gmra.mxu0 %v1772
  %v3122 = vpop.f32.mrf.mxu0
  %v3123 = vadd.f32 %v2754, %v3122
  %v3124 = vpop.f32.mrf.mxu0
  %v3125 = vadd.f32 %v2756, %v3124
  %3126 = vmatmul.bf16.gmra.mxu0 %v1776
  %v3127 = vpop.f32.mrf.mxu0
  %v3128 = vadd.f32 %v2759, %v3127
  %v3129 = vpop.f32.mrf.mxu0
  %v3130 = vadd.f32 %v2761, %v3129
  %3131 = vmatmul.bf16.gmra.mxu0 %v1780
  %v3132 = vpop.f32.mrf.mxu0
  %v3133 = vadd.f32 %v2764, %v3132
  %v3134 = vpop.f32.mrf.mxu0
  %v3135 = vadd.f32 %v2766, %v3134
  %3136 = vmatmul.bf16.gmra.mxu0 %v1784
  %v3137 = vpop.f32.mrf.mxu0
  %v3138 = vadd.f32 %v2769, %v3137
  %v3139 = vpop.f32.mrf.mxu0
  %v3140 = vadd.f32 %v2771, %v3139
  %3141 = vmatmul.bf16.gmra.mxu0 %v1788
  %v3142 = vpop.f32.mrf.mxu0
  %v3143 = vadd.f32 %v2774, %v3142
  %v3144 = vpop.f32.mrf.mxu0
  %v3145 = vadd.f32 %v2776, %v3144
  %3146 = vmatmul.bf16.gmra.mxu0 %v1792
  %v3147 = vpop.f32.mrf.mxu0
  %v3148 = vadd.f32 %v2779, %v3147
  %v3149 = vpop.f32.mrf.mxu0
  %v3150 = vadd.f32 %v2781, %v3149
  %3151 = vmatmul.bf16.gmra.mxu0 %v1796
  %v3152 = vpop.f32.mrf.mxu0
  %v3153 = vadd.f32 %v2784, %v3152
  %v3154 = vpop.f32.mrf.mxu0
  %v3155 = vadd.f32 %v2786, %v3154
  %3156 = vmatmul.bf16.gmra.mxu0 %v1800
  %v3157 = vpop.f32.mrf.mxu0
  %v3158 = vadd.f32 %v2789, %v3157
  %v3159 = vpop.f32.mrf.mxu0
  %v3160 = vadd.f32 %v2791, %v3159
  %3161 = vmatmul.bf16.gmra.mxu0 %v1804
  %v3162 = vpop.f32.mrf.mxu0
  %v3163 = vadd.f32 %v2794, %v3162
  %v3164 = vpop.f32.mrf.mxu0
  %v3165 = vadd.f32 %v2796, %v3164
  %3166 = vmatmul.bf16.gmra.mxu0 %v1808
  %v3167 = vpop.f32.mrf.mxu0
  %v3168 = vadd.f32 %v2799, %v3167
  %v3169 = vpop.f32.mrf.mxu0
  %v3170 = vadd.f32 %v2801, %v3169
  %3171 = vmatmul.bf16.gmra.mxu0 %v1812
  %v3172 = vpop.f32.mrf.mxu0
  %v3173 = vadd.f32 %v2804, %v3172
  %v3174 = vpop.f32.mrf.mxu0
  %v3175 = vadd.f32 %v2806, %v3174
  %3176 = vmatmul.bf16.gmra.mxu0 %v1816
  %v3177 = vpop.f32.mrf.mxu0
  %v3178 = vadd.f32 %v2809, %v3177
  %v3179 = vpop.f32.mrf.mxu0
  %v3180 = vadd.f32 %v2811, %v3179
  %3181 = vmatmul.bf16.gmra.mxu0 %v1820
  %v3182 = vpop.f32.mrf.mxu0
  %v3183 = vadd.f32 %v2814, %v3182
  %v3184 = vpop.f32.mrf.mxu0
  %v3185 = vadd.f32 %v2816, %v3184
  %3186 = vmatmul.bf16.gmra.mxu0 %v1824
  %v3187 = vpop.f32.mrf.mxu0
  %v3188 = vadd.f32 %v2819, %v3187
  %v3189 = vpop.f32.mrf.mxu0
  %v3190 = vadd.f32 %v2821, %v3189
  %3191 = vmatmul.bf16.gmra.mxu0 %v1828
  %v3192 = vpop.f32.mrf.mxu0
  %v3193 = vadd.f32 %v2824, %v3192
  %v3194 = vpop.f32.mrf.mxu0
  %v3195 = vadd.f32 %v2826, %v3194
  %3196 = vmatmul.bf16.gmra.mxu0 %v1832
  %v3197 = vpop.f32.mrf.mxu0
  %v3198 = vadd.f32 %v2829, %v3197
  %v3199 = vpop.f32.mrf.mxu0
  %v3200 = vadd.f32 %v2831, %v3199
  %3201 = vmatmul.bf16.gmra.mxu0 %v1836
  %v3202 = vpop.f32.mrf.mxu0
  %v3203 = vadd.f32 %v2834, %v3202
  %v3204 = vpop.f32.mrf.mxu0
  %v3205 = vadd.f32 %v2836, %v3204
  %3206 = vmatmul.bf16.gmra.mxu0 %v1840
  %v3207 = vpop.f32.mrf.mxu0
  %v3208 = vadd.f32 %v2839, %v3207
  %v3209 = vpop.f32.mrf.mxu0
  %v3210 = vadd.f32 %v2841, %v3209
  %3211 = vmatmul.bf16.gmra.mxu0 %v1844
  %v3212 = vpop.f32.mrf.mxu0
  %v3213 = vadd.f32 %v2844, %v3212
  %v3214 = vpop.f32.mrf.mxu0
  %v3215 = vadd.f32 %v2846, %v3214
  %3216 = vmatmul.bf16.gmra.mxu0 %v1848
  %v3217 = vpop.f32.mrf.mxu0
  %v3218 = vadd.f32 %v2849, %v3217
  %v3219 = vpop.f32.mrf.mxu0
  %v3220 = vadd.f32 %v2851, %v3219
  %3221 = vmatmul.bf16.gmra.mxu0 %v1852
  %v3222 = vpop.f32.mrf.mxu0
  %v3223 = vadd.f32 %v2854, %v3222
  %v3224 = vpop.f32.mrf.mxu0
  %v3225 = vadd.f32 %v2856, %v3224
  %3226 = vmatmul.bf16.gmra.mxu0 %v1856
  %v3227 = vpop.f32.mrf.mxu0
  %v3228 = vadd.f32 %v2859, %v3227
  %v3229 = vpop.f32.mrf.mxu0
  %v3230 = vadd.f32 %v2861, %v3229
  %3231 = vmatmul.bf16.gmra.mxu0 %v1860
  %v3232 = vpop.f32.mrf.mxu0
  %v3233 = vadd.f32 %v2864, %v3232
  %v3234 = vpop.f32.mrf.mxu0
  %v3235 = vadd.f32 %v2866, %v3234
  %3236 = vmatmul.bf16.gmra.mxu0 %v1864
  %v3237 = vpop.f32.mrf.mxu0
  %v3238 = vadd.f32 %v2869, %v3237
  %v3239 = vpop.f32.mrf.mxu0
  %v3240 = vadd.f32 %v2871, %v3239
  %3241 = vmatmul.bf16.gmra.mxu0 %v1868
  %v3242 = vpop.f32.mrf.mxu0
  %v3243 = vadd.f32 %v2874, %v3242
  %v3244 = vpop.f32.mrf.mxu0
  %v3245 = vadd.f32 %v2876, %v3244
  %3246 = vmatmul.bf16.gmra.mxu0 %v1872
  %v3247 = vpop.f32.mrf.mxu0
  %v3248 = vadd.f32 %v2879, %v3247
  %v3249 = vpop.f32.mrf.mxu0
  %v3250 = vadd.f32 %v2881, %v3249
  %3251 = vmatmul.bf16.gmra.mxu0 %v1876
  %v3252 = vpop.f32.mrf.mxu0
  %v3253 = vadd.f32 %v2884, %v3252
  %v3254 = vpop.f32.mrf.mxu0
  %v3255 = vadd.f32 %v2886, %v3254
  %3256 = vmatmul.bf16.gmra.mxu0 %v1880
  %v3257 = vpop.f32.mrf.mxu0
  %v3258 = vadd.f32 %v2889, %v3257
  %v3259 = vpop.f32.mrf.mxu0
  %v3260 = vadd.f32 %v2891, %v3259
  %3261 = vmatmul.bf16.gmra.mxu0 %v1884
  %v3262 = vpop.f32.mrf.mxu0
  %v3263 = vadd.f32 %v2894, %v3262
  %v3264 = vpop.f32.mrf.mxu0
  %v3265 = vadd.f32 %v2896, %v3264
  %3266 = vmatmul.bf16.gmra.mxu0 %v1888
  %v3267 = vpop.f32.mrf.mxu0
  %v3268 = vadd.f32 %v2899, %v3267
  %v3269 = vpop.f32.mrf.mxu0
  %v3270 = vadd.f32 %v2901, %v3269
  %3271 = vmatmul.bf16.gmra.mxu0 %v1892
  %v3272 = vpop.f32.mrf.mxu0
  %v3273 = vadd.f32 %v2904, %v3272
  %v3274 = vpop.f32.mrf.mxu0
  %v3275 = vadd.f32 %v2906, %v3274
  %3276 = vmatmul.bf16.gmra.mxu0 %v1896
  %v3277 = vpop.f32.mrf.mxu0
  %v3278 = vadd.f32 %v2909, %v3277
  %v3279 = vpop.f32.mrf.mxu0
  %v3280 = vadd.f32 %v2911, %v3279
  %3281 = vmatmul.bf16.gmra.mxu0 %v1900
  %v3282 = vpop.f32.mrf.mxu0
  %v3283 = vadd.f32 %v2914, %v3282
  %v3284 = vpop.f32.mrf.mxu0
  %v3285 = vadd.f32 %v2916, %v3284
  %3286 = vmatmul.bf16.gmra.mxu0 %v1904
  %v3287 = vpop.f32.mrf.mxu0
  %v3288 = vadd.f32 %v2919, %v3287
  %v3289 = vpop.f32.mrf.mxu0
  %v3290 = vadd.f32 %v2921, %v3289
  %3291 = vmatmul.bf16.gmra.mxu0 %v1908
  %v3292 = vpop.f32.mrf.mxu0
  %v3293 = vadd.f32 %v2924, %v3292
  %v3294 = vpop.f32.mrf.mxu0
  %v3295 = vadd.f32 %v2926, %v3294
  %3296 = vmatmul.bf16.gmra.mxu0 %v1912
  %v3297 = vpop.f32.mrf.mxu0
  %v3298 = vadd.f32 %v2929, %v3297
  %v3299 = vpop.f32.mrf.mxu0
  %v3300 = vadd.f32 %v2931, %v3299
  %3301 = vmatmul.bf16.gmra.mxu0 %v1916
  %v3302 = vpop.f32.mrf.mxu0
  %v3303 = vadd.f32 %v2934, %v3302
  %v3304 = vpop.f32.mrf.mxu0
  %v3305 = vadd.f32 %v2936, %v3304
  %3306 = vmatmul.bf16.gmra.mxu0 %v1920
  %v3307 = vpop.f32.mrf.mxu0
  %v3308 = vadd.f32 %v2939, %v3307
  %v3309 = vpop.f32.mrf.mxu0
  %v3310 = vadd.f32 %v2941, %v3309
  %3311 = vmatmul.bf16.gmra.mxu0 %v1924
  %v3312 = vpop.f32.mrf.mxu0
  %v3313 = vadd.f32 %v2944, %v3312
  %v3314 = vpop.f32.mrf.mxu0
  %v3315 = vadd.f32 %v2946, %v3314
  %3316 = vmatmul.bf16.gmra.mxu0 %v1928
  %v3317 = vpop.f32.mrf.mxu0
  %v3318 = vadd.f32 %v2949, %v3317
  %v3319 = vpop.f32.mrf.mxu0
  %v3320 = vadd.f32 %v2951, %v3319
  %3321 = vmatmul.bf16.gmra.mxu0 %v1932
  %v3322 = vpop.f32.mrf.mxu0
  %v3323 = vadd.f32 %v2954, %v3322
  %v3324 = vpop.f32.mrf.mxu0
  %v3325 = vadd.f32 %v2956, %v3324
  %3326 = vmatmul.bf16.gmra.mxu0 %v1936
  %v3327 = vpop.f32.mrf.mxu0
  %v3328 = vadd.f32 %v2959, %v3327
  %v3329 = vpop.f32.mrf.mxu0
  %v3330 = vadd.f32 %v2961, %v3329
  %3331 = vmatmul.bf16.gmra.mxu0 %v1940
  %v3332 = vpop.f32.mrf.mxu0
  %v3333 = vadd.f32 %v2964, %v3332
  %v3334 = vpop.f32.mrf.mxu0
  %v3335 = vadd.f32 %v2966, %v3334
  %3336 = vdwg.mxu0
  %3337 = vmatpush.bf16.msra.mxu0 %v789
  %3338 = vmatpush.bf16.msra.mxu0 %v788
  %3339 = vmatpush.bf16.msra.mxu0 %v787
  %3340 = vmatpush.bf16.msra.mxu0 %v786
  %3341 = vmatpush.bf16.msra.mxu0 %v785
  %3342 = vmatpush.bf16.msra.mxu0 %v784
  %3343 = vmatpush.bf16.msra.mxu0 %v783
  %3344 = vmatpush.bf16.msra.mxu0 %v782
  %3345 = vmatmul.bf16.gmra.mxu0 %v1657
  %v3346 = vpop.f32.mrf.mxu0
  %v3347 = vadd.f32 %v2978, %v3346
  %v3348 = vpop.f32.mrf.mxu0
  %v3349 = vadd.f32 %v2980, %v3348
  %3350 = vmatmul.bf16.gmra.mxu0 %v1661
  %v3351 = vpop.f32.mrf.mxu0
  %v3352 = vadd.f32 %v2983, %v3351
  %v3353 = vpop.f32.mrf.mxu0
  %v3354 = vadd.f32 %v2985, %v3353
  %3355 = vmatmul.bf16.gmra.mxu0 %v1665
  %v3356 = vpop.f32.mrf.mxu0
  %v3357 = vadd.f32 %v2988, %v3356
  %v3358 = vpop.f32.mrf.mxu0
  %v3359 = vadd.f32 %v2990, %v3358
  %3360 = vmatmul.bf16.gmra.mxu0 %v1669
  %v3361 = vpop.f32.mrf.mxu0
  %v3362 = vadd.f32 %v2993, %v3361
  %v3363 = vpop.f32.mrf.mxu0
  %v3364 = vadd.f32 %v2995, %v3363
  %3365 = vmatmul.bf16.gmra.mxu0 %v1673
  %v3366 = vpop.f32.mrf.mxu0
  %v3367 = vadd.f32 %v2998, %v3366
  %v3368 = vpop.f32.mrf.mxu0
  %v3369 = vadd.f32 %v3000, %v3368
  %3370 = vmatmul.bf16.gmra.mxu0 %v1677
  %v3371 = vpop.f32.mrf.mxu0
  %v3372 = vadd.f32 %v3003, %v3371
  %v3373 = vpop.f32.mrf.mxu0
  %v3374 = vadd.f32 %v3005, %v3373
  %3375 = vmatmul.bf16.gmra.mxu0 %v1681
  %v3376 = vpop.f32.mrf.mxu0
  %v3377 = vadd.f32 %v3008, %v3376
  %v3378 = vpop.f32.mrf.mxu0
  %v3379 = vadd.f32 %v3010, %v3378
  %3380 = vmatmul.bf16.gmra.mxu0 %v1685
  %v3381 = vpop.f32.mrf.mxu0
  %v3382 = vadd.f32 %v3013, %v3381
  %v3383 = vpop.f32.mrf.mxu0
  %v3384 = vadd.f32 %v3015, %v3383
  %3385 = vmatmul.bf16.gmra.mxu0 %v1689
  %v3386 = vpop.f32.mrf.mxu0
  %v3387 = vadd.f32 %v3018, %v3386
  %v3388 = vpop.f32.mrf.mxu0
  %v3389 = vadd.f32 %v3020, %v3388
  %3390 = vmatmul.bf16.gmra.mxu0 %v1693
  %v3391 = vpop.f32.mrf.mxu0
  %v3392 = vadd.f32 %v3023, %v3391
  %v3393 = vpop.f32.mrf.mxu0
  %v3394 = vadd.f32 %v3025, %v3393
  %3395 = vmatmul.bf16.gmra.mxu0 %v1697
  %v3396 = vpop.f32.mrf.mxu0
  %v3397 = vadd.f32 %v3028, %v3396
  %v3398 = vpop.f32.mrf.mxu0
  %v3399 = vadd.f32 %v3030, %v3398
  %3400 = vmatmul.bf16.gmra.mxu0 %v1701
  %v3401 = vpop.f32.mrf.mxu0
  %v3402 = vadd.f32 %v3033, %v3401
  %v3403 = vpop.f32.mrf.mxu0
  %v3404 = vadd.f32 %v3035, %v3403
  %3405 = vmatmul.bf16.gmra.mxu0 %v1705
  %v3406 = vpop.f32.mrf.mxu0
  %v3407 = vadd.f32 %v3038, %v3406
  %v3408 = vpop.f32.mrf.mxu0
  %v3409 = vadd.f32 %v3040, %v3408
  %3410 = vmatmul.bf16.gmra.mxu0 %v1709
  %v3411 = vpop.f32.mrf.mxu0
  %v3412 = vadd.f32 %v3043, %v3411
  %v3413 = vpop.f32.mrf.mxu0
  %v3414 = vadd.f32 %v3045, %v3413
  %3415 = vmatmul.bf16.gmra.mxu0 %v1713
  %v3416 = vpop.f32.mrf.mxu0
  %v3417 = vadd.f32 %v3048, %v3416
  %v3418 = vpop.f32.mrf.mxu0
  %v3419 = vadd.f32 %v3050, %v3418
  %3420 = vmatmul.bf16.gmra.mxu0 %v1717
  %v3421 = vpop.f32.mrf.mxu0
  %v3422 = vadd.f32 %v3053, %v3421
  %v3423 = vpop.f32.mrf.mxu0
  %v3424 = vadd.f32 %v3055, %v3423
  %3425 = vmatmul.bf16.gmra.mxu0 %v1721
  %v3426 = vpop.f32.mrf.mxu0
  %v3427 = vadd.f32 %v3058, %v3426
  %v3428 = vpop.f32.mrf.mxu0
  %v3429 = vadd.f32 %v3060, %v3428
  %3430 = vmatmul.bf16.gmra.mxu0 %v1725
  %v3431 = vpop.f32.mrf.mxu0
  %v3432 = vadd.f32 %v3063, %v3431
  %v3433 = vpop.f32.mrf.mxu0
  %v3434 = vadd.f32 %v3065, %v3433
  %3435 = vmatmul.bf16.gmra.mxu0 %v1729
  %v3436 = vpop.f32.mrf.mxu0
  %v3437 = vadd.f32 %v3068, %v3436
  %v3438 = vpop.f32.mrf.mxu0
  %v3439 = vadd.f32 %v3070, %v3438
  %3440 = vmatmul.bf16.gmra.mxu0 %v1733
  %v3441 = vpop.f32.mrf.mxu0
  %v3442 = vadd.f32 %v3073, %v3441
  %v3443 = vpop.f32.mrf.mxu0
  %v3444 = vadd.f32 %v3075, %v3443
  %3445 = vmatmul.bf16.gmra.mxu0 %v1737
  %v3446 = vpop.f32.mrf.mxu0
  %v3447 = vadd.f32 %v3078, %v3446
  %v3448 = vpop.f32.mrf.mxu0
  %v3449 = vadd.f32 %v3080, %v3448
  %3450 = vmatmul.bf16.gmra.mxu0 %v1741
  %v3451 = vpop.f32.mrf.mxu0
  %v3452 = vadd.f32 %v3083, %v3451
  %v3453 = vpop.f32.mrf.mxu0
  %v3454 = vadd.f32 %v3085, %v3453
  %3455 = vmatmul.bf16.gmra.mxu0 %v1745
  %v3456 = vpop.f32.mrf.mxu0
  %v3457 = vadd.f32 %v3088, %v3456
  %v3458 = vpop.f32.mrf.mxu0
  %v3459 = vadd.f32 %v3090, %v3458
  %3460 = vmatmul.bf16.gmra.mxu0 %v1749
  %v3461 = vpop.f32.mrf.mxu0
  %v3462 = vadd.f32 %v3093, %v3461
  %v3463 = vpop.f32.mrf.mxu0
  %v3464 = vadd.f32 %v3095, %v3463
  %3465 = vmatmul.bf16.gmra.mxu0 %v1753
  %v3466 = vpop.f32.mrf.mxu0
  %v3467 = vadd.f32 %v3098, %v3466
  %v3468 = vpop.f32.mrf.mxu0
  %v3469 = vadd.f32 %v3100, %v3468
  %3470 = vmatmul.bf16.gmra.mxu0 %v1757
  %v3471 = vpop.f32.mrf.mxu0
  %v3472 = vadd.f32 %v3103, %v3471
  %v3473 = vpop.f32.mrf.mxu0
  %v3474 = vadd.f32 %v3105, %v3473
  %3475 = vmatmul.bf16.gmra.mxu0 %v1761
  %v3476 = vpop.f32.mrf.mxu0
  %v3477 = vadd.f32 %v3108, %v3476
  %v3478 = vpop.f32.mrf.mxu0
  %v3479 = vadd.f32 %v3110, %v3478
  %3480 = vmatmul.bf16.gmra.mxu0 %v1765
  %v3481 = vpop.f32.mrf.mxu0
  %v3482 = vadd.f32 %v3113, %v3481
  %v3483 = vpop.f32.mrf.mxu0
  %v3484 = vadd.f32 %v3115, %v3483
  %3485 = vmatmul.bf16.gmra.mxu0 %v1769
  %v3486 = vpop.f32.mrf.mxu0
  %v3487 = vadd.f32 %v3118, %v3486
  %v3488 = vpop.f32.mrf.mxu0
  %v3489 = vadd.f32 %v3120, %v3488
  %3490 = vmatmul.bf16.gmra.mxu0 %v1773
  %v3491 = vpop.f32.mrf.mxu0
  %v3492 = vadd.f32 %v3123, %v3491
  %v3493 = vpop.f32.mrf.mxu0
  %v3494 = vadd.f32 %v3125, %v3493
  %3495 = vmatmul.bf16.gmra.mxu0 %v1777
  %v3496 = vpop.f32.mrf.mxu0
  %v3497 = vadd.f32 %v3128, %v3496
  %v3498 = vpop.f32.mrf.mxu0
  %v3499 = vadd.f32 %v3130, %v3498
  %3500 = vmatmul.bf16.gmra.mxu0 %v1781
  %v3501 = vpop.f32.mrf.mxu0
  %v3502 = vadd.f32 %v3133, %v3501
  %v3503 = vpop.f32.mrf.mxu0
  %v3504 = vadd.f32 %v3135, %v3503
  %3505 = vmatmul.bf16.gmra.mxu0 %v1785
  %v3506 = vpop.f32.mrf.mxu0
  %v3507 = vadd.f32 %v3138, %v3506
  %v3508 = vpop.f32.mrf.mxu0
  %v3509 = vadd.f32 %v3140, %v3508
  %3510 = vmatmul.bf16.gmra.mxu0 %v1789
  %v3511 = vpop.f32.mrf.mxu0
  %v3512 = vadd.f32 %v3143, %v3511
  %v3513 = vpop.f32.mrf.mxu0
  %v3514 = vadd.f32 %v3145, %v3513
  %3515 = vmatmul.bf16.gmra.mxu0 %v1793
  %v3516 = vpop.f32.mrf.mxu0
  %v3517 = vadd.f32 %v3148, %v3516
  %v3518 = vpop.f32.mrf.mxu0
  %v3519 = vadd.f32 %v3150, %v3518
  %3520 = vmatmul.bf16.gmra.mxu0 %v1797
  %v3521 = vpop.f32.mrf.mxu0
  %v3522 = vadd.f32 %v3153, %v3521
  %v3523 = vpop.f32.mrf.mxu0
  %v3524 = vadd.f32 %v3155, %v3523
  %3525 = vmatmul.bf16.gmra.mxu0 %v1801
  %v3526 = vpop.f32.mrf.mxu0
  %v3527 = vadd.f32 %v3158, %v3526
  %v3528 = vpop.f32.mrf.mxu0
  %v3529 = vadd.f32 %v3160, %v3528
  %3530 = vmatmul.bf16.gmra.mxu0 %v1805
  %v3531 = vpop.f32.mrf.mxu0
  %v3532 = vadd.f32 %v3163, %v3531
  %v3533 = vpop.f32.mrf.mxu0
  %v3534 = vadd.f32 %v3165, %v3533
  %3535 = vmatmul.bf16.gmra.mxu0 %v1809
  %v3536 = vpop.f32.mrf.mxu0
  %v3537 = vadd.f32 %v3168, %v3536
  %v3538 = vpop.f32.mrf.mxu0
  %v3539 = vadd.f32 %v3170, %v3538
  %3540 = vmatmul.bf16.gmra.mxu0 %v1813
  %v3541 = vpop.f32.mrf.mxu0
  %v3542 = vadd.f32 %v3173, %v3541
  %v3543 = vpop.f32.mrf.mxu0
  %v3544 = vadd.f32 %v3175, %v3543
  %3545 = vmatmul.bf16.gmra.mxu0 %v1817
  %v3546 = vpop.f32.mrf.mxu0
  %v3547 = vadd.f32 %v3178, %v3546
  %v3548 = vpop.f32.mrf.mxu0
  %v3549 = vadd.f32 %v3180, %v3548
  %3550 = vmatmul.bf16.gmra.mxu0 %v1821
  %v3551 = vpop.f32.mrf.mxu0
  %v3552 = vadd.f32 %v3183, %v3551
  %v3553 = vpop.f32.mrf.mxu0
  %v3554 = vadd.f32 %v3185, %v3553
  %3555 = vmatmul.bf16.gmra.mxu0 %v1825
  %v3556 = vpop.f32.mrf.mxu0
  %v3557 = vadd.f32 %v3188, %v3556
  %v3558 = vpop.f32.mrf.mxu0
  %v3559 = vadd.f32 %v3190, %v3558
  %3560 = vmatmul.bf16.gmra.mxu0 %v1829
  %v3561 = vpop.f32.mrf.mxu0
  %v3562 = vadd.f32 %v3193, %v3561
  %v3563 = vpop.f32.mrf.mxu0
  %v3564 = vadd.f32 %v3195, %v3563
  %3565 = vmatmul.bf16.gmra.mxu0 %v1833
  %v3566 = vpop.f32.mrf.mxu0
  %v3567 = vadd.f32 %v3198, %v3566
  %v3568 = vpop.f32.mrf.mxu0
  %v3569 = vadd.f32 %v3200, %v3568
  %3570 = vmatmul.bf16.gmra.mxu0 %v1837
  %v3571 = vpop.f32.mrf.mxu0
  %v3572 = vadd.f32 %v3203, %v3571
  %v3573 = vpop.f32.mrf.mxu0
  %v3574 = vadd.f32 %v3205, %v3573
  %3575 = vmatmul.bf16.gmra.mxu0 %v1841
  %v3576 = vpop.f32.mrf.mxu0
  %v3577 = vadd.f32 %v3208, %v3576
  %v3578 = vpop.f32.mrf.mxu0
  %v3579 = vadd.f32 %v3210, %v3578
  %3580 = vmatmul.bf16.gmra.mxu0 %v1845
  %v3581 = vpop.f32.mrf.mxu0
  %v3582 = vadd.f32 %v3213, %v3581
  %v3583 = vpop.f32.mrf.mxu0
  %v3584 = vadd.f32 %v3215, %v3583
  %3585 = vmatmul.bf16.gmra.mxu0 %v1849
  %v3586 = vpop.f32.mrf.mxu0
  %v3587 = vadd.f32 %v3218, %v3586
  %v3588 = vpop.f32.mrf.mxu0
  %v3589 = vadd.f32 %v3220, %v3588
  %3590 = vmatmul.bf16.gmra.mxu0 %v1853
  %v3591 = vpop.f32.mrf.mxu0
  %v3592 = vadd.f32 %v3223, %v3591
  %v3593 = vpop.f32.mrf.mxu0
  %v3594 = vadd.f32 %v3225, %v3593
  %3595 = vmatmul.bf16.gmra.mxu0 %v1857
  %v3596 = vpop.f32.mrf.mxu0
  %v3597 = vadd.f32 %v3228, %v3596
  %v3598 = vpop.f32.mrf.mxu0
  %v3599 = vadd.f32 %v3230, %v3598
  %3600 = vmatmul.bf16.gmra.mxu0 %v1861
  %v3601 = vpop.f32.mrf.mxu0
  %v3602 = vadd.f32 %v3233, %v3601
  %v3603 = vpop.f32.mrf.mxu0
  %v3604 = vadd.f32 %v3235, %v3603
  %3605 = vmatmul.bf16.gmra.mxu0 %v1865
  %v3606 = vpop.f32.mrf.mxu0
  %v3607 = vadd.f32 %v3238, %v3606
  %v3608 = vpop.f32.mrf.mxu0
  %v3609 = vadd.f32 %v3240, %v3608
  %3610 = vmatmul.bf16.gmra.mxu0 %v1869
  %v3611 = vpop.f32.mrf.mxu0
  %v3612 = vadd.f32 %v3243, %v3611
  %v3613 = vpop.f32.mrf.mxu0
  %v3614 = vadd.f32 %v3245, %v3613
  %3615 = vmatmul.bf16.gmra.mxu0 %v1873
  %v3616 = vpop.f32.mrf.mxu0
  %v3617 = vadd.f32 %v3248, %v3616
  %v3618 = vpop.f32.mrf.mxu0
  %v3619 = vadd.f32 %v3250, %v3618
  %3620 = vmatmul.bf16.gmra.mxu0 %v1877
  %v3621 = vpop.f32.mrf.mxu0
  %v3622 = vadd.f32 %v3253, %v3621
  %v3623 = vpop.f32.mrf.mxu0
  %v3624 = vadd.f32 %v3255, %v3623
  %3625 = vmatmul.bf16.gmra.mxu0 %v1881
  %v3626 = vpop.f32.mrf.mxu0
  %v3627 = vadd.f32 %v3258, %v3626
  %v3628 = vpop.f32.mrf.mxu0
  %v3629 = vadd.f32 %v3260, %v3628
  %3630 = vmatmul.bf16.gmra.mxu0 %v1885
  %v3631 = vpop.f32.mrf.mxu0
  %v3632 = vadd.f32 %v3263, %v3631
  %v3633 = vpop.f32.mrf.mxu0
  %v3634 = vadd.f32 %v3265, %v3633
  %3635 = vmatmul.bf16.gmra.mxu0 %v1889
  %v3636 = vpop.f32.mrf.mxu0
  %v3637 = vadd.f32 %v3268, %v3636
  %v3638 = vpop.f32.mrf.mxu0
  %v3639 = vadd.f32 %v3270, %v3638
  %3640 = vmatmul.bf16.gmra.mxu0 %v1893
  %v3641 = vpop.f32.mrf.mxu0
  %v3642 = vadd.f32 %v3273, %v3641
  %v3643 = vpop.f32.mrf.mxu0
  %v3644 = vadd.f32 %v3275, %v3643
  %3645 = vmatmul.bf16.gmra.mxu0 %v1897
  %v3646 = vpop.f32.mrf.mxu0
  %v3647 = vadd.f32 %v3278, %v3646
  %v3648 = vpop.f32.mrf.mxu0
  %v3649 = vadd.f32 %v3280, %v3648
  %3650 = vmatmul.bf16.gmra.mxu0 %v1901
  %v3651 = vpop.f32.mrf.mxu0
  %v3652 = vadd.f32 %v3283, %v3651
  %v3653 = vpop.f32.mrf.mxu0
  %v3654 = vadd.f32 %v3285, %v3653
  %3655 = vmatmul.bf16.gmra.mxu0 %v1905
  %v3656 = vpop.f32.mrf.mxu0
  %v3657 = vadd.f32 %v3288, %v3656
  %v3658 = vpop.f32.mrf.mxu0
  %v3659 = vadd.f32 %v3290, %v3658
  %3660 = vmatmul.bf16.gmra.mxu0 %v1909
  %v3661 = vpop.f32.mrf.mxu0
  %v3662 = vadd.f32 %v3293, %v3661
  %v3663 = vpop.f32.mrf.mxu0
  %v3664 = vadd.f32 %v3295, %v3663
  %3665 = vmatmul.bf16.gmra.mxu0 %v1913
  %v3666 = vpop.f32.mrf.mxu0
  %v3667 = vadd.f32 %v3298, %v3666
  %v3668 = vpop.f32.mrf.mxu0
  %v3669 = vadd.f32 %v3300, %v3668
  %3670 = vmatmul.bf16.gmra.mxu0 %v1917
  %v3671 = vpop.f32.mrf.mxu0
  %v3672 = vadd.f32 %v3303, %v3671
  %v3673 = vpop.f32.mrf.mxu0
  %v3674 = vadd.f32 %v3305, %v3673
  %3675 = vmatmul.bf16.gmra.mxu0 %v1921
  %v3676 = vpop.f32.mrf.mxu0
  %v3677 = vadd.f32 %v3308, %v3676
  %v3678 = vpop.f32.mrf.mxu0
  %v3679 = vadd.f32 %v3310, %v3678
  %3680 = vmatmul.bf16.gmra.mxu0 %v1925
  %v3681 = vpop.f32.mrf.mxu0
  %v3682 = vadd.f32 %v3313, %v3681
  %v3683 = vpop.f32.mrf.mxu0
  %v3684 = vadd.f32 %v3315, %v3683
  %3685 = vmatmul.bf16.gmra.mxu0 %v1929
  %v3686 = vpop.f32.mrf.mxu0
  %v3687 = vadd.f32 %v3318, %v3686
  %v3688 = vpop.f32.mrf.mxu0
  %v3689 = vadd.f32 %v3320, %v3688
  %3690 = vmatmul.bf16.gmra.mxu0 %v1933
  %v3691 = vpop.f32.mrf.mxu0
  %v3692 = vadd.f32 %v3323, %v3691
  %v3693 = vpop.f32.mrf.mxu0
  %v3694 = vadd.f32 %v3325, %v3693
  %3695 = vmatmul.bf16.gmra.mxu0 %v1937
  %v3696 = vpop.f32.mrf.mxu0
  %v3697 = vadd.f32 %v3328, %v3696
  %v3698 = vpop.f32.mrf.mxu0
  %v3699 = vadd.f32 %v3330, %v3698
  %3700 = vmatmul.bf16.gmra.mxu0 %v1941
  %v3701 = vpop.f32.mrf.mxu0
  %v3702 = vadd.f32 %v3333, %v3701
  %v3703 = vpop.f32.mrf.mxu0
  %v3704 = vadd.f32 %v3335, %v3703
  %3705 = vdwg.mxu0
  %v3706 = vmax.f32 %v3347, %v3387
  %v3707 = vmax.f32 %v3349, %v3389
  %v3708 = vmax.f32 %v3352, %v3392
  %v3709 = vmax.f32 %v3354, %v3394
  %v3710 = vmax.f32 %v3357, %v3397
  %v3711 = vmax.f32 %v3359, %v3399
  %v3712 = vmax.f32 %v3362, %v3402
  %v3713 = vmax.f32 %v3364, %v3404
  %v3714 = vmax.f32 %v3367, %v3407
  %v3715 = vmax.f32 %v3369, %v3409
  %v3716 = vmax.f32 %v3372, %v3412
  %v3717 = vmax.f32 %v3374, %v3414
  %v3718 = vmax.f32 %v3377, %v3417
  %v3719 = vmax.f32 %v3379, %v3419
  %v3720 = vmax.f32 %v3382, %v3422
  %v3721 = vmax.f32 %v3384, %v3424
  %v3722 = vmax.f32 %v3706, %v3427
  %v3723 = vmax.f32 %v3707, %v3429
  %v3724 = vmax.f32 %v3708, %v3432
  %v3725 = vmax.f32 %v3709, %v3434
  %v3726 = vmax.f32 %v3710, %v3437
  %v3727 = vmax.f32 %v3711, %v3439
  %v3728 = vmax.f32 %v3712, %v3442
  %v3729 = vmax.f32 %v3713, %v3444
  %v3730 = vmax.f32 %v3714, %v3447
  %v3731 = vmax.f32 %v3715, %v3449
  %v3732 = vmax.f32 %v3716, %v3452
  %v3733 = vmax.f32 %v3717, %v3454
  %v3734 = vmax.f32 %v3718, %v3457
  %v3735 = vmax.f32 %v3719, %v3459
  %v3736 = vmax.f32 %v3720, %v3462
  %v3737 = vmax.f32 %v3721, %v3464
  %v3738 = vmax.f32 %v3722, %v3467
  %v3739 = vmax.f32 %v3723, %v3469
  %v3740 = vmax.f32 %v3724, %v3472
  %v3741 = vmax.f32 %v3725, %v3474
  %v3742 = vmax.f32 %v3726, %v3477
  %v3743 = vmax.f32 %v3727, %v3479
  %v3744 = vmax.f32 %v3728, %v3482
  %v3745 = vmax.f32 %v3729, %v3484
  %v3746 = vmax.f32 %v3730, %v3487
  %v3747 = vmax.f32 %v3731, %v3489
  %v3748 = vmax.f32 %v3732, %v3492
  %v3749 = vmax.f32 %v3733, %v3494
  %v3750 = vmax.f32 %v3734, %v3497
  %v3751 = vmax.f32 %v3735, %v3499
  %v3752 = vmax.f32 %v3736, %v3502
  %v3753 = vmax.f32 %v3737, %v3504
  %v3754 = vmax.f32 %v3738, %v3507
  %v3755 = vmax.f32 %v3739, %v3509
  %v3756 = vmax.f32 %v3740, %v3512
  %v3757 = vmax.f32 %v3741, %v3514
  %v3758 = vmax.f32 %v3742, %v3517
  %v3759 = vmax.f32 %v3743, %v3519
  %v3760 = vmax.f32 %v3744, %v3522
  %v3761 = vmax.f32 %v3745, %v3524
  %v3762 = vmax.f32 %v3746, %v3527
  %v3763 = vmax.f32 %v3747, %v3529
  %v3764 = vmax.f32 %v3748, %v3532
  %v3765 = vmax.f32 %v3749, %v3534
  %v3766 = vmax.f32 %v3750, %v3537
  %v3767 = vmax.f32 %v3751, %v3539
  %v3768 = vmax.f32 %v3752, %v3542
  %v3769 = vmax.f32 %v3753, %v3544
  %v3770 = vmax.f32 %v3754, %v3547
  %v3771 = vmax.f32 %v3755, %v3549
  %v3772 = vmax.f32 %v3756, %v3552
  %v3773 = vmax.f32 %v3757, %v3554
  %v3774 = vmax.f32 %v3758, %v3557
  %v3775 = vmax.f32 %v3759, %v3559
  %v3776 = vmax.f32 %v3760, %v3562
  %v3777 = vmax.f32 %v3761, %v3564
  %v3778 = vmax.f32 %v3762, %v3567
  %v3779 = vmax.f32 %v3763, %v3569
  %v3780 = vmax.f32 %v3764, %v3572
  %v3781 = vmax.f32 %v3765, %v3574
  %v3782 = vmax.f32 %v3766, %v3577
  %v3783 = vmax.f32 %v3767, %v3579
  %v3784 = vmax.f32 %v3768, %v3582
  %v3785 = vmax.f32 %v3769, %v3584
  %v3786 = vmax.f32 %v3770, %v3587
  %v3787 = vmax.f32 %v3771, %v3589
  %v3788 = vmax.f32 %v3772, %v3592
  %v3789 = vmax.f32 %v3773, %v3594
  %v3790 = vmax.f32 %v3774, %v3597
  %v3791 = vmax.f32 %v3775, %v3599
  %v3792 = vmax.f32 %v3776, %v3602
  %v3793 = vmax.f32 %v3777, %v3604
  %v3794 = vmax.f32 %v3778, %v3607
  %v3795 = vmax.f32 %v3779, %v3609
  %v3796 = vmax.f32 %v3780, %v3612
  %v3797 = vmax.f32 %v3781, %v3614
  %v3798 = vmax.f32 %v3782, %v3617
  %v3799 = vmax.f32 %v3783, %v3619
  %v3800 = vmax.f32 %v3784, %v3622
  %v3801 = vmax.f32 %v3785, %v3624
  %v3802 = vmax.f32 %v3786, %v3627
  %v3803 = vmax.f32 %v3787, %v3629
  %v3804 = vmax.f32 %v3788, %v3632
  %v3805 = vmax.f32 %v3789, %v3634
  %v3806 = vmax.f32 %v3790, %v3637
  %v3807 = vmax.f32 %v3791, %v3639
  %v3808 = vmax.f32 %v3792, %v3642
  %v3809 = vmax.f32 %v3793, %v3644
  %v3810 = vmax.f32 %v3794, %v3647
  %v3811 = vmax.f32 %v3795, %v3649
  %v3812 = vmax.f32 %v3796, %v3652
  %v3813 = vmax.f32 %v3797, %v3654
  %v3814 = vmax.f32 %v3798, %v3657
  %v3815 = vmax.f32 %v3799, %v3659
  %v3816 = vmax.f32 %v3800, %v3662
  %v3817 = vmax.f32 %v3801, %v3664
  %v3818 = vmax.f32 %v3802, %v3667
  %v3819 = vmax.f32 %v3803, %v3669
  %v3820 = vmax.f32 %v3804, %v3672
  %v3821 = vmax.f32 %v3805, %v3674
  %v3822 = vmax.f32 %v3806, %v3677
  %v3823 = vmax.f32 %v3807, %v3679
  %v3824 = vmax.f32 %v3808, %v3682
  %v3825 = vmax.f32 %v3809, %v3684
  %v3826 = vmax.f32 %v3810, %v3687
  %v3827 = vmax.f32 %v3811, %v3689
  %v3828 = vmax.f32 %v3812, %v3692
  %v3829 = vmax.f32 %v3813, %v3694
  %v3830 = vmax.f32 %v3814, %v3697
  %v3831 = vmax.f32 %v3815, %v3699
  %v3832 = vmax.f32 %v3816, %v3702
  %v3833 = vmax.f32 %v3817, %v3704
  %3834 = vst [vmem:[%s4] sm:$0xff] %v3818
  %3835 = vst [vmem:[%s4 + $0x8] sm:$0xff] %v3819
  %3836 = vst [vmem:[%s4 + $0x10] sm:$0xff] %v3820
  %3837 = vst [vmem:[%s4 + $0x18] sm:$0xff] %v3821
  %3838 = vst [vmem:[%s4 + $0x20] sm:$0xff] %v3822
  %3839 = vst [vmem:[%s4 + $0x28] sm:$0xff] %v3823
  %3840 = vst [vmem:[%s4 + $0x30] sm:$0xff] %v3824
  %3841 = vst [vmem:[%s4 + $0x38] sm:$0xff] %v3825
  %3842 = vst [vmem:[%s4 + $0x40] sm:$0xff] %v3826
  %3843 = vst [vmem:[%s4 + $0x48] sm:$0xff] %v3827
  %3844 = vst [vmem:[%s4 + $0x50] sm:$0xff] %v3828
  %3845 = vst [vmem:[%s4 + $0x58] sm:$0xff] %v3829
  %3846 = vst [vmem:[%s4 + $0x60] sm:$0xff] %v3830
  %3847 = vst [vmem:[%s4 + $0x68] sm:$0xff] %v3831
  %3848 = vst [vmem:[%s4 + $0x70] sm:$0xff] %v3832
  %3849 = vst [vmem:[%s4 + $0x78] sm:$0xff] %v3833
  // Predicated region
  $region18: #{_lambda_.8} parent=0 // pred_check
    _
  $region19: #{_lambda_.8} parent=0 // pred_check_branch
    %3851 = sbr.rel (0) target = $region21
  $region20: #{_lambda_.8} parent=0 // pred_region
    _
  $region21: #{_lambda_.8} parent=0 // pred_fallthru
    _
  // Predicated region
  $region22: #{_lambda_.8} parent=0 // pred_check
    _
  $region23: #{_lambda_.8} parent=0 // pred_check_branch
    %3853 = sbr.rel (0) target = $region25
  $region24: #{_lambda_.8} parent=0 // pred_region
    _
  $region25: #{_lambda_.8} parent=0 // pred_fallthru
    _

// kernel: _lambda_.13
$region0: #{_lambda_.13}
  #allocation0 [shape = 'u32[]', space=smem, size = 0x4, offset = 0x4, fixed_abs, tag = 'smem constant byte address 0x4 - core index']
  #allocation1 [shape = 'u32[72,128]{1,0:T(1,128)}', space=vmem, size = 0x9000, scoped, tag = 'internal scratch']
  %s0 = inlined_call_operand.vmem [shape: f32[8,128], index: 0, kind: input, shape index: {}]
  %s1 = inlined_call_operand.vmem [shape: bf16[128,256], index: 1, kind: input, shape index: {}]
  %s2 = inlined_call_operand.vmem [shape: f32[1,256], index: 2, kind: input, shape index: {}]
  %s3 = inlined_call_operand.vmem [shape: bf16[72,8], index: 3, kind: input, shape index: {}]
  %s4 = inlined_call_operand.vmem [shape: f32[16,256], index: 4, kind: input, shape index: {}]
  %s5 = inlined_call_operand.vmem [shape: bf16[256,256], index: 5, kind: input, shape index: {}]
  %s6 = inlined_call_operand.vmem [shape: f32[1,256], index: 6, kind: input, shape index: {}]
  %s7 = inlined_call_operand.vmem [shape: f32[8,256], index: 7, kind: output, shape index: {}]
  %s8 = sld [smem:[#allocation0]]
  $region38: #{_lambda_.13} parent=0
    _
  %s10 = ssub.s32 1, %s8
  %s11 = scalar_select 0, %s10, %s8
  // Predicated region
  $region2: #{_lambda_.13} parent=0 // pred_check
    _
  $region3: #{_lambda_.13} parent=0 // pred_check_branch
    %13 = sbr.rel (0) target = $region5
  $region4: #{_lambda_.13} parent=0 // pred_region
    _
  $region5: #{_lambda_.13} parent=0 // pred_fallthru
    _
  // Predicated region
  $region6: #{_lambda_.13} parent=0 // pred_check
    _
  $region7: #{_lambda_.13} parent=0 // pred_check_branch
    %15 = sbr.rel (0) target = $region9
  $region8: #{_lambda_.13} parent=0 // pred_region
    _
  $region9: #{_lambda_.13} parent=0 // pred_fallthru
    _
  // Predicated region
  $region10: #{_lambda_.13} parent=0 // pred_check
    _
  $region11: #{_lambda_.13} parent=0 // pred_check_branch
    %17 = sbr.rel (0) target = $region13
  $region12: #{_lambda_.13} parent=0 // pred_region
    _
  $region13: #{_lambda_.13} parent=0 // pred_fallthru
    _
  // Predicated region
  $region14: #{_lambda_.13} parent=0 // pred_check
    _
  $region15: #{_lambda_.13} parent=0 // pred_check_branch
    %19 = sbr.rel (0) target = $region17
  $region16: #{_lambda_.13} parent=0 // pred_region
    _
  $region17: #{_lambda_.13} parent=0 // pred_fallthru
    _
  // Predicated region
  $region18: #{_lambda_.13} parent=0 // pred_check
    _
  $region19: #{_lambda_.13} parent=0 // pred_check_branch
    %21 = sbr.rel (0) target = $region21
  $region20: #{_lambda_.13} parent=0 // pred_region
    _
  $region21: #{_lambda_.13} parent=0 // pred_fallthru
    _
  // Predicated region
  $region22: #{_lambda_.13} parent=0 // pred_check
    _
  $region23: #{_lambda_.13} parent=0 // pred_check_branch
    %23 = sbr.rel (0) target = $region25
  $region24: #{_lambda_.13} parent=0 // pred_region
    _
  $region25: #{_lambda_.13} parent=0 // pred_fallthru
    _
  // Predicated region
  $region26: #{_lambda_.13} parent=0 // pred_check
    _
  $region27: #{_lambda_.13} parent=0 // pred_check_branch
    %25 = sbr.rel (0) target = $region29
  $region28: #{_lambda_.13} parent=0 // pred_region
    _
  $region29: #{_lambda_.13} parent=0 // pred_fallthru
    _
  %v27 = vld [vmem:[%s0] sm:$0xff]
  %v28 = vld [vmem:[%s1] sm:$0xff]
  %v29 = vld [vmem:[%s1 + $0x8] sm:$0xff]
  %v30 = vld [vmem:[%s1 + $0x10] sm:$0xff]
  %v31 = vld [vmem:[%s1 + $0x18] sm:$0xff]
  %v32 = vld [vmem:[%s1 + $0x20] sm:$0xff]
  %v33 = vld [vmem:[%s1 + $0x28] sm:$0xff]
  %v34 = vld [vmem:[%s1 + $0x30] sm:$0xff]
  %v35 = vld [vmem:[%s1 + $0x38] sm:$0xff]
  %v36 = vld [vmem:[%s1 + $0x40] sm:$0xff]
  %v37 = vld [vmem:[%s1 + $0x48] sm:$0xff]
  %v38 = vld [vmem:[%s1 + $0x50] sm:$0xff]
  %v39 = vld [vmem:[%s1 + $0x58] sm:$0xff]
  %v40 = vld [vmem:[%s1 + $0x60] sm:$0xff]
  %v41 = vld [vmem:[%s1 + $0x68] sm:$0xff]
  %v42 = vld [vmem:[%s1 + $0x70] sm:$0xff]
  %v43 = vld [vmem:[%s1 + $0x78] sm:$0xff]
  %v44 = vld [vmem:[%s2] sm:$0x3]
  %v45 = vld [vmem:[%s3] sm:$0xf]
  %v46 = vld [vmem:[%s3 + $0x4] sm:$0xf]
  %v47 = vld [vmem:[%s3 + $0x8] sm:$0xf]
  %v48 = vld [vmem:[%s3 + $0xc] sm:$0xf]
  %v49 = vld [vmem:[%s3 + $0x10] sm:$0xf]
  %v50 = vld [vmem:[%s3 + $0x14] sm:$0xf]
  %v51 = vld [vmem:[%s3 + $0x18] sm:$0xf]
  %v52 = vld [vmem:[%s3 + $0x1c] sm:$0xf]
  %v53 = vld [vmem:[%s3 + $0x20] sm:$0xf]
  %v54 = vld [vmem:[%s4] sm:$0xff]
  %v55 = vld [vmem:[%s4 + $0x8] sm:$0xff]
  %v56 = vld [vmem:[%s4 + $0x10] sm:$0xff]
  %v57 = vld [vmem:[%s4 + $0x18] sm:$0xff]
  %v58 = vld [vmem:[%s5] sm:$0xff]
  %v59 = vld [vmem:[%s5 + $0x8] sm:$0xff]
  %v60 = vld [vmem:[%s5 + $0x10] sm:$0xff]
  %v61 = vld [vmem:[%s5 + $0x18] sm:$0xff]
  %v62 = vld [vmem:[%s5 + $0x20] sm:$0xff]
  %v63 = vld [vmem:[%s5 + $0x28] sm:$0xff]
  %v64 = vld [vmem:[%s5 + $0x30] sm:$0xff]
  %v65 = vld [vmem:[%s5 + $0x38] sm:$0xff]
  %v66 = vld [vmem:[%s5 + $0x40] sm:$0xff]
  %v67 = vld [vmem:[%s5 + $0x48] sm:$0xff]
  %v68 = vld [vmem:[%s5 + $0x50] sm:$0xff]
  %v69 = vld [vmem:[%s5 + $0x58] sm:$0xff]
  %v70 = vld [vmem:[%s5 + $0x60] sm:$0xff]
  %v71 = vld [vmem:[%s5 + $0x68] sm:$0xff]
  %v72 = vld [vmem:[%s5 + $0x70] sm:$0xff]
  %v73 = vld [vmem:[%s5 + $0x78] sm:$0xff]
  %v74 = vld [vmem:[%s5 + $0x80] sm:$0xff]
  %v75 = vld [vmem:[%s5 + $0x88] sm:$0xff]
  %v76 = vld [vmem:[%s5 + $0x90] sm:$0xff]
  %v77 = vld [vmem:[%s5 + $0x98] sm:$0xff]
  %v78 = vld [vmem:[%s5 + $0xa0] sm:$0xff]
  %v79 = vld [vmem:[%s5 + $0xa8] sm:$0xff]
  %v80 = vld [vmem:[%s5 + $0xb0] sm:$0xff]
  %v81 = vld [vmem:[%s5 + $0xb8] sm:$0xff]
  %v82 = vld [vmem:[%s5 + $0xc0] sm:$0xff]
  %v83 = vld [vmem:[%s5 + $0xc8] sm:$0xff]
  %v84 = vld [vmem:[%s5 + $0xd0] sm:$0xff]
  %v85 = vld [vmem:[%s5 + $0xd8] sm:$0xff]
  %v86 = vld [vmem:[%s5 + $0xe0] sm:$0xff]
  %v87 = vld [vmem:[%s5 + $0xe8] sm:$0xff]
  %v88 = vld [vmem:[%s5 + $0xf0] sm:$0xff]
  %v89 = vld [vmem:[%s5 + $0xf8] sm:$0xff]
  %v90 = vld [vmem:[%s6] sm:$0x3]
  %v91 = vpack.c.bf16 %v27, %v27
  %v93 = vperm.slane %v44, 0
  %v94 = vperm.slane %v44, 1
  %v113 = vunpack.c.l.b16 %v28
  %v114 = vunpack.c.h.b16 %v28
  %v115 = vunpack.c.l.b16 %v29
  %v116 = vunpack.c.h.b16 %v29
  %v117 = vunpack.c.l.b16 %v30
  %v118 = vunpack.c.h.b16 %v30
  %v119 = vunpack.c.l.b16 %v31
  %v120 = vunpack.c.h.b16 %v31
  %v121 = vunpack.c.l.b16 %v32
  %v122 = vunpack.c.h.b16 %v32
  %v123 = vunpack.c.l.b16 %v33
  %v124 = vunpack.c.h.b16 %v33
  %v125 = vunpack.c.l.b16 %v34
  %v126 = vunpack.c.h.b16 %v34
  %v127 = vunpack.c.l.b16 %v35
  %v128 = vunpack.c.h.b16 %v35
  %v129 = vunpack.c.l.b16 %v36
  %v130 = vunpack.c.h.b16 %v36
  %v131 = vunpack.c.l.b16 %v37
  %v132 = vunpack.c.h.b16 %v37
  %v133 = vunpack.c.l.b16 %v38
  %v134 = vunpack.c.h.b16 %v38
  %v135 = vunpack.c.l.b16 %v39
  %v136 = vunpack.c.h.b16 %v39
  %v137 = vunpack.c.l.b16 %v40
  %v138 = vunpack.c.h.b16 %v40
  %v139 = vunpack.c.l.b16 %v41
  %v140 = vunpack.c.h.b16 %v41
  %v141 = vunpack.c.l.b16 %v42
  %v142 = vunpack.c.h.b16 %v42
  %v143 = vunpack.c.l.b16 %v43
  %v144 = vunpack.c.h.b16 %v43
  %v145 = vpack.c.b16 %v115, %v113
  %v146 = vpack.c.b16 %v116, %v114
  %v147 = vpack.c.b16 %v119, %v117
  %v148 = vpack.c.b16 %v120, %v118
  %v149 = vpack.c.b16 %v123, %v121
  %v150 = vpack.c.b16 %v124, %v122
  %v151 = vpack.c.b16 %v127, %v125
  %v152 = vpack.c.b16 %v128, %v126
  %v153 = vpack.c.b16 %v131, %v129
  %v154 = vpack.c.b16 %v132, %v130
  %v155 = vpack.c.b16 %v135, %v133
  %v156 = vpack.c.b16 %v136, %v134
  %v157 = vpack.c.b16 %v139, %v137
  %v158 = vpack.c.b16 %v140, %v138
  %v159 = vpack.c.b16 %v143, %v141
  %v160 = vpack.c.b16 %v144, %v142
  %177 = vmatpush.bf16.msra.mxu0 %v159
  %178 = vmatpush.bf16.msra.mxu0 %v157
  %179 = vmatpush.bf16.msra.mxu0 %v155
  %180 = vmatpush.bf16.msra.mxu0 %v153
  %181 = vmatpush.bf16.msra.mxu0 %v151
  %182 = vmatpush.bf16.msra.mxu0 %v149
  %183 = vmatpush.bf16.msra.mxu0 %v147
  %184 = vmatpush.bf16.msra.mxu0 %v145
  %185 = vmatmul.bf16.gmra.mxu0 %v91
  %v186 = vpop.f32.mrf.mxu0
  %v187 = vadd.f32 %v93, %v186
  %v188 = vpop.f32.mrf.mxu0
  %189 = vdwg.mxu0
  %190 = vmatpush.bf16.msra.mxu0 %v160
  %191 = vmatpush.bf16.msra.mxu0 %v158
  %192 = vmatpush.bf16.msra.mxu0 %v156
  %193 = vmatpush.bf16.msra.mxu0 %v154
  %194 = vmatpush.bf16.msra.mxu0 %v152
  %195 = vmatpush.bf16.msra.mxu0 %v150
  %196 = vmatpush.bf16.msra.mxu0 %v148
  %197 = vmatpush.bf16.msra.mxu0 %v146
  %198 = vmatmul.bf16.gmra.mxu0 %v91
  %v199 = vpop.f32.mrf.mxu0
  %v200 = vadd.f32 %v94, %v199
  %v201 = vpop.f32.mrf.mxu0
  %202 = vdwg.mxu0
  %v203 = vmax.f32 %v187, 0.0
  %v204 = vmax.f32 %v200, 0.0
  %v205 = vpack.c.bf16 %v203, %v203
  %v206 = vpack.c.bf16 %v204, %v204
  %v216 = vunpack.c.l.b16 %v45
  %v217 = vunpack.c.l.b16 %v46
  %v218 = vunpack.c.l.b16 %v47
  %v219 = vunpack.c.l.b16 %v48
  %v220 = vunpack.c.l.b16 %v49
  %v221 = vunpack.c.l.b16 %v50
  %v222 = vunpack.c.l.b16 %v51
  %v223 = vunpack.c.l.b16 %v52
  %v224 = vunpack.c.l.b16 %v53
  %v225 = vpack.c.b16 %v217, %v216
  %v226 = vpack.c.b16 %v219, %v218
  %v227 = vpack.c.b16 %v221, %v220
  %v228 = vpack.c.b16 %v223, %v222
  %v229 = vpack.c.b16 %v224, %v224
  %vm230 = vcmask 64512
  %v232 = vsel %vm230, %v225, 0
  %v235 = vsel %vm230, %v226, 0
  %v238 = vsel %vm230, %v227, 0
  %v241 = vsel %vm230, %v228, 0
  %v244 = vsel %vm230, %v229, 0
  %vm246 = vcmask 1043456
  %v248 = vsel %vm246, %v205, 0
  %v251 = vsel %vm246, %v206, 0
  %253 = vmatpush.bf16.msra.mxu0 0
  %254 = vmatpush.bf16.msra.mxu0 0
  %255 = vmatpush.bf16.msra.mxu0 0
  %256 = vmatpush.bf16.msra.mxu0 0
  %257 = vmatpush.bf16.msra.mxu0 0
  %258 = vmatpush.bf16.msra.mxu0 0
  %259 = vmatpush.bf16.msra.mxu0 0
  %260 = vmatpush.bf16.msra.mxu0 %v248
  %261 = vmatmul.bf16.gmra.mxu0 %v232
  %v262 = vpop.f32.mrf.mxu0
  %v263 = vadd.f32 0.0, %v262
  %v264 = vpop.f32.mrf.mxu0
  %v265 = vadd.f32 0.0, %v264
  %266 = vmatmul.bf16.gmra.mxu0 %v235
  %v267 = vpop.f32.mrf.mxu0
  %v268 = vadd.f32 0.0, %v267
  %v269 = vpop.f32.mrf.mxu0
  %v270 = vadd.f32 0.0, %v269
  %271 = vmatmul.bf16.gmra.mxu0 %v238
  %v272 = vpop.f32.mrf.mxu0
  %v273 = vadd.f32 0.0, %v272
  %v274 = vpop.f32.mrf.mxu0
  %v275 = vadd.f32 0.0, %v274
  %276 = vmatmul.bf16.gmra.mxu0 %v241
  %v277 = vpop.f32.mrf.mxu0
  %v278 = vadd.f32 0.0, %v277
  %v279 = vpop.f32.mrf.mxu0
  %v280 = vadd.f32 0.0, %v279
  %281 = vmatmul.bf16.gmra.mxu0 %v244
  %v282 = vpop.f32.mrf.mxu0
  %v283 = vadd.f32 0.0, %v282
  %v284 = vpop.f32.mrf.mxu0
  %285 = vdwg.mxu0
  %286 = vmatpush.bf16.msra.mxu0 0
  %287 = vmatpush.bf16.msra.mxu0 0
  %288 = vmatpush.bf16.msra.mxu0 0
  %289 = vmatpush.bf16.msra.mxu0 0
  %290 = vmatpush.bf16.msra.mxu0 0
  %291 = vmatpush.bf16.msra.mxu0 0
  %292 = vmatpush.bf16.msra.mxu0 0
  %293 = vmatpush.bf16.msra.mxu0 %v251
  %294 = vmatmul.bf16.gmra.mxu0 %v232
  %v295 = vpop.f32.mrf.mxu0
  %v296 = vadd.f32 0.0, %v295
  %v297 = vpop.f32.mrf.mxu0
  %v298 = vadd.f32 0.0, %v297
  %299 = vmatmul.bf16.gmra.mxu0 %v235
  %v300 = vpop.f32.mrf.mxu0
  %v301 = vadd.f32 0.0, %v300
  %v302 = vpop.f32.mrf.mxu0
  %v303 = vadd.f32 0.0, %v302
  %304 = vmatmul.bf16.gmra.mxu0 %v238
  %v305 = vpop.f32.mrf.mxu0
  %v306 = vadd.f32 0.0, %v305
  %v307 = vpop.f32.mrf.mxu0
  %v308 = vadd.f32 0.0, %v307
  %309 = vmatmul.bf16.gmra.mxu0 %v241
  %v310 = vpop.f32.mrf.mxu0
  %v311 = vadd.f32 0.0, %v310
  %v312 = vpop.f32.mrf.mxu0
  %v313 = vadd.f32 0.0, %v312
  %314 = vmatmul.bf16.gmra.mxu0 %v244
  %v315 = vpop.f32.mrf.mxu0
  %v316 = vadd.f32 0.0, %v315
  %v317 = vpop.f32.mrf.mxu0
  %318 = vdwg.mxu0
  %v319 = vperm.slane %v54, 0
  %v320 = vperm.slane %v55, 0
  %v321 = vmul.f32 %v263, %v319
  %v322 = vmul.f32 %v296, %v320
  %v323 = vperm.slane %v54, 1
  %v324 = vperm.slane %v55, 1
  %v325 = vmul.f32 %v265, %v323
  %v326 = vmul.f32 %v298, %v324
  %v327 = vadd.f32 %v321, %v325
  %v328 = vadd.f32 %v322, %v326
  %v329 = vperm.slane %v54, 2
  %v330 = vperm.slane %v55, 2
  %v331 = vmul.f32 %v268, %v329
  %v332 = vmul.f32 %v301, %v330
  %v333 = vadd.f32 %v327, %v331
  %v334 = vadd.f32 %v328, %v332
  %v335 = vperm.slane %v54, 3
  %v336 = vperm.slane %v55, 3
  %v337 = vmul.f32 %v270, %v335
  %v338 = vmul.f32 %v303, %v336
  %v339 = vadd.f32 %v333, %v337
  %v340 = vadd.f32 %v334, %v338
  %v341 = vperm.slane %v54, 4
  %v342 = vperm.slane %v55, 4
  %v343 = vmul.f32 %v273, %v341
  %v344 = vmul.f32 %v306, %v342
  %v345 = vadd.f32 %v339, %v343
  %v346 = vadd.f32 %v340, %v344
  %v347 = vperm.slane %v54, 5
  %v348 = vperm.slane %v55, 5
  %v349 = vmul.f32 %v275, %v347
  %v350 = vmul.f32 %v308, %v348
  %v351 = vadd.f32 %v345, %v349
  %v352 = vadd.f32 %v346, %v350
  %v353 = vperm.slane %v54, 6
  %v354 = vperm.slane %v55, 6
  %v355 = vmul.f32 %v278, %v353
  %v356 = vmul.f32 %v311, %v354
  %v357 = vadd.f32 %v351, %v355
  %v358 = vadd.f32 %v352, %v356
  %v359 = vperm.slane %v54, 7
  %v360 = vperm.slane %v55, 7
  %v361 = vmul.f32 %v280, %v359
  %v362 = vmul.f32 %v313, %v360
  %v363 = vadd.f32 %v357, %v361
  %v364 = vadd.f32 %v358, %v362
  %v365 = vperm.slane %v56, 0
  %v366 = vperm.slane %v57, 0
  %v367 = vmul.f32 %v283, %v365
  %v368 = vmul.f32 %v316, %v366
  %v369 = vadd.f32 %v363, %v367
  %v370 = vadd.f32 %v364, %v368
  %v371 = vpack.c.bf16 %v369, %v369
  %v372 = vpack.c.bf16 %v370, %v370
  %v374 = vperm.slane %v90, 0
  %v375 = vperm.slane %v90, 1
  %v410 = vunpack.c.l.b16 %v58
  %v411 = vunpack.c.h.b16 %v58
  %v412 = vunpack.c.l.b16 %v59
  %v413 = vunpack.c.h.b16 %v59
  %v414 = vunpack.c.l.b16 %v60
  %v415 = vunpack.c.h.b16 %v60
  %v416 = vunpack.c.l.b16 %v61
  %v417 = vunpack.c.h.b16 %v61
  %v418 = vunpack.c.l.b16 %v62
  %v419 = vunpack.c.h.b16 %v62
  %v420 = vunpack.c.l.b16 %v63
  %v421 = vunpack.c.h.b16 %v63
  %v422 = vunpack.c.l.b16 %v64
  %v423 = vunpack.c.h.b16 %v64
  %v424 = vunpack.c.l.b16 %v65
  %v425 = vunpack.c.h.b16 %v65
  %v426 = vunpack.c.l.b16 %v66
  %v427 = vunpack.c.h.b16 %v66
  %v428 = vunpack.c.l.b16 %v67
  %v429 = vunpack.c.h.b16 %v67
  %v430 = vunpack.c.l.b16 %v68
  %v431 = vunpack.c.h.b16 %v68
  %v432 = vunpack.c.l.b16 %v69
  %v433 = vunpack.c.h.b16 %v69
  %v434 = vunpack.c.l.b16 %v70
  %v435 = vunpack.c.h.b16 %v70
  %v436 = vunpack.c.l.b16 %v71
  %v437 = vunpack.c.h.b16 %v71
  %v438 = vunpack.c.l.b16 %v72
  %v439 = vunpack.c.h.b16 %v72
  %v440 = vunpack.c.l.b16 %v73
  %v441 = vunpack.c.h.b16 %v73
  %v442 = vunpack.c.l.b16 %v74
  %v443 = vunpack.c.h.b16 %v74
  %v444 = vunpack.c.l.b16 %v75
  %v445 = vunpack.c.h.b16 %v75
  %v446 = vunpack.c.l.b16 %v76
  %v447 = vunpack.c.h.b16 %v76
  %v448 = vunpack.c.l.b16 %v77
  %v449 = vunpack.c.h.b16 %v77
  %v450 = vunpack.c.l.b16 %v78
  %v451 = vunpack.c.h.b16 %v78
  %v452 = vunpack.c.l.b16 %v79
  %v453 = vunpack.c.h.b16 %v79
  %v454 = vunpack.c.l.b16 %v80
  %v455 = vunpack.c.h.b16 %v80
  %v456 = vunpack.c.l.b16 %v81
  %v457 = vunpack.c.h.b16 %v81
  %v458 = vunpack.c.l.b16 %v82
  %v459 = vunpack.c.h.b16 %v82
  %v460 = vunpack.c.l.b16 %v83
  %v461 = vunpack.c.h.b16 %v83
  %v462 = vunpack.c.l.b16 %v84
  %v463 = vunpack.c.h.b16 %v84
  %v464 = vunpack.c.l.b16 %v85
  %v465 = vunpack.c.h.b16 %v85
  %v466 = vunpack.c.l.b16 %v86
  %v467 = vunpack.c.h.b16 %v86
  %v468 = vunpack.c.l.b16 %v87
  %v469 = vunpack.c.h.b16 %v87
  %v470 = vunpack.c.l.b16 %v88
  %v471 = vunpack.c.h.b16 %v88
  %v472 = vunpack.c.l.b16 %v89
  %v473 = vunpack.c.h.b16 %v89
  %v474 = vpack.c.b16 %v412, %v410
  %v475 = vpack.c.b16 %v413, %v411
  %v476 = vpack.c.b16 %v416, %v414
  %v477 = vpack.c.b16 %v417, %v415
  %v478 = vpack.c.b16 %v420, %v418
  %v479 = vpack.c.b16 %v421, %v419
  %v480 = vpack.c.b16 %v424, %v422
  %v481 = vpack.c.b16 %v425, %v423
  %v482 = vpack.c.b16 %v428, %v426
  %v483 = vpack.c.b16 %v429, %v427
  %v484 = vpack.c.b16 %v432, %v430
  %v485 = vpack.c.b16 %v433, %v431
  %v486 = vpack.c.b16 %v436, %v434
  %v487 = vpack.c.b16 %v437, %v435
  %v488 = vpack.c.b16 %v440, %v438
  %v489 = vpack.c.b16 %v441, %v439
  %v490 = vpack.c.b16 %v444, %v442
  %v491 = vpack.c.b16 %v445, %v443
  %v492 = vpack.c.b16 %v448, %v446
  %v493 = vpack.c.b16 %v449, %v447
  %v494 = vpack.c.b16 %v452, %v450
  %v495 = vpack.c.b16 %v453, %v451
  %v496 = vpack.c.b16 %v456, %v454
  %v497 = vpack.c.b16 %v457, %v455
  %v498 = vpack.c.b16 %v460, %v458
  %v499 = vpack.c.b16 %v461, %v459
  %v500 = vpack.c.b16 %v464, %v462
  %v501 = vpack.c.b16 %v465, %v463
  %v502 = vpack.c.b16 %v468, %v466
  %v503 = vpack.c.b16 %v469, %v467
  %v504 = vpack.c.b16 %v472, %v470
  %v505 = vpack.c.b16 %v473, %v471
  %538 = vmatpush.bf16.msra.mxu0 %v488
  %539 = vmatpush.bf16.msra.mxu0 %v486
  %540 = vmatpush.bf16.msra.mxu0 %v484
  %541 = vmatpush.bf16.msra.mxu0 %v482
  %542 = vmatpush.bf16.msra.mxu0 %v480
  %543 = vmatpush.bf16.msra.mxu0 %v478
  %544 = vmatpush.bf16.msra.mxu0 %v476
  %545 = vmatpush.bf16.msra.mxu0 %v474
  %546 = vmatmul.bf16.gmra.mxu0 %v371
  %v547 = vpop.f32.mrf.mxu0
  %v548 = vadd.f32 %v374, %v547
  %v549 = vpop.f32.mrf.mxu0
  %550 = vdwg.mxu0
  %551 = vmatpush.bf16.msra.mxu0 %v504
  %552 = vmatpush.bf16.msra.mxu0 %v502
  %553 = vmatpush.bf16.msra.mxu0 %v500
  %554 = vmatpush.bf16.msra.mxu0 %v498
  %555 = vmatpush.bf16.msra.mxu0 %v496
  %556 = vmatpush.bf16.msra.mxu0 %v494
  %557 = vmatpush.bf16.msra.mxu0 %v492
  %558 = vmatpush.bf16.msra.mxu0 %v490
  %559 = vmatmul.bf16.gmra.mxu0 %v372
  %v560 = vpop.f32.mrf.mxu0
  %v561 = vadd.f32 %v548, %v560
  %v562 = vpop.f32.mrf.mxu0
  %563 = vdwg.mxu0
  %564 = vmatpush.bf16.msra.mxu0 %v489
  %565 = vmatpush.bf16.msra.mxu0 %v487
  %566 = vmatpush.bf16.msra.mxu0 %v485
  %567 = vmatpush.bf16.msra.mxu0 %v483
  %568 = vmatpush.bf16.msra.mxu0 %v481
  %569 = vmatpush.bf16.msra.mxu0 %v479
  %570 = vmatpush.bf16.msra.mxu0 %v477
  %571 = vmatpush.bf16.msra.mxu0 %v475
  %572 = vmatmul.bf16.gmra.mxu0 %v371
  %v573 = vpop.f32.mrf.mxu0
  %v574 = vadd.f32 %v375, %v573
  %v575 = vpop.f32.mrf.mxu0
  %576 = vdwg.mxu0
  %577 = vmatpush.bf16.msra.mxu0 %v505
  %578 = vmatpush.bf16.msra.mxu0 %v503
  %579 = vmatpush.bf16.msra.mxu0 %v501
  %580 = vmatpush.bf16.msra.mxu0 %v499
  %581 = vmatpush.bf16.msra.mxu0 %v497
  %582 = vmatpush.bf16.msra.mxu0 %v495
  %583 = vmatpush.bf16.msra.mxu0 %v493
  %584 = vmatpush.bf16.msra.mxu0 %v491
  %585 = vmatmul.bf16.gmra.mxu0 %v372
  %v586 = vpop.f32.mrf.mxu0
  %v587 = vadd.f32 %v574, %v586
  %v588 = vpop.f32.mrf.mxu0
  %589 = vdwg.mxu0
  %v590 = vmax.f32 %v561, 0.0
  %v591 = vmax.f32 %v587, 0.0
  %592 = vst [vmem:[%s7] sm:$0xff] %v590
  %593 = vst [vmem:[%s7 + $0x8] sm:$0xff] %v591
  // Predicated region
  $region30: #{_lambda_.13} parent=0 // pred_check
    _
  $region31: #{_lambda_.13} parent=0 // pred_check_branch
    %595 = sbr.rel (0) target = $region33
  $region32: #{_lambda_.13} parent=0 // pred_region
    _
  $region33: #{_lambda_.13} parent=0 // pred_fallthru
    _
  // Predicated region
  $region34: #{_lambda_.13} parent=0 // pred_check
    _
  $region35: #{_lambda_.13} parent=0 // pred_check_branch
    %597 = sbr.rel (0) target = $region37
  $region36: #{_lambda_.13} parent=0 // pred_region
    _
  $region37: #{_lambda_.13} parent=0 // pred_fallthru
    _

// kernel: _lambda_.14
$region0: #{_lambda_.14}
  #allocation0 [shape = 'u32[]', space=smem, size = 0x4, offset = 0x4, fixed_abs, tag = 'smem constant byte address 0x4 - core index']
  #allocation1 [shape = 'u32[72,128]{1,0:T(1,128)}', space=vmem, size = 0x9000, scoped, tag = 'internal scratch']
  #allocation2 [shape = 'f32[8,256]{1,0:T(8,128)}', space=vmem, size = 0x2000, scoped, tag = 'scratch operand']
  %s0 = inlined_call_operand.vmem [shape: f32[8,256], index: 0, kind: input, shape index: {}]
  %s1 = inlined_call_operand.vmem [shape: bf16[72,8], index: 1, kind: input, shape index: {}]
  %s2 = inlined_call_operand.vmem [shape: bf16[3,256,256], index: 2, kind: input, shape index: {}]
  %s3 = inlined_call_operand.vmem [shape: f32[3,1,256], index: 3, kind: input, shape index: {}]
  %s4 = inlined_call_operand.vmem [shape: f32[3,16,256], index: 4, kind: input, shape index: {}]
  %s5 = inlined_call_operand.vmem [shape: bf16[3,256,256], index: 5, kind: input, shape index: {}]
  %s6 = inlined_call_operand.vmem [shape: f32[3,1,256], index: 6, kind: input, shape index: {}]
  %s7 = inlined_call_operand.vmem [shape: f32[8,256], index: 7, kind: output, shape index: {}]
  %s8 = sld [smem:[#allocation0]]
  $region69: #{_lambda_.14} parent=0
    _
  %s10 = ssub.s32 1, %s8
  %s11 = scalar_select 0, %s10, %s8
  loop: start=0, step=1, limit=5
  $region2: #{_lambda_.14} parent=0 // loop_pre_header
    _
  $region3: #{_lambda_.14} parent=0 // loop_header
    %s13 = sphi 0, %s17
    %p14 = scmp.ge.s32.totalorder %s13, 5
    %s21 = sphi 0, %s21
    %s23 = sphi 0, %s21
    %s24 = sphi 0, %s23
    %s38 = sphi 0, %s24
    %s42 = sphi 0, %s42
    %s44 = sphi 0, %s42
    %s45 = sphi 0, %s44
    %s59 = sphi 0, %s45
    %s65 = sphi 0, %s67
    %s68 = sphi 0, %s65
    %s69 = sphi 0, %s68
    %s85 = sphi 0, %s69
    %s91 = sphi 0, %s93
    %s94 = sphi 0, %s91
    %s95 = sphi 0, %s94
    %s111 = sphi 0, %s95
    %s117 = sphi 0, %s119
    %s120 = sphi 0, %s117
    %s121 = sphi 0, %s120
    %s137 = sphi 0, %s121
    %s143 = sphi 0, %s145
    %s146 = sphi 0, %s143
    %s147 = sphi 0, %s146
    %s163 = sphi 0, %s147
    %s169 = sphi 0, %s171
    %s172 = sphi 0, %s169
    %s173 = sphi 0, %s172
    %s189 = sphi 0, %s173
    %s193 = sphi 0, %s193
    %s195 = sphi 0, %s193
    %s196 = sphi 0, %s195
    %s210 = sphi 0, %s196
  $region4: #{_lambda_.14} parent=0 // loop_header_branch
    %16 = sbr.rel (%p14) target = $region8
  $region5: #{_lambda_.14} parent=0 // loop_body
    %s18 = ssub.s32 %s13, 1
    %s19 = ssub.s32 %s13, 2
    %s20 = sadd.s32 %s13, 1
    %s22 = sadd.s32 %s21, 1
    %p25 = scmp.eq.s32.totalorder %s13, 2
    %p26 = scmp.ne.s32.totalorder %s21, %s23
    %p27 = scmp.eq.s32.totalorder %s13, 0
    %p28 = por %p26, %p27
    %p29 = scmp.ne.s32.totalorder %s21, %s23
    %p30 = scmp.eq.s32.totalorder %s18, 2
    %p31 = por %p29, %p30
    %p32 = scmp.ne.s32.totalorder %s23, %s24
    %p33 = scmp.eq.s32.totalorder %s18, 0
    %p34 = por %p32, %p33
    %p35 = scmp.ne.s32.totalorder %s23, %s24
    %p36 = scmp.eq.s32.totalorder %s19, 2
    %p37 = por %p35, %p36
    %p39 = scmp.ne.s32.totalorder %s24, %s38
    %p40 = scmp.eq.s32.totalorder %s19, 0
    %p41 = por %p39, %p40
    %s43 = sadd.s32 %s42, 1
    %p46 = scmp.eq.s32.totalorder %s13, 2
    %p47 = scmp.ne.s32.totalorder %s42, %s44
    %p48 = scmp.eq.s32.totalorder %s13, 0
    %p49 = por %p47, %p48
    %p50 = scmp.ne.s32.totalorder %s42, %s44
    %p51 = scmp.eq.s32.totalorder %s18, 2
    %p52 = por %p50, %p51
    %p53 = scmp.ne.s32.totalorder %s44, %s45
    %p54 = scmp.eq.s32.totalorder %s18, 0
    %p55 = por %p53, %p54
    %p56 = scmp.ne.s32.totalorder %s44, %s45
    %p57 = scmp.eq.s32.totalorder %s19, 2
    %p58 = por %p56, %p57
    %p60 = scmp.ne.s32.totalorder %s45, %s59
    %p61 = scmp.eq.s32.totalorder %s19, 0
    %p62 = por %p60, %p61
    %s63 = ssub.s32 %s13, %s20
    %p64 = scmp.eq.s32.totalorder %s63, 0
    %s66 = sadd.s32 %s65, 1
    %s67 = scalar_select %p64, %s65, %s66
    %p70 = pneg %p64
    %p71 = scmp.eq.s32.totalorder %s13, 2
    %p72 = por %p70, %p71
    %p73 = scmp.ne.s32.totalorder %s65, %s68
    %p74 = scmp.eq.s32.totalorder %s13, 0
    %p75 = por %p73, %p74
    %p76 = scmp.ne.s32.totalorder %s65, %s68
    %p77 = scmp.eq.s32.totalorder %s18, 2
    %p78 = por %p76, %p77
    %p79 = scmp.ne.s32.totalorder %s68, %s69
    %p80 = scmp.eq.s32.totalorder %s18, 0
    %p81 = por %p79, %p80
    %p82 = scmp.ne.s32.totalorder %s68, %s69
    %p83 = scmp.eq.s32.totalorder %s19, 2
    %p84 = por %p82, %p83
    %p86 = scmp.ne.s32.totalorder %s69, %s85
    %p87 = scmp.eq.s32.totalorder %s19, 0
    %p88 = por %p86, %p87
    %s89 = ssub.s32 %s13, %s20
    %p90 = scmp.eq.s32.totalorder %s89, 0
    %s92 = sadd.s32 %s91, 1
    %s93 = scalar_select %p90, %s91, %s92
    %p96 = pneg %p90
    %p97 = scmp.eq.s32.totalorder %s13, 2
    %p98 = por %p96, %p97
    %p99 = scmp.ne.s32.totalorder %s91, %s94
    %p100 = scmp.eq.s32.totalorder %s13, 0
    %p101 = por %p99, %p100
    %p102 = scmp.ne.s32.totalorder %s91, %s94
    %p103 = scmp.eq.s32.totalorder %s18, 2
    %p104 = por %p102, %p103
    %p105 = scmp.ne.s32.totalorder %s94, %s95
    %p106 = scmp.eq.s32.totalorder %s18, 0
    %p107 = por %p105, %p106
    %p108 = scmp.ne.s32.totalorder %s94, %s95
    %p109 = scmp.eq.s32.totalorder %s19, 2
    %p110 = por %p108, %p109
    %p112 = scmp.ne.s32.totalorder %s95, %s111
    %p113 = scmp.eq.s32.totalorder %s19, 0
    %p114 = por %p112, %p113
    %s115 = ssub.s32 %s13, %s20
    %p116 = scmp.eq.s32.totalorder %s115, 0
    %s118 = sadd.s32 %s117, 1
    %s119 = scalar_select %p116, %s117, %s118
    %p122 = pneg %p116
    %p123 = scmp.eq.s32.totalorder %s13, 2
    %p124 = por %p122, %p123
    %p125 = scmp.ne.s32.totalorder %s117, %s120
    %p126 = scmp.eq.s32.totalorder %s13, 0
    %p127 = por %p125, %p126
    %p128 = scmp.ne.s32.totalorder %s117, %s120
    %p129 = scmp.eq.s32.totalorder %s18, 2
    %p130 = por %p128, %p129
    %p131 = scmp.ne.s32.totalorder %s120, %s121
    %p132 = scmp.eq.s32.totalorder %s18, 0
    %p133 = por %p131, %p132
    %p134 = scmp.ne.s32.totalorder %s120, %s121
    %p135 = scmp.eq.s32.totalorder %s19, 2
    %p136 = por %p134, %p135
    %p138 = scmp.ne.s32.totalorder %s121, %s137
    %p139 = scmp.eq.s32.totalorder %s19, 0
    %p140 = por %p138, %p139
    %s141 = ssub.s32 %s13, %s20
    %p142 = scmp.eq.s32.totalorder %s141, 0
    %s144 = sadd.s32 %s143, 1
    %s145 = scalar_select %p142, %s143, %s144
    %p148 = pneg %p142
    %p149 = scmp.eq.s32.totalorder %s13, 2
    %p150 = por %p148, %p149
    %p151 = scmp.ne.s32.totalorder %s143, %s146
    %p152 = scmp.eq.s32.totalorder %s13, 0
    %p153 = por %p151, %p152
    %p154 = scmp.ne.s32.totalorder %s143, %s146
    %p155 = scmp.eq.s32.totalorder %s18, 2
    %p156 = por %p154, %p155
    %p157 = scmp.ne.s32.totalorder %s146, %s147
    %p158 = scmp.eq.s32.totalorder %s18, 0
    %p159 = por %p157, %p158
    %p160 = scmp.ne.s32.totalorder %s146, %s147
    %p161 = scmp.eq.s32.totalorder %s19, 2
    %p162 = por %p160, %p161
    %p164 = scmp.ne.s32.totalorder %s147, %s163
    %p165 = scmp.eq.s32.totalorder %s19, 0
    %p166 = por %p164, %p165
    %s167 = ssub.s32 %s13, %s20
    %p168 = scmp.eq.s32.totalorder %s167, 0
    %s170 = sadd.s32 %s169, 1
    %s171 = scalar_select %p168, %s169, %s170
    %p174 = pneg %p168
    %p175 = scmp.eq.s32.totalorder %s13, 2
    %p176 = por %p174, %p175
    %p177 = scmp.ne.s32.totalorder %s169, %s172
    %p178 = scmp.eq.s32.totalorder %s13, 0
    %p179 = por %p177, %p178
    %p180 = scmp.ne.s32.totalorder %s169, %s172
    %p181 = scmp.eq.s32.totalorder %s18, 2
    %p182 = por %p180, %p181
    %p183 = scmp.ne.s32.totalorder %s172, %s173
    %p184 = scmp.eq.s32.totalorder %s18, 0
    %p185 = por %p183, %p184
    %p186 = scmp.ne.s32.totalorder %s172, %s173
    %p187 = scmp.eq.s32.totalorder %s19, 2
    %p188 = por %p186, %p187
    %p190 = scmp.ne.s32.totalorder %s173, %s189
    %p191 = scmp.eq.s32.totalorder %s19, 0
    %p192 = por %p190, %p191
    %s194 = sadd.s32 %s193, 1
    %p197 = scmp.eq.s32.totalorder %s13, 2
    %p198 = scmp.ne.s32.totalorder %s193, %s195
    %p199 = scmp.eq.s32.totalorder %s13, 0
    %p200 = por %p198, %p199
    %p201 = scmp.ne.s32.totalorder %s193, %s195
    %p202 = scmp.eq.s32.totalorder %s18, 2
    %p203 = por %p201, %p202
    %p204 = scmp.ne.s32.totalorder %s195, %s196
    %p205 = scmp.eq.s32.totalorder %s18, 0
    %p206 = por %p204, %p205
    %p207 = scmp.ne.s32.totalorder %s195, %s196
    %p208 = scmp.eq.s32.totalorder %s19, 2
    %p209 = por %p207, %p208
    %p211 = scmp.ne.s32.totalorder %s196, %s210
    %p212 = scmp.eq.s32.totalorder %s19, 0
    %p213 = por %p211, %p212
    %p214 = scmp.le.s32.totalorder 1, %s13
    %p215 = scmp.lt.s32.totalorder %s13, 4
    %p216 = pnand %p214, %p215
    %p217 = pneg %p216
    // Predicated region
    $region9: #{_lambda_.14} parent=5 // pred_check
      _
    $region10: #{_lambda_.14} parent=5 // pred_check_branch
      %219 = sbr.rel (%p216) target = $region12
    $region11: #{_lambda_.14} parent=5 // pred_region
      %s220 = ssub.s32 %s13, 1
      // Predicated region
      $region13: #{_lambda_.14} parent=11 // pred_check
        %p221 = pneg %p34
      $region14: #{_lambda_.14} parent=11 // pred_check_branch
        %223 = sbr.rel (%p221) target = $region16
      $region15: #{_lambda_.14} parent=11 // pred_region
        _
      $region16: #{_lambda_.14} parent=11 // pred_fallthru
        _
      // Predicated region
      $region17: #{_lambda_.14} parent=11 // pred_check
        %p224 = pneg %p55
      $region18: #{_lambda_.14} parent=11 // pred_check_branch
        %226 = sbr.rel (%p224) target = $region20
      $region19: #{_lambda_.14} parent=11 // pred_region
        _
      $region20: #{_lambda_.14} parent=11 // pred_fallthru
        _
    $region12: #{_lambda_.14} parent=5 // pred_fallthru
      _
    %p227 = scmp.lt.s32.totalorder %s13, 3
    // Predicated region
    $region21: #{_lambda_.14} parent=5 // pred_check
      %p228 = pneg %p227
    $region22: #{_lambda_.14} parent=5 // pred_check_branch
      %230 = sbr.rel (%p228) target = $region24
    $region23: #{_lambda_.14} parent=5 // pred_region
      // Predicated region
      $region25: #{_lambda_.14} parent=23 // pred_check
        %p231 = pneg %p75
      $region26: #{_lambda_.14} parent=23 // pred_check_branch
        %233 = sbr.rel (%p231) target = $region28
      $region27: #{_lambda_.14} parent=23 // pred_region
        %p234 = scmp.lt.s32.totalorder %s13, 2
        %s235 = scalar_select %p234, %s13, 2
        %s236 = smul.addr %s235, 64
        %s237 = smul.addr %s236, 4
        %s238 = scalar_lea.vmem %s2, %s237
      $region28: #{_lambda_.14} parent=23 // pred_fallthru
        _
      // Predicated region
      $region29: #{_lambda_.14} parent=23 // pred_check
        %p239 = pneg %p101
      $region30: #{_lambda_.14} parent=23 // pred_check_branch
        %241 = sbr.rel (%p239) target = $region32
      $region31: #{_lambda_.14} parent=23 // pred_region
        %p242 = scmp.lt.s32.totalorder %s13, 2
        %s243 = scalar_select %p242, %s13, 2
        %s244 = smul.addr %s243, 2
        %s245 = scalar_lea.vmem %s3, %s244
      $region32: #{_lambda_.14} parent=23 // pred_fallthru
        _
      // Predicated region
      $region33: #{_lambda_.14} parent=23 // pred_check
        %p246 = pneg %p127
      $region34: #{_lambda_.14} parent=23 // pred_check_branch
        %248 = sbr.rel (%p246) target = $region36
      $region35: #{_lambda_.14} parent=23 // pred_region
        %p249 = scmp.lt.s32.totalorder %s13, 2
        %s250 = scalar_select %p249, %s13, 2
        %s251 = smul.addr %s250, 4
        %s252 = smul.addr %s251, 8
        %s253 = scalar_lea.vmem %s4, %s252
      $region36: #{_lambda_.14} parent=23 // pred_fallthru
        _
      // Predicated region
      $region37: #{_lambda_.14} parent=23 // pred_check
        %p254 = pneg %p153
      $region38: #{_lambda_.14} parent=23 // pred_check_branch
        %256 = sbr.rel (%p254) target = $region40
      $region39: #{_lambda_.14} parent=23 // pred_region
        %p257 = scmp.lt.s32.totalorder %s13, 2
        %s258 = scalar_select %p257, %s13, 2
        %s259 = smul.addr %s258, 64
        %s260 = smul.addr %s259, 4
        %s261 = scalar_lea.vmem %s5, %s260
      $region40: #{_lambda_.14} parent=23 // pred_fallthru
        _
      // Predicated region
      $region41: #{_lambda_.14} parent=23 // pred_check
        %p262 = pneg %p179
      $region42: #{_lambda_.14} parent=23 // pred_check_branch
        %264 = sbr.rel (%p262) target = $region44
      $region43: #{_lambda_.14} parent=23 // pred_region
        %p265 = scmp.lt.s32.totalorder %s13, 2
        %s266 = scalar_select %p265, %s13, 2
        %s267 = smul.addr %s266, 2
        %s268 = scalar_lea.vmem %s6, %s267
      $region44: #{_lambda_.14} parent=23 // pred_fallthru
        _
    $region24: #{_lambda_.14} parent=5 // pred_fallthru
      _
    %p269 = scmp.le.s32.totalorder 1, %s13
    %p270 = scmp.lt.s32.totalorder %s13, 4
    %p271 = pnand %p269, %p270
    %p272 = pneg %p271
    // Predicated region
    $region45: #{_lambda_.14} parent=5 // pred_check
      _
    $region46: #{_lambda_.14} parent=5 // pred_check_branch
      %274 = sbr.rel (%p271) target = $region48
    $region47: #{_lambda_.14} parent=5 // pred_region
      %s275 = ssub.s32 %s13, 1
      %p276 = pneg %p34
      %p277 = pneg %p31
      %p278 = pneg %p55
      %p279 = pneg %p52
      %p280 = scmp.lt.s32.totalorder %s18, 2
      %s281 = scalar_select %p280, %s18, 2
      %s282 = smul.addr %s281, 64
      %s283 = smul.addr %s282, 4
      %s284 = scalar_lea.vmem %s2, %s283
      %p285 = pneg %p81
      %p286 = pneg %p78
      %p287 = scmp.lt.s32.totalorder %s18, 2
      %s288 = scalar_select %p287, %s18, 2
      %s289 = smul.addr %s288, 2
      %s290 = scalar_lea.vmem %s3, %s289
      %p291 = pneg %p107
      %p292 = pneg %p104
      %p293 = scmp.lt.s32.totalorder %s18, 2
      %s294 = scalar_select %p293, %s18, 2
      %s295 = smul.addr %s294, 4
      %s296 = smul.addr %s295, 8
      %s297 = scalar_lea.vmem %s4, %s296
      %p298 = pneg %p133
      %p299 = pneg %p130
      %p300 = scmp.lt.s32.totalorder %s18, 2
      %s301 = scalar_select %p300, %s18, 2
      %s302 = smul.addr %s301, 64
      %s303 = smul.addr %s302, 4
      %s304 = scalar_lea.vmem %s5, %s303
      %p305 = pneg %p159
      %p306 = pneg %p156
      %p307 = scmp.lt.s32.totalorder %s18, 2
      %s308 = scalar_select %p307, %s18, 2
      %s309 = smul.addr %s308, 2
      %s310 = scalar_lea.vmem %s6, %s309
      %p311 = pneg %p185
      %p312 = pneg %p182
      %p313 = pneg %p206
      %p314 = pneg %p203
      %p315 = scmp.lt.s32.totalorder %s18, 2
      %s316 = scalar_select %p315, %s18, 2
      %s317 = smul.addr %s316, 64
      %s318 = smul.addr %s317, 4
      %s319 = scalar_lea.vmem %s2, %s318
      %p320 = scmp.lt.s32.totalorder %s18, 2
      %s321 = scalar_select %p320, %s18, 2
      %s322 = smul.addr %s321, 2
      %s323 = scalar_lea.vmem %s3, %s322
      %p324 = scmp.lt.s32.totalorder %s18, 2
      %s325 = scalar_select %p324, %s18, 2
      %s326 = smul.addr %s325, 4
      %s327 = smul.addr %s326, 8
      %s328 = scalar_lea.vmem %s4, %s327
      %p329 = scmp.lt.s32.totalorder %s18, 2
      %s330 = scalar_select %p329, %s18, 2
      %s331 = smul.addr %s330, 64
      %s332 = smul.addr %s331, 4
      %s333 = scalar_lea.vmem %s5, %s332
      %p334 = scmp.lt.s32.totalorder %s18, 2
      %s335 = scalar_select %p334, %s18, 2
      %s336 = smul.addr %s335, 2
      %s337 = scalar_lea.vmem %s6, %s336
      %p339 = scmp.eq.s32.totalorder %s18, 0
      // Predicated region
      $region49: #{_lambda_.14} parent=47 // pred_check
        %p340 = pneg %p339
      $region50: #{_lambda_.14} parent=47 // pred_check_branch
        %342 = sbr.rel (%p340) target = $region52
      $region51: #{_lambda_.14} parent=47 // pred_region
        %v343 = vld [vmem:[%s0] sm:$0xff]
        %v344 = vld [vmem:[%s0 + $0x8] sm:$0xff]
        %345 = vst [vmem:[#allocation2] sm:$0xff] %v343
        %346 = vst [vmem:[#allocation2 + $0x8] sm:$0xff] %v344
      $region52: #{_lambda_.14} parent=47 // pred_fallthru
        _
      %v347 = vld [vmem:[#allocation2] sm:$0xff]
      %v348 = vld [vmem:[#allocation2 + $0x8] sm:$0xff]
      %v349 = vld [vmem:[%s319] sm:$0xff]
      %v350 = vld [vmem:[%s319 + $0x8] sm:$0xff]
      %v351 = vld [vmem:[%s319 + $0x10] sm:$0xff]
      %v352 = vld [vmem:[%s319 + $0x18] sm:$0xff]
      %v353 = vld [vmem:[%s319 + $0x20] sm:$0xff]
      %v354 = vld [vmem:[%s319 + $0x28] sm:$0xff]
      %v355 = vld [vmem:[%s319 + $0x30] sm:$0xff]
      %v356 = vld [vmem:[%s319 + $0x38] sm:$0xff]
      %v357 = vld [vmem:[%s319 + $0x40] sm:$0xff]
      %v358 = vld [vmem:[%s319 + $0x48] sm:$0xff]
      %v359 = vld [vmem:[%s319 + $0x50] sm:$0xff]
      %v360 = vld [vmem:[%s319 + $0x58] sm:$0xff]
      %v361 = vld [vmem:[%s319 + $0x60] sm:$0xff]
      %v362 = vld [vmem:[%s319 + $0x68] sm:$0xff]
      %v363 = vld [vmem:[%s319 + $0x70] sm:$0xff]
      %v364 = vld [vmem:[%s319 + $0x78] sm:$0xff]
      %v365 = vld [vmem:[%s319 + $0x80] sm:$0xff]
      %v366 = vld [vmem:[%s319 + $0x88] sm:$0xff]
      %v367 = vld [vmem:[%s319 + $0x90] sm:$0xff]
      %v368 = vld [vmem:[%s319 + $0x98] sm:$0xff]
      %v369 = vld [vmem:[%s319 + $0xa0] sm:$0xff]
      %v370 = vld [vmem:[%s319 + $0xa8] sm:$0xff]
      %v371 = vld [vmem:[%s319 + $0xb0] sm:$0xff]
      %v372 = vld [vmem:[%s319 + $0xb8] sm:$0xff]
      %v373 = vld [vmem:[%s319 + $0xc0] sm:$0xff]
      %v374 = vld [vmem:[%s319 + $0xc8] sm:$0xff]
      %v375 = vld [vmem:[%s319 + $0xd0] sm:$0xff]
      %v376 = vld [vmem:[%s319 + $0xd8] sm:$0xff]
      %v377 = vld [vmem:[%s319 + $0xe0] sm:$0xff]
      %v378 = vld [vmem:[%s319 + $0xe8] sm:$0xff]
      %v379 = vld [vmem:[%s319 + $0xf0] sm:$0xff]
      %v380 = vld [vmem:[%s319 + $0xf8] sm:$0xff]
      %v381 = vld [vmem:[%s323] sm:$0x3]
      %v382 = vld [vmem:[%s1] sm:$0xf]
      %v383 = vld [vmem:[%s1 + $0x4] sm:$0xf]
      %v384 = vld [vmem:[%s1 + $0x8] sm:$0xf]
      %v385 = vld [vmem:[%s1 + $0xc] sm:$0xf]
      %v386 = vld [vmem:[%s1 + $0x10] sm:$0xf]
      %v387 = vld [vmem:[%s1 + $0x14] sm:$0xf]
      %v388 = vld [vmem:[%s1 + $0x18] sm:$0xf]
      %v389 = vld [vmem:[%s1 + $0x1c] sm:$0xf]
      %v390 = vld [vmem:[%s1 + $0x20] sm:$0xf]
      %v391 = vld [vmem:[%s328] sm:$0xff]
      %v392 = vld [vmem:[%s328 + $0x8] sm:$0xff]
      %v393 = vld [vmem:[%s328 + $0x10] sm:$0xff]
      %v394 = vld [vmem:[%s328 + $0x18] sm:$0xff]
      %v395 = vld [vmem:[%s333] sm:$0xff]
      %v396 = vld [vmem:[%s333 + $0x8] sm:$0xff]
      %v397 = vld [vmem:[%s333 + $0x10] sm:$0xff]
      %v398 = vld [vmem:[%s333 + $0x18] sm:$0xff]
      %v399 = vld [vmem:[%s333 + $0x20] sm:$0xff]
      %v400 = vld [vmem:[%s333 + $0x28] sm:$0xff]
      %v401 = vld [vmem:[%s333 + $0x30] sm:$0xff]
      %v402 = vld [vmem:[%s333 + $0x38] sm:$0xff]
      %v403 = vld [vmem:[%s333 + $0x40] sm:$0xff]
      %v404 = vld [vmem:[%s333 + $0x48] sm:$0xff]
      %v405 = vld [vmem:[%s333 + $0x50] sm:$0xff]
      %v406 = vld [vmem:[%s333 + $0x58] sm:$0xff]
      %v407 = vld [vmem:[%s333 + $0x60] sm:$0xff]
      %v408 = vld [vmem:[%s333 + $0x68] sm:$0xff]
      %v409 = vld [vmem:[%s333 + $0x70] sm:$0xff]
      %v410 = vld [vmem:[%s333 + $0x78] sm:$0xff]
      %v411 = vld [vmem:[%s333 + $0x80] sm:$0xff]
      %v412 = vld [vmem:[%s333 + $0x88] sm:$0xff]
      %v413 = vld [vmem:[%s333 + $0x90] sm:$0xff]
      %v414 = vld [vmem:[%s333 + $0x98] sm:$0xff]
      %v415 = vld [vmem:[%s333 + $0xa0] sm:$0xff]
      %v416 = vld [vmem:[%s333 + $0xa8] sm:$0xff]
      %v417 = vld [vmem:[%s333 + $0xb0] sm:$0xff]
      %v418 = vld [vmem:[%s333 + $0xb8] sm:$0xff]
      %v419 = vld [vmem:[%s333 + $0xc0] sm:$0xff]
      %v420 = vld [vmem:[%s333 + $0xc8] sm:$0xff]
      %v421 = vld [vmem:[%s333 + $0xd0] sm:$0xff]
      %v422 = vld [vmem:[%s333 + $0xd8] sm:$0xff]
      %v423 = vld [vmem:[%s333 + $0xe0] sm:$0xff]
      %v424 = vld [vmem:[%s333 + $0xe8] sm:$0xff]
      %v425 = vld [vmem:[%s333 + $0xf0] sm:$0xff]
      %v426 = vld [vmem:[%s333 + $0xf8] sm:$0xff]
      %v427 = vld [vmem:[%s337] sm:$0x3]
      %v428 = vpack.c.bf16 %v347, %v347
      %v429 = vpack.c.bf16 %v348, %v348
      %v431 = vperm.slane %v381, 0
      %v432 = vperm.slane %v381, 1
      %v467 = vunpack.c.l.b16 %v349
      %v468 = vunpack.c.h.b16 %v349
      %v469 = vunpack.c.l.b16 %v350
      %v470 = vunpack.c.h.b16 %v350
      %v471 = vunpack.c.l.b16 %v351
      %v472 = vunpack.c.h.b16 %v351
      %v473 = vunpack.c.l.b16 %v352
      %v474 = vunpack.c.h.b16 %v352
      %v475 = vunpack.c.l.b16 %v353
      %v476 = vunpack.c.h.b16 %v353
      %v477 = vunpack.c.l.b16 %v354
      %v478 = vunpack.c.h.b16 %v354
      %v479 = vunpack.c.l.b16 %v355
      %v480 = vunpack.c.h.b16 %v355
      %v481 = vunpack.c.l.b16 %v356
      %v482 = vunpack.c.h.b16 %v356
      %v483 = vunpack.c.l.b16 %v357
      %v484 = vunpack.c.h.b16 %v357
      %v485 = vunpack.c.l.b16 %v358
      %v486 = vunpack.c.h.b16 %v358
      %v487 = vunpack.c.l.b16 %v359
      %v488 = vunpack.c.h.b16 %v359
      %v489 = vunpack.c.l.b16 %v360
      %v490 = vunpack.c.h.b16 %v360
      %v491 = vunpack.c.l.b16 %v361
      %v492 = vunpack.c.h.b16 %v361
      %v493 = vunpack.c.l.b16 %v362
      %v494 = vunpack.c.h.b16 %v362
      %v495 = vunpack.c.l.b16 %v363
      %v496 = vunpack.c.h.b16 %v363
      %v497 = vunpack.c.l.b16 %v364
      %v498 = vunpack.c.h.b16 %v364
      %v499 = vunpack.c.l.b16 %v365
      %v500 = vunpack.c.h.b16 %v365
      %v501 = vunpack.c.l.b16 %v366
      %v502 = vunpack.c.h.b16 %v366
      %v503 = vunpack.c.l.b16 %v367
      %v504 = vunpack.c.h.b16 %v367
      %v505 = vunpack.c.l.b16 %v368
      %v506 = vunpack.c.h.b16 %v368
      %v507 = vunpack.c.l.b16 %v369
      %v508 = vunpack.c.h.b16 %v369
      %v509 = vunpack.c.l.b16 %v370
      %v510 = vunpack.c.h.b16 %v370
      %v511 = vunpack.c.l.b16 %v371
      %v512 = vunpack.c.h.b16 %v371
      %v513 = vunpack.c.l.b16 %v372
      %v514 = vunpack.c.h.b16 %v372
      %v515 = vunpack.c.l.b16 %v373
      %v516 = vunpack.c.h.b16 %v373
      %v517 = vunpack.c.l.b16 %v374
      %v518 = vunpack.c.h.b16 %v374
      %v519 = vunpack.c.l.b16 %v375
      %v520 = vunpack.c.h.b16 %v375
      %v521 = vunpack.c.l.b16 %v376
      %v522 = vunpack.c.h.b16 %v376
      %v523 = vunpack.c.l.b16 %v377
      %v524 = vunpack.c.h.b16 %v377
      %v525 = vunpack.c.l.b16 %v378
      %v526 = vunpack.c.h.b16 %v378
      %v527 = vunpack.c.l.b16 %v379
      %v528 = vunpack.c.h.b16 %v379
      %v529 = vunpack.c.l.b16 %v380
      %v530 = vunpack.c.h.b16 %v380
      %v531 = vpack.c.b16 %v469, %v467
      %v532 = vpack.c.b16 %v470, %v468
      %v533 = vpack.c.b16 %v473, %v471
      %v534 = vpack.c.b16 %v474, %v472
      %v535 = vpack.c.b16 %v477, %v475
      %v536 = vpack.c.b16 %v478, %v476
      %v537 = vpack.c.b16 %v481, %v479
      %v538 = vpack.c.b16 %v482, %v480
      %v539 = vpack.c.b16 %v485, %v483
      %v540 = vpack.c.b16 %v486, %v484
      %v541 = vpack.c.b16 %v489, %v487
      %v542 = vpack.c.b16 %v490, %v488
      %v543 = vpack.c.b16 %v493, %v491
      %v544 = vpack.c.b16 %v494, %v492
      %v545 = vpack.c.b16 %v497, %v495
      %v546 = vpack.c.b16 %v498, %v496
      %v547 = vpack.c.b16 %v501, %v499
      %v548 = vpack.c.b16 %v502, %v500
      %v549 = vpack.c.b16 %v505, %v503
      %v550 = vpack.c.b16 %v506, %v504
      %v551 = vpack.c.b16 %v509, %v507
      %v552 = vpack.c.b16 %v510, %v508
      %v553 = vpack.c.b16 %v513, %v511
      %v554 = vpack.c.b16 %v514, %v512
      %v555 = vpack.c.b16 %v517, %v515
      %v556 = vpack.c.b16 %v518, %v516
      %v557 = vpack.c.b16 %v521, %v519
      %v558 = vpack.c.b16 %v522, %v520
      %v559 = vpack.c.b16 %v525, %v523
      %v560 = vpack.c.b16 %v526, %v524
      %v561 = vpack.c.b16 %v529, %v527
      %v562 = vpack.c.b16 %v530, %v528
      %595 = vmatpush.bf16.msra.mxu0 %v545
      %596 = vmatpush.bf16.msra.mxu0 %v543
      %597 = vmatpush.bf16.msra.mxu0 %v541
      %598 = vmatpush.bf16.msra.mxu0 %v539
      %599 = vmatpush.bf16.msra.mxu0 %v537
      %600 = vmatpush.bf16.msra.mxu0 %v535
      %601 = vmatpush.bf16.msra.mxu0 %v533
      %602 = vmatpush.bf16.msra.mxu0 %v531
      %603 = vmatmul.bf16.gmra.mxu0 %v428
      %v604 = vpop.f32.mrf.mxu0
      %v605 = vadd.f32 %v431, %v604
      %v606 = vpop.f32.mrf.mxu0
      %607 = vdwg.mxu0
      %608 = vmatpush.bf16.msra.mxu0 %v561
      %609 = vmatpush.bf16.msra.mxu0 %v559
      %610 = vmatpush.bf16.msra.mxu0 %v557
      %611 = vmatpush.bf16.msra.mxu0 %v555
      %612 = vmatpush.bf16.msra.mxu0 %v553
      %613 = vmatpush.bf16.msra.mxu0 %v551
      %614 = vmatpush.bf16.msra.mxu0 %v549
      %615 = vmatpush.bf16.msra.mxu0 %v547
      %616 = vmatmul.bf16.gmra.mxu0 %v429
      %v617 = vpop.f32.mrf.mxu0
      %v618 = vadd.f32 %v605, %v617
      %v619 = vpop.f32.mrf.mxu0
      %620 = vdwg.mxu0
      %621 = vmatpush.bf16.msra.mxu0 %v546
      %622 = vmatpush.bf16.msra.mxu0 %v544
      %623 = vmatpush.bf16.msra.mxu0 %v542
      %624 = vmatpush.bf16.msra.mxu0 %v540
      %625 = vmatpush.bf16.msra.mxu0 %v538
      %626 = vmatpush.bf16.msra.mxu0 %v536
      %627 = vmatpush.bf16.msra.mxu0 %v534
      %628 = vmatpush.bf16.msra.mxu0 %v532
      %629 = vmatmul.bf16.gmra.mxu0 %v428
      %v630 = vpop.f32.mrf.mxu0
      %v631 = vadd.f32 %v432, %v630
      %v632 = vpop.f32.mrf.mxu0
      %633 = vdwg.mxu0
      %634 = vmatpush.bf16.msra.mxu0 %v562
      %635 = vmatpush.bf16.msra.mxu0 %v560
      %636 = vmatpush.bf16.msra.mxu0 %v558
      %637 = vmatpush.bf16.msra.mxu0 %v556
      %638 = vmatpush.bf16.msra.mxu0 %v554
      %639 = vmatpush.bf16.msra.mxu0 %v552
      %640 = vmatpush.bf16.msra.mxu0 %v550
      %641 = vmatpush.bf16.msra.mxu0 %v548
      %642 = vmatmul.bf16.gmra.mxu0 %v429
      %v643 = vpop.f32.mrf.mxu0
      %v644 = vadd.f32 %v631, %v643
      %v645 = vpop.f32.mrf.mxu0
      %646 = vdwg.mxu0
      %v647 = vmax.f32 %v618, 0.0
      %v648 = vmax.f32 %v644, 0.0
      %v649 = vpack.c.bf16 %v647, %v647
      %v650 = vpack.c.bf16 %v648, %v648
      %v660 = vunpack.c.l.b16 %v382
      %v661 = vunpack.c.l.b16 %v383
      %v662 = vunpack.c.l.b16 %v384
      %v663 = vunpack.c.l.b16 %v385
      %v664 = vunpack.c.l.b16 %v386
      %v665 = vunpack.c.l.b16 %v387
      %v666 = vunpack.c.l.b16 %v388
      %v667 = vunpack.c.l.b16 %v389
      %v668 = vunpack.c.l.b16 %v390
      %v669 = vpack.c.b16 %v661, %v660
      %v670 = vpack.c.b16 %v663, %v662
      %v671 = vpack.c.b16 %v665, %v664
      %v672 = vpack.c.b16 %v667, %v666
      %v673 = vpack.c.b16 %v668, %v668
      %vm674 = vcmask 64512
      %v676 = vsel %vm674, %v669, 0
      %v679 = vsel %vm674, %v670, 0
      %v682 = vsel %vm674, %v671, 0
      %v685 = vsel %vm674, %v672, 0
      %v688 = vsel %vm674, %v673, 0
      %vm690 = vcmask 1043456
      %v692 = vsel %vm690, %v649, 0
      %v695 = vsel %vm690, %v650, 0
      %697 = vmatpush.bf16.msra.mxu0 0
      %698 = vmatpush.bf16.msra.mxu0 0
      %699 = vmatpush.bf16.msra.mxu0 0
      %700 = vmatpush.bf16.msra.mxu0 0
      %701 = vmatpush.bf16.msra.mxu0 0
      %702 = vmatpush.bf16.msra.mxu0 0
      %703 = vmatpush.bf16.msra.mxu0 0
      %704 = vmatpush.bf16.msra.mxu0 %v692
      %705 = vmatmul.bf16.gmra.mxu0 %v676
      %v706 = vpop.f32.mrf.mxu0
      %v707 = vadd.f32 0.0, %v706
      %v708 = vpop.f32.mrf.mxu0
      %v709 = vadd.f32 0.0, %v708
      %710 = vmatmul.bf16.gmra.mxu0 %v679
      %v711 = vpop.f32.mrf.mxu0
      %v712 = vadd.f32 0.0, %v711
      %v713 = vpop.f32.mrf.mxu0
      %v714 = vadd.f32 0.0, %v713
      %715 = vmatmul.bf16.gmra.mxu0 %v682
      %v716 = vpop.f32.mrf.mxu0
      %v717 = vadd.f32 0.0, %v716
      %v718 = vpop.f32.mrf.mxu0
      %v719 = vadd.f32 0.0, %v718
      %720 = vmatmul.bf16.gmra.mxu0 %v685
      %v721 = vpop.f32.mrf.mxu0
      %v722 = vadd.f32 0.0, %v721
      %v723 = vpop.f32.mrf.mxu0
      %v724 = vadd.f32 0.0, %v723
      %725 = vmatmul.bf16.gmra.mxu0 %v688
      %v726 = vpop.f32.mrf.mxu0
      %v727 = vadd.f32 0.0, %v726
      %v728 = vpop.f32.mrf.mxu0
      %729 = vdwg.mxu0
      %730 = vmatpush.bf16.msra.mxu0 0
      %731 = vmatpush.bf16.msra.mxu0 0
      %732 = vmatpush.bf16.msra.mxu0 0
      %733 = vmatpush.bf16.msra.mxu0 0
      %734 = vmatpush.bf16.msra.mxu0 0
      %735 = vmatpush.bf16.msra.mxu0 0
      %736 = vmatpush.bf16.msra.mxu0 0
      %737 = vmatpush.bf16.msra.mxu0 %v695
      %738 = vmatmul.bf16.gmra.mxu0 %v676
      %v739 = vpop.f32.mrf.mxu0
      %v740 = vadd.f32 0.0, %v739
      %v741 = vpop.f32.mrf.mxu0
      %v742 = vadd.f32 0.0, %v741
      %743 = vmatmul.bf16.gmra.mxu0 %v679
      %v744 = vpop.f32.mrf.mxu0
      %v745 = vadd.f32 0.0, %v744
      %v746 = vpop.f32.mrf.mxu0
      %v747 = vadd.f32 0.0, %v746
      %748 = vmatmul.bf16.gmra.mxu0 %v682
      %v749 = vpop.f32.mrf.mxu0
      %v750 = vadd.f32 0.0, %v749
      %v751 = vpop.f32.mrf.mxu0
      %v752 = vadd.f32 0.0, %v751
      %753 = vmatmul.bf16.gmra.mxu0 %v685
      %v754 = vpop.f32.mrf.mxu0
      %v755 = vadd.f32 0.0, %v754
      %v756 = vpop.f32.mrf.mxu0
      %v757 = vadd.f32 0.0, %v756
      %758 = vmatmul.bf16.gmra.mxu0 %v688
      %v759 = vpop.f32.mrf.mxu0
      %v760 = vadd.f32 0.0, %v759
      %v761 = vpop.f32.mrf.mxu0
      %762 = vdwg.mxu0
      %v763 = vperm.slane %v391, 0
      %v764 = vperm.slane %v392, 0
      %v765 = vmul.f32 %v707, %v763
      %v766 = vmul.f32 %v740, %v764
      %v767 = vperm.slane %v391, 1
      %v768 = vperm.slane %v392, 1
      %v769 = vmul.f32 %v709, %v767
      %v770 = vmul.f32 %v742, %v768
      %v771 = vadd.f32 %v765, %v769
      %v772 = vadd.f32 %v766, %v770
      %v773 = vperm.slane %v391, 2
      %v774 = vperm.slane %v392, 2
      %v775 = vmul.f32 %v712, %v773
      %v776 = vmul.f32 %v745, %v774
      %v777 = vadd.f32 %v771, %v775
      %v778 = vadd.f32 %v772, %v776
      %v779 = vperm.slane %v391, 3
      %v780 = vperm.slane %v392, 3
      %v781 = vmul.f32 %v714, %v779
      %v782 = vmul.f32 %v747, %v780
      %v783 = vadd.f32 %v777, %v781
      %v784 = vadd.f32 %v778, %v782
      %v785 = vperm.slane %v391, 4
      %v786 = vperm.slane %v392, 4
      %v787 = vmul.f32 %v717, %v785
      %v788 = vmul.f32 %v750, %v786
      %v789 = vadd.f32 %v783, %v787
      %v790 = vadd.f32 %v784, %v788
      %v791 = vperm.slane %v391, 5
      %v792 = vperm.slane %v392, 5
      %v793 = vmul.f32 %v719, %v791
      %v794 = vmul.f32 %v752, %v792
      %v795 = vadd.f32 %v789, %v793
      %v796 = vadd.f32 %v790, %v794
      %v797 = vperm.slane %v391, 6
      %v798 = vperm.slane %v392, 6
      %v799 = vmul.f32 %v722, %v797
      %v800 = vmul.f32 %v755, %v798
      %v801 = vadd.f32 %v795, %v799
      %v802 = vadd.f32 %v796, %v800
      %v803 = vperm.slane %v391, 7
      %v804 = vperm.slane %v392, 7
      %v805 = vmul.f32 %v724, %v803
      %v806 = vmul.f32 %v757, %v804
      %v807 = vadd.f32 %v801, %v805
      %v808 = vadd.f32 %v802, %v806
      %v809 = vperm.slane %v393, 0
      %v810 = vperm.slane %v394, 0
      %v811 = vmul.f32 %v727, %v809
      %v812 = vmul.f32 %v760, %v810
      %v813 = vadd.f32 %v807, %v811
      %v814 = vadd.f32 %v808, %v812
      %v815 = vpack.c.bf16 %v813, %v813
      %v816 = vpack.c.bf16 %v814, %v814
      %v818 = vperm.slane %v427, 0
      %v819 = vperm.slane %v427, 1
      %v854 = vunpack.c.l.b16 %v395
      %v855 = vunpack.c.h.b16 %v395
      %v856 = vunpack.c.l.b16 %v396
      %v857 = vunpack.c.h.b16 %v396
      %v858 = vunpack.c.l.b16 %v397
      %v859 = vunpack.c.h.b16 %v397
      %v860 = vunpack.c.l.b16 %v398
      %v861 = vunpack.c.h.b16 %v398
      %v862 = vunpack.c.l.b16 %v399
      %v863 = vunpack.c.h.b16 %v399
      %v864 = vunpack.c.l.b16 %v400
      %v865 = vunpack.c.h.b16 %v400
      %v866 = vunpack.c.l.b16 %v401
      %v867 = vunpack.c.h.b16 %v401
      %v868 = vunpack.c.l.b16 %v402
      %v869 = vunpack.c.h.b16 %v402
      %v870 = vunpack.c.l.b16 %v403
      %v871 = vunpack.c.h.b16 %v403
      %v872 = vunpack.c.l.b16 %v404
      %v873 = vunpack.c.h.b16 %v404
      %v874 = vunpack.c.l.b16 %v405
      %v875 = vunpack.c.h.b16 %v405
      %v876 = vunpack.c.l.b16 %v406
      %v877 = vunpack.c.h.b16 %v406
      %v878 = vunpack.c.l.b16 %v407
      %v879 = vunpack.c.h.b16 %v407
      %v880 = vunpack.c.l.b16 %v408
      %v881 = vunpack.c.h.b16 %v408
      %v882 = vunpack.c.l.b16 %v409
      %v883 = vunpack.c.h.b16 %v409
      %v884 = vunpack.c.l.b16 %v410
      %v885 = vunpack.c.h.b16 %v410
      %v886 = vunpack.c.l.b16 %v411
      %v887 = vunpack.c.h.b16 %v411
      %v888 = vunpack.c.l.b16 %v412
      %v889 = vunpack.c.h.b16 %v412
      %v890 = vunpack.c.l.b16 %v413
      %v891 = vunpack.c.h.b16 %v413
      %v892 = vunpack.c.l.b16 %v414
      %v893 = vunpack.c.h.b16 %v414
      %v894 = vunpack.c.l.b16 %v415
      %v895 = vunpack.c.h.b16 %v415
      %v896 = vunpack.c.l.b16 %v416
      %v897 = vunpack.c.h.b16 %v416
      %v898 = vunpack.c.l.b16 %v417
      %v899 = vunpack.c.h.b16 %v417
      %v900 = vunpack.c.l.b16 %v418
      %v901 = vunpack.c.h.b16 %v418
      %v902 = vunpack.c.l.b16 %v419
      %v903 = vunpack.c.h.b16 %v419
      %v904 = vunpack.c.l.b16 %v420
      %v905 = vunpack.c.h.b16 %v420
      %v906 = vunpack.c.l.b16 %v421
      %v907 = vunpack.c.h.b16 %v421
      %v908 = vunpack.c.l.b16 %v422
      %v909 = vunpack.c.h.b16 %v422
      %v910 = vunpack.c.l.b16 %v423
      %v911 = vunpack.c.h.b16 %v423
      %v912 = vunpack.c.l.b16 %v424
      %v913 = vunpack.c.h.b16 %v424
      %v914 = vunpack.c.l.b16 %v425
      %v915 = vunpack.c.h.b16 %v425
      %v916 = vunpack.c.l.b16 %v426
      %v917 = vunpack.c.h.b16 %v426
      %v918 = vpack.c.b16 %v856, %v854
      %v919 = vpack.c.b16 %v857, %v855
      %v920 = vpack.c.b16 %v860, %v858
      %v921 = vpack.c.b16 %v861, %v859
      %v922 = vpack.c.b16 %v864, %v862
      %v923 = vpack.c.b16 %v865, %v863
      %v924 = vpack.c.b16 %v868, %v866
      %v925 = vpack.c.b16 %v869, %v867
      %v926 = vpack.c.b16 %v872, %v870
      %v927 = vpack.c.b16 %v873, %v871
      %v928 = vpack.c.b16 %v876, %v874
      %v929 = vpack.c.b16 %v877, %v875
      %v930 = vpack.c.b16 %v880, %v878
      %v931 = vpack.c.b16 %v881, %v879
      %v932 = vpack.c.b16 %v884, %v882
      %v933 = vpack.c.b16 %v885, %v883
      %v934 = vpack.c.b16 %v888, %v886
      %v935 = vpack.c.b16 %v889, %v887
      %v936 = vpack.c.b16 %v892, %v890
      %v937 = vpack.c.b16 %v893, %v891
      %v938 = vpack.c.b16 %v896, %v894
      %v939 = vpack.c.b16 %v897, %v895
      %v940 = vpack.c.b16 %v900, %v898
      %v941 = vpack.c.b16 %v901, %v899
      %v942 = vpack.c.b16 %v904, %v902
      %v943 = vpack.c.b16 %v905, %v903
      %v944 = vpack.c.b16 %v908, %v906
      %v945 = vpack.c.b16 %v909, %v907
      %v946 = vpack.c.b16 %v912, %v910
      %v947 = vpack.c.b16 %v913, %v911
      %v948 = vpack.c.b16 %v916, %v914
      %v949 = vpack.c.b16 %v917, %v915
      %982 = vmatpush.bf16.msra.mxu0 %v932
      %983 = vmatpush.bf16.msra.mxu0 %v930
      %984 = vmatpush.bf16.msra.mxu0 %v928
      %985 = vmatpush.bf16.msra.mxu0 %v926
      %986 = vmatpush.bf16.msra.mxu0 %v924
      %987 = vmatpush.bf16.msra.mxu0 %v922
      %988 = vmatpush.bf16.msra.mxu0 %v920
      %989 = vmatpush.bf16.msra.mxu0 %v918
      %990 = vmatmul.bf16.gmra.mxu0 %v815
      %v991 = vpop.f32.mrf.mxu0
      %v992 = vadd.f32 %v818, %v991
      %v993 = vpop.f32.mrf.mxu0
      %994 = vdwg.mxu0
      %995 = vmatpush.bf16.msra.mxu0 %v948
      %996 = vmatpush.bf16.msra.mxu0 %v946
      %997 = vmatpush.bf16.msra.mxu0 %v944
      %998 = vmatpush.bf16.msra.mxu0 %v942
      %999 = vmatpush.bf16.msra.mxu0 %v940
      %1000 = vmatpush.bf16.msra.mxu0 %v938
      %1001 = vmatpush.bf16.msra.mxu0 %v936
      %1002 = vmatpush.bf16.msra.mxu0 %v934
      %1003 = vmatmul.bf16.gmra.mxu0 %v816
      %v1004 = vpop.f32.mrf.mxu0
      %v1005 = vadd.f32 %v992, %v1004
      %v1006 = vpop.f32.mrf.mxu0
      %1007 = vdwg.mxu0
      %1008 = vmatpush.bf16.msra.mxu0 %v933
      %1009 = vmatpush.bf16.msra.mxu0 %v931
      %1010 = vmatpush.bf16.msra.mxu0 %v929
      %1011 = vmatpush.bf16.msra.mxu0 %v927
      %1012 = vmatpush.bf16.msra.mxu0 %v925
      %1013 = vmatpush.bf16.msra.mxu0 %v923
      %1014 = vmatpush.bf16.msra.mxu0 %v921
      %1015 = vmatpush.bf16.msra.mxu0 %v919
      %1016 = vmatmul.bf16.gmra.mxu0 %v815
      %v1017 = vpop.f32.mrf.mxu0
      %v1018 = vadd.f32 %v819, %v1017
      %v1019 = vpop.f32.mrf.mxu0
      %1020 = vdwg.mxu0
      %1021 = vmatpush.bf16.msra.mxu0 %v949
      %1022 = vmatpush.bf16.msra.mxu0 %v947
      %1023 = vmatpush.bf16.msra.mxu0 %v945
      %1024 = vmatpush.bf16.msra.mxu0 %v943
      %1025 = vmatpush.bf16.msra.mxu0 %v941
      %1026 = vmatpush.bf16.msra.mxu0 %v939
      %1027 = vmatpush.bf16.msra.mxu0 %v937
      %1028 = vmatpush.bf16.msra.mxu0 %v935
      %1029 = vmatmul.bf16.gmra.mxu0 %v816
      %v1030 = vpop.f32.mrf.mxu0
      %v1031 = vadd.f32 %v1018, %v1030
      %v1032 = vpop.f32.mrf.mxu0
      %1033 = vdwg.mxu0
      %v1034 = vmax.f32 %v1005, 0.0
      %v1035 = vmax.f32 %v1031, 0.0
      %1036 = vst [vmem:[#allocation2] sm:$0xff] %v1034
      %1037 = vst [vmem:[#allocation2 + $0x8] sm:$0xff] %v1035
      %p1038 = scmp.eq.s32.totalorder %s18, 2
      // Predicated region
      $region53: #{_lambda_.14} parent=47 // pred_check
        %p1039 = pneg %p1038
      $region54: #{_lambda_.14} parent=47 // pred_check_branch
        %1041 = sbr.rel (%p1039) target = $region56
      $region55: #{_lambda_.14} parent=47 // pred_region
        %1042 = vst [vmem:[%s7] sm:$0xff] %v1034
        %1043 = vst [vmem:[%s7 + $0x8] sm:$0xff] %v1035
      $region56: #{_lambda_.14} parent=47 // pred_fallthru
        _
      // Predicated region
      $region57: #{_lambda_.14} parent=47 // pred_check
        %p1044 = pneg %p203
      $region58: #{_lambda_.14} parent=47 // pred_check_branch
        %1046 = sbr.rel (%p1044) target = $region60
      $region59: #{_lambda_.14} parent=47 // pred_region
        _
      $region60: #{_lambda_.14} parent=47 // pred_fallthru
        _
      // Predicated region
      $region61: #{_lambda_.14} parent=47 // pred_check
        %p1047 = pneg %p203
      $region62: #{_lambda_.14} parent=47 // pred_check_branch
        %1049 = sbr.rel (%p1047) target = $region64
      $region63: #{_lambda_.14} parent=47 // pred_region
        _
      $region64: #{_lambda_.14} parent=47 // pred_fallthru
        _
    $region48: #{_lambda_.14} parent=5 // pred_fallthru
      _
    %p1050 = scmp.le.s32.totalorder 2, %s13
    // Predicated region
    $region65: #{_lambda_.14} parent=5 // pred_check
      %p1051 = pneg %p1050
    $region66: #{_lambda_.14} parent=5 // pred_check_branch
      %1053 = sbr.rel (%p1051) target = $region68
    $region67: #{_lambda_.14} parent=5 // pred_region
      %s1054 = ssub.s32 %s13, 2
    $region68: #{_lambda_.14} parent=5 // pred_fallthru
      _
  $region6: #{_lambda_.14} parent=0 // loop_footer
    %s17 = sadd.s32 1, %s13
  $region7: #{_lambda_.14} parent=0 // loop_footer_branch
    %12 = sbr.rel target = $region3
  $region8: #{_lambda_.14} parent=0 // loop_exit
    _

// kernel: _lambda_.15
$region0: #{_lambda_.15}
  #allocation0 [shape = 'u32[]', space=smem, size = 0x4, offset = 0x4, fixed_abs, tag = 'smem constant byte address 0x4 - core index']
  #allocation1 [shape = 'u32[72,128]{1,0:T(1,128)}', space=vmem, size = 0x9000, scoped, tag = 'internal scratch']
  %s0 = inlined_call_operand.vmem [shape: f32[8,256], index: 0, kind: input, shape index: {}]
  %s1 = inlined_call_operand.vmem [shape: bf16[256,1024], index: 1, kind: input, shape index: {}]
  %s2 = inlined_call_operand.vmem [shape: f32[1,1024], index: 2, kind: input, shape index: {}]
  %s3 = inlined_call_operand.vmem [shape: f32[8,1024], index: 3, kind: output, shape index: {}]
  %s4 = sld [smem:[#allocation0]]
  $region22: #{_lambda_.15} parent=0
    _
  %s6 = ssub.s32 1, %s4
  %s7 = scalar_select 0, %s6, %s4
  // Predicated region
  $region2: #{_lambda_.15} parent=0 // pred_check
    _
  $region3: #{_lambda_.15} parent=0 // pred_check_branch
    %9 = sbr.rel (0) target = $region5
  $region4: #{_lambda_.15} parent=0 // pred_region
    _
  $region5: #{_lambda_.15} parent=0 // pred_fallthru
    _
  // Predicated region
  $region6: #{_lambda_.15} parent=0 // pred_check
    _
  $region7: #{_lambda_.15} parent=0 // pred_check_branch
    %11 = sbr.rel (0) target = $region9
  $region8: #{_lambda_.15} parent=0 // pred_region
    _
  $region9: #{_lambda_.15} parent=0 // pred_fallthru
    _
  // Predicated region
  $region10: #{_lambda_.15} parent=0 // pred_check
    _
  $region11: #{_lambda_.15} parent=0 // pred_check_branch
    %13 = sbr.rel (0) target = $region13
  $region12: #{_lambda_.15} parent=0 // pred_region
    _
  $region13: #{_lambda_.15} parent=0 // pred_fallthru
    _
  %v14 = vld [vmem:[%s0] sm:$0xff]
  %v15 = vld [vmem:[%s0 + $0x8] sm:$0xff]
  %v16 = vpack.c.bf16 %v14, %v14
  %v17 = vpack.c.bf16 %v15, %v15
  %v18 = vld [vmem:[%s1] sm:$0xff]
  %v19 = vld [vmem:[%s1 + $0x8] sm:$0xff]
  %v20 = vld [vmem:[%s1 + $0x10] sm:$0xff]
  %v21 = vld [vmem:[%s1 + $0x18] sm:$0xff]
  %v22 = vld [vmem:[%s1 + $0x20] sm:$0xff]
  %v23 = vld [vmem:[%s1 + $0x28] sm:$0xff]
  %v24 = vld [vmem:[%s1 + $0x30] sm:$0xff]
  %v25 = vld [vmem:[%s1 + $0x38] sm:$0xff]
  %v26 = vld [vmem:[%s1 + $0x40] sm:$0xff]
  %v27 = vld [vmem:[%s1 + $0x48] sm:$0xff]
  %v28 = vld [vmem:[%s1 + $0x50] sm:$0xff]
  %v29 = vld [vmem:[%s1 + $0x58] sm:$0xff]
  %v30 = vld [vmem:[%s1 + $0x60] sm:$0xff]
  %v31 = vld [vmem:[%s1 + $0x68] sm:$0xff]
  %v32 = vld [vmem:[%s1 + $0x70] sm:$0xff]
  %v33 = vld [vmem:[%s1 + $0x78] sm:$0xff]
  %v34 = vld [vmem:[%s1 + $0x80] sm:$0xff]
  %v35 = vld [vmem:[%s1 + $0x88] sm:$0xff]
  %v36 = vld [vmem:[%s1 + $0x90] sm:$0xff]
  %v37 = vld [vmem:[%s1 + $0x98] sm:$0xff]
  %v38 = vld [vmem:[%s1 + $0xa0] sm:$0xff]
  %v39 = vld [vmem:[%s1 + $0xa8] sm:$0xff]
  %v40 = vld [vmem:[%s1 + $0xb0] sm:$0xff]
  %v41 = vld [vmem:[%s1 + $0xb8] sm:$0xff]
  %v42 = vld [vmem:[%s1 + $0xc0] sm:$0xff]
  %v43 = vld [vmem:[%s1 + $0xc8] sm:$0xff]
  %v44 = vld [vmem:[%s1 + $0xd0] sm:$0xff]
  %v45 = vld [vmem:[%s1 + $0xd8] sm:$0xff]
  %v46 = vld [vmem:[%s1 + $0xe0] sm:$0xff]
  %v47 = vld [vmem:[%s1 + $0xe8] sm:$0xff]
  %v48 = vld [vmem:[%s1 + $0xf0] sm:$0xff]
  %v49 = vld [vmem:[%s1 + $0xf8] sm:$0xff]
  %v50 = vld [vmem:[%s1 + $0x100] sm:$0xff]
  %v51 = vld [vmem:[%s1 + $0x108] sm:$0xff]
  %v52 = vld [vmem:[%s1 + $0x110] sm:$0xff]
  %v53 = vld [vmem:[%s1 + $0x118] sm:$0xff]
  %v54 = vld [vmem:[%s1 + $0x120] sm:$0xff]
  %v55 = vld [vmem:[%s1 + $0x128] sm:$0xff]
  %v56 = vld [vmem:[%s1 + $0x130] sm:$0xff]
  %v57 = vld [vmem:[%s1 + $0x138] sm:$0xff]
  %v58 = vld [vmem:[%s1 + $0x140] sm:$0xff]
  %v59 = vld [vmem:[%s1 + $0x148] sm:$0xff]
  %v60 = vld [vmem:[%s1 + $0x150] sm:$0xff]
  %v61 = vld [vmem:[%s1 + $0x158] sm:$0xff]
  %v62 = vld [vmem:[%s1 + $0x160] sm:$0xff]
  %v63 = vld [vmem:[%s1 + $0x168] sm:$0xff]
  %v64 = vld [vmem:[%s1 + $0x170] sm:$0xff]
  %v65 = vld [vmem:[%s1 + $0x178] sm:$0xff]
  %v66 = vld [vmem:[%s1 + $0x180] sm:$0xff]
  %v67 = vld [vmem:[%s1 + $0x188] sm:$0xff]
  %v68 = vld [vmem:[%s1 + $0x190] sm:$0xff]
  %v69 = vld [vmem:[%s1 + $0x198] sm:$0xff]
  %v70 = vld [vmem:[%s1 + $0x1a0] sm:$0xff]
  %v71 = vld [vmem:[%s1 + $0x1a8] sm:$0xff]
  %v72 = vld [vmem:[%s1 + $0x1b0] sm:$0xff]
  %v73 = vld [vmem:[%s1 + $0x1b8] sm:$0xff]
  %v74 = vld [vmem:[%s1 + $0x1c0] sm:$0xff]
  %v75 = vld [vmem:[%s1 + $0x1c8] sm:$0xff]
  %v76 = vld [vmem:[%s1 + $0x1d0] sm:$0xff]
  %v77 = vld [vmem:[%s1 + $0x1d8] sm:$0xff]
  %v78 = vld [vmem:[%s1 + $0x1e0] sm:$0xff]
  %v79 = vld [vmem:[%s1 + $0x1e8] sm:$0xff]
  %v80 = vld [vmem:[%s1 + $0x1f0] sm:$0xff]
  %v81 = vld [vmem:[%s1 + $0x1f8] sm:$0xff]
  %v82 = vld [vmem:[%s1 + $0x200] sm:$0xff]
  %v83 = vld [vmem:[%s1 + $0x208] sm:$0xff]
  %v84 = vld [vmem:[%s1 + $0x210] sm:$0xff]
  %v85 = vld [vmem:[%s1 + $0x218] sm:$0xff]
  %v86 = vld [vmem:[%s1 + $0x220] sm:$0xff]
  %v87 = vld [vmem:[%s1 + $0x228] sm:$0xff]
  %v88 = vld [vmem:[%s1 + $0x230] sm:$0xff]
  %v89 = vld [vmem:[%s1 + $0x238] sm:$0xff]
  %v90 = vld [vmem:[%s1 + $0x240] sm:$0xff]
  %v91 = vld [vmem:[%s1 + $0x248] sm:$0xff]
  %v92 = vld [vmem:[%s1 + $0x250] sm:$0xff]
  %v93 = vld [vmem:[%s1 + $0x258] sm:$0xff]
  %v94 = vld [vmem:[%s1 + $0x260] sm:$0xff]
  %v95 = vld [vmem:[%s1 + $0x268] sm:$0xff]
  %v96 = vld [vmem:[%s1 + $0x270] sm:$0xff]
  %v97 = vld [vmem:[%s1 + $0x278] sm:$0xff]
  %v98 = vld [vmem:[%s1 + $0x280] sm:$0xff]
  %v99 = vld [vmem:[%s1 + $0x288] sm:$0xff]
  %v100 = vld [vmem:[%s1 + $0x290] sm:$0xff]
  %v101 = vld [vmem:[%s1 + $0x298] sm:$0xff]
  %v102 = vld [vmem:[%s1 + $0x2a0] sm:$0xff]
  %v103 = vld [vmem:[%s1 + $0x2a8] sm:$0xff]
  %v104 = vld [vmem:[%s1 + $0x2b0] sm:$0xff]
  %v105 = vld [vmem:[%s1 + $0x2b8] sm:$0xff]
  %v106 = vld [vmem:[%s1 + $0x2c0] sm:$0xff]
  %v107 = vld [vmem:[%s1 + $0x2c8] sm:$0xff]
  %v108 = vld [vmem:[%s1 + $0x2d0] sm:$0xff]
  %v109 = vld [vmem:[%s1 + $0x2d8] sm:$0xff]
  %v110 = vld [vmem:[%s1 + $0x2e0] sm:$0xff]
  %v111 = vld [vmem:[%s1 + $0x2e8] sm:$0xff]
  %v112 = vld [vmem:[%s1 + $0x2f0] sm:$0xff]
  %v113 = vld [vmem:[%s1 + $0x2f8] sm:$0xff]
  %v114 = vld [vmem:[%s1 + $0x300] sm:$0xff]
  %v115 = vld [vmem:[%s1 + $0x308] sm:$0xff]
  %v116 = vld [vmem:[%s1 + $0x310] sm:$0xff]
  %v117 = vld [vmem:[%s1 + $0x318] sm:$0xff]
  %v118 = vld [vmem:[%s1 + $0x320] sm:$0xff]
  %v119 = vld [vmem:[%s1 + $0x328] sm:$0xff]
  %v120 = vld [vmem:[%s1 + $0x330] sm:$0xff]
  %v121 = vld [vmem:[%s1 + $0x338] sm:$0xff]
  %v122 = vld [vmem:[%s1 + $0x340] sm:$0xff]
  %v123 = vld [vmem:[%s1 + $0x348] sm:$0xff]
  %v124 = vld [vmem:[%s1 + $0x350] sm:$0xff]
  %v125 = vld [vmem:[%s1 + $0x358] sm:$0xff]
  %v126 = vld [vmem:[%s1 + $0x360] sm:$0xff]
  %v127 = vld [vmem:[%s1 + $0x368] sm:$0xff]
  %v128 = vld [vmem:[%s1 + $0x370] sm:$0xff]
  %v129 = vld [vmem:[%s1 + $0x378] sm:$0xff]
  %v130 = vld [vmem:[%s1 + $0x380] sm:$0xff]
  %v131 = vld [vmem:[%s1 + $0x388] sm:$0xff]
  %v132 = vld [vmem:[%s1 + $0x390] sm:$0xff]
  %v133 = vld [vmem:[%s1 + $0x398] sm:$0xff]
  %v134 = vld [vmem:[%s1 + $0x3a0] sm:$0xff]
  %v135 = vld [vmem:[%s1 + $0x3a8] sm:$0xff]
  %v136 = vld [vmem:[%s1 + $0x3b0] sm:$0xff]
  %v137 = vld [vmem:[%s1 + $0x3b8] sm:$0xff]
  %v138 = vld [vmem:[%s1 + $0x3c0] sm:$0xff]
  %v139 = vld [vmem:[%s1 + $0x3c8] sm:$0xff]
  %v140 = vld [vmem:[%s1 + $0x3d0] sm:$0xff]
  %v141 = vld [vmem:[%s1 + $0x3d8] sm:$0xff]
  %v142 = vld [vmem:[%s1 + $0x3e0] sm:$0xff]
  %v143 = vld [vmem:[%s1 + $0x3e8] sm:$0xff]
  %v144 = vld [vmem:[%s1 + $0x3f0] sm:$0xff]
  %v145 = vld [vmem:[%s1 + $0x3f8] sm:$0xff]
  %v146 = vld [vmem:[%s2] sm:$0xff]
  %v148 = vperm.slane %v146, 0
  %v149 = vperm.slane %v146, 1
  %v150 = vperm.slane %v146, 2
  %v151 = vperm.slane %v146, 3
  %v152 = vperm.slane %v146, 4
  %v153 = vperm.slane %v146, 5
  %v154 = vperm.slane %v146, 6
  %v155 = vperm.slane %v146, 7
  %v292 = vunpack.c.l.b16 %v18
  %v293 = vunpack.c.h.b16 %v18
  %v294 = vunpack.c.l.b16 %v19
  %v295 = vunpack.c.h.b16 %v19
  %v296 = vunpack.c.l.b16 %v20
  %v297 = vunpack.c.h.b16 %v20
  %v298 = vunpack.c.l.b16 %v21
  %v299 = vunpack.c.h.b16 %v21
  %v300 = vunpack.c.l.b16 %v22
  %v301 = vunpack.c.h.b16 %v22
  %v302 = vunpack.c.l.b16 %v23
  %v303 = vunpack.c.h.b16 %v23
  %v304 = vunpack.c.l.b16 %v24
  %v305 = vunpack.c.h.b16 %v24
  %v306 = vunpack.c.l.b16 %v25
  %v307 = vunpack.c.h.b16 %v25
  %v308 = vunpack.c.l.b16 %v26
  %v309 = vunpack.c.h.b16 %v26
  %v310 = vunpack.c.l.b16 %v27
  %v311 = vunpack.c.h.b16 %v27
  %v312 = vunpack.c.l.b16 %v28
  %v313 = vunpack.c.h.b16 %v28
  %v314 = vunpack.c.l.b16 %v29
  %v315 = vunpack.c.h.b16 %v29
  %v316 = vunpack.c.l.b16 %v30
  %v317 = vunpack.c.h.b16 %v30
  %v318 = vunpack.c.l.b16 %v31
  %v319 = vunpack.c.h.b16 %v31
  %v320 = vunpack.c.l.b16 %v32
  %v321 = vunpack.c.h.b16 %v32
  %v322 = vunpack.c.l.b16 %v33
  %v323 = vunpack.c.h.b16 %v33
  %v324 = vunpack.c.l.b16 %v34
  %v325 = vunpack.c.h.b16 %v34
  %v326 = vunpack.c.l.b16 %v35
  %v327 = vunpack.c.h.b16 %v35
  %v328 = vunpack.c.l.b16 %v36
  %v329 = vunpack.c.h.b16 %v36
  %v330 = vunpack.c.l.b16 %v37
  %v331 = vunpack.c.h.b16 %v37
  %v332 = vunpack.c.l.b16 %v38
  %v333 = vunpack.c.h.b16 %v38
  %v334 = vunpack.c.l.b16 %v39
  %v335 = vunpack.c.h.b16 %v39
  %v336 = vunpack.c.l.b16 %v40
  %v337 = vunpack.c.h.b16 %v40
  %v338 = vunpack.c.l.b16 %v41
  %v339 = vunpack.c.h.b16 %v41
  %v340 = vunpack.c.l.b16 %v42
  %v341 = vunpack.c.h.b16 %v42
  %v342 = vunpack.c.l.b16 %v43
  %v343 = vunpack.c.h.b16 %v43
  %v344 = vunpack.c.l.b16 %v44
  %v345 = vunpack.c.h.b16 %v44
  %v346 = vunpack.c.l.b16 %v45
  %v347 = vunpack.c.h.b16 %v45
  %v348 = vunpack.c.l.b16 %v46
  %v349 = vunpack.c.h.b16 %v46
  %v350 = vunpack.c.l.b16 %v47
  %v351 = vunpack.c.h.b16 %v47
  %v352 = vunpack.c.l.b16 %v48
  %v353 = vunpack.c.h.b16 %v48
  %v354 = vunpack.c.l.b16 %v49
  %v355 = vunpack.c.h.b16 %v49
  %v356 = vunpack.c.l.b16 %v50
  %v357 = vunpack.c.h.b16 %v50
  %v358 = vunpack.c.l.b16 %v51
  %v359 = vunpack.c.h.b16 %v51
  %v360 = vunpack.c.l.b16 %v52
  %v361 = vunpack.c.h.b16 %v52
  %v362 = vunpack.c.l.b16 %v53
  %v363 = vunpack.c.h.b16 %v53
  %v364 = vunpack.c.l.b16 %v54
  %v365 = vunpack.c.h.b16 %v54
  %v366 = vunpack.c.l.b16 %v55
  %v367 = vunpack.c.h.b16 %v55
  %v368 = vunpack.c.l.b16 %v56
  %v369 = vunpack.c.h.b16 %v56
  %v370 = vunpack.c.l.b16 %v57
  %v371 = vunpack.c.h.b16 %v57
  %v372 = vunpack.c.l.b16 %v58
  %v373 = vunpack.c.h.b16 %v58
  %v374 = vunpack.c.l.b16 %v59
  %v375 = vunpack.c.h.b16 %v59
  %v376 = vunpack.c.l.b16 %v60
  %v377 = vunpack.c.h.b16 %v60
  %v378 = vunpack.c.l.b16 %v61
  %v379 = vunpack.c.h.b16 %v61
  %v380 = vunpack.c.l.b16 %v62
  %v381 = vunpack.c.h.b16 %v62
  %v382 = vunpack.c.l.b16 %v63
  %v383 = vunpack.c.h.b16 %v63
  %v384 = vunpack.c.l.b16 %v64
  %v385 = vunpack.c.h.b16 %v64
  %v386 = vunpack.c.l.b16 %v65
  %v387 = vunpack.c.h.b16 %v65
  %v388 = vunpack.c.l.b16 %v66
  %v389 = vunpack.c.h.b16 %v66
  %v390 = vunpack.c.l.b16 %v67
  %v391 = vunpack.c.h.b16 %v67
  %v392 = vunpack.c.l.b16 %v68
  %v393 = vunpack.c.h.b16 %v68
  %v394 = vunpack.c.l.b16 %v69
  %v395 = vunpack.c.h.b16 %v69
  %v396 = vunpack.c.l.b16 %v70
  %v397 = vunpack.c.h.b16 %v70
  %v398 = vunpack.c.l.b16 %v71
  %v399 = vunpack.c.h.b16 %v71
  %v400 = vunpack.c.l.b16 %v72
  %v401 = vunpack.c.h.b16 %v72
  %v402 = vunpack.c.l.b16 %v73
  %v403 = vunpack.c.h.b16 %v73
  %v404 = vunpack.c.l.b16 %v74
  %v405 = vunpack.c.h.b16 %v74
  %v406 = vunpack.c.l.b16 %v75
  %v407 = vunpack.c.h.b16 %v75
  %v408 = vunpack.c.l.b16 %v76
  %v409 = vunpack.c.h.b16 %v76
  %v410 = vunpack.c.l.b16 %v77
  %v411 = vunpack.c.h.b16 %v77
  %v412 = vunpack.c.l.b16 %v78
  %v413 = vunpack.c.h.b16 %v78
  %v414 = vunpack.c.l.b16 %v79
  %v415 = vunpack.c.h.b16 %v79
  %v416 = vunpack.c.l.b16 %v80
  %v417 = vunpack.c.h.b16 %v80
  %v418 = vunpack.c.l.b16 %v81
  %v419 = vunpack.c.h.b16 %v81
  %v420 = vunpack.c.l.b16 %v82
  %v421 = vunpack.c.h.b16 %v82
  %v422 = vunpack.c.l.b16 %v83
  %v423 = vunpack.c.h.b16 %v83
  %v424 = vunpack.c.l.b16 %v84
  %v425 = vunpack.c.h.b16 %v84
  %v426 = vunpack.c.l.b16 %v85
  %v427 = vunpack.c.h.b16 %v85
  %v428 = vunpack.c.l.b16 %v86
  %v429 = vunpack.c.h.b16 %v86
  %v430 = vunpack.c.l.b16 %v87
  %v431 = vunpack.c.h.b16 %v87
  %v432 = vunpack.c.l.b16 %v88
  %v433 = vunpack.c.h.b16 %v88
  %v434 = vunpack.c.l.b16 %v89
  %v435 = vunpack.c.h.b16 %v89
  %v436 = vunpack.c.l.b16 %v90
  %v437 = vunpack.c.h.b16 %v90
  %v438 = vunpack.c.l.b16 %v91
  %v439 = vunpack.c.h.b16 %v91
  %v440 = vunpack.c.l.b16 %v92
  %v441 = vunpack.c.h.b16 %v92
  %v442 = vunpack.c.l.b16 %v93
  %v443 = vunpack.c.h.b16 %v93
  %v444 = vunpack.c.l.b16 %v94
  %v445 = vunpack.c.h.b16 %v94
  %v446 = vunpack.c.l.b16 %v95
  %v447 = vunpack.c.h.b16 %v95
  %v448 = vunpack.c.l.b16 %v96
  %v449 = vunpack.c.h.b16 %v96
  %v450 = vunpack.c.l.b16 %v97
  %v451 = vunpack.c.h.b16 %v97
  %v452 = vunpack.c.l.b16 %v98
  %v453 = vunpack.c.h.b16 %v98
  %v454 = vunpack.c.l.b16 %v99
  %v455 = vunpack.c.h.b16 %v99
  %v456 = vunpack.c.l.b16 %v100
  %v457 = vunpack.c.h.b16 %v100
  %v458 = vunpack.c.l.b16 %v101
  %v459 = vunpack.c.h.b16 %v101
  %v460 = vunpack.c.l.b16 %v102
  %v461 = vunpack.c.h.b16 %v102
  %v462 = vunpack.c.l.b16 %v103
  %v463 = vunpack.c.h.b16 %v103
  %v464 = vunpack.c.l.b16 %v104
  %v465 = vunpack.c.h.b16 %v104
  %v466 = vunpack.c.l.b16 %v105
  %v467 = vunpack.c.h.b16 %v105
  %v468 = vunpack.c.l.b16 %v106
  %v469 = vunpack.c.h.b16 %v106
  %v470 = vunpack.c.l.b16 %v107
  %v471 = vunpack.c.h.b16 %v107
  %v472 = vunpack.c.l.b16 %v108
  %v473 = vunpack.c.h.b16 %v108
  %v474 = vunpack.c.l.b16 %v109
  %v475 = vunpack.c.h.b16 %v109
  %v476 = vunpack.c.l.b16 %v110
  %v477 = vunpack.c.h.b16 %v110
  %v478 = vunpack.c.l.b16 %v111
  %v479 = vunpack.c.h.b16 %v111
  %v480 = vunpack.c.l.b16 %v112
  %v481 = vunpack.c.h.b16 %v112
  %v482 = vunpack.c.l.b16 %v113
  %v483 = vunpack.c.h.b16 %v113
  %v484 = vunpack.c.l.b16 %v114
  %v485 = vunpack.c.h.b16 %v114
  %v486 = vunpack.c.l.b16 %v115
  %v487 = vunpack.c.h.b16 %v115
  %v488 = vunpack.c.l.b16 %v116
  %v489 = vunpack.c.h.b16 %v116
  %v490 = vunpack.c.l.b16 %v117
  %v491 = vunpack.c.h.b16 %v117
  %v492 = vunpack.c.l.b16 %v118
  %v493 = vunpack.c.h.b16 %v118
  %v494 = vunpack.c.l.b16 %v119
  %v495 = vunpack.c.h.b16 %v119
  %v496 = vunpack.c.l.b16 %v120
  %v497 = vunpack.c.h.b16 %v120
  %v498 = vunpack.c.l.b16 %v121
  %v499 = vunpack.c.h.b16 %v121
  %v500 = vunpack.c.l.b16 %v122
  %v501 = vunpack.c.h.b16 %v122
  %v502 = vunpack.c.l.b16 %v123
  %v503 = vunpack.c.h.b16 %v123
  %v504 = vunpack.c.l.b16 %v124
  %v505 = vunpack.c.h.b16 %v124
  %v506 = vunpack.c.l.b16 %v125
  %v507 = vunpack.c.h.b16 %v125
  %v508 = vunpack.c.l.b16 %v126
  %v509 = vunpack.c.h.b16 %v126
  %v510 = vunpack.c.l.b16 %v127
  %v511 = vunpack.c.h.b16 %v127
  %v512 = vunpack.c.l.b16 %v128
  %v513 = vunpack.c.h.b16 %v128
  %v514 = vunpack.c.l.b16 %v129
  %v515 = vunpack.c.h.b16 %v129
  %v516 = vunpack.c.l.b16 %v130
  %v517 = vunpack.c.h.b16 %v130
  %v518 = vunpack.c.l.b16 %v131
  %v519 = vunpack.c.h.b16 %v131
  %v520 = vunpack.c.l.b16 %v132
  %v521 = vunpack.c.h.b16 %v132
  %v522 = vunpack.c.l.b16 %v133
  %v523 = vunpack.c.h.b16 %v133
  %v524 = vunpack.c.l.b16 %v134
  %v525 = vunpack.c.h.b16 %v134
  %v526 = vunpack.c.l.b16 %v135
  %v527 = vunpack.c.h.b16 %v135
  %v528 = vunpack.c.l.b16 %v136
  %v529 = vunpack.c.h.b16 %v136
  %v530 = vunpack.c.l.b16 %v137
  %v531 = vunpack.c.h.b16 %v137
  %v532 = vunpack.c.l.b16 %v138
  %v533 = vunpack.c.h.b16 %v138
  %v534 = vunpack.c.l.b16 %v139
  %v535 = vunpack.c.h.b16 %v139
  %v536 = vunpack.c.l.b16 %v140
  %v537 = vunpack.c.h.b16 %v140
  %v538 = vunpack.c.l.b16 %v141
  %v539 = vunpack.c.h.b16 %v141
  %v540 = vunpack.c.l.b16 %v142
  %v541 = vunpack.c.h.b16 %v142
  %v542 = vunpack.c.l.b16 %v143
  %v543 = vunpack.c.h.b16 %v143
  %v544 = vunpack.c.l.b16 %v144
  %v545 = vunpack.c.h.b16 %v144
  %v546 = vunpack.c.l.b16 %v145
  %v547 = vunpack.c.h.b16 %v145
  %v548 = vpack.c.b16 %v300, %v292
  %v549 = vpack.c.b16 %v301, %v293
  %v550 = vpack.c.b16 %v302, %v294
  %v551 = vpack.c.b16 %v303, %v295
  %v552 = vpack.c.b16 %v304, %v296
  %v553 = vpack.c.b16 %v305, %v297
  %v554 = vpack.c.b16 %v306, %v298
  %v555 = vpack.c.b16 %v307, %v299
  %v556 = vpack.c.b16 %v316, %v308
  %v557 = vpack.c.b16 %v317, %v309
  %v558 = vpack.c.b16 %v318, %v310
  %v559 = vpack.c.b16 %v319, %v311
  %v560 = vpack.c.b16 %v320, %v312
  %v561 = vpack.c.b16 %v321, %v313
  %v562 = vpack.c.b16 %v322, %v314
  %v563 = vpack.c.b16 %v323, %v315
  %v564 = vpack.c.b16 %v332, %v324
  %v565 = vpack.c.b16 %v333, %v325
  %v566 = vpack.c.b16 %v334, %v326
  %v567 = vpack.c.b16 %v335, %v327
  %v568 = vpack.c.b16 %v336, %v328
  %v569 = vpack.c.b16 %v337, %v329
  %v570 = vpack.c.b16 %v338, %v330
  %v571 = vpack.c.b16 %v339, %v331
  %v572 = vpack.c.b16 %v348, %v340
  %v573 = vpack.c.b16 %v349, %v341
  %v574 = vpack.c.b16 %v350, %v342
  %v575 = vpack.c.b16 %v351, %v343
  %v576 = vpack.c.b16 %v352, %v344
  %v577 = vpack.c.b16 %v353, %v345
  %v578 = vpack.c.b16 %v354, %v346
  %v579 = vpack.c.b16 %v355, %v347
  %v580 = vpack.c.b16 %v364, %v356
  %v581 = vpack.c.b16 %v365, %v357
  %v582 = vpack.c.b16 %v366, %v358
  %v583 = vpack.c.b16 %v367, %v359
  %v584 = vpack.c.b16 %v368, %v360
  %v585 = vpack.c.b16 %v369, %v361
  %v586 = vpack.c.b16 %v370, %v362
  %v587 = vpack.c.b16 %v371, %v363
  %v588 = vpack.c.b16 %v380, %v372
  %v589 = vpack.c.b16 %v381, %v373
  %v590 = vpack.c.b16 %v382, %v374
  %v591 = vpack.c.b16 %v383, %v375
  %v592 = vpack.c.b16 %v384, %v376
  %v593 = vpack.c.b16 %v385, %v377
  %v594 = vpack.c.b16 %v386, %v378
  %v595 = vpack.c.b16 %v387, %v379
  %v596 = vpack.c.b16 %v396, %v388
  %v597 = vpack.c.b16 %v397, %v389
  %v598 = vpack.c.b16 %v398, %v390
  %v599 = vpack.c.b16 %v399, %v391
  %v600 = vpack.c.b16 %v400, %v392
  %v601 = vpack.c.b16 %v401, %v393
  %v602 = vpack.c.b16 %v402, %v394
  %v603 = vpack.c.b16 %v403, %v395
  %v604 = vpack.c.b16 %v412, %v404
  %v605 = vpack.c.b16 %v413, %v405
  %v606 = vpack.c.b16 %v414, %v406
  %v607 = vpack.c.b16 %v415, %v407
  %v608 = vpack.c.b16 %v416, %v408
  %v609 = vpack.c.b16 %v417, %v409
  %v610 = vpack.c.b16 %v418, %v410
  %v611 = vpack.c.b16 %v419, %v411
  %v612 = vpack.c.b16 %v428, %v420
  %v613 = vpack.c.b16 %v429, %v421
  %v614 = vpack.c.b16 %v430, %v422
  %v615 = vpack.c.b16 %v431, %v423
  %v616 = vpack.c.b16 %v432, %v424
  %v617 = vpack.c.b16 %v433, %v425
  %v618 = vpack.c.b16 %v434, %v426
  %v619 = vpack.c.b16 %v435, %v427
  %v620 = vpack.c.b16 %v444, %v436
  %v621 = vpack.c.b16 %v445, %v437
  %v622 = vpack.c.b16 %v446, %v438
  %v623 = vpack.c.b16 %v447, %v439
  %v624 = vpack.c.b16 %v448, %v440
  %v625 = vpack.c.b16 %v449, %v441
  %v626 = vpack.c.b16 %v450, %v442
  %v627 = vpack.c.b16 %v451, %v443
  %v628 = vpack.c.b16 %v460, %v452
  %v629 = vpack.c.b16 %v461, %v453
  %v630 = vpack.c.b16 %v462, %v454
  %v631 = vpack.c.b16 %v463, %v455
  %v632 = vpack.c.b16 %v464, %v456
  %v633 = vpack.c.b16 %v465, %v457
  %v634 = vpack.c.b16 %v466, %v458
  %v635 = vpack.c.b16 %v467, %v459
  %v636 = vpack.c.b16 %v476, %v468
  %v637 = vpack.c.b16 %v477, %v469
  %v638 = vpack.c.b16 %v478, %v470
  %v639 = vpack.c.b16 %v479, %v471
  %v640 = vpack.c.b16 %v480, %v472
  %v641 = vpack.c.b16 %v481, %v473
  %v642 = vpack.c.b16 %v482, %v474
  %v643 = vpack.c.b16 %v483, %v475
  %v644 = vpack.c.b16 %v492, %v484
  %v645 = vpack.c.b16 %v493, %v485
  %v646 = vpack.c.b16 %v494, %v486
  %v647 = vpack.c.b16 %v495, %v487
  %v648 = vpack.c.b16 %v496, %v488
  %v649 = vpack.c.b16 %v497, %v489
  %v650 = vpack.c.b16 %v498, %v490
  %v651 = vpack.c.b16 %v499, %v491
  %v652 = vpack.c.b16 %v508, %v500
  %v653 = vpack.c.b16 %v509, %v501
  %v654 = vpack.c.b16 %v510, %v502
  %v655 = vpack.c.b16 %v511, %v503
  %v656 = vpack.c.b16 %v512, %v504
  %v657 = vpack.c.b16 %v513, %v505
  %v658 = vpack.c.b16 %v514, %v506
  %v659 = vpack.c.b16 %v515, %v507
  %v660 = vpack.c.b16 %v524, %v516
  %v661 = vpack.c.b16 %v525, %v517
  %v662 = vpack.c.b16 %v526, %v518
  %v663 = vpack.c.b16 %v527, %v519
  %v664 = vpack.c.b16 %v528, %v520
  %v665 = vpack.c.b16 %v529, %v521
  %v666 = vpack.c.b16 %v530, %v522
  %v667 = vpack.c.b16 %v531, %v523
  %v668 = vpack.c.b16 %v540, %v532
  %v669 = vpack.c.b16 %v541, %v533
  %v670 = vpack.c.b16 %v542, %v534
  %v671 = vpack.c.b16 %v543, %v535
  %v672 = vpack.c.b16 %v544, %v536
  %v673 = vpack.c.b16 %v545, %v537
  %v674 = vpack.c.b16 %v546, %v538
  %v675 = vpack.c.b16 %v547, %v539
  %804 = vmatpush.bf16.msra.mxu0 %v604
  %805 = vmatpush.bf16.msra.mxu0 %v596
  %806 = vmatpush.bf16.msra.mxu0 %v588
  %807 = vmatpush.bf16.msra.mxu0 %v580
  %808 = vmatpush.bf16.msra.mxu0 %v572
  %809 = vmatpush.bf16.msra.mxu0 %v564
  %810 = vmatpush.bf16.msra.mxu0 %v556
  %811 = vmatpush.bf16.msra.mxu0 %v548
  %812 = vmatmul.bf16.gmra.mxu0 %v16
  %v813 = vpop.f32.mrf.mxu0
  %v814 = vadd.f32 %v148, %v813
  %v815 = vpop.f32.mrf.mxu0
  %816 = vdwg.mxu0
  %817 = vmatpush.bf16.msra.mxu0 %v668
  %818 = vmatpush.bf16.msra.mxu0 %v660
  %819 = vmatpush.bf16.msra.mxu0 %v652
  %820 = vmatpush.bf16.msra.mxu0 %v644
  %821 = vmatpush.bf16.msra.mxu0 %v636
  %822 = vmatpush.bf16.msra.mxu0 %v628
  %823 = vmatpush.bf16.msra.mxu0 %v620
  %824 = vmatpush.bf16.msra.mxu0 %v612
  %825 = vmatmul.bf16.gmra.mxu0 %v17
  %v826 = vpop.f32.mrf.mxu0
  %v827 = vadd.f32 %v814, %v826
  %v828 = vpop.f32.mrf.mxu0
  %829 = vdwg.mxu0
  %830 = vmatpush.bf16.msra.mxu0 %v605
  %831 = vmatpush.bf16.msra.mxu0 %v597
  %832 = vmatpush.bf16.msra.mxu0 %v589
  %833 = vmatpush.bf16.msra.mxu0 %v581
  %834 = vmatpush.bf16.msra.mxu0 %v573
  %835 = vmatpush.bf16.msra.mxu0 %v565
  %836 = vmatpush.bf16.msra.mxu0 %v557
  %837 = vmatpush.bf16.msra.mxu0 %v549
  %838 = vmatmul.bf16.gmra.mxu0 %v16
  %v839 = vpop.f32.mrf.mxu0
  %v840 = vadd.f32 %v149, %v839
  %v841 = vpop.f32.mrf.mxu0
  %842 = vdwg.mxu0
  %843 = vmatpush.bf16.msra.mxu0 %v669
  %844 = vmatpush.bf16.msra.mxu0 %v661
  %845 = vmatpush.bf16.msra.mxu0 %v653
  %846 = vmatpush.bf16.msra.mxu0 %v645
  %847 = vmatpush.bf16.msra.mxu0 %v637
  %848 = vmatpush.bf16.msra.mxu0 %v629
  %849 = vmatpush.bf16.msra.mxu0 %v621
  %850 = vmatpush.bf16.msra.mxu0 %v613
  %851 = vmatmul.bf16.gmra.mxu0 %v17
  %v852 = vpop.f32.mrf.mxu0
  %v853 = vadd.f32 %v840, %v852
  %v854 = vpop.f32.mrf.mxu0
  %855 = vdwg.mxu0
  %856 = vmatpush.bf16.msra.mxu0 %v606
  %857 = vmatpush.bf16.msra.mxu0 %v598
  %858 = vmatpush.bf16.msra.mxu0 %v590
  %859 = vmatpush.bf16.msra.mxu0 %v582
  %860 = vmatpush.bf16.msra.mxu0 %v574
  %861 = vmatpush.bf16.msra.mxu0 %v566
  %862 = vmatpush.bf16.msra.mxu0 %v558
  %863 = vmatpush.bf16.msra.mxu0 %v550
  %864 = vmatmul.bf16.gmra.mxu0 %v16
  %v865 = vpop.f32.mrf.mxu0
  %v866 = vadd.f32 %v150, %v865
  %v867 = vpop.f32.mrf.mxu0
  %868 = vdwg.mxu0
  %869 = vmatpush.bf16.msra.mxu0 %v670
  %870 = vmatpush.bf16.msra.mxu0 %v662
  %871 = vmatpush.bf16.msra.mxu0 %v654
  %872 = vmatpush.bf16.msra.mxu0 %v646
  %873 = vmatpush.bf16.msra.mxu0 %v638
  %874 = vmatpush.bf16.msra.mxu0 %v630
  %875 = vmatpush.bf16.msra.mxu0 %v622
  %876 = vmatpush.bf16.msra.mxu0 %v614
  %877 = vmatmul.bf16.gmra.mxu0 %v17
  %v878 = vpop.f32.mrf.mxu0
  %v879 = vadd.f32 %v866, %v878
  %v880 = vpop.f32.mrf.mxu0
  %881 = vdwg.mxu0
  %882 = vmatpush.bf16.msra.mxu0 %v607
  %883 = vmatpush.bf16.msra.mxu0 %v599
  %884 = vmatpush.bf16.msra.mxu0 %v591
  %885 = vmatpush.bf16.msra.mxu0 %v583
  %886 = vmatpush.bf16.msra.mxu0 %v575
  %887 = vmatpush.bf16.msra.mxu0 %v567
  %888 = vmatpush.bf16.msra.mxu0 %v559
  %889 = vmatpush.bf16.msra.mxu0 %v551
  %890 = vmatmul.bf16.gmra.mxu0 %v16
  %v891 = vpop.f32.mrf.mxu0
  %v892 = vadd.f32 %v151, %v891
  %v893 = vpop.f32.mrf.mxu0
  %894 = vdwg.mxu0
  %895 = vmatpush.bf16.msra.mxu0 %v671
  %896 = vmatpush.bf16.msra.mxu0 %v663
  %897 = vmatpush.bf16.msra.mxu0 %v655
  %898 = vmatpush.bf16.msra.mxu0 %v647
  %899 = vmatpush.bf16.msra.mxu0 %v639
  %900 = vmatpush.bf16.msra.mxu0 %v631
  %901 = vmatpush.bf16.msra.mxu0 %v623
  %902 = vmatpush.bf16.msra.mxu0 %v615
  %903 = vmatmul.bf16.gmra.mxu0 %v17
  %v904 = vpop.f32.mrf.mxu0
  %v905 = vadd.f32 %v892, %v904
  %v906 = vpop.f32.mrf.mxu0
  %907 = vdwg.mxu0
  %908 = vmatpush.bf16.msra.mxu0 %v608
  %909 = vmatpush.bf16.msra.mxu0 %v600
  %910 = vmatpush.bf16.msra.mxu0 %v592
  %911 = vmatpush.bf16.msra.mxu0 %v584
  %912 = vmatpush.bf16.msra.mxu0 %v576
  %913 = vmatpush.bf16.msra.mxu0 %v568
  %914 = vmatpush.bf16.msra.mxu0 %v560
  %915 = vmatpush.bf16.msra.mxu0 %v552
  %916 = vmatmul.bf16.gmra.mxu0 %v16
  %v917 = vpop.f32.mrf.mxu0
  %v918 = vadd.f32 %v152, %v917
  %v919 = vpop.f32.mrf.mxu0
  %920 = vdwg.mxu0
  %921 = vmatpush.bf16.msra.mxu0 %v672
  %922 = vmatpush.bf16.msra.mxu0 %v664
  %923 = vmatpush.bf16.msra.mxu0 %v656
  %924 = vmatpush.bf16.msra.mxu0 %v648
  %925 = vmatpush.bf16.msra.mxu0 %v640
  %926 = vmatpush.bf16.msra.mxu0 %v632
  %927 = vmatpush.bf16.msra.mxu0 %v624
  %928 = vmatpush.bf16.msra.mxu0 %v616
  %929 = vmatmul.bf16.gmra.mxu0 %v17
  %v930 = vpop.f32.mrf.mxu0
  %v931 = vadd.f32 %v918, %v930
  %v932 = vpop.f32.mrf.mxu0
  %933 = vdwg.mxu0
  %934 = vmatpush.bf16.msra.mxu0 %v609
  %935 = vmatpush.bf16.msra.mxu0 %v601
  %936 = vmatpush.bf16.msra.mxu0 %v593
  %937 = vmatpush.bf16.msra.mxu0 %v585
  %938 = vmatpush.bf16.msra.mxu0 %v577
  %939 = vmatpush.bf16.msra.mxu0 %v569
  %940 = vmatpush.bf16.msra.mxu0 %v561
  %941 = vmatpush.bf16.msra.mxu0 %v553
  %942 = vmatmul.bf16.gmra.mxu0 %v16
  %v943 = vpop.f32.mrf.mxu0
  %v944 = vadd.f32 %v153, %v943
  %v945 = vpop.f32.mrf.mxu0
  %946 = vdwg.mxu0
  %947 = vmatpush.bf16.msra.mxu0 %v673
  %948 = vmatpush.bf16.msra.mxu0 %v665
  %949 = vmatpush.bf16.msra.mxu0 %v657
  %950 = vmatpush.bf16.msra.mxu0 %v649
  %951 = vmatpush.bf16.msra.mxu0 %v641
  %952 = vmatpush.bf16.msra.mxu0 %v633
  %953 = vmatpush.bf16.msra.mxu0 %v625
  %954 = vmatpush.bf16.msra.mxu0 %v617
  %955 = vmatmul.bf16.gmra.mxu0 %v17
  %v956 = vpop.f32.mrf.mxu0
  %v957 = vadd.f32 %v944, %v956
  %v958 = vpop.f32.mrf.mxu0
  %959 = vdwg.mxu0
  %960 = vmatpush.bf16.msra.mxu0 %v610
  %961 = vmatpush.bf16.msra.mxu0 %v602
  %962 = vmatpush.bf16.msra.mxu0 %v594
  %963 = vmatpush.bf16.msra.mxu0 %v586
  %964 = vmatpush.bf16.msra.mxu0 %v578
  %965 = vmatpush.bf16.msra.mxu0 %v570
  %966 = vmatpush.bf16.msra.mxu0 %v562
  %967 = vmatpush.bf16.msra.mxu0 %v554
  %968 = vmatmul.bf16.gmra.mxu0 %v16
  %v969 = vpop.f32.mrf.mxu0
  %v970 = vadd.f32 %v154, %v969
  %v971 = vpop.f32.mrf.mxu0
  %972 = vdwg.mxu0
  %973 = vmatpush.bf16.msra.mxu0 %v674
  %974 = vmatpush.bf16.msra.mxu0 %v666
  %975 = vmatpush.bf16.msra.mxu0 %v658
  %976 = vmatpush.bf16.msra.mxu0 %v650
  %977 = vmatpush.bf16.msra.mxu0 %v642
  %978 = vmatpush.bf16.msra.mxu0 %v634
  %979 = vmatpush.bf16.msra.mxu0 %v626
  %980 = vmatpush.bf16.msra.mxu0 %v618
  %981 = vmatmul.bf16.gmra.mxu0 %v17
  %v982 = vpop.f32.mrf.mxu0
  %v983 = vadd.f32 %v970, %v982
  %v984 = vpop.f32.mrf.mxu0
  %985 = vdwg.mxu0
  %986 = vmatpush.bf16.msra.mxu0 %v611
  %987 = vmatpush.bf16.msra.mxu0 %v603
  %988 = vmatpush.bf16.msra.mxu0 %v595
  %989 = vmatpush.bf16.msra.mxu0 %v587
  %990 = vmatpush.bf16.msra.mxu0 %v579
  %991 = vmatpush.bf16.msra.mxu0 %v571
  %992 = vmatpush.bf16.msra.mxu0 %v563
  %993 = vmatpush.bf16.msra.mxu0 %v555
  %994 = vmatmul.bf16.gmra.mxu0 %v16
  %v995 = vpop.f32.mrf.mxu0
  %v996 = vadd.f32 %v155, %v995
  %v997 = vpop.f32.mrf.mxu0
  %998 = vdwg.mxu0
  %999 = vmatpush.bf16.msra.mxu0 %v675
  %1000 = vmatpush.bf16.msra.mxu0 %v667
  %1001 = vmatpush.bf16.msra.mxu0 %v659
  %1002 = vmatpush.bf16.msra.mxu0 %v651
  %1003 = vmatpush.bf16.msra.mxu0 %v643
  %1004 = vmatpush.bf16.msra.mxu0 %v635
  %1005 = vmatpush.bf16.msra.mxu0 %v627
  %1006 = vmatpush.bf16.msra.mxu0 %v619
  %1007 = vmatmul.bf16.gmra.mxu0 %v17
  %v1008 = vpop.f32.mrf.mxu0
  %v1009 = vadd.f32 %v996, %v1008
  %v1010 = vpop.f32.mrf.mxu0
  %1011 = vdwg.mxu0
  %v1012 = vmax.f32 %v827, 0.0
  %v1013 = vmax.f32 %v853, 0.0
  %v1014 = vmax.f32 %v879, 0.0
  %v1015 = vmax.f32 %v905, 0.0
  %v1016 = vmax.f32 %v931, 0.0
  %v1017 = vmax.f32 %v957, 0.0
  %v1018 = vmax.f32 %v983, 0.0
  %v1019 = vmax.f32 %v1009, 0.0
  %1020 = vst [vmem:[%s3] sm:$0xff] %v1012
  %1021 = vst [vmem:[%s3 + $0x8] sm:$0xff] %v1013
  %1022 = vst [vmem:[%s3 + $0x10] sm:$0xff] %v1014
  %1023 = vst [vmem:[%s3 + $0x18] sm:$0xff] %v1015
  %1024 = vst [vmem:[%s3 + $0x20] sm:$0xff] %v1016
  %1025 = vst [vmem:[%s3 + $0x28] sm:$0xff] %v1017
  %1026 = vst [vmem:[%s3 + $0x30] sm:$0xff] %v1018
  %1027 = vst [vmem:[%s3 + $0x38] sm:$0xff] %v1019
  // Predicated region
  $region14: #{_lambda_.15} parent=0 // pred_check
    _
  $region15: #{_lambda_.15} parent=0 // pred_check_branch
    %1029 = sbr.rel (0) target = $region17
  $region16: #{_lambda_.15} parent=0 // pred_region
    _
  $region17: #{_lambda_.15} parent=0 // pred_fallthru
    _
  // Predicated region
  $region18: #{_lambda_.15} parent=0 // pred_check
    _
  $region19: #{_lambda_.15} parent=0 // pred_check_branch
    %1031 = sbr.rel (0) target = $region21
  $region20: #{_lambda_.15} parent=0 // pred_region
    _
  $region21: #{_lambda_.15} parent=0 // pred_fallthru
    _

</llo_original>
